<compile_context>
chip_gen: v7x
topology: tpu7x:2x2x1
jax: 0.10.0
libtpu: 0.0.40
codegen_flags: <defaults>
</compile_context>

<pallas_src>
import math

import numpy as np
import jax
import jax.numpy as jnp
from jax import lax
from jax.experimental import pallas as pl
from jax.experimental.pallas import tpu as pltpu

NEG_SLOPE = 0.3   # LeakyReLU negative_slope (matches the PyTorch module)
BN_EPS = 1e-5     # nn.BatchNorm2d default eps
PAD = 4           # canvas padding for branch intermediates (max pad: 1x9 / 9x1)


def _branch_descs(cin):
    # (param name, Cout, Cin, KH, KW, pad_h, pad_w); this order defines the
    # flat weight / bias vector layout shared by the wrapper and the kernel.
    return (
        ("e1_w1", 2, cin, 3, 3, 1, 1),
        ("e1_w2", 2, 2, 1, 9, 0, 4),
        ("e1_w3", 2, 2, 9, 1, 4, 0),
        ("e2_w1", 2, cin, 3, 3, 1, 1),
        ("e3_w1", 2, cin, 3, 3, 1, 1),
        ("e3_w2", 2, 2, 1, 3, 0, 1),
        ("e3_w3", 2, 2, 3, 1, 1, 0),
    )


def _lrelu(a):
    return jnp.where(a >= 0.0, a, NEG_SLOPE * a)


def _make_kernel(descs, H, W):
    Wh, Hh, Wq, Hq = W // 2, H // 2, W // 4, H // 4

    # Flat offsets into the SMEM weight / bias vectors (static Python ints).
    w_off, b_off = [], []
    wo = bo = 0
    for (_, cout, cinl, kh, kw, _, _) in descs:
        w_off.append(wo)
        b_off.append(bo)
        wo += cout * cinl * kh * kw
        bo += cout

    def kernel(w_sref, b_sref,                       # scalar-prefetch (SMEM)
               x_ref, a1_ref, r1_ref, a2_ref, r2_ref, b1_ref, b2_ref,  # inputs
               o_ref,                                 # output
               xpad_ref, cpad_ref):                   # VMEM scratch
        # Zero-init both padded canvases: the border IS the conv zero padding.
        xpad_ref[...] = jnp.zeros_like(xpad_ref)
        cpad_ref[...] = jnp.zeros_like(cpad_ref)
        xpad_ref[:, 1:1 + H, 1:1 + W] = x_ref[0]

        def conv_layer(li, src_ref, cy, cx):
            # Stride-1 conv (+ folded BN scale) + BN bias + LeakyReLU.
            # Tiny channel counts -> unrolled scalar-broadcast MACs on the VPU;
            # weights/biases come from SMEM as scalars.
            _, cout, cinl, kh, kw, ph, pw = descs[li]
            wb, bb = w_off[li], b_off[li]
            patches = []
            for dy in range(kh):
                for dx in range(kw):
                    y0, x0 = cy - ph + dy, cx - pw + dx
                    patches.append(src_ref[:, y0:y0 + H, x0:x0 + W])
            outs = []
            for co in range(cout):
                acc = jnp.full((H, W), b_sref[bb + co], jnp.float32)
                t = 0
                for dy in range(kh):
                    for dx in range(kw):
                        p = patches[t]
                        t += 1
                        for ci in range(cinl):
                            widx = wb + ((co * cinl + ci) * kh + dy) * kw + dx
                            acc = acc + p[ci] * w_sref[widx]
                outs.append(_lrelu(acc))
            return outs

        def run_branch(layer_ids):
            outs = conv_layer(layer_ids[0], xpad_ref, 1, 1)
            for li in layer_ids[1:]:
                for c, o in enumerate(outs):
                    cpad_ref[c, PAD:PAD + H, PAD:PAD + W] = o
                outs = conv_layer(li, cpad_ref, PAD, PAD)
            return outs

        # Branch order matches torch.cat((encode1, encode2, encode3), dim=1).
        cat = run_branch((0, 1, 2)) + run_branch((3,)) + run_branch((4, 5, 6))

        # feature_encoder_conv conv1 (6->12, 2x2, stride 2) on the MXU:
        #   out1[oy, co*Wh + ox] = conv1 output at (co, oy, ox)
        out1 = jnp.zeros((Hh, 12 * Wh), jnp.float32)
        for dy in range(2):
            v = jnp.zeros((H, 12 * Wh), jnp.float32)
            for ci in range(6):
                v = v + jnp.dot(cat[ci], a1_ref[dy, ci * W:(ci + 1) * W, :],
                                preferred_element_type=jnp.float32)
            out1 = out1 + jnp.dot(r1_ref[dy], v,
                                  preferred_element_type=jnp.float32)
        out1 = _lrelu(out1 + b1_ref[...])

        # conv2 (12->12, 2x2, stride 2):
        out2 = jnp.zeros((Hq, 12 * Wq), jnp.float32)
        for dy in range(2):
            v = jnp.dot(out1, a2_ref[dy], preferred_element_type=jnp.float32)
            out2 = out2 + jnp.dot(r2_ref[dy], v,
                                  preferred_element_type=jnp.float32)
        out2 = _lrelu(out2 + b2_ref[...])

        # Write NCHW output directly.
        for co in range(12):
            o_ref[0, co, :, :] = out2[:, co * Wq:(co + 1) * Wq]

    return kernel


def encoder_forward(x, params):
    """x: (B, C, H, W) NCHW like PyTorch.  Returns (B, 12, H//4, W//4)."""
    x = x.astype(jnp.float32)
    B, cin, H, W = x.shape
    assert H % 4 == 0 and W % 4 == 0
    Wh, Hh, Wq, Hq = W // 2, H // 2, W // 4, H // 4
    descs = _branch_descs(cin)

    # Fold the eval-mode BatchNorm scale into the conv weights (host side,
    # weight preprocessing only); BN biases stay as separate vectors.
    def folded(name):
        return params[name] * params[name + "_bns"][:, None, None, None]

    wvec = jnp.concatenate([folded(n).reshape(-1) for (n, *_r) in descs])
    bvec = jnp.concatenate([params[n + "_bnb"] for (n, *_r) in descs])

    # feature_encoder_conv weights -> block matrices so the strided 2x2 convs
    # become plain MXU matmuls inside the kernel (no lane-strided gathers).
    w1s = folded("fc_w1")          # (12, 6, 2, 2)
    w2s = folded("fc_w2")          # (12, 12, 2, 2)

    def col_embed(w_out, w_in):
        e = np.zeros((2, w_out, w_in), np.float32)
        for dxp in range(2):
            for ox in range(w_out):
                e[dxp, ox, 2 * ox + dxp] = 1.0
        return jnp.asarray(e)

    def row_select(h_out, h_in):
        r = np.zeros((2, h_out, h_in), np.float32)
        for dy in range(2):
            for oy in range(h_out):
                r[dy, oy, 2 * oy + dy] = 1.0
        return jnp.asarray(r)

    E1, E2 = col_embed(Wh, W), col_embed(Wq, Wh)
    hi = lax.Precision.HIGHEST
    A1 = jnp.stack([jnp.einsum("oid,dxs->isox", w1s[:, :, dy, :], E1,
                               precision=hi).reshape(6 * W, 12 * Wh)
                    for dy in range(2)])
    A2 = jnp.stack([jnp.einsum("oid,dxs->isox", w2s[:, :, dy, :], E2,
                               precision=hi).reshape(12 * Wh, 12 * Wq)
                    for dy in range(2)])
    R1, R2 = row_select(Hh, H), row_select(Hq, Hh)
    b1row = jnp.repeat(params["fc_w1_bnb"], Wh)[None, :]   # (1, 12*Wh)
    b2row = jnp.repeat(params["fc_w2_bnb"], Wq)[None, :]   # (1, 12*Wq)

    kernel = _make_kernel(descs, H, W)
    return pl.pallas_call(
        kernel,
        out_shape=jax.ShapeDtypeStruct((B, 12, Hq, Wq), jnp.float32),
        grid_spec=pltpu.PrefetchScalarGridSpec(
            num_scalar_prefetch=2,            # wvec, bvec -> SMEM scalars
            grid=(B,),
            in_specs=[
                pl.BlockSpec((1, cin, H, W), lambda b, *_: (b, 0, 0, 0)),
                pl.BlockSpec((2, 6 * W, 12 * Wh), lambda b, *_: (0, 0, 0)),
                pl.BlockSpec((2, Hh, H), lambda b, *_: (0, 0, 0)),
                pl.BlockSpec((2, 12 * Wh, 12 * Wq), lambda b, *_: (0, 0, 0)),
                pl.BlockSpec((2, Hq, Hh), lambda b, *_: (0, 0, 0)),
                pl.BlockSpec((1, 12 * Wh), lambda b, *_: (0, 0)),
                pl.BlockSpec((1, 12 * Wq), lambda b, *_: (0, 0)),
            ],
            out_specs=pl.BlockSpec((1, 12, Hq, Wq), lambda b, *_: (b, 0, 0, 0)),
            scratch_shapes=[
                pltpu.VMEM((cin, H + 2, W + 2), jnp.float32),       # input pad
                pltpu.VMEM((2, H + 2 * PAD, W + 2 * PAD), jnp.float32),  # mids
            ],
        ),
        compiler_params=pltpu.CompilerParams(
            dimension_semantics=("parallel",)),
    )(wvec, bvec, x, A1, R1, A2, R2, b1row, b2row)


def encoder_reference(x, params):
    """Pure-JAX (XLA) reference of the same forward pass, for validation."""
    x = x.astype(jnp.float32)

    def cbn(y, name, pad, stride=1):
        y = lax.conv_general_dilated(
            y, params[name], (stride, stride), pad,
            dimension_numbers=("NCHW", "OIHW", "NCHW"),
            precision=lax.Precision.HIGHEST)
        s = params[name + "_bns"]
        b = params[name + "_bnb"]
        return y * s[None, :, None, None] + b[None, :, None, None]

    e1 = _lrelu(cbn(x, "e1_w1", [(1, 1), (1, 1)]))
    e1 = _lrelu(cbn(e1, "e1_w2", [(0, 0), (4, 4)]))
    e1 = cbn(e1, "e1_w3", [(4, 4), (0, 0)])
    e2 = cbn(x, "e2_w1", [(1, 1), (1, 1)])
    e3 = _lrelu(cbn(x, "e3_w1", [(1, 1), (1, 1)]))
    e3 = _lrelu(cbn(e3, "e3_w2", [(0, 0), (1, 1)]))
    e3 = cbn(e3, "e3_w3", [(1, 1), (0, 0)])
    out = _lrelu(jnp.concatenate([e1, e2, e3], axis=1))
    out = _lrelu(cbn(out, "fc_w1", [(0, 0), (0, 0)], stride=2))
    out = _lrelu(cbn(out, "fc_w2", [(0, 0), (0, 0)], stride=2))
    return out


def _xavier_uniform(key, shape_oihw):
    o, i, kh, kw = shape_oihw
    fan_in, fan_out = i * kh * kw, o * kh * kw
    bound = math.sqrt(6.0 / (fan_in + fan_out))
    return jax.random.uniform(key, shape_oihw, jnp.float32, -bound, bound)


def init_params(key, n_channels):
    shapes = {
        "e1_w1": (2, n_channels, 3, 3),
        "e1_w2": (2, 2, 1, 9),
        "e1_w3": (2, 2, 9, 1),
        "e2_w1": (2, n_channels, 3, 3),
        "e3_w1": (2, n_channels, 3, 3),
        "e3_w2": (2, 2, 1, 3),
        "e3_w3": (2, 2, 3, 1),
        "fc_w1": (12, 6, 2, 2),
        "fc_w2": (12, 12, 2, 2),
    }
    keys = jax.random.split(key, len(shapes))
    params = {}
    for (name, shp), k in zip(shapes.items(), keys):
        params[name] = _xavier_uniform(k, shp)
        cout = shp[0]
        # Per-layer BatchNorm2d, eval mode with default init / fresh stats:
        # gamma=1, beta=0, running_mean=0, running_var=1.
        params[name + "_bns"] = jnp.full(
            (cout,), 1.0 / math.sqrt(1.0 + BN_EPS), jnp.float32)
        params[name + "_bnb"] = jnp.zeros((cout,), jnp.float32)
    return params


if __name__ == "__main__":
    key = jax.random.PRNGKey(0)
    kp, kx = jax.random.split(key)

    img_shape = (2, 16, 16)            # (channels, H, W) -> n_channels = 2
    B = 2
    params = init_params(kp, img_shape[0])
    x = jax.random.normal(kx, (B,) + img_shape, jnp.float32)   # NCHW

    out = jax.jit(encoder_forward)(x, params)
    out = jax.block_until_ready(out)

    assert out.shape == (B, 12, img_shape[1] // 4, img_shape[2] // 4), out.shape
    assert bool(jnp.all(jnp.isfinite(out)))

    ref = jax.block_until_ready(jax.jit(encoder_reference)(x, params))
    assert bool(jnp.allclose(out, ref, rtol=1e-3, atol=1e-3)), (
        "max |diff| = %e" % float(jnp.max(jnp.abs(out - ref))))

    print("KERNEL_OK")
</pallas_src>

<mosaic_0001>
module attributes {stable_mosaic.version = 11 : i64} {
  func.func @kernel(%arg0: i32, %arg1: memref<204xf32, #tpu.memory_space<smem>>, %arg2: memref<14xf32, #tpu.memory_space<smem>>, %arg3: memref<1x2x16x16xf32, #tpu.memory_space<vmem>>, %arg4: memref<2x96x96xf32, #tpu.memory_space<vmem>>, %arg5: memref<2x8x16xf32, #tpu.memory_space<vmem>>, %arg6: memref<2x96x48xf32, #tpu.memory_space<vmem>>, %arg7: memref<2x4x8xf32, #tpu.memory_space<vmem>>, %arg8: memref<1x96xf32, #tpu.memory_space<vmem>>, %arg9: memref<1x48xf32, #tpu.memory_space<vmem>>, %arg10: memref<1x12x4x4xf32, #tpu.memory_space<vmem>>, %arg11: memref<2x18x18xf32, #tpu.memory_space<vmem>>, %arg12: memref<2x24x24xf32, #tpu.memory_space<vmem>>) attributes {dimension_semantics = [#tpu.dimension_semantics<parallel>], iteration_bounds = array<i64: 2>, scalar_prefetch = 2 : i64, scratch_operands = 2 : i64, tpu.core_type = #tpu.core_type<tc>, window_params = [{transform_indices = @transform_0, window_bounds = array<i64: 1, 2, 16, 16>}, {pipeline_mode = #tpu.pipeline_mode<synchronous>, transform_indices = @transform_1, window_bounds = array<i64: 2, 96, 96>}, {pipeline_mode = #tpu.pipeline_mode<synchronous>, transform_indices = @transform_2, window_bounds = array<i64: 2, 8, 16>}, {pipeline_mode = #tpu.pipeline_mode<synchronous>, transform_indices = @transform_3, window_bounds = array<i64: 2, 96, 48>}, {pipeline_mode = #tpu.pipeline_mode<synchronous>, transform_indices = @transform_4, window_bounds = array<i64: 2, 4, 8>}, {pipeline_mode = #tpu.pipeline_mode<synchronous>, transform_indices = @transform_5, window_bounds = array<i64: 1, 96>}, {pipeline_mode = #tpu.pipeline_mode<synchronous>, transform_indices = @transform_6, window_bounds = array<i64: 1, 48>}, {transform_indices = @transform_7, window_bounds = array<i64: 1, 12, 4, 4>}]} {
    %cst = arith.constant 0.000000e+00 : f32
    %0 = vector.broadcast %cst : f32 to vector<2x18x18xf32>
    %c0 = arith.constant 0 : index
    %c0_0 = arith.constant 0 : index
    %c0_1 = arith.constant 0 : index
    %1 = vector.load %arg11[%c0, %c0_0, %c0_1] : memref<2x18x18xf32, #tpu.memory_space<vmem>>, vector<2x18x18xf32>
    tpu.vector_store %arg11[%c0, %c0_0, %c0_1], %0 {strides = array<i32>} : memref<2x18x18xf32, #tpu.memory_space<vmem>>, vector<2x18x18xf32>,
    %cst_2 = arith.constant 0.000000e+00 : f32
    %2 = vector.broadcast %cst_2 : f32 to vector<2x24x24xf32>
    %c0_3 = arith.constant 0 : index
    %c0_4 = arith.constant 0 : index
    %c0_5 = arith.constant 0 : index
    %3 = vector.load %arg12[%c0_3, %c0_4, %c0_5] : memref<2x24x24xf32, #tpu.memory_space<vmem>>, vector<2x24x24xf32>
    tpu.vector_store %arg12[%c0_3, %c0_4, %c0_5], %2 {strides = array<i32>} : memref<2x24x24xf32, #tpu.memory_space<vmem>>, vector<2x24x24xf32>,
    %c0_6 = arith.constant 0 : index
    %c0_7 = arith.constant 0 : index
    %c0_8 = arith.constant 0 : index
    %c0_9 = arith.constant 0 : index
    %4 = vector.load %arg3[%c0_6, %c0_7, %c0_8, %c0_9] : memref<1x2x16x16xf32, #tpu.memory_space<vmem>>, vector<1x2x16x16xf32>
    %5 = vector.shape_cast %4 : vector<1x2x16x16xf32> to vector<2x16x16xf32>
    %c0_10 = arith.constant 0 : index
    %c1 = arith.constant 1 : index
    %c1_11 = arith.constant 1 : index
    %6 = vector.load %arg11[%c0_10, %c1, %c1_11] : memref<2x18x18xf32, #tpu.memory_space<vmem>>, vector<2x16x16xf32>
    tpu.vector_store %arg11[%c0_10, %c1, %c1_11], %5 {strides = array<i32>} : memref<2x18x18xf32, #tpu.memory_space<vmem>>, vector<2x16x16xf32>,
    %c0_12 = arith.constant 0 : index
    %c0_13 = arith.constant 0 : index
    %c0_14 = arith.constant 0 : index
    %7 = vector.load %arg11[%c0_12, %c0_13, %c0_14] : memref<2x18x18xf32, #tpu.memory_space<vmem>>, vector<2x16x16xf32>
    %c0_15 = arith.constant 0 : index
    %c0_16 = arith.constant 0 : index
    %c1_17 = arith.constant 1 : index
    %8 = vector.load %arg11[%c0_15, %c0_16, %c1_17] : memref<2x18x18xf32, #tpu.memory_space<vmem>>, vector<2x16x16xf32>
    %c0_18 = arith.constant 0 : index
    %c0_19 = arith.constant 0 : index
    %c2 = arith.constant 2 : index
    %9 = vector.load %arg11[%c0_18, %c0_19, %c2] : memref<2x18x18xf32, #tpu.memory_space<vmem>>, vector<2x16x16xf32>
    %c0_20 = arith.constant 0 : index
    %c1_21 = arith.constant 1 : index
    %c0_22 = arith.constant 0 : index
    %10 = vector.load %arg11[%c0_20, %c1_21, %c0_22] : memref<2x18x18xf32, #tpu.memory_space<vmem>>, vector<2x16x16xf32>
    %c0_23 = arith.constant 0 : index
    %c1_24 = arith.constant 1 : index
    %c1_25 = arith.constant 1 : index
    %11 = vector.load %arg11[%c0_23, %c1_24, %c1_25] : memref<2x18x18xf32, #tpu.memory_space<vmem>>, vector<2x16x16xf32>
    %c0_26 = arith.constant 0 : index
    %c1_27 = arith.constant 1 : index
    %c2_28 = arith.constant 2 : index
    %12 = vector.load %arg11[%c0_26, %c1_27, %c2_28] : memref<2x18x18xf32, #tpu.memory_space<vmem>>, vector<2x16x16xf32>
    %c0_29 = arith.constant 0 : index
    %c2_30 = arith.constant 2 : index
    %c0_31 = arith.constant 0 : index
    %13 = vector.load %arg11[%c0_29, %c2_30, %c0_31] : memref<2x18x18xf32, #tpu.memory_space<vmem>>, vector<2x16x16xf32>
    %c0_32 = arith.constant 0 : index
    %c2_33 = arith.constant 2 : index
    %c1_34 = arith.constant 1 : index
    %14 = vector.load %arg11[%c0_32, %c2_33, %c1_34] : memref<2x18x18xf32, #tpu.memory_space<vmem>>, vector<2x16x16xf32>
    %c0_35 = arith.constant 0 : index
    %c2_36 = arith.constant 2 : index
    %c2_37 = arith.constant 2 : index
    %15 = vector.load %arg11[%c0_35, %c2_36, %c2_37] : memref<2x18x18xf32, #tpu.memory_space<vmem>>, vector<2x16x16xf32>
    %c0_38 = arith.constant 0 : index
    %16 = memref.load %arg2[%c0_38] : memref<14xf32, #tpu.memory_space<smem>>
    %17 = vector.broadcast %16 : f32 to vector<16x16xf32>
    %18 = vector.extract_strided_slice %7 {offsets = [0, 0, 0], sizes = [1, 16, 16], strides = [1, 1, 1]} : vector<2x16x16xf32> to vector<1x16x16xf32>
    %19 = vector.shape_cast %18 : vector<1x16x16xf32> to vector<16x16xf32>
    %c0_39 = arith.constant 0 : index
    %20 = memref.load %arg1[%c0_39] : memref<204xf32, #tpu.memory_space<smem>>
    %21 = vector.broadcast %20 : f32 to vector<16x16xf32>
    %22 = arith.mulf %19, %21 : vector<16x16xf32>
    %23 = arith.addf %17, %22 : vector<16x16xf32>
    %24 = vector.extract_strided_slice %7 {offsets = [1, 0, 0], sizes = [1, 16, 16], strides = [1, 1, 1]} : vector<2x16x16xf32> to vector<1x16x16xf32>
    %25 = vector.shape_cast %24 : vector<1x16x16xf32> to vector<16x16xf32>
    %c9 = arith.constant 9 : index
    %26 = memref.load %arg1[%c9] : memref<204xf32, #tpu.memory_space<smem>>
    %27 = vector.broadcast %26 : f32 to vector<16x16xf32>
    %28 = arith.mulf %25, %27 : vector<16x16xf32>
    %29 = arith.addf %23, %28 : vector<16x16xf32>
    %30 = vector.extract_strided_slice %8 {offsets = [0, 0, 0], sizes = [1, 16, 16], strides = [1, 1, 1]} : vector<2x16x16xf32> to vector<1x16x16xf32>
    %31 = vector.shape_cast %30 : vector<1x16x16xf32> to vector<16x16xf32>
    %c1_40 = arith.constant 1 : index
    %32 = memref.load %arg1[%c1_40] : memref<204xf32, #tpu.memory_space<smem>>
    %33 = vector.broadcast %32 : f32 to vector<16x16xf32>
    %34 = arith.mulf %31, %33 : vector<16x16xf32>
    %35 = arith.addf %29, %34 : vector<16x16xf32>
    %36 = vector.extract_strided_slice %8 {offsets = [1, 0, 0], sizes = [1, 16, 16], strides = [1, 1, 1]} : vector<2x16x16xf32> to vector<1x16x16xf32>
    %37 = vector.shape_cast %36 : vector<1x16x16xf32> to vector<16x16xf32>
    %c10 = arith.constant 10 : index
    %38 = memref.load %arg1[%c10] : memref<204xf32, #tpu.memory_space<smem>>
    %39 = vector.broadcast %38 : f32 to vector<16x16xf32>
    %40 = arith.mulf %37, %39 : vector<16x16xf32>
    %41 = arith.addf %35, %40 : vector<16x16xf32>
    %42 = vector.extract_strided_slice %9 {offsets = [0, 0, 0], sizes = [1, 16, 16], strides = [1, 1, 1]} : vector<2x16x16xf32> to vector<1x16x16xf32>
    %43 = vector.shape_cast %42 : vector<1x16x16xf32> to vector<16x16xf32>
    %c2_41 = arith.constant 2 : index
    %44 = memref.load %arg1[%c2_41] : memref<204xf32, #tpu.memory_space<smem>>
    %45 = vector.broadcast %44 : f32 to vector<16x16xf32>
    %46 = arith.mulf %43, %45 : vector<16x16xf32>
    %47 = arith.addf %41, %46 : vector<16x16xf32>
    %48 = vector.extract_strided_slice %9 {offsets = [1, 0, 0], sizes = [1, 16, 16], strides = [1, 1, 1]} : vector<2x16x16xf32> to vector<1x16x16xf32>
    %49 = vector.shape_cast %48 : vector<1x16x16xf32> to vector<16x16xf32>
    %c11 = arith.constant 11 : index
    %50 = memref.load %arg1[%c11] : memref<204xf32, #tpu.memory_space<smem>>
    %51 = vector.broadcast %50 : f32 to vector<16x16xf32>
    %52 = arith.mulf %49, %51 : vector<16x16xf32>
    %53 = arith.addf %47, %52 : vector<16x16xf32>
    %54 = vector.extract_strided_slice %10 {offsets = [0, 0, 0], sizes = [1, 16, 16], strides = [1, 1, 1]} : vector<2x16x16xf32> to vector<1x16x16xf32>
    %55 = vector.shape_cast %54 : vector<1x16x16xf32> to vector<16x16xf32>
    %c3 = arith.constant 3 : index
    %56 = memref.load %arg1[%c3] : memref<204xf32, #tpu.memory_space<smem>>
    %57 = vector.broadcast %56 : f32 to vector<16x16xf32>
    %58 = arith.mulf %55, %57 : vector<16x16xf32>
    %59 = arith.addf %53, %58 : vector<16x16xf32>
    %60 = vector.extract_strided_slice %10 {offsets = [1, 0, 0], sizes = [1, 16, 16], strides = [1, 1, 1]} : vector<2x16x16xf32> to vector<1x16x16xf32>
    %61 = vector.shape_cast %60 : vector<1x16x16xf32> to vector<16x16xf32>
    %c12 = arith.constant 12 : index
    %62 = memref.load %arg1[%c12] : memref<204xf32, #tpu.memory_space<smem>>
    %63 = vector.broadcast %62 : f32 to vector<16x16xf32>
    %64 = arith.mulf %61, %63 : vector<16x16xf32>
    %65 = arith.addf %59, %64 : vector<16x16xf32>
    %66 = vector.extract_strided_slice %11 {offsets = [0, 0, 0], sizes = [1, 16, 16], strides = [1, 1, 1]} : vector<2x16x16xf32> to vector<1x16x16xf32>
    %67 = vector.shape_cast %66 : vector<1x16x16xf32> to vector<16x16xf32>
    %c4 = arith.constant 4 : index
    %68 = memref.load %arg1[%c4] : memref<204xf32, #tpu.memory_space<smem>>
    %69 = vector.broadcast %68 : f32 to vector<16x16xf32>
    %70 = arith.mulf %67, %69 : vector<16x16xf32>
    %71 = arith.addf %65, %70 : vector<16x16xf32>
    %72 = vector.extract_strided_slice %11 {offsets = [1, 0, 0], sizes = [1, 16, 16], strides = [1, 1, 1]} : vector<2x16x16xf32> to vector<1x16x16xf32>
    %73 = vector.shape_cast %72 : vector<1x16x16xf32> to vector<16x16xf32>
    %c13 = arith.constant 13 : index
    %74 = memref.load %arg1[%c13] : memref<204xf32, #tpu.memory_space<smem>>
    %75 = vector.broadcast %74 : f32 to vector<16x16xf32>
    %76 = arith.mulf %73, %75 : vector<16x16xf32>
    %77 = arith.addf %71, %76 : vector<16x16xf32>
    %78 = vector.extract_strided_slice %12 {offsets = [0, 0, 0], sizes = [1, 16, 16], strides = [1, 1, 1]} : vector<2x16x16xf32> to vector<1x16x16xf32>
    %79 = vector.shape_cast %78 : vector<1x16x16xf32> to vector<16x16xf32>
    %c5 = arith.constant 5 : index
    %80 = memref.load %arg1[%c5] : memref<204xf32, #tpu.memory_space<smem>>
    %81 = vector.broadcast %80 : f32 to vector<16x16xf32>
    %82 = arith.mulf %79, %81 : vector<16x16xf32>
    %83 = arith.addf %77, %82 : vector<16x16xf32>
    %84 = vector.extract_strided_slice %12 {offsets = [1, 0, 0], sizes = [1, 16, 16], strides = [1, 1, 1]} : vector<2x16x16xf32> to vector<1x16x16xf32>
    %85 = vector.shape_cast %84 : vector<1x16x16xf32> to vector<16x16xf32>
    %c14 = arith.constant 14 : index
    %86 = memref.load %arg1[%c14] : memref<204xf32, #tpu.memory_space<smem>>
    %87 = vector.broadcast %86 : f32 to vector<16x16xf32>
    %88 = arith.mulf %85, %87 : vector<16x16xf32>
    %89 = arith.addf %83, %88 : vector<16x16xf32>
    %90 = vector.extract_strided_slice %13 {offsets = [0, 0, 0], sizes = [1, 16, 16], strides = [1, 1, 1]} : vector<2x16x16xf32> to vector<1x16x16xf32>
    %91 = vector.shape_cast %90 : vector<1x16x16xf32> to vector<16x16xf32>
    %c6 = arith.constant 6 : index
    %92 = memref.load %arg1[%c6] : memref<204xf32, #tpu.memory_space<smem>>
    %93 = vector.broadcast %92 : f32 to vector<16x16xf32>
    %94 = arith.mulf %91, %93 : vector<16x16xf32>
    %95 = arith.addf %89, %94 : vector<16x16xf32>
    %96 = vector.extract_strided_slice %13 {offsets = [1, 0, 0], sizes = [1, 16, 16], strides = [1, 1, 1]} : vector<2x16x16xf32> to vector<1x16x16xf32>
    %97 = vector.shape_cast %96 : vector<1x16x16xf32> to vector<16x16xf32>
    %c15 = arith.constant 15 : index
    %98 = memref.load %arg1[%c15] : memref<204xf32, #tpu.memory_space<smem>>
    %99 = vector.broadcast %98 : f32 to vector<16x16xf32>
    %100 = arith.mulf %97, %99 : vector<16x16xf32>
    %101 = arith.addf %95, %100 : vector<16x16xf32>
    %102 = vector.extract_strided_slice %14 {offsets = [0, 0, 0], sizes = [1, 16, 16], strides = [1, 1, 1]} : vector<2x16x16xf32> to vector<1x16x16xf32>
    %103 = vector.shape_cast %102 : vector<1x16x16xf32> to vector<16x16xf32>
    %c7 = arith.constant 7 : index
    %104 = memref.load %arg1[%c7] : memref<204xf32, #tpu.memory_space<smem>>
    %105 = vector.broadcast %104 : f32 to vector<16x16xf32>
    %106 = arith.mulf %103, %105 : vector<16x16xf32>
    %107 = arith.addf %101, %106 : vector<16x16xf32>
    %108 = vector.extract_strided_slice %14 {offsets = [1, 0, 0], sizes = [1, 16, 16], strides = [1, 1, 1]} : vector<2x16x16xf32> to vector<1x16x16xf32>
    %109 = vector.shape_cast %108 : vector<1x16x16xf32> to vector<16x16xf32>
    %c16 = arith.constant 16 : index
    %110 = memref.load %arg1[%c16] : memref<204xf32, #tpu.memory_space<smem>>
    %111 = vector.broadcast %110 : f32 to vector<16x16xf32>
    %112 = arith.mulf %109, %111 : vector<16x16xf32>
    %113 = arith.addf %107, %112 : vector<16x16xf32>
    %114 = vector.extract_strided_slice %15 {offsets = [0, 0, 0], sizes = [1, 16, 16], strides = [1, 1, 1]} : vector<2x16x16xf32> to vector<1x16x16xf32>
    %115 = vector.shape_cast %114 : vector<1x16x16xf32> to vector<16x16xf32>
    %c8 = arith.constant 8 : index
    %116 = memref.load %arg1[%c8] : memref<204xf32, #tpu.memory_space<smem>>
    %117 = vector.broadcast %116 : f32 to vector<16x16xf32>
    %118 = arith.mulf %115, %117 : vector<16x16xf32>
    %119 = arith.addf %113, %118 : vector<16x16xf32>
    %120 = vector.extract_strided_slice %15 {offsets = [1, 0, 0], sizes = [1, 16, 16], strides = [1, 1, 1]} : vector<2x16x16xf32> to vector<1x16x16xf32>
    %121 = vector.shape_cast %120 : vector<1x16x16xf32> to vector<16x16xf32>
    %c17 = arith.constant 17 : index
    %122 = memref.load %arg1[%c17] : memref<204xf32, #tpu.memory_space<smem>>
    %123 = vector.broadcast %122 : f32 to vector<16x16xf32>
    %124 = arith.mulf %121, %123 : vector<16x16xf32>
    %125 = arith.addf %119, %124 : vector<16x16xf32>
    %cst_42 = arith.constant 0.000000e+00 : f32
    %126 = vector.broadcast %cst_42 : f32 to vector<16x16xf32>
    %127 = arith.cmpf oge, %125, %126 : vector<16x16xf32>
    %cst_43 = arith.constant 3.000000e-01 : f32
    %128 = vector.broadcast %cst_43 : f32 to vector<16x16xf32>
    %129 = arith.mulf %128, %125 : vector<16x16xf32>
    %130 = arith.select %127, %125, %129 : vector<16x16xi1>, vector<16x16xf32>
    %c1_44 = arith.constant 1 : index
    %131 = memref.load %arg2[%c1_44] : memref<14xf32, #tpu.memory_space<smem>>
    %132 = vector.broadcast %131 : f32 to vector<16x16xf32>
    %133 = vector.extract_strided_slice %7 {offsets = [0, 0, 0], sizes = [1, 16, 16], strides = [1, 1, 1]} : vector<2x16x16xf32> to vector<1x16x16xf32>
    %134 = vector.shape_cast %133 : vector<1x16x16xf32> to vector<16x16xf32>
    %c18 = arith.constant 18 : index
    %135 = memref.load %arg1[%c18] : memref<204xf32, #tpu.memory_space<smem>>
    %136 = vector.broadcast %135 : f32 to vector<16x16xf32>
    %137 = arith.mulf %134, %136 : vector<16x16xf32>
    %138 = arith.addf %132, %137 : vector<16x16xf32>
    %139 = vector.extract_strided_slice %7 {offsets = [1, 0, 0], sizes = [1, 16, 16], strides = [1, 1, 1]} : vector<2x16x16xf32> to vector<1x16x16xf32>
    %140 = vector.shape_cast %139 : vector<1x16x16xf32> to vector<16x16xf32>
    %c27 = arith.constant 27 : index
    %141 = memref.load %arg1[%c27] : memref<204xf32, #tpu.memory_space<smem>>
    %142 = vector.broadcast %141 : f32 to vector<16x16xf32>
    %143 = arith.mulf %140, %142 : vector<16x16xf32>
    %144 = arith.addf %138, %143 : vector<16x16xf32>
    %145 = vector.extract_strided_slice %8 {offsets = [0, 0, 0], sizes = [1, 16, 16], strides = [1, 1, 1]} : vector<2x16x16xf32> to vector<1x16x16xf32>
    %146 = vector.shape_cast %145 : vector<1x16x16xf32> to vector<16x16xf32>
    %c19 = arith.constant 19 : index
    %147 = memref.load %arg1[%c19] : memref<204xf32, #tpu.memory_space<smem>>
    %148 = vector.broadcast %147 : f32 to vector<16x16xf32>
    %149 = arith.mulf %146, %148 : vector<16x16xf32>
    %150 = arith.addf %144, %149 : vector<16x16xf32>
    %151 = vector.extract_strided_slice %8 {offsets = [1, 0, 0], sizes = [1, 16, 16], strides = [1, 1, 1]} : vector<2x16x16xf32> to vector<1x16x16xf32>
    %152 = vector.shape_cast %151 : vector<1x16x16xf32> to vector<16x16xf32>
    %c28 = arith.constant 28 : index
    %153 = memref.load %arg1[%c28] : memref<204xf32, #tpu.memory_space<smem>>
    %154 = vector.broadcast %153 : f32 to vector<16x16xf32>
    %155 = arith.mulf %152, %154 : vector<16x16xf32>
    %156 = arith.addf %150, %155 : vector<16x16xf32>
    %157 = vector.extract_strided_slice %9 {offsets = [0, 0, 0], sizes = [1, 16, 16], strides = [1, 1, 1]} : vector<2x16x16xf32> to vector<1x16x16xf32>
    %158 = vector.shape_cast %157 : vector<1x16x16xf32> to vector<16x16xf32>
    %c20 = arith.constant 20 : index
    %159 = memref.load %arg1[%c20] : memref<204xf32, #tpu.memory_space<smem>>
    %160 = vector.broadcast %159 : f32 to vector<16x16xf32>
    %161 = arith.mulf %158, %160 : vector<16x16xf32>
    %162 = arith.addf %156, %161 : vector<16x16xf32>
    %163 = vector.extract_strided_slice %9 {offsets = [1, 0, 0], sizes = [1, 16, 16], strides = [1, 1, 1]} : vector<2x16x16xf32> to vector<1x16x16xf32>
    %164 = vector.shape_cast %163 : vector<1x16x16xf32> to vector<16x16xf32>
    %c29 = arith.constant 29 : index
    %165 = memref.load %arg1[%c29] : memref<204xf32, #tpu.memory_space<smem>>
    %166 = vector.broadcast %165 : f32 to vector<16x16xf32>
    %167 = arith.mulf %164, %166 : vector<16x16xf32>
    %168 = arith.addf %162, %167 : vector<16x16xf32>
    %169 = vector.extract_strided_slice %10 {offsets = [0, 0, 0], sizes = [1, 16, 16], strides = [1, 1, 1]} : vector<2x16x16xf32> to vector<1x16x16xf32>
    %170 = vector.shape_cast %169 : vector<1x16x16xf32> to vector<16x16xf32>
    %c21 = arith.constant 21 : index
    %171 = memref.load %arg1[%c21] : memref<204xf32, #tpu.memory_space<smem>>
    %172 = vector.broadcast %171 : f32 to vector<16x16xf32>
    %173 = arith.mulf %170, %172 : vector<16x16xf32>
    %174 = arith.addf %168, %173 : vector<16x16xf32>
    %175 = vector.extract_strided_slice %10 {offsets = [1, 0, 0], sizes = [1, 16, 16], strides = [1, 1, 1]} : vector<2x16x16xf32> to vector<1x16x16xf32>
    %176 = vector.shape_cast %175 : vector<1x16x16xf32> to vector<16x16xf32>
    %c30 = arith.constant 30 : index
    %177 = memref.load %arg1[%c30] : memref<204xf32, #tpu.memory_space<smem>>
    %178 = vector.broadcast %177 : f32 to vector<16x16xf32>
    %179 = arith.mulf %176, %178 : vector<16x16xf32>
    %180 = arith.addf %174, %179 : vector<16x16xf32>
    %181 = vector.extract_strided_slice %11 {offsets = [0, 0, 0], sizes = [1, 16, 16], strides = [1, 1, 1]} : vector<2x16x16xf32> to vector<1x16x16xf32>
    %182 = vector.shape_cast %181 : vector<1x16x16xf32> to vector<16x16xf32>
    %c22 = arith.constant 22 : index
    %183 = memref.load %arg1[%c22] : memref<204xf32, #tpu.memory_space<smem>>
    %184 = vector.broadcast %183 : f32 to vector<16x16xf32>
    %185 = arith.mulf %182, %184 : vector<16x16xf32>
    %186 = arith.addf %180, %185 : vector<16x16xf32>
    %187 = vector.extract_strided_slice %11 {offsets = [1, 0, 0], sizes = [1, 16, 16], strides = [1, 1, 1]} : vector<2x16x16xf32> to vector<1x16x16xf32>
    %188 = vector.shape_cast %187 : vector<1x16x16xf32> to vector<16x16xf32>
    %c31 = arith.constant 31 : index
    %189 = memref.load %arg1[%c31] : memref<204xf32, #tpu.memory_space<smem>>
    %190 = vector.broadcast %189 : f32 to vector<16x16xf32>
    %191 = arith.mulf %188, %190 : vector<16x16xf32>
    %192 = arith.addf %186, %191 : vector<16x16xf32>
    %193 = vector.extract_strided_slice %12 {offsets = [0, 0, 0], sizes = [1, 16, 16], strides = [1, 1, 1]} : vector<2x16x16xf32> to vector<1x16x16xf32>
    %194 = vector.shape_cast %193 : vector<1x16x16xf32> to vector<16x16xf32>
    %c23 = arith.constant 23 : index
    %195 = memref.load %arg1[%c23] : memref<204xf32, #tpu.memory_space<smem>>
    %196 = vector.broadcast %195 : f32 to vector<16x16xf32>
    %197 = arith.mulf %194, %196 : vector<16x16xf32>
    %198 = arith.addf %192, %197 : vector<16x16xf32>
    %199 = vector.extract_strided_slice %12 {offsets = [1, 0, 0], sizes = [1, 16, 16], strides = [1, 1, 1]} : vector<2x16x16xf32> to vector<1x16x16xf32>
    %200 = vector.shape_cast %199 : vector<1x16x16xf32> to vector<16x16xf32>
    %c32 = arith.constant 32 : index
    %201 = memref.load %arg1[%c32] : memref<204xf32, #tpu.memory_space<smem>>
    %202 = vector.broadcast %201 : f32 to vector<16x16xf32>
    %203 = arith.mulf %200, %202 : vector<16x16xf32>
    %204 = arith.addf %198, %203 : vector<16x16xf32>
    %205 = vector.extract_strided_slice %13 {offsets = [0, 0, 0], sizes = [1, 16, 16], strides = [1, 1, 1]} : vector<2x16x16xf32> to vector<1x16x16xf32>
    %206 = vector.shape_cast %205 : vector<1x16x16xf32> to vector<16x16xf32>
    %c24 = arith.constant 24 : index
    %207 = memref.load %arg1[%c24] : memref<204xf32, #tpu.memory_space<smem>>
    %208 = vector.broadcast %207 : f32 to vector<16x16xf32>
    %209 = arith.mulf %206, %208 : vector<16x16xf32>
    %210 = arith.addf %204, %209 : vector<16x16xf32>
    %211 = vector.extract_strided_slice %13 {offsets = [1, 0, 0], sizes = [1, 16, 16], strides = [1, 1, 1]} : vector<2x16x16xf32> to vector<1x16x16xf32>
    %212 = vector.shape_cast %211 : vector<1x16x16xf32> to vector<16x16xf32>
    %c33 = arith.constant 33 : index
    %213 = memref.load %arg1[%c33] : memref<204xf32, #tpu.memory_space<smem>>
    %214 = vector.broadcast %213 : f32 to vector<16x16xf32>
    %215 = arith.mulf %212, %214 : vector<16x16xf32>
    %216 = arith.addf %210, %215 : vector<16x16xf32>
    %217 = vector.extract_strided_slice %14 {offsets = [0, 0, 0], sizes = [1, 16, 16], strides = [1, 1, 1]} : vector<2x16x16xf32> to vector<1x16x16xf32>
    %218 = vector.shape_cast %217 : vector<1x16x16xf32> to vector<16x16xf32>
    %c25 = arith.constant 25 : index
    %219 = memref.load %arg1[%c25] : memref<204xf32, #tpu.memory_space<smem>>
    %220 = vector.broadcast %219 : f32 to vector<16x16xf32>
    %221 = arith.mulf %218, %220 : vector<16x16xf32>
    %222 = arith.addf %216, %221 : vector<16x16xf32>
    %223 = vector.extract_strided_slice %14 {offsets = [1, 0, 0], sizes = [1, 16, 16], strides = [1, 1, 1]} : vector<2x16x16xf32> to vector<1x16x16xf32>
    %224 = vector.shape_cast %223 : vector<1x16x16xf32> to vector<16x16xf32>
    %c34 = arith.constant 34 : index
    %225 = memref.load %arg1[%c34] : memref<204xf32, #tpu.memory_space<smem>>
    %226 = vector.broadcast %225 : f32 to vector<16x16xf32>
    %227 = arith.mulf %224, %226 : vector<16x16xf32>
    %228 = arith.addf %222, %227 : vector<16x16xf32>
    %229 = vector.extract_strided_slice %15 {offsets = [0, 0, 0], sizes = [1, 16, 16], strides = [1, 1, 1]} : vector<2x16x16xf32> to vector<1x16x16xf32>
    %230 = vector.shape_cast %229 : vector<1x16x16xf32> to vector<16x16xf32>
    %c26 = arith.constant 26 : index
    %231 = memref.load %arg1[%c26] : memref<204xf32, #tpu.memory_space<smem>>
    %232 = vector.broadcast %231 : f32 to vector<16x16xf32>
    %233 = arith.mulf %230, %232 : vector<16x16xf32>
    %234 = arith.addf %228, %233 : vector<16x16xf32>
    %235 = vector.extract_strided_slice %15 {offsets = [1, 0, 0], sizes = [1, 16, 16], strides = [1, 1, 1]} : vector<2x16x16xf32> to vector<1x16x16xf32>
    %236 = vector.shape_cast %235 : vector<1x16x16xf32> to vector<16x16xf32>
    %c35 = arith.constant 35 : index
    %237 = memref.load %arg1[%c35] : memref<204xf32, #tpu.memory_space<smem>>
    %238 = vector.broadcast %237 : f32 to vector<16x16xf32>
    %239 = arith.mulf %236, %238 : vector<16x16xf32>
    %240 = arith.addf %234, %239 : vector<16x16xf32>
    %cst_45 = arith.constant 0.000000e+00 : f32
    %241 = vector.broadcast %cst_45 : f32 to vector<16x16xf32>
    %242 = arith.cmpf oge, %240, %241 : vector<16x16xf32>
    %cst_46 = arith.constant 3.000000e-01 : f32
    %243 = vector.broadcast %cst_46 : f32 to vector<16x16xf32>
    %244 = arith.mulf %243, %240 : vector<16x16xf32>
    %245 = arith.select %242, %240, %244 : vector<16x16xi1>, vector<16x16xf32>
    %c0_47 = arith.constant 0 : index
    %c4_48 = arith.constant 4 : index
    %c4_49 = arith.constant 4 : index
    %246 = vector.load %arg12[%c0_47, %c4_48, %c4_49] : memref<2x24x24xf32, #tpu.memory_space<vmem>>, vector<1x16x16xf32>
    %247 = vector.shape_cast %246 : vector<1x16x16xf32> to vector<16x16xf32>
    %248 = vector.shape_cast %130 : vector<16x16xf32> to vector<1x16x16xf32>
    tpu.vector_store %arg12[%c0_47, %c4_48, %c4_49], %248 {strides = array<i32>} : memref<2x24x24xf32, #tpu.memory_space<vmem>>, vector<1x16x16xf32>,
    %c1_50 = arith.constant 1 : index
    %c4_51 = arith.constant 4 : index
    %c4_52 = arith.constant 4 : index
    %249 = vector.load %arg12[%c1_50, %c4_51, %c4_52] : memref<2x24x24xf32, #tpu.memory_space<vmem>>, vector<1x16x16xf32>
    %250 = vector.shape_cast %249 : vector<1x16x16xf32> to vector<16x16xf32>
    %251 = vector.shape_cast %245 : vector<16x16xf32> to vector<1x16x16xf32>
    tpu.vector_store %arg12[%c1_50, %c4_51, %c4_52], %251 {strides = array<i32>} : memref<2x24x24xf32, #tpu.memory_space<vmem>>, vector<1x16x16xf32>,
    %c0_53 = arith.constant 0 : index
    %c4_54 = arith.constant 4 : index
    %c0_55 = arith.constant 0 : index
    %252 = vector.load %arg12[%c0_53, %c4_54, %c0_55] : memref<2x24x24xf32, #tpu.memory_space<vmem>>, vector<2x16x16xf32>
    %c0_56 = arith.constant 0 : index
    %c4_57 = arith.constant 4 : index
    %c1_58 = arith.constant 1 : index
    %253 = vector.load %arg12[%c0_56, %c4_57, %c1_58] : memref<2x24x24xf32, #tpu.memory_space<vmem>>, vector<2x16x16xf32>
    %c0_59 = arith.constant 0 : index
    %c4_60 = arith.constant 4 : index
    %c2_61 = arith.constant 2 : index
    %254 = vector.load %arg12[%c0_59, %c4_60, %c2_61] : memref<2x24x24xf32, #tpu.memory_space<vmem>>, vector<2x16x16xf32>
    %c0_62 = arith.constant 0 : index
    %c4_63 = arith.constant 4 : index
    %c3_64 = arith.constant 3 : index
    %255 = vector.load %arg12[%c0_62, %c4_63, %c3_64] : memref<2x24x24xf32, #tpu.memory_space<vmem>>, vector<2x16x16xf32>
    %c0_65 = arith.constant 0 : index
    %c4_66 = arith.constant 4 : index
    %c4_67 = arith.constant 4 : index
    %256 = vector.load %arg12[%c0_65, %c4_66, %c4_67] : memref<2x24x24xf32, #tpu.memory_space<vmem>>, vector<2x16x16xf32>
    %c0_68 = arith.constant 0 : index
    %c4_69 = arith.constant 4 : index
    %c5_70 = arith.constant 5 : index
    %257 = vector.load %arg12[%c0_68, %c4_69, %c5_70] : memref<2x24x24xf32, #tpu.memory_space<vmem>>, vector<2x16x16xf32>
    %c0_71 = arith.constant 0 : index
    %c4_72 = arith.constant 4 : index
    %c6_73 = arith.constant 6 : index
    %258 = vector.load %arg12[%c0_71, %c4_72, %c6_73] : memref<2x24x24xf32, #tpu.memory_space<vmem>>, vector<2x16x16xf32>
    %c0_74 = arith.constant 0 : index
    %c4_75 = arith.constant 4 : index
    %c7_76 = arith.constant 7 : index
    %259 = vector.load %arg12[%c0_74, %c4_75, %c7_76] : memref<2x24x24xf32, #tpu.memory_space<vmem>>, vector<2x16x16xf32>
    %c0_77 = arith.constant 0 : index
    %c4_78 = arith.constant 4 : index
    %c8_79 = arith.constant 8 : index
    %260 = vector.load %arg12[%c0_77, %c4_78, %c8_79] : memref<2x24x24xf32, #tpu.memory_space<vmem>>, vector<2x16x16xf32>
    %c2_80 = arith.constant 2 : index
    %261 = memref.load %arg2[%c2_80] : memref<14xf32, #tpu.memory_space<smem>>
    %262 = vector.broadcast %261 : f32 to vector<16x16xf32>
    %263 = vector.extract_strided_slice %252 {offsets = [0, 0, 0], sizes = [1, 16, 16], strides = [1, 1, 1]} : vector<2x16x16xf32> to vector<1x16x16xf32>
    %264 = vector.shape_cast %263 : vector<1x16x16xf32> to vector<16x16xf32>
    %c36 = arith.constant 36 : index
    %265 = memref.load %arg1[%c36] : memref<204xf32, #tpu.memory_space<smem>>
    %266 = vector.broadcast %265 : f32 to vector<16x16xf32>
    %267 = arith.mulf %264, %266 : vector<16x16xf32>
    %268 = arith.addf %262, %267 : vector<16x16xf32>
    %269 = vector.extract_strided_slice %252 {offsets = [1, 0, 0], sizes = [1, 16, 16], strides = [1, 1, 1]} : vector<2x16x16xf32> to vector<1x16x16xf32>
    %270 = vector.shape_cast %269 : vector<1x16x16xf32> to vector<16x16xf32>
    %c45 = arith.constant 45 : index
    %271 = memref.load %arg1[%c45] : memref<204xf32, #tpu.memory_space<smem>>
    %272 = vector.broadcast %271 : f32 to vector<16x16xf32>
    %273 = arith.mulf %270, %272 : vector<16x16xf32>
    %274 = arith.addf %268, %273 : vector<16x16xf32>
    %275 = vector.extract_strided_slice %253 {offsets = [0, 0, 0], sizes = [1, 16, 16], strides = [1, 1, 1]} : vector<2x16x16xf32> to vector<1x16x16xf32>
    %276 = vector.shape_cast %275 : vector<1x16x16xf32> to vector<16x16xf32>
    %c37 = arith.constant 37 : index
    %277 = memref.load %arg1[%c37] : memref<204xf32, #tpu.memory_space<smem>>
    %278 = vector.broadcast %277 : f32 to vector<16x16xf32>
    %279 = arith.mulf %276, %278 : vector<16x16xf32>
    %280 = arith.addf %274, %279 : vector<16x16xf32>
    %281 = vector.extract_strided_slice %253 {offsets = [1, 0, 0], sizes = [1, 16, 16], strides = [1, 1, 1]} : vector<2x16x16xf32> to vector<1x16x16xf32>
    %282 = vector.shape_cast %281 : vector<1x16x16xf32> to vector<16x16xf32>
    %c46 = arith.constant 46 : index
    %283 = memref.load %arg1[%c46] : memref<204xf32, #tpu.memory_space<smem>>
    %284 = vector.broadcast %283 : f32 to vector<16x16xf32>
    %285 = arith.mulf %282, %284 : vector<16x16xf32>
    %286 = arith.addf %280, %285 : vector<16x16xf32>
    %287 = vector.extract_strided_slice %254 {offsets = [0, 0, 0], sizes = [1, 16, 16], strides = [1, 1, 1]} : vector<2x16x16xf32> to vector<1x16x16xf32>
    %288 = vector.shape_cast %287 : vector<1x16x16xf32> to vector<16x16xf32>
    %c38 = arith.constant 38 : index
    %289 = memref.load %arg1[%c38] : memref<204xf32, #tpu.memory_space<smem>>
    %290 = vector.broadcast %289 : f32 to vector<16x16xf32>
    %291 = arith.mulf %288, %290 : vector<16x16xf32>
    %292 = arith.addf %286, %291 : vector<16x16xf32>
    %293 = vector.extract_strided_slice %254 {offsets = [1, 0, 0], sizes = [1, 16, 16], strides = [1, 1, 1]} : vector<2x16x16xf32> to vector<1x16x16xf32>
    %294 = vector.shape_cast %293 : vector<1x16x16xf32> to vector<16x16xf32>
    %c47 = arith.constant 47 : index
    %295 = memref.load %arg1[%c47] : memref<204xf32, #tpu.memory_space<smem>>
    %296 = vector.broadcast %295 : f32 to vector<16x16xf32>
    %297 = arith.mulf %294, %296 : vector<16x16xf32>
    %298 = arith.addf %292, %297 : vector<16x16xf32>
    %299 = vector.extract_strided_slice %255 {offsets = [0, 0, 0], sizes = [1, 16, 16], strides = [1, 1, 1]} : vector<2x16x16xf32> to vector<1x16x16xf32>
    %300 = vector.shape_cast %299 : vector<1x16x16xf32> to vector<16x16xf32>
    %c39 = arith.constant 39 : index
    %301 = memref.load %arg1[%c39] : memref<204xf32, #tpu.memory_space<smem>>
    %302 = vector.broadcast %301 : f32 to vector<16x16xf32>
    %303 = arith.mulf %300, %302 : vector<16x16xf32>
    %304 = arith.addf %298, %303 : vector<16x16xf32>
    %305 = vector.extract_strided_slice %255 {offsets = [1, 0, 0], sizes = [1, 16, 16], strides = [1, 1, 1]} : vector<2x16x16xf32> to vector<1x16x16xf32>
    %306 = vector.shape_cast %305 : vector<1x16x16xf32> to vector<16x16xf32>
    %c48 = arith.constant 48 : index
    %307 = memref.load %arg1[%c48] : memref<204xf32, #tpu.memory_space<smem>>
    %308 = vector.broadcast %307 : f32 to vector<16x16xf32>
    %309 = arith.mulf %306, %308 : vector<16x16xf32>
    %310 = arith.addf %304, %309 : vector<16x16xf32>
    %311 = vector.extract_strided_slice %256 {offsets = [0, 0, 0], sizes = [1, 16, 16], strides = [1, 1, 1]} : vector<2x16x16xf32> to vector<1x16x16xf32>
    %312 = vector.shape_cast %311 : vector<1x16x16xf32> to vector<16x16xf32>
    %c40 = arith.constant 40 : index
    %313 = memref.load %arg1[%c40] : memref<204xf32, #tpu.memory_space<smem>>
    %314 = vector.broadcast %313 : f32 to vector<16x16xf32>
    %315 = arith.mulf %312, %314 : vector<16x16xf32>
    %316 = arith.addf %310, %315 : vector<16x16xf32>
    %317 = vector.extract_strided_slice %256 {offsets = [1, 0, 0], sizes = [1, 16, 16], strides = [1, 1, 1]} : vector<2x16x16xf32> to vector<1x16x16xf32>
    %318 = vector.shape_cast %317 : vector<1x16x16xf32> to vector<16x16xf32>
    %c49 = arith.constant 49 : index
    %319 = memref.load %arg1[%c49] : memref<204xf32, #tpu.memory_space<smem>>
    %320 = vector.broadcast %319 : f32 to vector<16x16xf32>
    %321 = arith.mulf %318, %320 : vector<16x16xf32>
    %322 = arith.addf %316, %321 : vector<16x16xf32>
    %323 = vector.extract_strided_slice %257 {offsets = [0, 0, 0], sizes = [1, 16, 16], strides = [1, 1, 1]} : vector<2x16x16xf32> to vector<1x16x16xf32>
    %324 = vector.shape_cast %323 : vector<1x16x16xf32> to vector<16x16xf32>
    %c41 = arith.constant 41 : index
    %325 = memref.load %arg1[%c41] : memref<204xf32, #tpu.memory_space<smem>>
    %326 = vector.broadcast %325 : f32 to vector<16x16xf32>
    %327 = arith.mulf %324, %326 : vector<16x16xf32>
    %328 = arith.addf %322, %327 : vector<16x16xf32>
    %329 = vector.extract_strided_slice %257 {offsets = [1, 0, 0], sizes = [1, 16, 16], strides = [1, 1, 1]} : vector<2x16x16xf32> to vector<1x16x16xf32>
    %330 = vector.shape_cast %329 : vector<1x16x16xf32> to vector<16x16xf32>
    %c50 = arith.constant 50 : index
    %331 = memref.load %arg1[%c50] : memref<204xf32, #tpu.memory_space<smem>>
    %332 = vector.broadcast %331 : f32 to vector<16x16xf32>
    %333 = arith.mulf %330, %332 : vector<16x16xf32>
    %334 = arith.addf %328, %333 : vector<16x16xf32>
    %335 = vector.extract_strided_slice %258 {offsets = [0, 0, 0], sizes = [1, 16, 16], strides = [1, 1, 1]} : vector<2x16x16xf32> to vector<1x16x16xf32>
    %336 = vector.shape_cast %335 : vector<1x16x16xf32> to vector<16x16xf32>
    %c42 = arith.constant 42 : index
    %337 = memref.load %arg1[%c42] : memref<204xf32, #tpu.memory_space<smem>>
    %338 = vector.broadcast %337 : f32 to vector<16x16xf32>
    %339 = arith.mulf %336, %338 : vector<16x16xf32>
    %340 = arith.addf %334, %339 : vector<16x16xf32>
    %341 = vector.extract_strided_slice %258 {offsets = [1, 0, 0], sizes = [1, 16, 16], strides = [1, 1, 1]} : vector<2x16x16xf32> to vector<1x16x16xf32>
    %342 = vector.shape_cast %341 : vector<1x16x16xf32> to vector<16x16xf32>
    %c51 = arith.constant 51 : index
    %343 = memref.load %arg1[%c51] : memref<204xf32, #tpu.memory_space<smem>>
    %344 = vector.broadcast %343 : f32 to vector<16x16xf32>
    %345 = arith.mulf %342, %344 : vector<16x16xf32>
    %346 = arith.addf %340, %345 : vector<16x16xf32>
    %347 = vector.extract_strided_slice %259 {offsets = [0, 0, 0], sizes = [1, 16, 16], strides = [1, 1, 1]} : vector<2x16x16xf32> to vector<1x16x16xf32>
    %348 = vector.shape_cast %347 : vector<1x16x16xf32> to vector<16x16xf32>
    %c43 = arith.constant 43 : index
    %349 = memref.load %arg1[%c43] : memref<204xf32, #tpu.memory_space<smem>>
    %350 = vector.broadcast %349 : f32 to vector<16x16xf32>
    %351 = arith.mulf %348, %350 : vector<16x16xf32>
    %352 = arith.addf %346, %351 : vector<16x16xf32>
    %353 = vector.extract_strided_slice %259 {offsets = [1, 0, 0], sizes = [1, 16, 16], strides = [1, 1, 1]} : vector<2x16x16xf32> to vector<1x16x16xf32>
    %354 = vector.shape_cast %353 : vector<1x16x16xf32> to vector<16x16xf32>
    %c52 = arith.constant 52 : index
    %355 = memref.load %arg1[%c52] : memref<204xf32, #tpu.memory_space<smem>>
    %356 = vector.broadcast %355 : f32 to vector<16x16xf32>
    %357 = arith.mulf %354, %356 : vector<16x16xf32>
    %358 = arith.addf %352, %357 : vector<16x16xf32>
    %359 = vector.extract_strided_slice %260 {offsets = [0, 0, 0], sizes = [1, 16, 16], strides = [1, 1, 1]} : vector<2x16x16xf32> to vector<1x16x16xf32>
    %360 = vector.shape_cast %359 : vector<1x16x16xf32> to vector<16x16xf32>
    %c44 = arith.constant 44 : index
    %361 = memref.load %arg1[%c44] : memref<204xf32, #tpu.memory_space<smem>>
    %362 = vector.broadcast %361 : f32 to vector<16x16xf32>
    %363 = arith.mulf %360, %362 : vector<16x16xf32>
    %364 = arith.addf %358, %363 : vector<16x16xf32>
    %365 = vector.extract_strided_slice %260 {offsets = [1, 0, 0], sizes = [1, 16, 16], strides = [1, 1, 1]} : vector<2x16x16xf32> to vector<1x16x16xf32>
    %366 = vector.shape_cast %365 : vector<1x16x16xf32> to vector<16x16xf32>
    %c53 = arith.constant 53 : index
    %367 = memref.load %arg1[%c53] : memref<204xf32, #tpu.memory_space<smem>>
    %368 = vector.broadcast %367 : f32 to vector<16x16xf32>
    %369 = arith.mulf %366, %368 : vector<16x16xf32>
    %370 = arith.addf %364, %369 : vector<16x16xf32>
    %cst_81 = arith.constant 0.000000e+00 : f32
    %371 = vector.broadcast %cst_81 : f32 to vector<16x16xf32>
    %372 = arith.cmpf oge, %370, %371 : vector<16x16xf32>
    %cst_82 = arith.constant 3.000000e-01 : f32
    %373 = vector.broadcast %cst_82 : f32 to vector<16x16xf32>
    %374 = arith.mulf %373, %370 : vector<16x16xf32>
    %375 = arith.select %372, %370, %374 : vector<16x16xi1>, vector<16x16xf32>
    %c3_83 = arith.constant 3 : index
    %376 = memref.load %arg2[%c3_83] : memref<14xf32, #tpu.memory_space<smem>>
    %377 = vector.broadcast %376 : f32 to vector<16x16xf32>
    %378 = vector.extract_strided_slice %252 {offsets = [0, 0, 0], sizes = [1, 16, 16], strides = [1, 1, 1]} : vector<2x16x16xf32> to vector<1x16x16xf32>
    %379 = vector.shape_cast %378 : vector<1x16x16xf32> to vector<16x16xf32>
    %c54 = arith.constant 54 : index
    %380 = memref.load %arg1[%c54] : memref<204xf32, #tpu.memory_space<smem>>
    %381 = vector.broadcast %380 : f32 to vector<16x16xf32>
    %382 = arith.mulf %379, %381 : vector<16x16xf32>
    %383 = arith.addf %377, %382 : vector<16x16xf32>
    %384 = vector.extract_strided_slice %252 {offsets = [1, 0, 0], sizes = [1, 16, 16], strides = [1, 1, 1]} : vector<2x16x16xf32> to vector<1x16x16xf32>
    %385 = vector.shape_cast %384 : vector<1x16x16xf32> to vector<16x16xf32>
    %c63 = arith.constant 63 : index
    %386 = memref.load %arg1[%c63] : memref<204xf32, #tpu.memory_space<smem>>
    %387 = vector.broadcast %386 : f32 to vector<16x16xf32>
    %388 = arith.mulf %385, %387 : vector<16x16xf32>
    %389 = arith.addf %383, %388 : vector<16x16xf32>
    %390 = vector.extract_strided_slice %253 {offsets = [0, 0, 0], sizes = [1, 16, 16], strides = [1, 1, 1]} : vector<2x16x16xf32> to vector<1x16x16xf32>
    %391 = vector.shape_cast %390 : vector<1x16x16xf32> to vector<16x16xf32>
    %c55 = arith.constant 55 : index
    %392 = memref.load %arg1[%c55] : memref<204xf32, #tpu.memory_space<smem>>
    %393 = vector.broadcast %392 : f32 to vector<16x16xf32>
    %394 = arith.mulf %391, %393 : vector<16x16xf32>
    %395 = arith.addf %389, %394 : vector<16x16xf32>
    %396 = vector.extract_strided_slice %253 {offsets = [1, 0, 0], sizes = [1, 16, 16], strides = [1, 1, 1]} : vector<2x16x16xf32> to vector<1x16x16xf32>
    %397 = vector.shape_cast %396 : vector<1x16x16xf32> to vector<16x16xf32>
    %c64 = arith.constant 64 : index
    %398 = memref.load %arg1[%c64] : memref<204xf32, #tpu.memory_space<smem>>
    %399 = vector.broadcast %398 : f32 to vector<16x16xf32>
    %400 = arith.mulf %397, %399 : vector<16x16xf32>
    %401 = arith.addf %395, %400 : vector<16x16xf32>
    %402 = vector.extract_strided_slice %254 {offsets = [0, 0, 0], sizes = [1, 16, 16], strides = [1, 1, 1]} : vector<2x16x16xf32> to vector<1x16x16xf32>
    %403 = vector.shape_cast %402 : vector<1x16x16xf32> to vector<16x16xf32>
    %c56 = arith.constant 56 : index
    %404 = memref.load %arg1[%c56] : memref<204xf32, #tpu.memory_space<smem>>
    %405 = vector.broadcast %404 : f32 to vector<16x16xf32>
    %406 = arith.mulf %403, %405 : vector<16x16xf32>
    %407 = arith.addf %401, %406 : vector<16x16xf32>
    %408 = vector.extract_strided_slice %254 {offsets = [1, 0, 0], sizes = [1, 16, 16], strides = [1, 1, 1]} : vector<2x16x16xf32> to vector<1x16x16xf32>
    %409 = vector.shape_cast %408 : vector<1x16x16xf32> to vector<16x16xf32>
    %c65 = arith.constant 65 : index
    %410 = memref.load %arg1[%c65] : memref<204xf32, #tpu.memory_space<smem>>
    %411 = vector.broadcast %410 : f32 to vector<16x16xf32>
    %412 = arith.mulf %409, %411 : vector<16x16xf32>
    %413 = arith.addf %407, %412 : vector<16x16xf32>
    %414 = vector.extract_strided_slice %255 {offsets = [0, 0, 0], sizes = [1, 16, 16], strides = [1, 1, 1]} : vector<2x16x16xf32> to vector<1x16x16xf32>
    %415 = vector.shape_cast %414 : vector<1x16x16xf32> to vector<16x16xf32>
    %c57 = arith.constant 57 : index
    %416 = memref.load %arg1[%c57] : memref<204xf32, #tpu.memory_space<smem>>
    %417 = vector.broadcast %416 : f32 to vector<16x16xf32>
    %418 = arith.mulf %415, %417 : vector<16x16xf32>
    %419 = arith.addf %413, %418 : vector<16x16xf32>
    %420 = vector.extract_strided_slice %255 {offsets = [1, 0, 0], sizes = [1, 16, 16], strides = [1, 1, 1]} : vector<2x16x16xf32> to vector<1x16x16xf32>
    %421 = vector.shape_cast %420 : vector<1x16x16xf32> to vector<16x16xf32>
    %c66 = arith.constant 66 : index
    %422 = memref.load %arg1[%c66] : memref<204xf32, #tpu.memory_space<smem>>
    %423 = vector.broadcast %422 : f32 to vector<16x16xf32>
    %424 = arith.mulf %421, %423 : vector<16x16xf32>
    %425 = arith.addf %419, %424 : vector<16x16xf32>
    %426 = vector.extract_strided_slice %256 {offsets = [0, 0, 0], sizes = [1, 16, 16], strides = [1, 1, 1]} : vector<2x16x16xf32> to vector<1x16x16xf32>
    %427 = vector.shape_cast %426 : vector<1x16x16xf32> to vector<16x16xf32>
    %c58 = arith.constant 58 : index
    %428 = memref.load %arg1[%c58] : memref<204xf32, #tpu.memory_space<smem>>
    %429 = vector.broadcast %428 : f32 to vector<16x16xf32>
    %430 = arith.mulf %427, %429 : vector<16x16xf32>
    %431 = arith.addf %425, %430 : vector<16x16xf32>
    %432 = vector.extract_strided_slice %256 {offsets = [1, 0, 0], sizes = [1, 16, 16], strides = [1, 1, 1]} : vector<2x16x16xf32> to vector<1x16x16xf32>
    %433 = vector.shape_cast %432 : vector<1x16x16xf32> to vector<16x16xf32>
    %c67 = arith.constant 67 : index
    %434 = memref.load %arg1[%c67] : memref<204xf32, #tpu.memory_space<smem>>
    %435 = vector.broadcast %434 : f32 to vector<16x16xf32>
    %436 = arith.mulf %433, %435 : vector<16x16xf32>
    %437 = arith.addf %431, %436 : vector<16x16xf32>
    %438 = vector.extract_strided_slice %257 {offsets = [0, 0, 0], sizes = [1, 16, 16], strides = [1, 1, 1]} : vector<2x16x16xf32> to vector<1x16x16xf32>
    %439 = vector.shape_cast %438 : vector<1x16x16xf32> to vector<16x16xf32>
    %c59 = arith.constant 59 : index
    %440 = memref.load %arg1[%c59] : memref<204xf32, #tpu.memory_space<smem>>
    %441 = vector.broadcast %440 : f32 to vector<16x16xf32>
    %442 = arith.mulf %439, %441 : vector<16x16xf32>
    %443 = arith.addf %437, %442 : vector<16x16xf32>
    %444 = vector.extract_strided_slice %257 {offsets = [1, 0, 0], sizes = [1, 16, 16], strides = [1, 1, 1]} : vector<2x16x16xf32> to vector<1x16x16xf32>
    %445 = vector.shape_cast %444 : vector<1x16x16xf32> to vector<16x16xf32>
    %c68 = arith.constant 68 : index
    %446 = memref.load %arg1[%c68] : memref<204xf32, #tpu.memory_space<smem>>
    %447 = vector.broadcast %446 : f32 to vector<16x16xf32>
    %448 = arith.mulf %445, %447 : vector<16x16xf32>
    %449 = arith.addf %443, %448 : vector<16x16xf32>
    %450 = vector.extract_strided_slice %258 {offsets = [0, 0, 0], sizes = [1, 16, 16], strides = [1, 1, 1]} : vector<2x16x16xf32> to vector<1x16x16xf32>
    %451 = vector.shape_cast %450 : vector<1x16x16xf32> to vector<16x16xf32>
    %c60 = arith.constant 60 : index
    %452 = memref.load %arg1[%c60] : memref<204xf32, #tpu.memory_space<smem>>
    %453 = vector.broadcast %452 : f32 to vector<16x16xf32>
    %454 = arith.mulf %451, %453 : vector<16x16xf32>
    %455 = arith.addf %449, %454 : vector<16x16xf32>
    %456 = vector.extract_strided_slice %258 {offsets = [1, 0, 0], sizes = [1, 16, 16], strides = [1, 1, 1]} : vector<2x16x16xf32> to vector<1x16x16xf32>
    %457 = vector.shape_cast %456 : vector<1x16x16xf32> to vector<16x16xf32>
    %c69 = arith.constant 69 : index
    %458 = memref.load %arg1[%c69] : memref<204xf32, #tpu.memory_space<smem>>
    %459 = vector.broadcast %458 : f32 to vector<16x16xf32>
    %460 = arith.mulf %457, %459 : vector<16x16xf32>
    %461 = arith.addf %455, %460 : vector<16x16xf32>
    %462 = vector.extract_strided_slice %259 {offsets = [0, 0, 0], sizes = [1, 16, 16], strides = [1, 1, 1]} : vector<2x16x16xf32> to vector<1x16x16xf32>
    %463 = vector.shape_cast %462 : vector<1x16x16xf32> to vector<16x16xf32>
    %c61 = arith.constant 61 : index
    %464 = memref.load %arg1[%c61] : memref<204xf32, #tpu.memory_space<smem>>
    %465 = vector.broadcast %464 : f32 to vector<16x16xf32>
    %466 = arith.mulf %463, %465 : vector<16x16xf32>
    %467 = arith.addf %461, %466 : vector<16x16xf32>
    %468 = vector.extract_strided_slice %259 {offsets = [1, 0, 0], sizes = [1, 16, 16], strides = [1, 1, 1]} : vector<2x16x16xf32> to vector<1x16x16xf32>
    %469 = vector.shape_cast %468 : vector<1x16x16xf32> to vector<16x16xf32>
    %c70 = arith.constant 70 : index
    %470 = memref.load %arg1[%c70] : memref<204xf32, #tpu.memory_space<smem>>
    %471 = vector.broadcast %470 : f32 to vector<16x16xf32>
    %472 = arith.mulf %469, %471 : vector<16x16xf32>
    %473 = arith.addf %467, %472 : vector<16x16xf32>
    %474 = vector.extract_strided_slice %260 {offsets = [0, 0, 0], sizes = [1, 16, 16], strides = [1, 1, 1]} : vector<2x16x16xf32> to vector<1x16x16xf32>
    %475 = vector.shape_cast %474 : vector<1x16x16xf32> to vector<16x16xf32>
    %c62 = arith.constant 62 : index
    %476 = memref.load %arg1[%c62] : memref<204xf32, #tpu.memory_space<smem>>
    %477 = vector.broadcast %476 : f32 to vector<16x16xf32>
    %478 = arith.mulf %475, %477 : vector<16x16xf32>
    %479 = arith.addf %473, %478 : vector<16x16xf32>
    %480 = vector.extract_strided_slice %260 {offsets = [1, 0, 0], sizes = [1, 16, 16], strides = [1, 1, 1]} : vector<2x16x16xf32> to vector<1x16x16xf32>
    %481 = vector.shape_cast %480 : vector<1x16x16xf32> to vector<16x16xf32>
    %c71 = arith.constant 71 : index
    %482 = memref.load %arg1[%c71] : memref<204xf32, #tpu.memory_space<smem>>
    %483 = vector.broadcast %482 : f32 to vector<16x16xf32>
    %484 = arith.mulf %481, %483 : vector<16x16xf32>
    %485 = arith.addf %479, %484 : vector<16x16xf32>
    %cst_84 = arith.constant 0.000000e+00 : f32
    %486 = vector.broadcast %cst_84 : f32 to vector<16x16xf32>
    %487 = arith.cmpf oge, %485, %486 : vector<16x16xf32>
    %cst_85 = arith.constant 3.000000e-01 : f32
    %488 = vector.broadcast %cst_85 : f32 to vector<16x16xf32>
    %489 = arith.mulf %488, %485 : vector<16x16xf32>
    %490 = arith.select %487, %485, %489 : vector<16x16xi1>, vector<16x16xf32>
    %c0_86 = arith.constant 0 : index
    %c4_87 = arith.constant 4 : index
    %c4_88 = arith.constant 4 : index
    %491 = vector.load %arg12[%c0_86, %c4_87, %c4_88] : memref<2x24x24xf32, #tpu.memory_space<vmem>>, vector<1x16x16xf32>
    %492 = vector.shape_cast %491 : vector<1x16x16xf32> to vector<16x16xf32>
    %493 = vector.shape_cast %375 : vector<16x16xf32> to vector<1x16x16xf32>
    tpu.vector_store %arg12[%c0_86, %c4_87, %c4_88], %493 {strides = array<i32>} : memref<2x24x24xf32, #tpu.memory_space<vmem>>, vector<1x16x16xf32>,
    %c1_89 = arith.constant 1 : index
    %c4_90 = arith.constant 4 : index
    %c4_91 = arith.constant 4 : index
    %494 = vector.load %arg12[%c1_89, %c4_90, %c4_91] : memref<2x24x24xf32, #tpu.memory_space<vmem>>, vector<1x16x16xf32>
    %495 = vector.shape_cast %494 : vector<1x16x16xf32> to vector<16x16xf32>
    %496 = vector.shape_cast %490 : vector<16x16xf32> to vector<1x16x16xf32>
    tpu.vector_store %arg12[%c1_89, %c4_90, %c4_91], %496 {strides = array<i32>} : memref<2x24x24xf32, #tpu.memory_space<vmem>>, vector<1x16x16xf32>,
    %c0_92 = arith.constant 0 : index
    %c0_93 = arith.constant 0 : index
    %c4_94 = arith.constant 4 : index
    %497 = vector.load %arg12[%c0_92, %c0_93, %c4_94] : memref<2x24x24xf32, #tpu.memory_space<vmem>>, vector<2x16x16xf32>
    %c0_95 = arith.constant 0 : index
    %c1_96 = arith.constant 1 : index
    %c4_97 = arith.constant 4 : index
    %498 = vector.load %arg12[%c0_95, %c1_96, %c4_97] : memref<2x24x24xf32, #tpu.memory_space<vmem>>, vector<2x16x16xf32>
    %c0_98 = arith.constant 0 : index
    %c2_99 = arith.constant 2 : index
    %c4_100 = arith.constant 4 : index
    %499 = vector.load %arg12[%c0_98, %c2_99, %c4_100] : memref<2x24x24xf32, #tpu.memory_space<vmem>>, vector<2x16x16xf32>
    %c0_101 = arith.constant 0 : index
    %c3_102 = arith.constant 3 : index
    %c4_103 = arith.constant 4 : index
    %500 = vector.load %arg12[%c0_101, %c3_102, %c4_103] : memref<2x24x24xf32, #tpu.memory_space<vmem>>, vector<2x16x16xf32>
    %c0_104 = arith.constant 0 : index
    %c4_105 = arith.constant 4 : index
    %c4_106 = arith.constant 4 : index
    %501 = vector.load %arg12[%c0_104, %c4_105, %c4_106] : memref<2x24x24xf32, #tpu.memory_space<vmem>>, vector<2x16x16xf32>
    %c0_107 = arith.constant 0 : index
    %c5_108 = arith.constant 5 : index
    %c4_109 = arith.constant 4 : index
    %502 = vector.load %arg12[%c0_107, %c5_108, %c4_109] : memref<2x24x24xf32, #tpu.memory_space<vmem>>, vector<2x16x16xf32>
    %c0_110 = arith.constant 0 : index
    %c6_111 = arith.constant 6 : index
    %c4_112 = arith.constant 4 : index
    %503 = vector.load %arg12[%c0_110, %c6_111, %c4_112] : memref<2x24x24xf32, #tpu.memory_space<vmem>>, vector<2x16x16xf32>
    %c0_113 = arith.constant 0 : index
    %c7_114 = arith.constant 7 : index
    %c4_115 = arith.constant 4 : index
    %504 = vector.load %arg12[%c0_113, %c7_114, %c4_115] : memref<2x24x24xf32, #tpu.memory_space<vmem>>, vector<2x16x16xf32>
    %c0_116 = arith.constant 0 : index
    %c8_117 = arith.constant 8 : index
    %c4_118 = arith.constant 4 : index
    %505 = vector.load %arg12[%c0_116, %c8_117, %c4_118] : memref<2x24x24xf32, #tpu.memory_space<vmem>>, vector<2x16x16xf32>
    %c4_119 = arith.constant 4 : index
    %506 = memref.load %arg2[%c4_119] : memref<14xf32, #tpu.memory_space<smem>>
    %507 = vector.broadcast %506 : f32 to vector<16x16xf32>
    %508 = vector.extract_strided_slice %497 {offsets = [0, 0, 0], sizes = [1, 16, 16], strides = [1, 1, 1]} : vector<2x16x16xf32> to vector<1x16x16xf32>
    %509 = vector.shape_cast %508 : vector<1x16x16xf32> to vector<16x16xf32>
    %c72 = arith.constant 72 : index
    %510 = memref.load %arg1[%c72] : memref<204xf32, #tpu.memory_space<smem>>
    %511 = vector.broadcast %510 : f32 to vector<16x16xf32>
    %512 = arith.mulf %509, %511 : vector<16x16xf32>
    %513 = arith.addf %507, %512 : vector<16x16xf32>
    %514 = vector.extract_strided_slice %497 {offsets = [1, 0, 0], sizes = [1, 16, 16], strides = [1, 1, 1]} : vector<2x16x16xf32> to vector<1x16x16xf32>
    %515 = vector.shape_cast %514 : vector<1x16x16xf32> to vector<16x16xf32>
    %c81 = arith.constant 81 : index
    %516 = memref.load %arg1[%c81] : memref<204xf32, #tpu.memory_space<smem>>
    %517 = vector.broadcast %516 : f32 to vector<16x16xf32>
    %518 = arith.mulf %515, %517 : vector<16x16xf32>
    %519 = arith.addf %513, %518 : vector<16x16xf32>
    %520 = vector.extract_strided_slice %498 {offsets = [0, 0, 0], sizes = [1, 16, 16], strides = [1, 1, 1]} : vector<2x16x16xf32> to vector<1x16x16xf32>
    %521 = vector.shape_cast %520 : vector<1x16x16xf32> to vector<16x16xf32>
    %c73 = arith.constant 73 : index
    %522 = memref.load %arg1[%c73] : memref<204xf32, #tpu.memory_space<smem>>
    %523 = vector.broadcast %522 : f32 to vector<16x16xf32>
    %524 = arith.mulf %521, %523 : vector<16x16xf32>
    %525 = arith.addf %519, %524 : vector<16x16xf32>
    %526 = vector.extract_strided_slice %498 {offsets = [1, 0, 0], sizes = [1, 16, 16], strides = [1, 1, 1]} : vector<2x16x16xf32> to vector<1x16x16xf32>
    %527 = vector.shape_cast %526 : vector<1x16x16xf32> to vector<16x16xf32>
    %c82 = arith.constant 82 : index
    %528 = memref.load %arg1[%c82] : memref<204xf32, #tpu.memory_space<smem>>
    %529 = vector.broadcast %528 : f32 to vector<16x16xf32>
    %530 = arith.mulf %527, %529 : vector<16x16xf32>
    %531 = arith.addf %525, %530 : vector<16x16xf32>
    %532 = vector.extract_strided_slice %499 {offsets = [0, 0, 0], sizes = [1, 16, 16], strides = [1, 1, 1]} : vector<2x16x16xf32> to vector<1x16x16xf32>
    %533 = vector.shape_cast %532 : vector<1x16x16xf32> to vector<16x16xf32>
    %c74 = arith.constant 74 : index
    %534 = memref.load %arg1[%c74] : memref<204xf32, #tpu.memory_space<smem>>
    %535 = vector.broadcast %534 : f32 to vector<16x16xf32>
    %536 = arith.mulf %533, %535 : vector<16x16xf32>
    %537 = arith.addf %531, %536 : vector<16x16xf32>
    %538 = vector.extract_strided_slice %499 {offsets = [1, 0, 0], sizes = [1, 16, 16], strides = [1, 1, 1]} : vector<2x16x16xf32> to vector<1x16x16xf32>
    %539 = vector.shape_cast %538 : vector<1x16x16xf32> to vector<16x16xf32>
    %c83 = arith.constant 83 : index
    %540 = memref.load %arg1[%c83] : memref<204xf32, #tpu.memory_space<smem>>
    %541 = vector.broadcast %540 : f32 to vector<16x16xf32>
    %542 = arith.mulf %539, %541 : vector<16x16xf32>
    %543 = arith.addf %537, %542 : vector<16x16xf32>
    %544 = vector.extract_strided_slice %500 {offsets = [0, 0, 0], sizes = [1, 16, 16], strides = [1, 1, 1]} : vector<2x16x16xf32> to vector<1x16x16xf32>
    %545 = vector.shape_cast %544 : vector<1x16x16xf32> to vector<16x16xf32>
    %c75 = arith.constant 75 : index
    %546 = memref.load %arg1[%c75] : memref<204xf32, #tpu.memory_space<smem>>
    %547 = vector.broadcast %546 : f32 to vector<16x16xf32>
    %548 = arith.mulf %545, %547 : vector<16x16xf32>
    %549 = arith.addf %543, %548 : vector<16x16xf32>
    %550 = vector.extract_strided_slice %500 {offsets = [1, 0, 0], sizes = [1, 16, 16], strides = [1, 1, 1]} : vector<2x16x16xf32> to vector<1x16x16xf32>
    %551 = vector.shape_cast %550 : vector<1x16x16xf32> to vector<16x16xf32>
    %c84 = arith.constant 84 : index
    %552 = memref.load %arg1[%c84] : memref<204xf32, #tpu.memory_space<smem>>
    %553 = vector.broadcast %552 : f32 to vector<16x16xf32>
    %554 = arith.mulf %551, %553 : vector<16x16xf32>
    %555 = arith.addf %549, %554 : vector<16x16xf32>
    %556 = vector.extract_strided_slice %501 {offsets = [0, 0, 0], sizes = [1, 16, 16], strides = [1, 1, 1]} : vector<2x16x16xf32> to vector<1x16x16xf32>
    %557 = vector.shape_cast %556 : vector<1x16x16xf32> to vector<16x16xf32>
    %c76 = arith.constant 76 : index
    %558 = memref.load %arg1[%c76] : memref<204xf32, #tpu.memory_space<smem>>
    %559 = vector.broadcast %558 : f32 to vector<16x16xf32>
    %560 = arith.mulf %557, %559 : vector<16x16xf32>
    %561 = arith.addf %555, %560 : vector<16x16xf32>
    %562 = vector.extract_strided_slice %501 {offsets = [1, 0, 0], sizes = [1, 16, 16], strides = [1, 1, 1]} : vector<2x16x16xf32> to vector<1x16x16xf32>
    %563 = vector.shape_cast %562 : vector<1x16x16xf32> to vector<16x16xf32>
    %c85 = arith.constant 85 : index
    %564 = memref.load %arg1[%c85] : memref<204xf32, #tpu.memory_space<smem>>
    %565 = vector.broadcast %564 : f32 to vector<16x16xf32>
    %566 = arith.mulf %563, %565 : vector<16x16xf32>
    %567 = arith.addf %561, %566 : vector<16x16xf32>
    %568 = vector.extract_strided_slice %502 {offsets = [0, 0, 0], sizes = [1, 16, 16], strides = [1, 1, 1]} : vector<2x16x16xf32> to vector<1x16x16xf32>
    %569 = vector.shape_cast %568 : vector<1x16x16xf32> to vector<16x16xf32>
    %c77 = arith.constant 77 : index
    %570 = memref.load %arg1[%c77] : memref<204xf32, #tpu.memory_space<smem>>
    %571 = vector.broadcast %570 : f32 to vector<16x16xf32>
    %572 = arith.mulf %569, %571 : vector<16x16xf32>
    %573 = arith.addf %567, %572 : vector<16x16xf32>
    %574 = vector.extract_strided_slice %502 {offsets = [1, 0, 0], sizes = [1, 16, 16], strides = [1, 1, 1]} : vector<2x16x16xf32> to vector<1x16x16xf32>
    %575 = vector.shape_cast %574 : vector<1x16x16xf32> to vector<16x16xf32>
    %c86 = arith.constant 86 : index
    %576 = memref.load %arg1[%c86] : memref<204xf32, #tpu.memory_space<smem>>
    %577 = vector.broadcast %576 : f32 to vector<16x16xf32>
    %578 = arith.mulf %575, %577 : vector<16x16xf32>
    %579 = arith.addf %573, %578 : vector<16x16xf32>
    %580 = vector.extract_strided_slice %503 {offsets = [0, 0, 0], sizes = [1, 16, 16], strides = [1, 1, 1]} : vector<2x16x16xf32> to vector<1x16x16xf32>
    %581 = vector.shape_cast %580 : vector<1x16x16xf32> to vector<16x16xf32>
    %c78 = arith.constant 78 : index
    %582 = memref.load %arg1[%c78] : memref<204xf32, #tpu.memory_space<smem>>
    %583 = vector.broadcast %582 : f32 to vector<16x16xf32>
    %584 = arith.mulf %581, %583 : vector<16x16xf32>
    %585 = arith.addf %579, %584 : vector<16x16xf32>
    %586 = vector.extract_strided_slice %503 {offsets = [1, 0, 0], sizes = [1, 16, 16], strides = [1, 1, 1]} : vector<2x16x16xf32> to vector<1x16x16xf32>
    %587 = vector.shape_cast %586 : vector<1x16x16xf32> to vector<16x16xf32>
    %c87 = arith.constant 87 : index
    %588 = memref.load %arg1[%c87] : memref<204xf32, #tpu.memory_space<smem>>
    %589 = vector.broadcast %588 : f32 to vector<16x16xf32>
    %590 = arith.mulf %587, %589 : vector<16x16xf32>
    %591 = arith.addf %585, %590 : vector<16x16xf32>
    %592 = vector.extract_strided_slice %504 {offsets = [0, 0, 0], sizes = [1, 16, 16], strides = [1, 1, 1]} : vector<2x16x16xf32> to vector<1x16x16xf32>
    %593 = vector.shape_cast %592 : vector<1x16x16xf32> to vector<16x16xf32>
    %c79 = arith.constant 79 : index
    %594 = memref.load %arg1[%c79] : memref<204xf32, #tpu.memory_space<smem>>
    %595 = vector.broadcast %594 : f32 to vector<16x16xf32>
    %596 = arith.mulf %593, %595 : vector<16x16xf32>
    %597 = arith.addf %591, %596 : vector<16x16xf32>
    %598 = vector.extract_strided_slice %504 {offsets = [1, 0, 0], sizes = [1, 16, 16], strides = [1, 1, 1]} : vector<2x16x16xf32> to vector<1x16x16xf32>
    %599 = vector.shape_cast %598 : vector<1x16x16xf32> to vector<16x16xf32>
    %c88 = arith.constant 88 : index
    %600 = memref.load %arg1[%c88] : memref<204xf32, #tpu.memory_space<smem>>
    %601 = vector.broadcast %600 : f32 to vector<16x16xf32>
    %602 = arith.mulf %599, %601 : vector<16x16xf32>
    %603 = arith.addf %597, %602 : vector<16x16xf32>
    %604 = vector.extract_strided_slice %505 {offsets = [0, 0, 0], sizes = [1, 16, 16], strides = [1, 1, 1]} : vector<2x16x16xf32> to vector<1x16x16xf32>
    %605 = vector.shape_cast %604 : vector<1x16x16xf32> to vector<16x16xf32>
    %c80 = arith.constant 80 : index
    %606 = memref.load %arg1[%c80] : memref<204xf32, #tpu.memory_space<smem>>
    %607 = vector.broadcast %606 : f32 to vector<16x16xf32>
    %608 = arith.mulf %605, %607 : vector<16x16xf32>
    %609 = arith.addf %603, %608 : vector<16x16xf32>
    %610 = vector.extract_strided_slice %505 {offsets = [1, 0, 0], sizes = [1, 16, 16], strides = [1, 1, 1]} : vector<2x16x16xf32> to vector<1x16x16xf32>
    %611 = vector.shape_cast %610 : vector<1x16x16xf32> to vector<16x16xf32>
    %c89 = arith.constant 89 : index
    %612 = memref.load %arg1[%c89] : memref<204xf32, #tpu.memory_space<smem>>
    %613 = vector.broadcast %612 : f32 to vector<16x16xf32>
    %614 = arith.mulf %611, %613 : vector<16x16xf32>
    %615 = arith.addf %609, %614 : vector<16x16xf32>
    %cst_120 = arith.constant 0.000000e+00 : f32
    %616 = vector.broadcast %cst_120 : f32 to vector<16x16xf32>
    %617 = arith.cmpf oge, %615, %616 : vector<16x16xf32>
    %cst_121 = arith.constant 3.000000e-01 : f32
    %618 = vector.broadcast %cst_121 : f32 to vector<16x16xf32>
    %619 = arith.mulf %618, %615 : vector<16x16xf32>
    %620 = arith.select %617, %615, %619 : vector<16x16xi1>, vector<16x16xf32>
    %c5_122 = arith.constant 5 : index
    %621 = memref.load %arg2[%c5_122] : memref<14xf32, #tpu.memory_space<smem>>
    %622 = vector.broadcast %621 : f32 to vector<16x16xf32>
    %623 = vector.extract_strided_slice %497 {offsets = [0, 0, 0], sizes = [1, 16, 16], strides = [1, 1, 1]} : vector<2x16x16xf32> to vector<1x16x16xf32>
    %624 = vector.shape_cast %623 : vector<1x16x16xf32> to vector<16x16xf32>
    %c90 = arith.constant 90 : index
    %625 = memref.load %arg1[%c90] : memref<204xf32, #tpu.memory_space<smem>>
    %626 = vector.broadcast %625 : f32 to vector<16x16xf32>
    %627 = arith.mulf %624, %626 : vector<16x16xf32>
    %628 = arith.addf %622, %627 : vector<16x16xf32>
    %629 = vector.extract_strided_slice %497 {offsets = [1, 0, 0], sizes = [1, 16, 16], strides = [1, 1, 1]} : vector<2x16x16xf32> to vector<1x16x16xf32>
    %630 = vector.shape_cast %629 : vector<1x16x16xf32> to vector<16x16xf32>
    %c99 = arith.constant 99 : index
    %631 = memref.load %arg1[%c99] : memref<204xf32, #tpu.memory_space<smem>>
    %632 = vector.broadcast %631 : f32 to vector<16x16xf32>
    %633 = arith.mulf %630, %632 : vector<16x16xf32>
    %634 = arith.addf %628, %633 : vector<16x16xf32>
    %635 = vector.extract_strided_slice %498 {offsets = [0, 0, 0], sizes = [1, 16, 16], strides = [1, 1, 1]} : vector<2x16x16xf32> to vector<1x16x16xf32>
    %636 = vector.shape_cast %635 : vector<1x16x16xf32> to vector<16x16xf32>
    %c91 = arith.constant 91 : index
    %637 = memref.load %arg1[%c91] : memref<204xf32, #tpu.memory_space<smem>>
    %638 = vector.broadcast %637 : f32 to vector<16x16xf32>
    %639 = arith.mulf %636, %638 : vector<16x16xf32>
    %640 = arith.addf %634, %639 : vector<16x16xf32>
    %641 = vector.extract_strided_slice %498 {offsets = [1, 0, 0], sizes = [1, 16, 16], strides = [1, 1, 1]} : vector<2x16x16xf32> to vector<1x16x16xf32>
    %642 = vector.shape_cast %641 : vector<1x16x16xf32> to vector<16x16xf32>
    %c100 = arith.constant 100 : index
    %643 = memref.load %arg1[%c100] : memref<204xf32, #tpu.memory_space<smem>>
    %644 = vector.broadcast %643 : f32 to vector<16x16xf32>
    %645 = arith.mulf %642, %644 : vector<16x16xf32>
    %646 = arith.addf %640, %645 : vector<16x16xf32>
    %647 = vector.extract_strided_slice %499 {offsets = [0, 0, 0], sizes = [1, 16, 16], strides = [1, 1, 1]} : vector<2x16x16xf32> to vector<1x16x16xf32>
    %648 = vector.shape_cast %647 : vector<1x16x16xf32> to vector<16x16xf32>
    %c92 = arith.constant 92 : index
    %649 = memref.load %arg1[%c92] : memref<204xf32, #tpu.memory_space<smem>>
    %650 = vector.broadcast %649 : f32 to vector<16x16xf32>
    %651 = arith.mulf %648, %650 : vector<16x16xf32>
    %652 = arith.addf %646, %651 : vector<16x16xf32>
    %653 = vector.extract_strided_slice %499 {offsets = [1, 0, 0], sizes = [1, 16, 16], strides = [1, 1, 1]} : vector<2x16x16xf32> to vector<1x16x16xf32>
    %654 = vector.shape_cast %653 : vector<1x16x16xf32> to vector<16x16xf32>
    %c101 = arith.constant 101 : index
    %655 = memref.load %arg1[%c101] : memref<204xf32, #tpu.memory_space<smem>>
    %656 = vector.broadcast %655 : f32 to vector<16x16xf32>
    %657 = arith.mulf %654, %656 : vector<16x16xf32>
    %658 = arith.addf %652, %657 : vector<16x16xf32>
    %659 = vector.extract_strided_slice %500 {offsets = [0, 0, 0], sizes = [1, 16, 16], strides = [1, 1, 1]} : vector<2x16x16xf32> to vector<1x16x16xf32>
    %660 = vector.shape_cast %659 : vector<1x16x16xf32> to vector<16x16xf32>
    %c93 = arith.constant 93 : index
    %661 = memref.load %arg1[%c93] : memref<204xf32, #tpu.memory_space<smem>>
    %662 = vector.broadcast %661 : f32 to vector<16x16xf32>
    %663 = arith.mulf %660, %662 : vector<16x16xf32>
    %664 = arith.addf %658, %663 : vector<16x16xf32>
    %665 = vector.extract_strided_slice %500 {offsets = [1, 0, 0], sizes = [1, 16, 16], strides = [1, 1, 1]} : vector<2x16x16xf32> to vector<1x16x16xf32>
    %666 = vector.shape_cast %665 : vector<1x16x16xf32> to vector<16x16xf32>
    %c102 = arith.constant 102 : index
    %667 = memref.load %arg1[%c102] : memref<204xf32, #tpu.memory_space<smem>>
    %668 = vector.broadcast %667 : f32 to vector<16x16xf32>
    %669 = arith.mulf %666, %668 : vector<16x16xf32>
    %670 = arith.addf %664, %669 : vector<16x16xf32>
    %671 = vector.extract_strided_slice %501 {offsets = [0, 0, 0], sizes = [1, 16, 16], strides = [1, 1, 1]} : vector<2x16x16xf32> to vector<1x16x16xf32>
    %672 = vector.shape_cast %671 : vector<1x16x16xf32> to vector<16x16xf32>
    %c94 = arith.constant 94 : index
    %673 = memref.load %arg1[%c94] : memref<204xf32, #tpu.memory_space<smem>>
    %674 = vector.broadcast %673 : f32 to vector<16x16xf32>
    %675 = arith.mulf %672, %674 : vector<16x16xf32>
    %676 = arith.addf %670, %675 : vector<16x16xf32>
    %677 = vector.extract_strided_slice %501 {offsets = [1, 0, 0], sizes = [1, 16, 16], strides = [1, 1, 1]} : vector<2x16x16xf32> to vector<1x16x16xf32>
    %678 = vector.shape_cast %677 : vector<1x16x16xf32> to vector<16x16xf32>
    %c103 = arith.constant 103 : index
    %679 = memref.load %arg1[%c103] : memref<204xf32, #tpu.memory_space<smem>>
    %680 = vector.broadcast %679 : f32 to vector<16x16xf32>
    %681 = arith.mulf %678, %680 : vector<16x16xf32>
    %682 = arith.addf %676, %681 : vector<16x16xf32>
    %683 = vector.extract_strided_slice %502 {offsets = [0, 0, 0], sizes = [1, 16, 16], strides = [1, 1, 1]} : vector<2x16x16xf32> to vector<1x16x16xf32>
    %684 = vector.shape_cast %683 : vector<1x16x16xf32> to vector<16x16xf32>
    %c95 = arith.constant 95 : index
    %685 = memref.load %arg1[%c95] : memref<204xf32, #tpu.memory_space<smem>>
    %686 = vector.broadcast %685 : f32 to vector<16x16xf32>
    %687 = arith.mulf %684, %686 : vector<16x16xf32>
    %688 = arith.addf %682, %687 : vector<16x16xf32>
    %689 = vector.extract_strided_slice %502 {offsets = [1, 0, 0], sizes = [1, 16, 16], strides = [1, 1, 1]} : vector<2x16x16xf32> to vector<1x16x16xf32>
    %690 = vector.shape_cast %689 : vector<1x16x16xf32> to vector<16x16xf32>
    %c104 = arith.constant 104 : index
    %691 = memref.load %arg1[%c104] : memref<204xf32, #tpu.memory_space<smem>>
    %692 = vector.broadcast %691 : f32 to vector<16x16xf32>
    %693 = arith.mulf %690, %692 : vector<16x16xf32>
    %694 = arith.addf %688, %693 : vector<16x16xf32>
    %695 = vector.extract_strided_slice %503 {offsets = [0, 0, 0], sizes = [1, 16, 16], strides = [1, 1, 1]} : vector<2x16x16xf32> to vector<1x16x16xf32>
    %696 = vector.shape_cast %695 : vector<1x16x16xf32> to vector<16x16xf32>
    %c96 = arith.constant 96 : index
    %697 = memref.load %arg1[%c96] : memref<204xf32, #tpu.memory_space<smem>>
    %698 = vector.broadcast %697 : f32 to vector<16x16xf32>
    %699 = arith.mulf %696, %698 : vector<16x16xf32>
    %700 = arith.addf %694, %699 : vector<16x16xf32>
    %701 = vector.extract_strided_slice %503 {offsets = [1, 0, 0], sizes = [1, 16, 16], strides = [1, 1, 1]} : vector<2x16x16xf32> to vector<1x16x16xf32>
    %702 = vector.shape_cast %701 : vector<1x16x16xf32> to vector<16x16xf32>
    %c105 = arith.constant 105 : index
    %703 = memref.load %arg1[%c105] : memref<204xf32, #tpu.memory_space<smem>>
    %704 = vector.broadcast %703 : f32 to vector<16x16xf32>
    %705 = arith.mulf %702, %704 : vector<16x16xf32>
    %706 = arith.addf %700, %705 : vector<16x16xf32>
    %707 = vector.extract_strided_slice %504 {offsets = [0, 0, 0], sizes = [1, 16, 16], strides = [1, 1, 1]} : vector<2x16x16xf32> to vector<1x16x16xf32>
    %708 = vector.shape_cast %707 : vector<1x16x16xf32> to vector<16x16xf32>
    %c97 = arith.constant 97 : index
    %709 = memref.load %arg1[%c97] : memref<204xf32, #tpu.memory_space<smem>>
    %710 = vector.broadcast %709 : f32 to vector<16x16xf32>
    %711 = arith.mulf %708, %710 : vector<16x16xf32>
    %712 = arith.addf %706, %711 : vector<16x16xf32>
    %713 = vector.extract_strided_slice %504 {offsets = [1, 0, 0], sizes = [1, 16, 16], strides = [1, 1, 1]} : vector<2x16x16xf32> to vector<1x16x16xf32>
    %714 = vector.shape_cast %713 : vector<1x16x16xf32> to vector<16x16xf32>
    %c106 = arith.constant 106 : index
    %715 = memref.load %arg1[%c106] : memref<204xf32, #tpu.memory_space<smem>>
    %716 = vector.broadcast %715 : f32 to vector<16x16xf32>
    %717 = arith.mulf %714, %716 : vector<16x16xf32>
    %718 = arith.addf %712, %717 : vector<16x16xf32>
    %719 = vector.extract_strided_slice %505 {offsets = [0, 0, 0], sizes = [1, 16, 16], strides = [1, 1, 1]} : vector<2x16x16xf32> to vector<1x16x16xf32>
    %720 = vector.shape_cast %719 : vector<1x16x16xf32> to vector<16x16xf32>
    %c98 = arith.constant 98 : index
    %721 = memref.load %arg1[%c98] : memref<204xf32, #tpu.memory_space<smem>>
    %722 = vector.broadcast %721 : f32 to vector<16x16xf32>
    %723 = arith.mulf %720, %722 : vector<16x16xf32>
    %724 = arith.addf %718, %723 : vector<16x16xf32>
    %725 = vector.extract_strided_slice %505 {offsets = [1, 0, 0], sizes = [1, 16, 16], strides = [1, 1, 1]} : vector<2x16x16xf32> to vector<1x16x16xf32>
    %726 = vector.shape_cast %725 : vector<1x16x16xf32> to vector<16x16xf32>
    %c107 = arith.constant 107 : index
    %727 = memref.load %arg1[%c107] : memref<204xf32, #tpu.memory_space<smem>>
    %728 = vector.broadcast %727 : f32 to vector<16x16xf32>
    %729 = arith.mulf %726, %728 : vector<16x16xf32>
    %730 = arith.addf %724, %729 : vector<16x16xf32>
    %cst_123 = arith.constant 0.000000e+00 : f32
    %731 = vector.broadcast %cst_123 : f32 to vector<16x16xf32>
    %732 = arith.cmpf oge, %730, %731 : vector<16x16xf32>
    %cst_124 = arith.constant 3.000000e-01 : f32
    %733 = vector.broadcast %cst_124 : f32 to vector<16x16xf32>
    %734 = arith.mulf %733, %730 : vector<16x16xf32>
    %735 = arith.select %732, %730, %734 : vector<16x16xi1>, vector<16x16xf32>
    %c0_125 = arith.constant 0 : index
    %c0_126 = arith.constant 0 : index
    %c0_127 = arith.constant 0 : index
    %736 = vector.load %arg11[%c0_125, %c0_126, %c0_127] : memref<2x18x18xf32, #tpu.memory_space<vmem>>, vector<2x16x16xf32>
    %c0_128 = arith.constant 0 : index
    %c0_129 = arith.constant 0 : index
    %c1_130 = arith.constant 1 : index
    %737 = vector.load %arg11[%c0_128, %c0_129, %c1_130] : memref<2x18x18xf32, #tpu.memory_space<vmem>>, vector<2x16x16xf32>
    %c0_131 = arith.constant 0 : index
    %c0_132 = arith.constant 0 : index
    %c2_133 = arith.constant 2 : index
    %738 = vector.load %arg11[%c0_131, %c0_132, %c2_133] : memref<2x18x18xf32, #tpu.memory_space<vmem>>, vector<2x16x16xf32>
    %c0_134 = arith.constant 0 : index
    %c1_135 = arith.constant 1 : index
    %c0_136 = arith.constant 0 : index
    %739 = vector.load %arg11[%c0_134, %c1_135, %c0_136] : memref<2x18x18xf32, #tpu.memory_space<vmem>>, vector<2x16x16xf32>
    %c0_137 = arith.constant 0 : index
    %c1_138 = arith.constant 1 : index
    %c1_139 = arith.constant 1 : index
    %740 = vector.load %arg11[%c0_137, %c1_138, %c1_139] : memref<2x18x18xf32, #tpu.memory_space<vmem>>, vector<2x16x16xf32>
    %c0_140 = arith.constant 0 : index
    %c1_141 = arith.constant 1 : index
    %c2_142 = arith.constant 2 : index
    %741 = vector.load %arg11[%c0_140, %c1_141, %c2_142] : memref<2x18x18xf32, #tpu.memory_space<vmem>>, vector<2x16x16xf32>
    %c0_143 = arith.constant 0 : index
    %c2_144 = arith.constant 2 : index
    %c0_145 = arith.constant 0 : index
    %742 = vector.load %arg11[%c0_143, %c2_144, %c0_145] : memref<2x18x18xf32, #tpu.memory_space<vmem>>, vector<2x16x16xf32>
    %c0_146 = arith.constant 0 : index
    %c2_147 = arith.constant 2 : index
    %c1_148 = arith.constant 1 : index
    %743 = vector.load %arg11[%c0_146, %c2_147, %c1_148] : memref<2x18x18xf32, #tpu.memory_space<vmem>>, vector<2x16x16xf32>
    %c0_149 = arith.constant 0 : index
    %c2_150 = arith.constant 2 : index
    %c2_151 = arith.constant 2 : index
    %744 = vector.load %arg11[%c0_149, %c2_150, %c2_151] : memref<2x18x18xf32, #tpu.memory_space<vmem>>, vector<2x16x16xf32>
    %c6_152 = arith.constant 6 : index
    %745 = memref.load %arg2[%c6_152] : memref<14xf32, #tpu.memory_space<smem>>
    %746 = vector.broadcast %745 : f32 to vector<16x16xf32>
    %747 = vector.extract_strided_slice %736 {offsets = [0, 0, 0], sizes = [1, 16, 16], strides = [1, 1, 1]} : vector<2x16x16xf32> to vector<1x16x16xf32>
    %748 = vector.shape_cast %747 : vector<1x16x16xf32> to vector<16x16xf32>
    %c108 = arith.constant 108 : index
    %749 = memref.load %arg1[%c108] : memref<204xf32, #tpu.memory_space<smem>>
    %750 = vector.broadcast %749 : f32 to vector<16x16xf32>
    %751 = arith.mulf %748, %750 : vector<16x16xf32>
    %752 = arith.addf %746, %751 : vector<16x16xf32>
    %753 = vector.extract_strided_slice %736 {offsets = [1, 0, 0], sizes = [1, 16, 16], strides = [1, 1, 1]} : vector<2x16x16xf32> to vector<1x16x16xf32>
    %754 = vector.shape_cast %753 : vector<1x16x16xf32> to vector<16x16xf32>
    %c117 = arith.constant 117 : index
    %755 = memref.load %arg1[%c117] : memref<204xf32, #tpu.memory_space<smem>>
    %756 = vector.broadcast %755 : f32 to vector<16x16xf32>
    %757 = arith.mulf %754, %756 : vector<16x16xf32>
    %758 = arith.addf %752, %757 : vector<16x16xf32>
    %759 = vector.extract_strided_slice %737 {offsets = [0, 0, 0], sizes = [1, 16, 16], strides = [1, 1, 1]} : vector<2x16x16xf32> to vector<1x16x16xf32>
    %760 = vector.shape_cast %759 : vector<1x16x16xf32> to vector<16x16xf32>
    %c109 = arith.constant 109 : index
    %761 = memref.load %arg1[%c109] : memref<204xf32, #tpu.memory_space<smem>>
    %762 = vector.broadcast %761 : f32 to vector<16x16xf32>
    %763 = arith.mulf %760, %762 : vector<16x16xf32>
    %764 = arith.addf %758, %763 : vector<16x16xf32>
    %765 = vector.extract_strided_slice %737 {offsets = [1, 0, 0], sizes = [1, 16, 16], strides = [1, 1, 1]} : vector<2x16x16xf32> to vector<1x16x16xf32>
    %766 = vector.shape_cast %765 : vector<1x16x16xf32> to vector<16x16xf32>
    %c118 = arith.constant 118 : index
    %767 = memref.load %arg1[%c118] : memref<204xf32, #tpu.memory_space<smem>>
    %768 = vector.broadcast %767 : f32 to vector<16x16xf32>
    %769 = arith.mulf %766, %768 : vector<16x16xf32>
    %770 = arith.addf %764, %769 : vector<16x16xf32>
    %771 = vector.extract_strided_slice %738 {offsets = [0, 0, 0], sizes = [1, 16, 16], strides = [1, 1, 1]} : vector<2x16x16xf32> to vector<1x16x16xf32>
    %772 = vector.shape_cast %771 : vector<1x16x16xf32> to vector<16x16xf32>
    %c110 = arith.constant 110 : index
    %773 = memref.load %arg1[%c110] : memref<204xf32, #tpu.memory_space<smem>>
    %774 = vector.broadcast %773 : f32 to vector<16x16xf32>
    %775 = arith.mulf %772, %774 : vector<16x16xf32>
    %776 = arith.addf %770, %775 : vector<16x16xf32>
    %777 = vector.extract_strided_slice %738 {offsets = [1, 0, 0], sizes = [1, 16, 16], strides = [1, 1, 1]} : vector<2x16x16xf32> to vector<1x16x16xf32>
    %778 = vector.shape_cast %777 : vector<1x16x16xf32> to vector<16x16xf32>
    %c119 = arith.constant 119 : index
    %779 = memref.load %arg1[%c119] : memref<204xf32, #tpu.memory_space<smem>>
    %780 = vector.broadcast %779 : f32 to vector<16x16xf32>
    %781 = arith.mulf %778, %780 : vector<16x16xf32>
    %782 = arith.addf %776, %781 : vector<16x16xf32>
    %783 = vector.extract_strided_slice %739 {offsets = [0, 0, 0], sizes = [1, 16, 16], strides = [1, 1, 1]} : vector<2x16x16xf32> to vector<1x16x16xf32>
    %784 = vector.shape_cast %783 : vector<1x16x16xf32> to vector<16x16xf32>
    %c111 = arith.constant 111 : index
    %785 = memref.load %arg1[%c111] : memref<204xf32, #tpu.memory_space<smem>>
    %786 = vector.broadcast %785 : f32 to vector<16x16xf32>
    %787 = arith.mulf %784, %786 : vector<16x16xf32>
    %788 = arith.addf %782, %787 : vector<16x16xf32>
    %789 = vector.extract_strided_slice %739 {offsets = [1, 0, 0], sizes = [1, 16, 16], strides = [1, 1, 1]} : vector<2x16x16xf32> to vector<1x16x16xf32>
    %790 = vector.shape_cast %789 : vector<1x16x16xf32> to vector<16x16xf32>
    %c120 = arith.constant 120 : index
    %791 = memref.load %arg1[%c120] : memref<204xf32, #tpu.memory_space<smem>>
    %792 = vector.broadcast %791 : f32 to vector<16x16xf32>
    %793 = arith.mulf %790, %792 : vector<16x16xf32>
    %794 = arith.addf %788, %793 : vector<16x16xf32>
    %795 = vector.extract_strided_slice %740 {offsets = [0, 0, 0], sizes = [1, 16, 16], strides = [1, 1, 1]} : vector<2x16x16xf32> to vector<1x16x16xf32>
    %796 = vector.shape_cast %795 : vector<1x16x16xf32> to vector<16x16xf32>
    %c112 = arith.constant 112 : index
    %797 = memref.load %arg1[%c112] : memref<204xf32, #tpu.memory_space<smem>>
    %798 = vector.broadcast %797 : f32 to vector<16x16xf32>
    %799 = arith.mulf %796, %798 : vector<16x16xf32>
    %800 = arith.addf %794, %799 : vector<16x16xf32>
    %801 = vector.extract_strided_slice %740 {offsets = [1, 0, 0], sizes = [1, 16, 16], strides = [1, 1, 1]} : vector<2x16x16xf32> to vector<1x16x16xf32>
    %802 = vector.shape_cast %801 : vector<1x16x16xf32> to vector<16x16xf32>
    %c121 = arith.constant 121 : index
    %803 = memref.load %arg1[%c121] : memref<204xf32, #tpu.memory_space<smem>>
    %804 = vector.broadcast %803 : f32 to vector<16x16xf32>
    %805 = arith.mulf %802, %804 : vector<16x16xf32>
    %806 = arith.addf %800, %805 : vector<16x16xf32>
    %807 = vector.extract_strided_slice %741 {offsets = [0, 0, 0], sizes = [1, 16, 16], strides = [1, 1, 1]} : vector<2x16x16xf32> to vector<1x16x16xf32>
    %808 = vector.shape_cast %807 : vector<1x16x16xf32> to vector<16x16xf32>
    %c113 = arith.constant 113 : index
    %809 = memref.load %arg1[%c113] : memref<204xf32, #tpu.memory_space<smem>>
    %810 = vector.broadcast %809 : f32 to vector<16x16xf32>
    %811 = arith.mulf %808, %810 : vector<16x16xf32>
    %812 = arith.addf %806, %811 : vector<16x16xf32>
    %813 = vector.extract_strided_slice %741 {offsets = [1, 0, 0], sizes = [1, 16, 16], strides = [1, 1, 1]} : vector<2x16x16xf32> to vector<1x16x16xf32>
    %814 = vector.shape_cast %813 : vector<1x16x16xf32> to vector<16x16xf32>
    %c122 = arith.constant 122 : index
    %815 = memref.load %arg1[%c122] : memref<204xf32, #tpu.memory_space<smem>>
    %816 = vector.broadcast %815 : f32 to vector<16x16xf32>
    %817 = arith.mulf %814, %816 : vector<16x16xf32>
    %818 = arith.addf %812, %817 : vector<16x16xf32>
    %819 = vector.extract_strided_slice %742 {offsets = [0, 0, 0], sizes = [1, 16, 16], strides = [1, 1, 1]} : vector<2x16x16xf32> to vector<1x16x16xf32>
    %820 = vector.shape_cast %819 : vector<1x16x16xf32> to vector<16x16xf32>
    %c114 = arith.constant 114 : index
    %821 = memref.load %arg1[%c114] : memref<204xf32, #tpu.memory_space<smem>>
    %822 = vector.broadcast %821 : f32 to vector<16x16xf32>
    %823 = arith.mulf %820, %822 : vector<16x16xf32>
    %824 = arith.addf %818, %823 : vector<16x16xf32>
    %825 = vector.extract_strided_slice %742 {offsets = [1, 0, 0], sizes = [1, 16, 16], strides = [1, 1, 1]} : vector<2x16x16xf32> to vector<1x16x16xf32>
    %826 = vector.shape_cast %825 : vector<1x16x16xf32> to vector<16x16xf32>
    %c123 = arith.constant 123 : index
    %827 = memref.load %arg1[%c123] : memref<204xf32, #tpu.memory_space<smem>>
    %828 = vector.broadcast %827 : f32 to vector<16x16xf32>
    %829 = arith.mulf %826, %828 : vector<16x16xf32>
    %830 = arith.addf %824, %829 : vector<16x16xf32>
    %831 = vector.extract_strided_slice %743 {offsets = [0, 0, 0], sizes = [1, 16, 16], strides = [1, 1, 1]} : vector<2x16x16xf32> to vector<1x16x16xf32>
    %832 = vector.shape_cast %831 : vector<1x16x16xf32> to vector<16x16xf32>
    %c115 = arith.constant 115 : index
    %833 = memref.load %arg1[%c115] : memref<204xf32, #tpu.memory_space<smem>>
    %834 = vector.broadcast %833 : f32 to vector<16x16xf32>
    %835 = arith.mulf %832, %834 : vector<16x16xf32>
    %836 = arith.addf %830, %835 : vector<16x16xf32>
    %837 = vector.extract_strided_slice %743 {offsets = [1, 0, 0], sizes = [1, 16, 16], strides = [1, 1, 1]} : vector<2x16x16xf32> to vector<1x16x16xf32>
    %838 = vector.shape_cast %837 : vector<1x16x16xf32> to vector<16x16xf32>
    %c124 = arith.constant 124 : index
    %839 = memref.load %arg1[%c124] : memref<204xf32, #tpu.memory_space<smem>>
    %840 = vector.broadcast %839 : f32 to vector<16x16xf32>
    %841 = arith.mulf %838, %840 : vector<16x16xf32>
    %842 = arith.addf %836, %841 : vector<16x16xf32>
    %843 = vector.extract_strided_slice %744 {offsets = [0, 0, 0], sizes = [1, 16, 16], strides = [1, 1, 1]} : vector<2x16x16xf32> to vector<1x16x16xf32>
    %844 = vector.shape_cast %843 : vector<1x16x16xf32> to vector<16x16xf32>
    %c116 = arith.constant 116 : index
    %845 = memref.load %arg1[%c116] : memref<204xf32, #tpu.memory_space<smem>>
    %846 = vector.broadcast %845 : f32 to vector<16x16xf32>
    %847 = arith.mulf %844, %846 : vector<16x16xf32>
    %848 = arith.addf %842, %847 : vector<16x16xf32>
    %849 = vector.extract_strided_slice %744 {offsets = [1, 0, 0], sizes = [1, 16, 16], strides = [1, 1, 1]} : vector<2x16x16xf32> to vector<1x16x16xf32>
    %850 = vector.shape_cast %849 : vector<1x16x16xf32> to vector<16x16xf32>
    %c125 = arith.constant 125 : index
    %851 = memref.load %arg1[%c125] : memref<204xf32, #tpu.memory_space<smem>>
    %852 = vector.broadcast %851 : f32 to vector<16x16xf32>
    %853 = arith.mulf %850, %852 : vector<16x16xf32>
    %854 = arith.addf %848, %853 : vector<16x16xf32>
    %cst_153 = arith.constant 0.000000e+00 : f32
    %855 = vector.broadcast %cst_153 : f32 to vector<16x16xf32>
    %856 = arith.cmpf oge, %854, %855 : vector<16x16xf32>
    %cst_154 = arith.constant 3.000000e-01 : f32
    %857 = vector.broadcast %cst_154 : f32 to vector<16x16xf32>
    %858 = arith.mulf %857, %854 : vector<16x16xf32>
    %859 = arith.select %856, %854, %858 : vector<16x16xi1>, vector<16x16xf32>
    %c7_155 = arith.constant 7 : index
    %860 = memref.load %arg2[%c7_155] : memref<14xf32, #tpu.memory_space<smem>>
    %861 = vector.broadcast %860 : f32 to vector<16x16xf32>
    %862 = vector.extract_strided_slice %736 {offsets = [0, 0, 0], sizes = [1, 16, 16], strides = [1, 1, 1]} : vector<2x16x16xf32> to vector<1x16x16xf32>
    %863 = vector.shape_cast %862 : vector<1x16x16xf32> to vector<16x16xf32>
    %c126 = arith.constant 126 : index
    %864 = memref.load %arg1[%c126] : memref<204xf32, #tpu.memory_space<smem>>
    %865 = vector.broadcast %864 : f32 to vector<16x16xf32>
    %866 = arith.mulf %863, %865 : vector<16x16xf32>
    %867 = arith.addf %861, %866 : vector<16x16xf32>
    %868 = vector.extract_strided_slice %736 {offsets = [1, 0, 0], sizes = [1, 16, 16], strides = [1, 1, 1]} : vector<2x16x16xf32> to vector<1x16x16xf32>
    %869 = vector.shape_cast %868 : vector<1x16x16xf32> to vector<16x16xf32>
    %c135 = arith.constant 135 : index
    %870 = memref.load %arg1[%c135] : memref<204xf32, #tpu.memory_space<smem>>
    %871 = vector.broadcast %870 : f32 to vector<16x16xf32>
    %872 = arith.mulf %869, %871 : vector<16x16xf32>
    %873 = arith.addf %867, %872 : vector<16x16xf32>
    %874 = vector.extract_strided_slice %737 {offsets = [0, 0, 0], sizes = [1, 16, 16], strides = [1, 1, 1]} : vector<2x16x16xf32> to vector<1x16x16xf32>
    %875 = vector.shape_cast %874 : vector<1x16x16xf32> to vector<16x16xf32>
    %c127 = arith.constant 127 : index
    %876 = memref.load %arg1[%c127] : memref<204xf32, #tpu.memory_space<smem>>
    %877 = vector.broadcast %876 : f32 to vector<16x16xf32>
    %878 = arith.mulf %875, %877 : vector<16x16xf32>
    %879 = arith.addf %873, %878 : vector<16x16xf32>
    %880 = vector.extract_strided_slice %737 {offsets = [1, 0, 0], sizes = [1, 16, 16], strides = [1, 1, 1]} : vector<2x16x16xf32> to vector<1x16x16xf32>
    %881 = vector.shape_cast %880 : vector<1x16x16xf32> to vector<16x16xf32>
    %c136 = arith.constant 136 : index
    %882 = memref.load %arg1[%c136] : memref<204xf32, #tpu.memory_space<smem>>
    %883 = vector.broadcast %882 : f32 to vector<16x16xf32>
    %884 = arith.mulf %881, %883 : vector<16x16xf32>
    %885 = arith.addf %879, %884 : vector<16x16xf32>
    %886 = vector.extract_strided_slice %738 {offsets = [0, 0, 0], sizes = [1, 16, 16], strides = [1, 1, 1]} : vector<2x16x16xf32> to vector<1x16x16xf32>
    %887 = vector.shape_cast %886 : vector<1x16x16xf32> to vector<16x16xf32>
    %c128 = arith.constant 128 : index
    %888 = memref.load %arg1[%c128] : memref<204xf32, #tpu.memory_space<smem>>
    %889 = vector.broadcast %888 : f32 to vector<16x16xf32>
    %890 = arith.mulf %887, %889 : vector<16x16xf32>
    %891 = arith.addf %885, %890 : vector<16x16xf32>
    %892 = vector.extract_strided_slice %738 {offsets = [1, 0, 0], sizes = [1, 16, 16], strides = [1, 1, 1]} : vector<2x16x16xf32> to vector<1x16x16xf32>
    %893 = vector.shape_cast %892 : vector<1x16x16xf32> to vector<16x16xf32>
    %c137 = arith.constant 137 : index
    %894 = memref.load %arg1[%c137] : memref<204xf32, #tpu.memory_space<smem>>
    %895 = vector.broadcast %894 : f32 to vector<16x16xf32>
    %896 = arith.mulf %893, %895 : vector<16x16xf32>
    %897 = arith.addf %891, %896 : vector<16x16xf32>
    %898 = vector.extract_strided_slice %739 {offsets = [0, 0, 0], sizes = [1, 16, 16], strides = [1, 1, 1]} : vector<2x16x16xf32> to vector<1x16x16xf32>
    %899 = vector.shape_cast %898 : vector<1x16x16xf32> to vector<16x16xf32>
    %c129 = arith.constant 129 : index
    %900 = memref.load %arg1[%c129] : memref<204xf32, #tpu.memory_space<smem>>
    %901 = vector.broadcast %900 : f32 to vector<16x16xf32>
    %902 = arith.mulf %899, %901 : vector<16x16xf32>
    %903 = arith.addf %897, %902 : vector<16x16xf32>
    %904 = vector.extract_strided_slice %739 {offsets = [1, 0, 0], sizes = [1, 16, 16], strides = [1, 1, 1]} : vector<2x16x16xf32> to vector<1x16x16xf32>
    %905 = vector.shape_cast %904 : vector<1x16x16xf32> to vector<16x16xf32>
    %c138 = arith.constant 138 : index
    %906 = memref.load %arg1[%c138] : memref<204xf32, #tpu.memory_space<smem>>
    %907 = vector.broadcast %906 : f32 to vector<16x16xf32>
    %908 = arith.mulf %905, %907 : vector<16x16xf32>
    %909 = arith.addf %903, %908 : vector<16x16xf32>
    %910 = vector.extract_strided_slice %740 {offsets = [0, 0, 0], sizes = [1, 16, 16], strides = [1, 1, 1]} : vector<2x16x16xf32> to vector<1x16x16xf32>
    %911 = vector.shape_cast %910 : vector<1x16x16xf32> to vector<16x16xf32>
    %c130 = arith.constant 130 : index
    %912 = memref.load %arg1[%c130] : memref<204xf32, #tpu.memory_space<smem>>
    %913 = vector.broadcast %912 : f32 to vector<16x16xf32>
    %914 = arith.mulf %911, %913 : vector<16x16xf32>
    %915 = arith.addf %909, %914 : vector<16x16xf32>
    %916 = vector.extract_strided_slice %740 {offsets = [1, 0, 0], sizes = [1, 16, 16], strides = [1, 1, 1]} : vector<2x16x16xf32> to vector<1x16x16xf32>
    %917 = vector.shape_cast %916 : vector<1x16x16xf32> to vector<16x16xf32>
    %c139 = arith.constant 139 : index
    %918 = memref.load %arg1[%c139] : memref<204xf32, #tpu.memory_space<smem>>
    %919 = vector.broadcast %918 : f32 to vector<16x16xf32>
    %920 = arith.mulf %917, %919 : vector<16x16xf32>
    %921 = arith.addf %915, %920 : vector<16x16xf32>
    %922 = vector.extract_strided_slice %741 {offsets = [0, 0, 0], sizes = [1, 16, 16], strides = [1, 1, 1]} : vector<2x16x16xf32> to vector<1x16x16xf32>
    %923 = vector.shape_cast %922 : vector<1x16x16xf32> to vector<16x16xf32>
    %c131 = arith.constant 131 : index
    %924 = memref.load %arg1[%c131] : memref<204xf32, #tpu.memory_space<smem>>
    %925 = vector.broadcast %924 : f32 to vector<16x16xf32>
    %926 = arith.mulf %923, %925 : vector<16x16xf32>
    %927 = arith.addf %921, %926 : vector<16x16xf32>
    %928 = vector.extract_strided_slice %741 {offsets = [1, 0, 0], sizes = [1, 16, 16], strides = [1, 1, 1]} : vector<2x16x16xf32> to vector<1x16x16xf32>
    %929 = vector.shape_cast %928 : vector<1x16x16xf32> to vector<16x16xf32>
    %c140 = arith.constant 140 : index
    %930 = memref.load %arg1[%c140] : memref<204xf32, #tpu.memory_space<smem>>
    %931 = vector.broadcast %930 : f32 to vector<16x16xf32>
    %932 = arith.mulf %929, %931 : vector<16x16xf32>
    %933 = arith.addf %927, %932 : vector<16x16xf32>
    %934 = vector.extract_strided_slice %742 {offsets = [0, 0, 0], sizes = [1, 16, 16], strides = [1, 1, 1]} : vector<2x16x16xf32> to vector<1x16x16xf32>
    %935 = vector.shape_cast %934 : vector<1x16x16xf32> to vector<16x16xf32>
    %c132 = arith.constant 132 : index
    %936 = memref.load %arg1[%c132] : memref<204xf32, #tpu.memory_space<smem>>
    %937 = vector.broadcast %936 : f32 to vector<16x16xf32>
    %938 = arith.mulf %935, %937 : vector<16x16xf32>
    %939 = arith.addf %933, %938 : vector<16x16xf32>
    %940 = vector.extract_strided_slice %742 {offsets = [1, 0, 0], sizes = [1, 16, 16], strides = [1, 1, 1]} : vector<2x16x16xf32> to vector<1x16x16xf32>
    %941 = vector.shape_cast %940 : vector<1x16x16xf32> to vector<16x16xf32>
    %c141 = arith.constant 141 : index
    %942 = memref.load %arg1[%c141] : memref<204xf32, #tpu.memory_space<smem>>
    %943 = vector.broadcast %942 : f32 to vector<16x16xf32>
    %944 = arith.mulf %941, %943 : vector<16x16xf32>
    %945 = arith.addf %939, %944 : vector<16x16xf32>
    %946 = vector.extract_strided_slice %743 {offsets = [0, 0, 0], sizes = [1, 16, 16], strides = [1, 1, 1]} : vector<2x16x16xf32> to vector<1x16x16xf32>
    %947 = vector.shape_cast %946 : vector<1x16x16xf32> to vector<16x16xf32>
    %c133 = arith.constant 133 : index
    %948 = memref.load %arg1[%c133] : memref<204xf32, #tpu.memory_space<smem>>
    %949 = vector.broadcast %948 : f32 to vector<16x16xf32>
    %950 = arith.mulf %947, %949 : vector<16x16xf32>
    %951 = arith.addf %945, %950 : vector<16x16xf32>
    %952 = vector.extract_strided_slice %743 {offsets = [1, 0, 0], sizes = [1, 16, 16], strides = [1, 1, 1]} : vector<2x16x16xf32> to vector<1x16x16xf32>
    %953 = vector.shape_cast %952 : vector<1x16x16xf32> to vector<16x16xf32>
    %c142 = arith.constant 142 : index
    %954 = memref.load %arg1[%c142] : memref<204xf32, #tpu.memory_space<smem>>
    %955 = vector.broadcast %954 : f32 to vector<16x16xf32>
    %956 = arith.mulf %953, %955 : vector<16x16xf32>
    %957 = arith.addf %951, %956 : vector<16x16xf32>
    %958 = vector.extract_strided_slice %744 {offsets = [0, 0, 0], sizes = [1, 16, 16], strides = [1, 1, 1]} : vector<2x16x16xf32> to vector<1x16x16xf32>
    %959 = vector.shape_cast %958 : vector<1x16x16xf32> to vector<16x16xf32>
    %c134 = arith.constant 134 : index
    %960 = memref.load %arg1[%c134] : memref<204xf32, #tpu.memory_space<smem>>
    %961 = vector.broadcast %960 : f32 to vector<16x16xf32>
    %962 = arith.mulf %959, %961 : vector<16x16xf32>
    %963 = arith.addf %957, %962 : vector<16x16xf32>
    %964 = vector.extract_strided_slice %744 {offsets = [1, 0, 0], sizes = [1, 16, 16], strides = [1, 1, 1]} : vector<2x16x16xf32> to vector<1x16x16xf32>
    %965 = vector.shape_cast %964 : vector<1x16x16xf32> to vector<16x16xf32>
    %c143 = arith.constant 143 : index
    %966 = memref.load %arg1[%c143] : memref<204xf32, #tpu.memory_space<smem>>
    %967 = vector.broadcast %966 : f32 to vector<16x16xf32>
    %968 = arith.mulf %965, %967 : vector<16x16xf32>
    %969 = arith.addf %963, %968 : vector<16x16xf32>
    %cst_156 = arith.constant 0.000000e+00 : f32
    %970 = vector.broadcast %cst_156 : f32 to vector<16x16xf32>
    %971 = arith.cmpf oge, %969, %970 : vector<16x16xf32>
    %cst_157 = arith.constant 3.000000e-01 : f32
    %972 = vector.broadcast %cst_157 : f32 to vector<16x16xf32>
    %973 = arith.mulf %972, %969 : vector<16x16xf32>
    %974 = arith.select %971, %969, %973 : vector<16x16xi1>, vector<16x16xf32>
    %c0_158 = arith.constant 0 : index
    %c0_159 = arith.constant 0 : index
    %c0_160 = arith.constant 0 : index
    %975 = vector.load %arg11[%c0_158, %c0_159, %c0_160] : memref<2x18x18xf32, #tpu.memory_space<vmem>>, vector<2x16x16xf32>
    %c0_161 = arith.constant 0 : index
    %c0_162 = arith.constant 0 : index
    %c1_163 = arith.constant 1 : index
    %976 = vector.load %arg11[%c0_161, %c0_162, %c1_163] : memref<2x18x18xf32, #tpu.memory_space<vmem>>, vector<2x16x16xf32>
    %c0_164 = arith.constant 0 : index
    %c0_165 = arith.constant 0 : index
    %c2_166 = arith.constant 2 : index
    %977 = vector.load %arg11[%c0_164, %c0_165, %c2_166] : memref<2x18x18xf32, #tpu.memory_space<vmem>>, vector<2x16x16xf32>
    %c0_167 = arith.constant 0 : index
    %c1_168 = arith.constant 1 : index
    %c0_169 = arith.constant 0 : index
    %978 = vector.load %arg11[%c0_167, %c1_168, %c0_169] : memref<2x18x18xf32, #tpu.memory_space<vmem>>, vector<2x16x16xf32>
    %c0_170 = arith.constant 0 : index
    %c1_171 = arith.constant 1 : index
    %c1_172 = arith.constant 1 : index
    %979 = vector.load %arg11[%c0_170, %c1_171, %c1_172] : memref<2x18x18xf32, #tpu.memory_space<vmem>>, vector<2x16x16xf32>
    %c0_173 = arith.constant 0 : index
    %c1_174 = arith.constant 1 : index
    %c2_175 = arith.constant 2 : index
    %980 = vector.load %arg11[%c0_173, %c1_174, %c2_175] : memref<2x18x18xf32, #tpu.memory_space<vmem>>, vector<2x16x16xf32>
    %c0_176 = arith.constant 0 : index
    %c2_177 = arith.constant 2 : index
    %c0_178 = arith.constant 0 : index
    %981 = vector.load %arg11[%c0_176, %c2_177, %c0_178] : memref<2x18x18xf32, #tpu.memory_space<vmem>>, vector<2x16x16xf32>
    %c0_179 = arith.constant 0 : index
    %c2_180 = arith.constant 2 : index
    %c1_181 = arith.constant 1 : index
    %982 = vector.load %arg11[%c0_179, %c2_180, %c1_181] : memref<2x18x18xf32, #tpu.memory_space<vmem>>, vector<2x16x16xf32>
    %c0_182 = arith.constant 0 : index
    %c2_183 = arith.constant 2 : index
    %c2_184 = arith.constant 2 : index
    %983 = vector.load %arg11[%c0_182, %c2_183, %c2_184] : memref<2x18x18xf32, #tpu.memory_space<vmem>>, vector<2x16x16xf32>
    %c8_185 = arith.constant 8 : index
    %984 = memref.load %arg2[%c8_185] : memref<14xf32, #tpu.memory_space<smem>>
    %985 = vector.broadcast %984 : f32 to vector<16x16xf32>
    %986 = vector.extract_strided_slice %975 {offsets = [0, 0, 0], sizes = [1, 16, 16], strides = [1, 1, 1]} : vector<2x16x16xf32> to vector<1x16x16xf32>
    %987 = vector.shape_cast %986 : vector<1x16x16xf32> to vector<16x16xf32>
    %c144 = arith.constant 144 : index
    %988 = memref.load %arg1[%c144] : memref<204xf32, #tpu.memory_space<smem>>
    %989 = vector.broadcast %988 : f32 to vector<16x16xf32>
    %990 = arith.mulf %987, %989 : vector<16x16xf32>
    %991 = arith.addf %985, %990 : vector<16x16xf32>
    %992 = vector.extract_strided_slice %975 {offsets = [1, 0, 0], sizes = [1, 16, 16], strides = [1, 1, 1]} : vector<2x16x16xf32> to vector<1x16x16xf32>
    %993 = vector.shape_cast %992 : vector<1x16x16xf32> to vector<16x16xf32>
    %c153 = arith.constant 153 : index
    %994 = memref.load %arg1[%c153] : memref<204xf32, #tpu.memory_space<smem>>
    %995 = vector.broadcast %994 : f32 to vector<16x16xf32>
    %996 = arith.mulf %993, %995 : vector<16x16xf32>
    %997 = arith.addf %991, %996 : vector<16x16xf32>
    %998 = vector.extract_strided_slice %976 {offsets = [0, 0, 0], sizes = [1, 16, 16], strides = [1, 1, 1]} : vector<2x16x16xf32> to vector<1x16x16xf32>
    %999 = vector.shape_cast %998 : vector<1x16x16xf32> to vector<16x16xf32>
    %c145 = arith.constant 145 : index
    %1000 = memref.load %arg1[%c145] : memref<204xf32, #tpu.memory_space<smem>>
    %1001 = vector.broadcast %1000 : f32 to vector<16x16xf32>
    %1002 = arith.mulf %999, %1001 : vector<16x16xf32>
    %1003 = arith.addf %997, %1002 : vector<16x16xf32>
    %1004 = vector.extract_strided_slice %976 {offsets = [1, 0, 0], sizes = [1, 16, 16], strides = [1, 1, 1]} : vector<2x16x16xf32> to vector<1x16x16xf32>
    %1005 = vector.shape_cast %1004 : vector<1x16x16xf32> to vector<16x16xf32>
    %c154 = arith.constant 154 : index
    %1006 = memref.load %arg1[%c154] : memref<204xf32, #tpu.memory_space<smem>>
    %1007 = vector.broadcast %1006 : f32 to vector<16x16xf32>
    %1008 = arith.mulf %1005, %1007 : vector<16x16xf32>
    %1009 = arith.addf %1003, %1008 : vector<16x16xf32>
    %1010 = vector.extract_strided_slice %977 {offsets = [0, 0, 0], sizes = [1, 16, 16], strides = [1, 1, 1]} : vector<2x16x16xf32> to vector<1x16x16xf32>
    %1011 = vector.shape_cast %1010 : vector<1x16x16xf32> to vector<16x16xf32>
    %c146 = arith.constant 146 : index
    %1012 = memref.load %arg1[%c146] : memref<204xf32, #tpu.memory_space<smem>>
    %1013 = vector.broadcast %1012 : f32 to vector<16x16xf32>
    %1014 = arith.mulf %1011, %1013 : vector<16x16xf32>
    %1015 = arith.addf %1009, %1014 : vector<16x16xf32>
    %1016 = vector.extract_strided_slice %977 {offsets = [1, 0, 0], sizes = [1, 16, 16], strides = [1, 1, 1]} : vector<2x16x16xf32> to vector<1x16x16xf32>
    %1017 = vector.shape_cast %1016 : vector<1x16x16xf32> to vector<16x16xf32>
    %c155 = arith.constant 155 : index
    %1018 = memref.load %arg1[%c155] : memref<204xf32, #tpu.memory_space<smem>>
    %1019 = vector.broadcast %1018 : f32 to vector<16x16xf32>
    %1020 = arith.mulf %1017, %1019 : vector<16x16xf32>
    %1021 = arith.addf %1015, %1020 : vector<16x16xf32>
    %1022 = vector.extract_strided_slice %978 {offsets = [0, 0, 0], sizes = [1, 16, 16], strides = [1, 1, 1]} : vector<2x16x16xf32> to vector<1x16x16xf32>
    %1023 = vector.shape_cast %1022 : vector<1x16x16xf32> to vector<16x16xf32>
    %c147 = arith.constant 147 : index
    %1024 = memref.load %arg1[%c147] : memref<204xf32, #tpu.memory_space<smem>>
    %1025 = vector.broadcast %1024 : f32 to vector<16x16xf32>
    %1026 = arith.mulf %1023, %1025 : vector<16x16xf32>
    %1027 = arith.addf %1021, %1026 : vector<16x16xf32>
    %1028 = vector.extract_strided_slice %978 {offsets = [1, 0, 0], sizes = [1, 16, 16], strides = [1, 1, 1]} : vector<2x16x16xf32> to vector<1x16x16xf32>
    %1029 = vector.shape_cast %1028 : vector<1x16x16xf32> to vector<16x16xf32>
    %c156 = arith.constant 156 : index
    %1030 = memref.load %arg1[%c156] : memref<204xf32, #tpu.memory_space<smem>>
    %1031 = vector.broadcast %1030 : f32 to vector<16x16xf32>
    %1032 = arith.mulf %1029, %1031 : vector<16x16xf32>
    %1033 = arith.addf %1027, %1032 : vector<16x16xf32>
    %1034 = vector.extract_strided_slice %979 {offsets = [0, 0, 0], sizes = [1, 16, 16], strides = [1, 1, 1]} : vector<2x16x16xf32> to vector<1x16x16xf32>
    %1035 = vector.shape_cast %1034 : vector<1x16x16xf32> to vector<16x16xf32>
    %c148 = arith.constant 148 : index
    %1036 = memref.load %arg1[%c148] : memref<204xf32, #tpu.memory_space<smem>>
    %1037 = vector.broadcast %1036 : f32 to vector<16x16xf32>
    %1038 = arith.mulf %1035, %1037 : vector<16x16xf32>
    %1039 = arith.addf %1033, %1038 : vector<16x16xf32>
    %1040 = vector.extract_strided_slice %979 {offsets = [1, 0, 0], sizes = [1, 16, 16], strides = [1, 1, 1]} : vector<2x16x16xf32> to vector<1x16x16xf32>
    %1041 = vector.shape_cast %1040 : vector<1x16x16xf32> to vector<16x16xf32>
    %c157 = arith.constant 157 : index
    %1042 = memref.load %arg1[%c157] : memref<204xf32, #tpu.memory_space<smem>>
    %1043 = vector.broadcast %1042 : f32 to vector<16x16xf32>
    %1044 = arith.mulf %1041, %1043 : vector<16x16xf32>
    %1045 = arith.addf %1039, %1044 : vector<16x16xf32>
    %1046 = vector.extract_strided_slice %980 {offsets = [0, 0, 0], sizes = [1, 16, 16], strides = [1, 1, 1]} : vector<2x16x16xf32> to vector<1x16x16xf32>
    %1047 = vector.shape_cast %1046 : vector<1x16x16xf32> to vector<16x16xf32>
    %c149 = arith.constant 149 : index
    %1048 = memref.load %arg1[%c149] : memref<204xf32, #tpu.memory_space<smem>>
    %1049 = vector.broadcast %1048 : f32 to vector<16x16xf32>
    %1050 = arith.mulf %1047, %1049 : vector<16x16xf32>
    %1051 = arith.addf %1045, %1050 : vector<16x16xf32>
    %1052 = vector.extract_strided_slice %980 {offsets = [1, 0, 0], sizes = [1, 16, 16], strides = [1, 1, 1]} : vector<2x16x16xf32> to vector<1x16x16xf32>
    %1053 = vector.shape_cast %1052 : vector<1x16x16xf32> to vector<16x16xf32>
    %c158 = arith.constant 158 : index
    %1054 = memref.load %arg1[%c158] : memref<204xf32, #tpu.memory_space<smem>>
    %1055 = vector.broadcast %1054 : f32 to vector<16x16xf32>
    %1056 = arith.mulf %1053, %1055 : vector<16x16xf32>
    %1057 = arith.addf %1051, %1056 : vector<16x16xf32>
    %1058 = vector.extract_strided_slice %981 {offsets = [0, 0, 0], sizes = [1, 16, 16], strides = [1, 1, 1]} : vector<2x16x16xf32> to vector<1x16x16xf32>
    %1059 = vector.shape_cast %1058 : vector<1x16x16xf32> to vector<16x16xf32>
    %c150 = arith.constant 150 : index
    %1060 = memref.load %arg1[%c150] : memref<204xf32, #tpu.memory_space<smem>>
    %1061 = vector.broadcast %1060 : f32 to vector<16x16xf32>
    %1062 = arith.mulf %1059, %1061 : vector<16x16xf32>
    %1063 = arith.addf %1057, %1062 : vector<16x16xf32>
    %1064 = vector.extract_strided_slice %981 {offsets = [1, 0, 0], sizes = [1, 16, 16], strides = [1, 1, 1]} : vector<2x16x16xf32> to vector<1x16x16xf32>
    %1065 = vector.shape_cast %1064 : vector<1x16x16xf32> to vector<16x16xf32>
    %c159 = arith.constant 159 : index
    %1066 = memref.load %arg1[%c159] : memref<204xf32, #tpu.memory_space<smem>>
    %1067 = vector.broadcast %1066 : f32 to vector<16x16xf32>
    %1068 = arith.mulf %1065, %1067 : vector<16x16xf32>
    %1069 = arith.addf %1063, %1068 : vector<16x16xf32>
    %1070 = vector.extract_strided_slice %982 {offsets = [0, 0, 0], sizes = [1, 16, 16], strides = [1, 1, 1]} : vector<2x16x16xf32> to vector<1x16x16xf32>
    %1071 = vector.shape_cast %1070 : vector<1x16x16xf32> to vector<16x16xf32>
    %c151 = arith.constant 151 : index
    %1072 = memref.load %arg1[%c151] : memref<204xf32, #tpu.memory_space<smem>>
    %1073 = vector.broadcast %1072 : f32 to vector<16x16xf32>
    %1074 = arith.mulf %1071, %1073 : vector<16x16xf32>
    %1075 = arith.addf %1069, %1074 : vector<16x16xf32>
    %1076 = vector.extract_strided_slice %982 {offsets = [1, 0, 0], sizes = [1, 16, 16], strides = [1, 1, 1]} : vector<2x16x16xf32> to vector<1x16x16xf32>
    %1077 = vector.shape_cast %1076 : vector<1x16x16xf32> to vector<16x16xf32>
    %c160 = arith.constant 160 : index
    %1078 = memref.load %arg1[%c160] : memref<204xf32, #tpu.memory_space<smem>>
    %1079 = vector.broadcast %1078 : f32 to vector<16x16xf32>
    %1080 = arith.mulf %1077, %1079 : vector<16x16xf32>
    %1081 = arith.addf %1075, %1080 : vector<16x16xf32>
    %1082 = vector.extract_strided_slice %983 {offsets = [0, 0, 0], sizes = [1, 16, 16], strides = [1, 1, 1]} : vector<2x16x16xf32> to vector<1x16x16xf32>
    %1083 = vector.shape_cast %1082 : vector<1x16x16xf32> to vector<16x16xf32>
    %c152 = arith.constant 152 : index
    %1084 = memref.load %arg1[%c152] : memref<204xf32, #tpu.memory_space<smem>>
    %1085 = vector.broadcast %1084 : f32 to vector<16x16xf32>
    %1086 = arith.mulf %1083, %1085 : vector<16x16xf32>
    %1087 = arith.addf %1081, %1086 : vector<16x16xf32>
    %1088 = vector.extract_strided_slice %983 {offsets = [1, 0, 0], sizes = [1, 16, 16], strides = [1, 1, 1]} : vector<2x16x16xf32> to vector<1x16x16xf32>
    %1089 = vector.shape_cast %1088 : vector<1x16x16xf32> to vector<16x16xf32>
    %c161 = arith.constant 161 : index
    %1090 = memref.load %arg1[%c161] : memref<204xf32, #tpu.memory_space<smem>>
    %1091 = vector.broadcast %1090 : f32 to vector<16x16xf32>
    %1092 = arith.mulf %1089, %1091 : vector<16x16xf32>
    %1093 = arith.addf %1087, %1092 : vector<16x16xf32>
    %cst_186 = arith.constant 0.000000e+00 : f32
    %1094 = vector.broadcast %cst_186 : f32 to vector<16x16xf32>
    %1095 = arith.cmpf oge, %1093, %1094 : vector<16x16xf32>
    %cst_187 = arith.constant 3.000000e-01 : f32
    %1096 = vector.broadcast %cst_187 : f32 to vector<16x16xf32>
    %1097 = arith.mulf %1096, %1093 : vector<16x16xf32>
    %1098 = arith.select %1095, %1093, %1097 : vector<16x16xi1>, vector<16x16xf32>
    %c9_188 = arith.constant 9 : index
    %1099 = memref.load %arg2[%c9_188] : memref<14xf32, #tpu.memory_space<smem>>
    %1100 = vector.broadcast %1099 : f32 to vector<16x16xf32>
    %1101 = vector.extract_strided_slice %975 {offsets = [0, 0, 0], sizes = [1, 16, 16], strides = [1, 1, 1]} : vector<2x16x16xf32> to vector<1x16x16xf32>
    %1102 = vector.shape_cast %1101 : vector<1x16x16xf32> to vector<16x16xf32>
    %c162 = arith.constant 162 : index
    %1103 = memref.load %arg1[%c162] : memref<204xf32, #tpu.memory_space<smem>>
    %1104 = vector.broadcast %1103 : f32 to vector<16x16xf32>
    %1105 = arith.mulf %1102, %1104 : vector<16x16xf32>
    %1106 = arith.addf %1100, %1105 : vector<16x16xf32>
    %1107 = vector.extract_strided_slice %975 {offsets = [1, 0, 0], sizes = [1, 16, 16], strides = [1, 1, 1]} : vector<2x16x16xf32> to vector<1x16x16xf32>
    %1108 = vector.shape_cast %1107 : vector<1x16x16xf32> to vector<16x16xf32>
    %c171 = arith.constant 171 : index
    %1109 = memref.load %arg1[%c171] : memref<204xf32, #tpu.memory_space<smem>>
    %1110 = vector.broadcast %1109 : f32 to vector<16x16xf32>
    %1111 = arith.mulf %1108, %1110 : vector<16x16xf32>
    %1112 = arith.addf %1106, %1111 : vector<16x16xf32>
    %1113 = vector.extract_strided_slice %976 {offsets = [0, 0, 0], sizes = [1, 16, 16], strides = [1, 1, 1]} : vector<2x16x16xf32> to vector<1x16x16xf32>
    %1114 = vector.shape_cast %1113 : vector<1x16x16xf32> to vector<16x16xf32>
    %c163 = arith.constant 163 : index
    %1115 = memref.load %arg1[%c163] : memref<204xf32, #tpu.memory_space<smem>>
    %1116 = vector.broadcast %1115 : f32 to vector<16x16xf32>
    %1117 = arith.mulf %1114, %1116 : vector<16x16xf32>
    %1118 = arith.addf %1112, %1117 : vector<16x16xf32>
    %1119 = vector.extract_strided_slice %976 {offsets = [1, 0, 0], sizes = [1, 16, 16], strides = [1, 1, 1]} : vector<2x16x16xf32> to vector<1x16x16xf32>
    %1120 = vector.shape_cast %1119 : vector<1x16x16xf32> to vector<16x16xf32>
    %c172 = arith.constant 172 : index
    %1121 = memref.load %arg1[%c172] : memref<204xf32, #tpu.memory_space<smem>>
    %1122 = vector.broadcast %1121 : f32 to vector<16x16xf32>
    %1123 = arith.mulf %1120, %1122 : vector<16x16xf32>
    %1124 = arith.addf %1118, %1123 : vector<16x16xf32>
    %1125 = vector.extract_strided_slice %977 {offsets = [0, 0, 0], sizes = [1, 16, 16], strides = [1, 1, 1]} : vector<2x16x16xf32> to vector<1x16x16xf32>
    %1126 = vector.shape_cast %1125 : vector<1x16x16xf32> to vector<16x16xf32>
    %c164 = arith.constant 164 : index
    %1127 = memref.load %arg1[%c164] : memref<204xf32, #tpu.memory_space<smem>>
    %1128 = vector.broadcast %1127 : f32 to vector<16x16xf32>
    %1129 = arith.mulf %1126, %1128 : vector<16x16xf32>
    %1130 = arith.addf %1124, %1129 : vector<16x16xf32>
    %1131 = vector.extract_strided_slice %977 {offsets = [1, 0, 0], sizes = [1, 16, 16], strides = [1, 1, 1]} : vector<2x16x16xf32> to vector<1x16x16xf32>
    %1132 = vector.shape_cast %1131 : vector<1x16x16xf32> to vector<16x16xf32>
    %c173 = arith.constant 173 : index
    %1133 = memref.load %arg1[%c173] : memref<204xf32, #tpu.memory_space<smem>>
    %1134 = vector.broadcast %1133 : f32 to vector<16x16xf32>
    %1135 = arith.mulf %1132, %1134 : vector<16x16xf32>
    %1136 = arith.addf %1130, %1135 : vector<16x16xf32>
    %1137 = vector.extract_strided_slice %978 {offsets = [0, 0, 0], sizes = [1, 16, 16], strides = [1, 1, 1]} : vector<2x16x16xf32> to vector<1x16x16xf32>
    %1138 = vector.shape_cast %1137 : vector<1x16x16xf32> to vector<16x16xf32>
    %c165 = arith.constant 165 : index
    %1139 = memref.load %arg1[%c165] : memref<204xf32, #tpu.memory_space<smem>>
    %1140 = vector.broadcast %1139 : f32 to vector<16x16xf32>
    %1141 = arith.mulf %1138, %1140 : vector<16x16xf32>
    %1142 = arith.addf %1136, %1141 : vector<16x16xf32>
    %1143 = vector.extract_strided_slice %978 {offsets = [1, 0, 0], sizes = [1, 16, 16], strides = [1, 1, 1]} : vector<2x16x16xf32> to vector<1x16x16xf32>
    %1144 = vector.shape_cast %1143 : vector<1x16x16xf32> to vector<16x16xf32>
    %c174 = arith.constant 174 : index
    %1145 = memref.load %arg1[%c174] : memref<204xf32, #tpu.memory_space<smem>>
    %1146 = vector.broadcast %1145 : f32 to vector<16x16xf32>
    %1147 = arith.mulf %1144, %1146 : vector<16x16xf32>
    %1148 = arith.addf %1142, %1147 : vector<16x16xf32>
    %1149 = vector.extract_strided_slice %979 {offsets = [0, 0, 0], sizes = [1, 16, 16], strides = [1, 1, 1]} : vector<2x16x16xf32> to vector<1x16x16xf32>
    %1150 = vector.shape_cast %1149 : vector<1x16x16xf32> to vector<16x16xf32>
    %c166 = arith.constant 166 : index
    %1151 = memref.load %arg1[%c166] : memref<204xf32, #tpu.memory_space<smem>>
    %1152 = vector.broadcast %1151 : f32 to vector<16x16xf32>
    %1153 = arith.mulf %1150, %1152 : vector<16x16xf32>
    %1154 = arith.addf %1148, %1153 : vector<16x16xf32>
    %1155 = vector.extract_strided_slice %979 {offsets = [1, 0, 0], sizes = [1, 16, 16], strides = [1, 1, 1]} : vector<2x16x16xf32> to vector<1x16x16xf32>
    %1156 = vector.shape_cast %1155 : vector<1x16x16xf32> to vector<16x16xf32>
    %c175 = arith.constant 175 : index
    %1157 = memref.load %arg1[%c175] : memref<204xf32, #tpu.memory_space<smem>>
    %1158 = vector.broadcast %1157 : f32 to vector<16x16xf32>
    %1159 = arith.mulf %1156, %1158 : vector<16x16xf32>
    %1160 = arith.addf %1154, %1159 : vector<16x16xf32>
    %1161 = vector.extract_strided_slice %980 {offsets = [0, 0, 0], sizes = [1, 16, 16], strides = [1, 1, 1]} : vector<2x16x16xf32> to vector<1x16x16xf32>
    %1162 = vector.shape_cast %1161 : vector<1x16x16xf32> to vector<16x16xf32>
    %c167 = arith.constant 167 : index
    %1163 = memref.load %arg1[%c167] : memref<204xf32, #tpu.memory_space<smem>>
    %1164 = vector.broadcast %1163 : f32 to vector<16x16xf32>
    %1165 = arith.mulf %1162, %1164 : vector<16x16xf32>
    %1166 = arith.addf %1160, %1165 : vector<16x16xf32>
    %1167 = vector.extract_strided_slice %980 {offsets = [1, 0, 0], sizes = [1, 16, 16], strides = [1, 1, 1]} : vector<2x16x16xf32> to vector<1x16x16xf32>
    %1168 = vector.shape_cast %1167 : vector<1x16x16xf32> to vector<16x16xf32>
    %c176 = arith.constant 176 : index
    %1169 = memref.load %arg1[%c176] : memref<204xf32, #tpu.memory_space<smem>>
    %1170 = vector.broadcast %1169 : f32 to vector<16x16xf32>
    %1171 = arith.mulf %1168, %1170 : vector<16x16xf32>
    %1172 = arith.addf %1166, %1171 : vector<16x16xf32>
    %1173 = vector.extract_strided_slice %981 {offsets = [0, 0, 0], sizes = [1, 16, 16], strides = [1, 1, 1]} : vector<2x16x16xf32> to vector<1x16x16xf32>
    %1174 = vector.shape_cast %1173 : vector<1x16x16xf32> to vector<16x16xf32>
    %c168 = arith.constant 168 : index
    %1175 = memref.load %arg1[%c168] : memref<204xf32, #tpu.memory_space<smem>>
    %1176 = vector.broadcast %1175 : f32 to vector<16x16xf32>
    %1177 = arith.mulf %1174, %1176 : vector<16x16xf32>
    %1178 = arith.addf %1172, %1177 : vector<16x16xf32>
    %1179 = vector.extract_strided_slice %981 {offsets = [1, 0, 0], sizes = [1, 16, 16], strides = [1, 1, 1]} : vector<2x16x16xf32> to vector<1x16x16xf32>
    %1180 = vector.shape_cast %1179 : vector<1x16x16xf32> to vector<16x16xf32>
    %c177 = arith.constant 177 : index
    %1181 = memref.load %arg1[%c177] : memref<204xf32, #tpu.memory_space<smem>>
    %1182 = vector.broadcast %1181 : f32 to vector<16x16xf32>
    %1183 = arith.mulf %1180, %1182 : vector<16x16xf32>
    %1184 = arith.addf %1178, %1183 : vector<16x16xf32>
    %1185 = vector.extract_strided_slice %982 {offsets = [0, 0, 0], sizes = [1, 16, 16], strides = [1, 1, 1]} : vector<2x16x16xf32> to vector<1x16x16xf32>
    %1186 = vector.shape_cast %1185 : vector<1x16x16xf32> to vector<16x16xf32>
    %c169 = arith.constant 169 : index
    %1187 = memref.load %arg1[%c169] : memref<204xf32, #tpu.memory_space<smem>>
    %1188 = vector.broadcast %1187 : f32 to vector<16x16xf32>
    %1189 = arith.mulf %1186, %1188 : vector<16x16xf32>
    %1190 = arith.addf %1184, %1189 : vector<16x16xf32>
    %1191 = vector.extract_strided_slice %982 {offsets = [1, 0, 0], sizes = [1, 16, 16], strides = [1, 1, 1]} : vector<2x16x16xf32> to vector<1x16x16xf32>
    %1192 = vector.shape_cast %1191 : vector<1x16x16xf32> to vector<16x16xf32>
    %c178 = arith.constant 178 : index
    %1193 = memref.load %arg1[%c178] : memref<204xf32, #tpu.memory_space<smem>>
    %1194 = vector.broadcast %1193 : f32 to vector<16x16xf32>
    %1195 = arith.mulf %1192, %1194 : vector<16x16xf32>
    %1196 = arith.addf %1190, %1195 : vector<16x16xf32>
    %1197 = vector.extract_strided_slice %983 {offsets = [0, 0, 0], sizes = [1, 16, 16], strides = [1, 1, 1]} : vector<2x16x16xf32> to vector<1x16x16xf32>
    %1198 = vector.shape_cast %1197 : vector<1x16x16xf32> to vector<16x16xf32>
    %c170 = arith.constant 170 : index
    %1199 = memref.load %arg1[%c170] : memref<204xf32, #tpu.memory_space<smem>>
    %1200 = vector.broadcast %1199 : f32 to vector<16x16xf32>
    %1201 = arith.mulf %1198, %1200 : vector<16x16xf32>
    %1202 = arith.addf %1196, %1201 : vector<16x16xf32>
    %1203 = vector.extract_strided_slice %983 {offsets = [1, 0, 0], sizes = [1, 16, 16], strides = [1, 1, 1]} : vector<2x16x16xf32> to vector<1x16x16xf32>
    %1204 = vector.shape_cast %1203 : vector<1x16x16xf32> to vector<16x16xf32>
    %c179 = arith.constant 179 : index
    %1205 = memref.load %arg1[%c179] : memref<204xf32, #tpu.memory_space<smem>>
    %1206 = vector.broadcast %1205 : f32 to vector<16x16xf32>
    %1207 = arith.mulf %1204, %1206 : vector<16x16xf32>
    %1208 = arith.addf %1202, %1207 : vector<16x16xf32>
    %cst_189 = arith.constant 0.000000e+00 : f32
    %1209 = vector.broadcast %cst_189 : f32 to vector<16x16xf32>
    %1210 = arith.cmpf oge, %1208, %1209 : vector<16x16xf32>
    %cst_190 = arith.constant 3.000000e-01 : f32
    %1211 = vector.broadcast %cst_190 : f32 to vector<16x16xf32>
    %1212 = arith.mulf %1211, %1208 : vector<16x16xf32>
    %1213 = arith.select %1210, %1208, %1212 : vector<16x16xi1>, vector<16x16xf32>
    %c0_191 = arith.constant 0 : index
    %c4_192 = arith.constant 4 : index
    %c4_193 = arith.constant 4 : index
    %1214 = vector.load %arg12[%c0_191, %c4_192, %c4_193] : memref<2x24x24xf32, #tpu.memory_space<vmem>>, vector<1x16x16xf32>
    %1215 = vector.shape_cast %1214 : vector<1x16x16xf32> to vector<16x16xf32>
    %1216 = vector.shape_cast %1098 : vector<16x16xf32> to vector<1x16x16xf32>
    tpu.vector_store %arg12[%c0_191, %c4_192, %c4_193], %1216 {strides = array<i32>} : memref<2x24x24xf32, #tpu.memory_space<vmem>>, vector<1x16x16xf32>,
    %c1_194 = arith.constant 1 : index
    %c4_195 = arith.constant 4 : index
    %c4_196 = arith.constant 4 : index
    %1217 = vector.load %arg12[%c1_194, %c4_195, %c4_196] : memref<2x24x24xf32, #tpu.memory_space<vmem>>, vector<1x16x16xf32>
    %1218 = vector.shape_cast %1217 : vector<1x16x16xf32> to vector<16x16xf32>
    %1219 = vector.shape_cast %1213 : vector<16x16xf32> to vector<1x16x16xf32>
    tpu.vector_store %arg12[%c1_194, %c4_195, %c4_196], %1219 {strides = array<i32>} : memref<2x24x24xf32, #tpu.memory_space<vmem>>, vector<1x16x16xf32>,
    %c0_197 = arith.constant 0 : index
    %c4_198 = arith.constant 4 : index
    %c3_199 = arith.constant 3 : index
    %1220 = vector.load %arg12[%c0_197, %c4_198, %c3_199] : memref<2x24x24xf32, #tpu.memory_space<vmem>>, vector<2x16x16xf32>
    %c0_200 = arith.constant 0 : index
    %c4_201 = arith.constant 4 : index
    %c4_202 = arith.constant 4 : index
    %1221 = vector.load %arg12[%c0_200, %c4_201, %c4_202] : memref<2x24x24xf32, #tpu.memory_space<vmem>>, vector<2x16x16xf32>
    %c0_203 = arith.constant 0 : index
    %c4_204 = arith.constant 4 : index
    %c5_205 = arith.constant 5 : index
    %1222 = vector.load %arg12[%c0_203, %c4_204, %c5_205] : memref<2x24x24xf32, #tpu.memory_space<vmem>>, vector<2x16x16xf32>
    %c10_206 = arith.constant 10 : index
    %1223 = memref.load %arg2[%c10_206] : memref<14xf32, #tpu.memory_space<smem>>
    %1224 = vector.broadcast %1223 : f32 to vector<16x16xf32>
    %1225 = vector.extract_strided_slice %1220 {offsets = [0, 0, 0], sizes = [1, 16, 16], strides = [1, 1, 1]} : vector<2x16x16xf32> to vector<1x16x16xf32>
    %1226 = vector.shape_cast %1225 : vector<1x16x16xf32> to vector<16x16xf32>
    %c180 = arith.constant 180 : index
    %1227 = memref.load %arg1[%c180] : memref<204xf32, #tpu.memory_space<smem>>
    %1228 = vector.broadcast %1227 : f32 to vector<16x16xf32>
    %1229 = arith.mulf %1226, %1228 : vector<16x16xf32>
    %1230 = arith.addf %1224, %1229 : vector<16x16xf32>
    %1231 = vector.extract_strided_slice %1220 {offsets = [1, 0, 0], sizes = [1, 16, 16], strides = [1, 1, 1]} : vector<2x16x16xf32> to vector<1x16x16xf32>
    %1232 = vector.shape_cast %1231 : vector<1x16x16xf32> to vector<16x16xf32>
    %c183 = arith.constant 183 : index
    %1233 = memref.load %arg1[%c183] : memref<204xf32, #tpu.memory_space<smem>>
    %1234 = vector.broadcast %1233 : f32 to vector<16x16xf32>
    %1235 = arith.mulf %1232, %1234 : vector<16x16xf32>
    %1236 = arith.addf %1230, %1235 : vector<16x16xf32>
    %1237 = vector.extract_strided_slice %1221 {offsets = [0, 0, 0], sizes = [1, 16, 16], strides = [1, 1, 1]} : vector<2x16x16xf32> to vector<1x16x16xf32>
    %1238 = vector.shape_cast %1237 : vector<1x16x16xf32> to vector<16x16xf32>
    %c181 = arith.constant 181 : index
    %1239 = memref.load %arg1[%c181] : memref<204xf32, #tpu.memory_space<smem>>
    %1240 = vector.broadcast %1239 : f32 to vector<16x16xf32>
    %1241 = arith.mulf %1238, %1240 : vector<16x16xf32>
    %1242 = arith.addf %1236, %1241 : vector<16x16xf32>
    %1243 = vector.extract_strided_slice %1221 {offsets = [1, 0, 0], sizes = [1, 16, 16], strides = [1, 1, 1]} : vector<2x16x16xf32> to vector<1x16x16xf32>
    %1244 = vector.shape_cast %1243 : vector<1x16x16xf32> to vector<16x16xf32>
    %c184 = arith.constant 184 : index
    %1245 = memref.load %arg1[%c184] : memref<204xf32, #tpu.memory_space<smem>>
    %1246 = vector.broadcast %1245 : f32 to vector<16x16xf32>
    %1247 = arith.mulf %1244, %1246 : vector<16x16xf32>
    %1248 = arith.addf %1242, %1247 : vector<16x16xf32>
    %1249 = vector.extract_strided_slice %1222 {offsets = [0, 0, 0], sizes = [1, 16, 16], strides = [1, 1, 1]} : vector<2x16x16xf32> to vector<1x16x16xf32>
    %1250 = vector.shape_cast %1249 : vector<1x16x16xf32> to vector<16x16xf32>
    %c182 = arith.constant 182 : index
    %1251 = memref.load %arg1[%c182] : memref<204xf32, #tpu.memory_space<smem>>
    %1252 = vector.broadcast %1251 : f32 to vector<16x16xf32>
    %1253 = arith.mulf %1250, %1252 : vector<16x16xf32>
    %1254 = arith.addf %1248, %1253 : vector<16x16xf32>
    %1255 = vector.extract_strided_slice %1222 {offsets = [1, 0, 0], sizes = [1, 16, 16], strides = [1, 1, 1]} : vector<2x16x16xf32> to vector<1x16x16xf32>
    %1256 = vector.shape_cast %1255 : vector<1x16x16xf32> to vector<16x16xf32>
    %c185 = arith.constant 185 : index
    %1257 = memref.load %arg1[%c185] : memref<204xf32, #tpu.memory_space<smem>>
    %1258 = vector.broadcast %1257 : f32 to vector<16x16xf32>
    %1259 = arith.mulf %1256, %1258 : vector<16x16xf32>
    %1260 = arith.addf %1254, %1259 : vector<16x16xf32>
    %cst_207 = arith.constant 0.000000e+00 : f32
    %1261 = vector.broadcast %cst_207 : f32 to vector<16x16xf32>
    %1262 = arith.cmpf oge, %1260, %1261 : vector<16x16xf32>
    %cst_208 = arith.constant 3.000000e-01 : f32
    %1263 = vector.broadcast %cst_208 : f32 to vector<16x16xf32>
    %1264 = arith.mulf %1263, %1260 : vector<16x16xf32>
    %1265 = arith.select %1262, %1260, %1264 : vector<16x16xi1>, vector<16x16xf32>
    %c11_209 = arith.constant 11 : index
    %1266 = memref.load %arg2[%c11_209] : memref<14xf32, #tpu.memory_space<smem>>
    %1267 = vector.broadcast %1266 : f32 to vector<16x16xf32>
    %1268 = vector.extract_strided_slice %1220 {offsets = [0, 0, 0], sizes = [1, 16, 16], strides = [1, 1, 1]} : vector<2x16x16xf32> to vector<1x16x16xf32>
    %1269 = vector.shape_cast %1268 : vector<1x16x16xf32> to vector<16x16xf32>
    %c186 = arith.constant 186 : index
    %1270 = memref.load %arg1[%c186] : memref<204xf32, #tpu.memory_space<smem>>
    %1271 = vector.broadcast %1270 : f32 to vector<16x16xf32>
    %1272 = arith.mulf %1269, %1271 : vector<16x16xf32>
    %1273 = arith.addf %1267, %1272 : vector<16x16xf32>
    %1274 = vector.extract_strided_slice %1220 {offsets = [1, 0, 0], sizes = [1, 16, 16], strides = [1, 1, 1]} : vector<2x16x16xf32> to vector<1x16x16xf32>
    %1275 = vector.shape_cast %1274 : vector<1x16x16xf32> to vector<16x16xf32>
    %c189 = arith.constant 189 : index
    %1276 = memref.load %arg1[%c189] : memref<204xf32, #tpu.memory_space<smem>>
    %1277 = vector.broadcast %1276 : f32 to vector<16x16xf32>
    %1278 = arith.mulf %1275, %1277 : vector<16x16xf32>
    %1279 = arith.addf %1273, %1278 : vector<16x16xf32>
    %1280 = vector.extract_strided_slice %1221 {offsets = [0, 0, 0], sizes = [1, 16, 16], strides = [1, 1, 1]} : vector<2x16x16xf32> to vector<1x16x16xf32>
    %1281 = vector.shape_cast %1280 : vector<1x16x16xf32> to vector<16x16xf32>
    %c187 = arith.constant 187 : index
    %1282 = memref.load %arg1[%c187] : memref<204xf32, #tpu.memory_space<smem>>
    %1283 = vector.broadcast %1282 : f32 to vector<16x16xf32>
    %1284 = arith.mulf %1281, %1283 : vector<16x16xf32>
    %1285 = arith.addf %1279, %1284 : vector<16x16xf32>
    %1286 = vector.extract_strided_slice %1221 {offsets = [1, 0, 0], sizes = [1, 16, 16], strides = [1, 1, 1]} : vector<2x16x16xf32> to vector<1x16x16xf32>
    %1287 = vector.shape_cast %1286 : vector<1x16x16xf32> to vector<16x16xf32>
    %c190 = arith.constant 190 : index
    %1288 = memref.load %arg1[%c190] : memref<204xf32, #tpu.memory_space<smem>>
    %1289 = vector.broadcast %1288 : f32 to vector<16x16xf32>
    %1290 = arith.mulf %1287, %1289 : vector<16x16xf32>
    %1291 = arith.addf %1285, %1290 : vector<16x16xf32>
    %1292 = vector.extract_strided_slice %1222 {offsets = [0, 0, 0], sizes = [1, 16, 16], strides = [1, 1, 1]} : vector<2x16x16xf32> to vector<1x16x16xf32>
    %1293 = vector.shape_cast %1292 : vector<1x16x16xf32> to vector<16x16xf32>
    %c188 = arith.constant 188 : index
    %1294 = memref.load %arg1[%c188] : memref<204xf32, #tpu.memory_space<smem>>
    %1295 = vector.broadcast %1294 : f32 to vector<16x16xf32>
    %1296 = arith.mulf %1293, %1295 : vector<16x16xf32>
    %1297 = arith.addf %1291, %1296 : vector<16x16xf32>
    %1298 = vector.extract_strided_slice %1222 {offsets = [1, 0, 0], sizes = [1, 16, 16], strides = [1, 1, 1]} : vector<2x16x16xf32> to vector<1x16x16xf32>
    %1299 = vector.shape_cast %1298 : vector<1x16x16xf32> to vector<16x16xf32>
    %c191 = arith.constant 191 : index
    %1300 = memref.load %arg1[%c191] : memref<204xf32, #tpu.memory_space<smem>>
    %1301 = vector.broadcast %1300 : f32 to vector<16x16xf32>
    %1302 = arith.mulf %1299, %1301 : vector<16x16xf32>
    %1303 = arith.addf %1297, %1302 : vector<16x16xf32>
    %cst_210 = arith.constant 0.000000e+00 : f32
    %1304 = vector.broadcast %cst_210 : f32 to vector<16x16xf32>
    %1305 = arith.cmpf oge, %1303, %1304 : vector<16x16xf32>
    %cst_211 = arith.constant 3.000000e-01 : f32
    %1306 = vector.broadcast %cst_211 : f32 to vector<16x16xf32>
    %1307 = arith.mulf %1306, %1303 : vector<16x16xf32>
    %1308 = arith.select %1305, %1303, %1307 : vector<16x16xi1>, vector<16x16xf32>
    %c0_212 = arith.constant 0 : index
    %c4_213 = arith.constant 4 : index
    %c4_214 = arith.constant 4 : index
    %1309 = vector.load %arg12[%c0_212, %c4_213, %c4_214] : memref<2x24x24xf32, #tpu.memory_space<vmem>>, vector<1x16x16xf32>
    %1310 = vector.shape_cast %1309 : vector<1x16x16xf32> to vector<16x16xf32>
    %1311 = vector.shape_cast %1265 : vector<16x16xf32> to vector<1x16x16xf32>
    tpu.vector_store %arg12[%c0_212, %c4_213, %c4_214], %1311 {strides = array<i32>} : memref<2x24x24xf32, #tpu.memory_space<vmem>>, vector<1x16x16xf32>,
    %c1_215 = arith.constant 1 : index
    %c4_216 = arith.constant 4 : index
    %c4_217 = arith.constant 4 : index
    %1312 = vector.load %arg12[%c1_215, %c4_216, %c4_217] : memref<2x24x24xf32, #tpu.memory_space<vmem>>, vector<1x16x16xf32>
    %1313 = vector.shape_cast %1312 : vector<1x16x16xf32> to vector<16x16xf32>
    %1314 = vector.shape_cast %1308 : vector<16x16xf32> to vector<1x16x16xf32>
    tpu.vector_store %arg12[%c1_215, %c4_216, %c4_217], %1314 {strides = array<i32>} : memref<2x24x24xf32, #tpu.memory_space<vmem>>, vector<1x16x16xf32>,
    %c0_218 = arith.constant 0 : index
    %c3_219 = arith.constant 3 : index
    %c4_220 = arith.constant 4 : index
    %1315 = vector.load %arg12[%c0_218, %c3_219, %c4_220] : memref<2x24x24xf32, #tpu.memory_space<vmem>>, vector<2x16x16xf32>
    %c0_221 = arith.constant 0 : index
    %c4_222 = arith.constant 4 : index
    %c4_223 = arith.constant 4 : index
    %1316 = vector.load %arg12[%c0_221, %c4_222, %c4_223] : memref<2x24x24xf32, #tpu.memory_space<vmem>>, vector<2x16x16xf32>
    %c0_224 = arith.constant 0 : index
    %c5_225 = arith.constant 5 : index
    %c4_226 = arith.constant 4 : index
    %1317 = vector.load %arg12[%c0_224, %c5_225, %c4_226] : memref<2x24x24xf32, #tpu.memory_space<vmem>>, vector<2x16x16xf32>
    %c12_227 = arith.constant 12 : index
    %1318 = memref.load %arg2[%c12_227] : memref<14xf32, #tpu.memory_space<smem>>
    %1319 = vector.broadcast %1318 : f32 to vector<16x16xf32>
    %1320 = vector.extract_strided_slice %1315 {offsets = [0, 0, 0], sizes = [1, 16, 16], strides = [1, 1, 1]} : vector<2x16x16xf32> to vector<1x16x16xf32>
    %1321 = vector.shape_cast %1320 : vector<1x16x16xf32> to vector<16x16xf32>
    %c192 = arith.constant 192 : index
    %1322 = memref.load %arg1[%c192] : memref<204xf32, #tpu.memory_space<smem>>
    %1323 = vector.broadcast %1322 : f32 to vector<16x16xf32>
    %1324 = arith.mulf %1321, %1323 : vector<16x16xf32>
    %1325 = arith.addf %1319, %1324 : vector<16x16xf32>
    %1326 = vector.extract_strided_slice %1315 {offsets = [1, 0, 0], sizes = [1, 16, 16], strides = [1, 1, 1]} : vector<2x16x16xf32> to vector<1x16x16xf32>
    %1327 = vector.shape_cast %1326 : vector<1x16x16xf32> to vector<16x16xf32>
    %c195 = arith.constant 195 : index
    %1328 = memref.load %arg1[%c195] : memref<204xf32, #tpu.memory_space<smem>>
    %1329 = vector.broadcast %1328 : f32 to vector<16x16xf32>
    %1330 = arith.mulf %1327, %1329 : vector<16x16xf32>
    %1331 = arith.addf %1325, %1330 : vector<16x16xf32>
    %1332 = vector.extract_strided_slice %1316 {offsets = [0, 0, 0], sizes = [1, 16, 16], strides = [1, 1, 1]} : vector<2x16x16xf32> to vector<1x16x16xf32>
    %1333 = vector.shape_cast %1332 : vector<1x16x16xf32> to vector<16x16xf32>
    %c193 = arith.constant 193 : index
    %1334 = memref.load %arg1[%c193] : memref<204xf32, #tpu.memory_space<smem>>
    %1335 = vector.broadcast %1334 : f32 to vector<16x16xf32>
    %1336 = arith.mulf %1333, %1335 : vector<16x16xf32>
    %1337 = arith.addf %1331, %1336 : vector<16x16xf32>
    %1338 = vector.extract_strided_slice %1316 {offsets = [1, 0, 0], sizes = [1, 16, 16], strides = [1, 1, 1]} : vector<2x16x16xf32> to vector<1x16x16xf32>
    %1339 = vector.shape_cast %1338 : vector<1x16x16xf32> to vector<16x16xf32>
    %c196 = arith.constant 196 : index
    %1340 = memref.load %arg1[%c196] : memref<204xf32, #tpu.memory_space<smem>>
    %1341 = vector.broadcast %1340 : f32 to vector<16x16xf32>
    %1342 = arith.mulf %1339, %1341 : vector<16x16xf32>
    %1343 = arith.addf %1337, %1342 : vector<16x16xf32>
    %1344 = vector.extract_strided_slice %1317 {offsets = [0, 0, 0], sizes = [1, 16, 16], strides = [1, 1, 1]} : vector<2x16x16xf32> to vector<1x16x16xf32>
    %1345 = vector.shape_cast %1344 : vector<1x16x16xf32> to vector<16x16xf32>
    %c194 = arith.constant 194 : index
    %1346 = memref.load %arg1[%c194] : memref<204xf32, #tpu.memory_space<smem>>
    %1347 = vector.broadcast %1346 : f32 to vector<16x16xf32>
    %1348 = arith.mulf %1345, %1347 : vector<16x16xf32>
    %1349 = arith.addf %1343, %1348 : vector<16x16xf32>
    %1350 = vector.extract_strided_slice %1317 {offsets = [1, 0, 0], sizes = [1, 16, 16], strides = [1, 1, 1]} : vector<2x16x16xf32> to vector<1x16x16xf32>
    %1351 = vector.shape_cast %1350 : vector<1x16x16xf32> to vector<16x16xf32>
    %c197 = arith.constant 197 : index
    %1352 = memref.load %arg1[%c197] : memref<204xf32, #tpu.memory_space<smem>>
    %1353 = vector.broadcast %1352 : f32 to vector<16x16xf32>
    %1354 = arith.mulf %1351, %1353 : vector<16x16xf32>
    %1355 = arith.addf %1349, %1354 : vector<16x16xf32>
    %cst_228 = arith.constant 0.000000e+00 : f32
    %1356 = vector.broadcast %cst_228 : f32 to vector<16x16xf32>
    %1357 = arith.cmpf oge, %1355, %1356 : vector<16x16xf32>
    %cst_229 = arith.constant 3.000000e-01 : f32
    %1358 = vector.broadcast %cst_229 : f32 to vector<16x16xf32>
    %1359 = arith.mulf %1358, %1355 : vector<16x16xf32>
    %1360 = arith.select %1357, %1355, %1359 : vector<16x16xi1>, vector<16x16xf32>
    %c13_230 = arith.constant 13 : index
    %1361 = memref.load %arg2[%c13_230] : memref<14xf32, #tpu.memory_space<smem>>
    %1362 = vector.broadcast %1361 : f32 to vector<16x16xf32>
    %1363 = vector.extract_strided_slice %1315 {offsets = [0, 0, 0], sizes = [1, 16, 16], strides = [1, 1, 1]} : vector<2x16x16xf32> to vector<1x16x16xf32>
    %1364 = vector.shape_cast %1363 : vector<1x16x16xf32> to vector<16x16xf32>
    %c198 = arith.constant 198 : index
    %1365 = memref.load %arg1[%c198] : memref<204xf32, #tpu.memory_space<smem>>
    %1366 = vector.broadcast %1365 : f32 to vector<16x16xf32>
    %1367 = arith.mulf %1364, %1366 : vector<16x16xf32>
    %1368 = arith.addf %1362, %1367 : vector<16x16xf32>
    %1369 = vector.extract_strided_slice %1315 {offsets = [1, 0, 0], sizes = [1, 16, 16], strides = [1, 1, 1]} : vector<2x16x16xf32> to vector<1x16x16xf32>
    %1370 = vector.shape_cast %1369 : vector<1x16x16xf32> to vector<16x16xf32>
    %c201 = arith.constant 201 : index
    %1371 = memref.load %arg1[%c201] : memref<204xf32, #tpu.memory_space<smem>>
    %1372 = vector.broadcast %1371 : f32 to vector<16x16xf32>
    %1373 = arith.mulf %1370, %1372 : vector<16x16xf32>
    %1374 = arith.addf %1368, %1373 : vector<16x16xf32>
    %1375 = vector.extract_strided_slice %1316 {offsets = [0, 0, 0], sizes = [1, 16, 16], strides = [1, 1, 1]} : vector<2x16x16xf32> to vector<1x16x16xf32>
    %1376 = vector.shape_cast %1375 : vector<1x16x16xf32> to vector<16x16xf32>
    %c199 = arith.constant 199 : index
    %1377 = memref.load %arg1[%c199] : memref<204xf32, #tpu.memory_space<smem>>
    %1378 = vector.broadcast %1377 : f32 to vector<16x16xf32>
    %1379 = arith.mulf %1376, %1378 : vector<16x16xf32>
    %1380 = arith.addf %1374, %1379 : vector<16x16xf32>
    %1381 = vector.extract_strided_slice %1316 {offsets = [1, 0, 0], sizes = [1, 16, 16], strides = [1, 1, 1]} : vector<2x16x16xf32> to vector<1x16x16xf32>
    %1382 = vector.shape_cast %1381 : vector<1x16x16xf32> to vector<16x16xf32>
    %c202 = arith.constant 202 : index
    %1383 = memref.load %arg1[%c202] : memref<204xf32, #tpu.memory_space<smem>>
    %1384 = vector.broadcast %1383 : f32 to vector<16x16xf32>
    %1385 = arith.mulf %1382, %1384 : vector<16x16xf32>
    %1386 = arith.addf %1380, %1385 : vector<16x16xf32>
    %1387 = vector.extract_strided_slice %1317 {offsets = [0, 0, 0], sizes = [1, 16, 16], strides = [1, 1, 1]} : vector<2x16x16xf32> to vector<1x16x16xf32>
    %1388 = vector.shape_cast %1387 : vector<1x16x16xf32> to vector<16x16xf32>
    %c200 = arith.constant 200 : index
    %1389 = memref.load %arg1[%c200] : memref<204xf32, #tpu.memory_space<smem>>
    %1390 = vector.broadcast %1389 : f32 to vector<16x16xf32>
    %1391 = arith.mulf %1388, %1390 : vector<16x16xf32>
    %1392 = arith.addf %1386, %1391 : vector<16x16xf32>
    %1393 = vector.extract_strided_slice %1317 {offsets = [1, 0, 0], sizes = [1, 16, 16], strides = [1, 1, 1]} : vector<2x16x16xf32> to vector<1x16x16xf32>
    %1394 = vector.shape_cast %1393 : vector<1x16x16xf32> to vector<16x16xf32>
    %c203 = arith.constant 203 : index
    %1395 = memref.load %arg1[%c203] : memref<204xf32, #tpu.memory_space<smem>>
    %1396 = vector.broadcast %1395 : f32 to vector<16x16xf32>
    %1397 = arith.mulf %1394, %1396 : vector<16x16xf32>
    %1398 = arith.addf %1392, %1397 : vector<16x16xf32>
    %cst_231 = arith.constant 0.000000e+00 : f32
    %1399 = vector.broadcast %cst_231 : f32 to vector<16x16xf32>
    %1400 = arith.cmpf oge, %1398, %1399 : vector<16x16xf32>
    %cst_232 = arith.constant 3.000000e-01 : f32
    %1401 = vector.broadcast %cst_232 : f32 to vector<16x16xf32>
    %1402 = arith.mulf %1401, %1398 : vector<16x16xf32>
    %1403 = arith.select %1400, %1398, %1402 : vector<16x16xi1>, vector<16x16xf32>
    %cst_233 = arith.constant 0.000000e+00 : f32
    %1404 = vector.broadcast %cst_233 : f32 to vector<8x96xf32>
    %cst_234 = arith.constant 0.000000e+00 : f32
    %1405 = vector.broadcast %cst_234 : f32 to vector<16x96xf32>
    %c0_235 = arith.constant 0 : index
    %c0_236 = arith.constant 0 : index
    %c0_237 = arith.constant 0 : index
    %1406 = vector.load %arg4[%c0_235, %c0_236, %c0_237] : memref<2x96x96xf32, #tpu.memory_space<vmem>>, vector<1x16x96xf32>
    %1407 = vector.shape_cast %1406 : vector<1x16x96xf32> to vector<16x96xf32>
    %cst_238 = arith.constant dense<0.000000e+00> : vector<16x96xf32>
    %1408 = tpu.matmul %620, %1407, %cst_238 {dimension_numbers = #tpu.dot_dimension_numbers<[1], [0], [0], [1], [0, 0, 1, 1], [], []>} : vector<16x16xf32>, vector<16x96xf32>, vector<16x96xf32> -> vector<16x96xf32>
    %1409 = arith.addf %1405, %1408 : vector<16x96xf32>
    %c0_239 = arith.constant 0 : index
    %c16_240 = arith.constant 16 : index
    %c0_241 = arith.constant 0 : index
    %1410 = vector.load %arg4[%c0_239, %c16_240, %c0_241] : memref<2x96x96xf32, #tpu.memory_space<vmem>>, vector<1x16x96xf32>
    %1411 = vector.shape_cast %1410 : vector<1x16x96xf32> to vector<16x96xf32>
    %cst_242 = arith.constant dense<0.000000e+00> : vector<16x96xf32>
    %1412 = tpu.matmul %735, %1411, %cst_242 {dimension_numbers = #tpu.dot_dimension_numbers<[1], [0], [0], [1], [0, 0, 1, 1], [], []>} : vector<16x16xf32>, vector<16x96xf32>, vector<16x96xf32> -> vector<16x96xf32>
    %1413 = arith.addf %1409, %1412 : vector<16x96xf32>
    %c0_243 = arith.constant 0 : index
    %c32_244 = arith.constant 32 : index
    %c0_245 = arith.constant 0 : index
    %1414 = vector.load %arg4[%c0_243, %c32_244, %c0_245] : memref<2x96x96xf32, #tpu.memory_space<vmem>>, vector<1x16x96xf32>
    %1415 = vector.shape_cast %1414 : vector<1x16x96xf32> to vector<16x96xf32>
    %cst_246 = arith.constant dense<0.000000e+00> : vector<16x96xf32>
    %1416 = tpu.matmul %859, %1415, %cst_246 {dimension_numbers = #tpu.dot_dimension_numbers<[1], [0], [0], [1], [0, 0, 1, 1], [], []>} : vector<16x16xf32>, vector<16x96xf32>, vector<16x96xf32> -> vector<16x96xf32>
    %1417 = arith.addf %1413, %1416 : vector<16x96xf32>
    %c0_247 = arith.constant 0 : index
    %c48_248 = arith.constant 48 : index
    %c0_249 = arith.constant 0 : index
    %1418 = vector.load %arg4[%c0_247, %c48_248, %c0_249] : memref<2x96x96xf32, #tpu.memory_space<vmem>>, vector<1x16x96xf32>
    %1419 = vector.shape_cast %1418 : vector<1x16x96xf32> to vector<16x96xf32>
    %cst_250 = arith.constant dense<0.000000e+00> : vector<16x96xf32>
    %1420 = tpu.matmul %974, %1419, %cst_250 {dimension_numbers = #tpu.dot_dimension_numbers<[1], [0], [0], [1], [0, 0, 1, 1], [], []>} : vector<16x16xf32>, vector<16x96xf32>, vector<16x96xf32> -> vector<16x96xf32>
    %1421 = arith.addf %1417, %1420 : vector<16x96xf32>
    %c0_251 = arith.constant 0 : index
    %c64_252 = arith.constant 64 : index
    %c0_253 = arith.constant 0 : index
    %1422 = vector.load %arg4[%c0_251, %c64_252, %c0_253] : memref<2x96x96xf32, #tpu.memory_space<vmem>>, vector<1x16x96xf32>
    %1423 = vector.shape_cast %1422 : vector<1x16x96xf32> to vector<16x96xf32>
    %cst_254 = arith.constant dense<0.000000e+00> : vector<16x96xf32>
    %1424 = tpu.matmul %1360, %1423, %cst_254 {dimension_numbers = #tpu.dot_dimension_numbers<[1], [0], [0], [1], [0, 0, 1, 1], [], []>} : vector<16x16xf32>, vector<16x96xf32>, vector<16x96xf32> -> vector<16x96xf32>
    %1425 = arith.addf %1421, %1424 : vector<16x96xf32>
    %c0_255 = arith.constant 0 : index
    %c80_256 = arith.constant 80 : index
    %c0_257 = arith.constant 0 : index
    %1426 = vector.load %arg4[%c0_255, %c80_256, %c0_257] : memref<2x96x96xf32, #tpu.memory_space<vmem>>, vector<1x16x96xf32>
    %1427 = vector.shape_cast %1426 : vector<1x16x96xf32> to vector<16x96xf32>
    %cst_258 = arith.constant dense<0.000000e+00> : vector<16x96xf32>
    %1428 = tpu.matmul %1403, %1427, %cst_258 {dimension_numbers = #tpu.dot_dimension_numbers<[1], [0], [0], [1], [0, 0, 1, 1], [], []>} : vector<16x16xf32>, vector<16x96xf32>, vector<16x96xf32> -> vector<16x96xf32>
    %1429 = arith.addf %1425, %1428 : vector<16x96xf32>
    %c0_259 = arith.constant 0 : index
    %c0_260 = arith.constant 0 : index
    %c0_261 = arith.constant 0 : index
    %1430 = vector.load %arg5[%c0_259, %c0_260, %c0_261] : memref<2x8x16xf32, #tpu.memory_space<vmem>>, vector<1x8x16xf32>
    %1431 = vector.shape_cast %1430 : vector<1x8x16xf32> to vector<8x16xf32>
    %cst_262 = arith.constant dense<0.000000e+00> : vector<8x96xf32>
    %1432 = tpu.matmul %1431, %1429, %cst_262 {dimension_numbers = #tpu.dot_dimension_numbers<[1], [0], [0], [1], [0, 0, 1, 1], [], []>} : vector<8x16xf32>, vector<16x96xf32>, vector<8x96xf32> -> vector<8x96xf32>
    %1433 = arith.addf %1404, %1432 : vector<8x96xf32>
    %cst_263 = arith.constant 0.000000e+00 : f32
    %1434 = vector.broadcast %cst_263 : f32 to vector<16x96xf32>
    %c1_264 = arith.constant 1 : index
    %c0_265 = arith.constant 0 : index
    %c0_266 = arith.constant 0 : index
    %1435 = vector.load %arg4[%c1_264, %c0_265, %c0_266] : memref<2x96x96xf32, #tpu.memory_space<vmem>>, vector<1x16x96xf32>
    %1436 = vector.shape_cast %1435 : vector<1x16x96xf32> to vector<16x96xf32>
    %cst_267 = arith.constant dense<0.000000e+00> : vector<16x96xf32>
    %1437 = tpu.matmul %620, %1436, %cst_267 {dimension_numbers = #tpu.dot_dimension_numbers<[1], [0], [0], [1], [0, 0, 1, 1], [], []>} : vector<16x16xf32>, vector<16x96xf32>, vector<16x96xf32> -> vector<16x96xf32>
    %1438 = arith.addf %1434, %1437 : vector<16x96xf32>
    %c1_268 = arith.constant 1 : index
    %c16_269 = arith.constant 16 : index
    %c0_270 = arith.constant 0 : index
    %1439 = vector.load %arg4[%c1_268, %c16_269, %c0_270] : memref<2x96x96xf32, #tpu.memory_space<vmem>>, vector<1x16x96xf32>
    %1440 = vector.shape_cast %1439 : vector<1x16x96xf32> to vector<16x96xf32>
    %cst_271 = arith.constant dense<0.000000e+00> : vector<16x96xf32>
    %1441 = tpu.matmul %735, %1440, %cst_271 {dimension_numbers = #tpu.dot_dimension_numbers<[1], [0], [0], [1], [0, 0, 1, 1], [], []>} : vector<16x16xf32>, vector<16x96xf32>, vector<16x96xf32> -> vector<16x96xf32>
    %1442 = arith.addf %1438, %1441 : vector<16x96xf32>
    %c1_272 = arith.constant 1 : index
    %c32_273 = arith.constant 32 : index
    %c0_274 = arith.constant 0 : index
    %1443 = vector.load %arg4[%c1_272, %c32_273, %c0_274] : memref<2x96x96xf32, #tpu.memory_space<vmem>>, vector<1x16x96xf32>
    %1444 = vector.shape_cast %1443 : vector<1x16x96xf32> to vector<16x96xf32>
    %cst_275 = arith.constant dense<0.000000e+00> : vector<16x96xf32>
    %1445 = tpu.matmul %859, %1444, %cst_275 {dimension_numbers = #tpu.dot_dimension_numbers<[1], [0], [0], [1], [0, 0, 1, 1], [], []>} : vector<16x16xf32>, vector<16x96xf32>, vector<16x96xf32> -> vector<16x96xf32>
    %1446 = arith.addf %1442, %1445 : vector<16x96xf32>
    %c1_276 = arith.constant 1 : index
    %c48_277 = arith.constant 48 : index
    %c0_278 = arith.constant 0 : index
    %1447 = vector.load %arg4[%c1_276, %c48_277, %c0_278] : memref<2x96x96xf32, #tpu.memory_space<vmem>>, vector<1x16x96xf32>
    %1448 = vector.shape_cast %1447 : vector<1x16x96xf32> to vector<16x96xf32>
    %cst_279 = arith.constant dense<0.000000e+00> : vector<16x96xf32>
    %1449 = tpu.matmul %974, %1448, %cst_279 {dimension_numbers = #tpu.dot_dimension_numbers<[1], [0], [0], [1], [0, 0, 1, 1], [], []>} : vector<16x16xf32>, vector<16x96xf32>, vector<16x96xf32> -> vector<16x96xf32>
    %1450 = arith.addf %1446, %1449 : vector<16x96xf32>
    %c1_280 = arith.constant 1 : index
    %c64_281 = arith.constant 64 : index
    %c0_282 = arith.constant 0 : index
    %1451 = vector.load %arg4[%c1_280, %c64_281, %c0_282] : memref<2x96x96xf32, #tpu.memory_space<vmem>>, vector<1x16x96xf32>
    %1452 = vector.shape_cast %1451 : vector<1x16x96xf32> to vector<16x96xf32>
    %cst_283 = arith.constant dense<0.000000e+00> : vector<16x96xf32>
    %1453 = tpu.matmul %1360, %1452, %cst_283 {dimension_numbers = #tpu.dot_dimension_numbers<[1], [0], [0], [1], [0, 0, 1, 1], [], []>} : vector<16x16xf32>, vector<16x96xf32>, vector<16x96xf32> -> vector<16x96xf32>
    %1454 = arith.addf %1450, %1453 : vector<16x96xf32>
    %c1_284 = arith.constant 1 : index
    %c80_285 = arith.constant 80 : index
    %c0_286 = arith.constant 0 : index
    %1455 = vector.load %arg4[%c1_284, %c80_285, %c0_286] : memref<2x96x96xf32, #tpu.memory_space<vmem>>, vector<1x16x96xf32>
    %1456 = vector.shape_cast %1455 : vector<1x16x96xf32> to vector<16x96xf32>
    %cst_287 = arith.constant dense<0.000000e+00> : vector<16x96xf32>
    %1457 = tpu.matmul %1403, %1456, %cst_287 {dimension_numbers = #tpu.dot_dimension_numbers<[1], [0], [0], [1], [0, 0, 1, 1], [], []>} : vector<16x16xf32>, vector<16x96xf32>, vector<16x96xf32> -> vector<16x96xf32>
    %1458 = arith.addf %1454, %1457 : vector<16x96xf32>
    %c1_288 = arith.constant 1 : index
    %c0_289 = arith.constant 0 : index
    %c0_290 = arith.constant 0 : index
    %1459 = vector.load %arg5[%c1_288, %c0_289, %c0_290] : memref<2x8x16xf32, #tpu.memory_space<vmem>>, vector<1x8x16xf32>
    %1460 = vector.shape_cast %1459 : vector<1x8x16xf32> to vector<8x16xf32>
    %cst_291 = arith.constant dense<0.000000e+00> : vector<8x96xf32>
    %1461 = tpu.matmul %1460, %1458, %cst_291 {dimension_numbers = #tpu.dot_dimension_numbers<[1], [0], [0], [1], [0, 0, 1, 1], [], []>} : vector<8x16xf32>, vector<16x96xf32>, vector<8x96xf32> -> vector<8x96xf32>
    %1462 = arith.addf %1433, %1461 : vector<8x96xf32>
    %c0_292 = arith.constant 0 : index
    %c0_293 = arith.constant 0 : index
    %1463 = vector.load %arg8[%c0_292, %c0_293] : memref<1x96xf32, #tpu.memory_space<vmem>>, vector<1x96xf32>
    %1464 = vector.broadcast %1463 : vector<1x96xf32> to vector<8x96xf32>
    %1465 = arith.addf %1462, %1464 : vector<8x96xf32>
    %cst_294 = arith.constant 0.000000e+00 : f32
    %1466 = vector.broadcast %cst_294 : f32 to vector<8x96xf32>
    %1467 = arith.cmpf oge, %1465, %1466 : vector<8x96xf32>
    %cst_295 = arith.constant 3.000000e-01 : f32
    %1468 = vector.broadcast %cst_295 : f32 to vector<8x96xf32>
    %1469 = arith.mulf %1468, %1465 : vector<8x96xf32>
    %1470 = arith.select %1467, %1465, %1469 : vector<8x96xi1>, vector<8x96xf32>
    %cst_296 = arith.constant 0.000000e+00 : f32
    %1471 = vector.broadcast %cst_296 : f32 to vector<4x48xf32>
    %c0_297 = arith.constant 0 : index
    %c0_298 = arith.constant 0 : index
    %c0_299 = arith.constant 0 : index
    %1472 = vector.load %arg6[%c0_297, %c0_298, %c0_299] : memref<2x96x48xf32, #tpu.memory_space<vmem>>, vector<1x96x48xf32>
    %1473 = vector.shape_cast %1472 : vector<1x96x48xf32> to vector<96x48xf32>
    %cst_300 = arith.constant dense<0.000000e+00> : vector<8x48xf32>
    %1474 = tpu.matmul %1470, %1473, %cst_300 {dimension_numbers = #tpu.dot_dimension_numbers<[1], [0], [0], [1], [0, 0, 1, 1], [], []>} : vector<8x96xf32>, vector<96x48xf32>, vector<8x48xf32> -> vector<8x48xf32>
    %c0_301 = arith.constant 0 : index
    %c0_302 = arith.constant 0 : index
    %c0_303 = arith.constant 0 : index
    %1475 = vector.load %arg7[%c0_301, %c0_302, %c0_303] : memref<2x4x8xf32, #tpu.memory_space<vmem>>, vector<1x4x8xf32>
    %1476 = vector.shape_cast %1475 : vector<1x4x8xf32> to vector<4x8xf32>
    %cst_304 = arith.constant dense<0.000000e+00> : vector<4x48xf32>
    %1477 = tpu.matmul %1476, %1474, %cst_304 {dimension_numbers = #tpu.dot_dimension_numbers<[1], [0], [0], [1], [0, 0, 1, 1], [], []>} : vector<4x8xf32>, vector<8x48xf32>, vector<4x48xf32> -> vector<4x48xf32>
    %1478 = arith.addf %1471, %1477 : vector<4x48xf32>
    %c1_305 = arith.constant 1 : index
    %c0_306 = arith.constant 0 : index
    %c0_307 = arith.constant 0 : index
    %1479 = vector.load %arg6[%c1_305, %c0_306, %c0_307] : memref<2x96x48xf32, #tpu.memory_space<vmem>>, vector<1x96x48xf32>
    %1480 = vector.shape_cast %1479 : vector<1x96x48xf32> to vector<96x48xf32>
    %cst_308 = arith.constant dense<0.000000e+00> : vector<8x48xf32>
    %1481 = tpu.matmul %1470, %1480, %cst_308 {dimension_numbers = #tpu.dot_dimension_numbers<[1], [0], [0], [1], [0, 0, 1, 1], [], []>} : vector<8x96xf32>, vector<96x48xf32>, vector<8x48xf32> -> vector<8x48xf32>
    %c1_309 = arith.constant 1 : index
    %c0_310 = arith.constant 0 : index
    %c0_311 = arith.constant 0 : index
    %1482 = vector.load %arg7[%c1_309, %c0_310, %c0_311] : memref<2x4x8xf32, #tpu.memory_space<vmem>>, vector<1x4x8xf32>
    %1483 = vector.shape_cast %1482 : vector<1x4x8xf32> to vector<4x8xf32>
    %cst_312 = arith.constant dense<0.000000e+00> : vector<4x48xf32>
    %1484 = tpu.matmul %1483, %1481, %cst_312 {dimension_numbers = #tpu.dot_dimension_numbers<[1], [0], [0], [1], [0, 0, 1, 1], [], []>} : vector<4x8xf32>, vector<8x48xf32>, vector<4x48xf32> -> vector<4x48xf32>
    %1485 = arith.addf %1478, %1484 : vector<4x48xf32>
    %c0_313 = arith.constant 0 : index
    %c0_314 = arith.constant 0 : index
    %1486 = vector.load %arg9[%c0_313, %c0_314] : memref<1x48xf32, #tpu.memory_space<vmem>>, vector<1x48xf32>
    %1487 = vector.broadcast %1486 : vector<1x48xf32> to vector<4x48xf32>
    %1488 = arith.addf %1485, %1487 : vector<4x48xf32>
    %cst_315 = arith.constant 0.000000e+00 : f32
    %1489 = vector.broadcast %cst_315 : f32 to vector<4x48xf32>
    %1490 = arith.cmpf oge, %1488, %1489 : vector<4x48xf32>
    %cst_316 = arith.constant 3.000000e-01 : f32
    %1491 = vector.broadcast %cst_316 : f32 to vector<4x48xf32>
    %1492 = arith.mulf %1491, %1488 : vector<4x48xf32>
    %1493 = arith.select %1490, %1488, %1492 : vector<4x48xi1>, vector<4x48xf32>
    %1494 = vector.extract_strided_slice %1493 {offsets = [0, 0], sizes = [4, 4], strides = [1, 1]} : vector<4x48xf32> to vector<4x4xf32>
    %c0_317 = arith.constant 0 : index
    %c0_318 = arith.constant 0 : index
    %c0_319 = arith.constant 0 : index
    %c0_320 = arith.constant 0 : index
    %1495 = vector.load %arg10[%c0_317, %c0_318, %c0_319, %c0_320] : memref<1x12x4x4xf32, #tpu.memory_space<vmem>>, vector<1x1x4x4xf32>
    %1496 = vector.shape_cast %1495 : vector<1x1x4x4xf32> to vector<4x4xf32>
    %1497 = vector.shape_cast %1494 : vector<4x4xf32> to vector<1x1x4x4xf32>
    tpu.vector_store %arg10[%c0_317, %c0_318, %c0_319, %c0_320], %1497 {strides = array<i32>} : memref<1x12x4x4xf32, #tpu.memory_space<vmem>>, vector<1x1x4x4xf32>,
    %1498 = vector.extract_strided_slice %1493 {offsets = [0, 4], sizes = [4, 4], strides = [1, 1]} : vector<4x48xf32> to vector<4x4xf32>
    %c0_321 = arith.constant 0 : index
    %c1_322 = arith.constant 1 : index
    %c0_323 = arith.constant 0 : index
    %c0_324 = arith.constant 0 : index
    %1499 = vector.load %arg10[%c0_321, %c1_322, %c0_323, %c0_324] : memref<1x12x4x4xf32, #tpu.memory_space<vmem>>, vector<1x1x4x4xf32>
    %1500 = vector.shape_cast %1499 : vector<1x1x4x4xf32> to vector<4x4xf32>
    %1501 = vector.shape_cast %1498 : vector<4x4xf32> to vector<1x1x4x4xf32>
    tpu.vector_store %arg10[%c0_321, %c1_322, %c0_323, %c0_324], %1501 {strides = array<i32>} : memref<1x12x4x4xf32, #tpu.memory_space<vmem>>, vector<1x1x4x4xf32>,
    %1502 = vector.extract_strided_slice %1493 {offsets = [0, 8], sizes = [4, 4], strides = [1, 1]} : vector<4x48xf32> to vector<4x4xf32>
    %c0_325 = arith.constant 0 : index
    %c2_326 = arith.constant 2 : index
    %c0_327 = arith.constant 0 : index
    %c0_328 = arith.constant 0 : index
    %1503 = vector.load %arg10[%c0_325, %c2_326, %c0_327, %c0_328] : memref<1x12x4x4xf32, #tpu.memory_space<vmem>>, vector<1x1x4x4xf32>
    %1504 = vector.shape_cast %1503 : vector<1x1x4x4xf32> to vector<4x4xf32>
    %1505 = vector.shape_cast %1502 : vector<4x4xf32> to vector<1x1x4x4xf32>
    tpu.vector_store %arg10[%c0_325, %c2_326, %c0_327, %c0_328], %1505 {strides = array<i32>} : memref<1x12x4x4xf32, #tpu.memory_space<vmem>>, vector<1x1x4x4xf32>,
    %1506 = vector.extract_strided_slice %1493 {offsets = [0, 12], sizes = [4, 4], strides = [1, 1]} : vector<4x48xf32> to vector<4x4xf32>
    %c0_329 = arith.constant 0 : index
    %c3_330 = arith.constant 3 : index
    %c0_331 = arith.constant 0 : index
    %c0_332 = arith.constant 0 : index
    %1507 = vector.load %arg10[%c0_329, %c3_330, %c0_331, %c0_332] : memref<1x12x4x4xf32, #tpu.memory_space<vmem>>, vector<1x1x4x4xf32>
    %1508 = vector.shape_cast %1507 : vector<1x1x4x4xf32> to vector<4x4xf32>
    %1509 = vector.shape_cast %1506 : vector<4x4xf32> to vector<1x1x4x4xf32>
    tpu.vector_store %arg10[%c0_329, %c3_330, %c0_331, %c0_332], %1509 {strides = array<i32>} : memref<1x12x4x4xf32, #tpu.memory_space<vmem>>, vector<1x1x4x4xf32>,
    %1510 = vector.extract_strided_slice %1493 {offsets = [0, 16], sizes = [4, 4], strides = [1, 1]} : vector<4x48xf32> to vector<4x4xf32>
    %c0_333 = arith.constant 0 : index
    %c4_334 = arith.constant 4 : index
    %c0_335 = arith.constant 0 : index
    %c0_336 = arith.constant 0 : index
    %1511 = vector.load %arg10[%c0_333, %c4_334, %c0_335, %c0_336] : memref<1x12x4x4xf32, #tpu.memory_space<vmem>>, vector<1x1x4x4xf32>
    %1512 = vector.shape_cast %1511 : vector<1x1x4x4xf32> to vector<4x4xf32>
    %1513 = vector.shape_cast %1510 : vector<4x4xf32> to vector<1x1x4x4xf32>
    tpu.vector_store %arg10[%c0_333, %c4_334, %c0_335, %c0_336], %1513 {strides = array<i32>} : memref<1x12x4x4xf32, #tpu.memory_space<vmem>>, vector<1x1x4x4xf32>,
    %1514 = vector.extract_strided_slice %1493 {offsets = [0, 20], sizes = [4, 4], strides = [1, 1]} : vector<4x48xf32> to vector<4x4xf32>
    %c0_337 = arith.constant 0 : index
    %c5_338 = arith.constant 5 : index
    %c0_339 = arith.constant 0 : index
    %c0_340 = arith.constant 0 : index
    %1515 = vector.load %arg10[%c0_337, %c5_338, %c0_339, %c0_340] : memref<1x12x4x4xf32, #tpu.memory_space<vmem>>, vector<1x1x4x4xf32>
    %1516 = vector.shape_cast %1515 : vector<1x1x4x4xf32> to vector<4x4xf32>
    %1517 = vector.shape_cast %1514 : vector<4x4xf32> to vector<1x1x4x4xf32>
    tpu.vector_store %arg10[%c0_337, %c5_338, %c0_339, %c0_340], %1517 {strides = array<i32>} : memref<1x12x4x4xf32, #tpu.memory_space<vmem>>, vector<1x1x4x4xf32>,
    %1518 = vector.extract_strided_slice %1493 {offsets = [0, 24], sizes = [4, 4], strides = [1, 1]} : vector<4x48xf32> to vector<4x4xf32>
    %c0_341 = arith.constant 0 : index
    %c6_342 = arith.constant 6 : index
    %c0_343 = arith.constant 0 : index
    %c0_344 = arith.constant 0 : index
    %1519 = vector.load %arg10[%c0_341, %c6_342, %c0_343, %c0_344] : memref<1x12x4x4xf32, #tpu.memory_space<vmem>>, vector<1x1x4x4xf32>
    %1520 = vector.shape_cast %1519 : vector<1x1x4x4xf32> to vector<4x4xf32>
    %1521 = vector.shape_cast %1518 : vector<4x4xf32> to vector<1x1x4x4xf32>
    tpu.vector_store %arg10[%c0_341, %c6_342, %c0_343, %c0_344], %1521 {strides = array<i32>} : memref<1x12x4x4xf32, #tpu.memory_space<vmem>>, vector<1x1x4x4xf32>,
    %1522 = vector.extract_strided_slice %1493 {offsets = [0, 28], sizes = [4, 4], strides = [1, 1]} : vector<4x48xf32> to vector<4x4xf32>
    %c0_345 = arith.constant 0 : index
    %c7_346 = arith.constant 7 : index
    %c0_347 = arith.constant 0 : index
    %c0_348 = arith.constant 0 : index
    %1523 = vector.load %arg10[%c0_345, %c7_346, %c0_347, %c0_348] : memref<1x12x4x4xf32, #tpu.memory_space<vmem>>, vector<1x1x4x4xf32>
    %1524 = vector.shape_cast %1523 : vector<1x1x4x4xf32> to vector<4x4xf32>
    %1525 = vector.shape_cast %1522 : vector<4x4xf32> to vector<1x1x4x4xf32>
    tpu.vector_store %arg10[%c0_345, %c7_346, %c0_347, %c0_348], %1525 {strides = array<i32>} : memref<1x12x4x4xf32, #tpu.memory_space<vmem>>, vector<1x1x4x4xf32>,
    %1526 = vector.extract_strided_slice %1493 {offsets = [0, 32], sizes = [4, 4], strides = [1, 1]} : vector<4x48xf32> to vector<4x4xf32>
    %c0_349 = arith.constant 0 : index
    %c8_350 = arith.constant 8 : index
    %c0_351 = arith.constant 0 : index
    %c0_352 = arith.constant 0 : index
    %1527 = vector.load %arg10[%c0_349, %c8_350, %c0_351, %c0_352] : memref<1x12x4x4xf32, #tpu.memory_space<vmem>>, vector<1x1x4x4xf32>
    %1528 = vector.shape_cast %1527 : vector<1x1x4x4xf32> to vector<4x4xf32>
    %1529 = vector.shape_cast %1526 : vector<4x4xf32> to vector<1x1x4x4xf32>
    tpu.vector_store %arg10[%c0_349, %c8_350, %c0_351, %c0_352], %1529 {strides = array<i32>} : memref<1x12x4x4xf32, #tpu.memory_space<vmem>>, vector<1x1x4x4xf32>,
    %1530 = vector.extract_strided_slice %1493 {offsets = [0, 36], sizes = [4, 4], strides = [1, 1]} : vector<4x48xf32> to vector<4x4xf32>
    %c0_353 = arith.constant 0 : index
    %c9_354 = arith.constant 9 : index
    %c0_355 = arith.constant 0 : index
    %c0_356 = arith.constant 0 : index
    %1531 = vector.load %arg10[%c0_353, %c9_354, %c0_355, %c0_356] : memref<1x12x4x4xf32, #tpu.memory_space<vmem>>, vector<1x1x4x4xf32>
    %1532 = vector.shape_cast %1531 : vector<1x1x4x4xf32> to vector<4x4xf32>
    %1533 = vector.shape_cast %1530 : vector<4x4xf32> to vector<1x1x4x4xf32>
    tpu.vector_store %arg10[%c0_353, %c9_354, %c0_355, %c0_356], %1533 {strides = array<i32>} : memref<1x12x4x4xf32, #tpu.memory_space<vmem>>, vector<1x1x4x4xf32>,
    %1534 = vector.extract_strided_slice %1493 {offsets = [0, 40], sizes = [4, 4], strides = [1, 1]} : vector<4x48xf32> to vector<4x4xf32>
    %c0_357 = arith.constant 0 : index
    %c10_358 = arith.constant 10 : index
    %c0_359 = arith.constant 0 : index
    %c0_360 = arith.constant 0 : index
    %1535 = vector.load %arg10[%c0_357, %c10_358, %c0_359, %c0_360] : memref<1x12x4x4xf32, #tpu.memory_space<vmem>>, vector<1x1x4x4xf32>
    %1536 = vector.shape_cast %1535 : vector<1x1x4x4xf32> to vector<4x4xf32>
    %1537 = vector.shape_cast %1534 : vector<4x4xf32> to vector<1x1x4x4xf32>
    tpu.vector_store %arg10[%c0_357, %c10_358, %c0_359, %c0_360], %1537 {strides = array<i32>} : memref<1x12x4x4xf32, #tpu.memory_space<vmem>>, vector<1x1x4x4xf32>,
    %1538 = vector.extract_strided_slice %1493 {offsets = [0, 44], sizes = [4, 4], strides = [1, 1]} : vector<4x48xf32> to vector<4x4xf32>
    %c0_361 = arith.constant 0 : index
    %c11_362 = arith.constant 11 : index
    %c0_363 = arith.constant 0 : index
    %c0_364 = arith.constant 0 : index
    %1539 = vector.load %arg10[%c0_361, %c11_362, %c0_363, %c0_364] : memref<1x12x4x4xf32, #tpu.memory_space<vmem>>, vector<1x1x4x4xf32>
    %1540 = vector.shape_cast %1539 : vector<1x1x4x4xf32> to vector<4x4xf32>
    %1541 = vector.shape_cast %1538 : vector<4x4xf32> to vector<1x1x4x4xf32>
    tpu.vector_store %arg10[%c0_361, %c11_362, %c0_363, %c0_364], %1541 {strides = array<i32>} : memref<1x12x4x4xf32, #tpu.memory_space<vmem>>, vector<1x1x4x4xf32>,
    return
  }
  func.func @transform_0(%arg0: i32, %arg1: memref<204xf32, #tpu.memory_space<smem>>, %arg2: memref<14xf32, #tpu.memory_space<smem>>) -> (i32, i32, i32, i32) {
    %c0_i32 = arith.constant 0 : i32
    %c0_i32_0 = arith.constant 0 : i32
    %c0_i32_1 = arith.constant 0 : i32
    %c0_i32_2 = arith.constant 0 : i32
    return %arg0, %c0_i32, %c0_i32_0, %c0_i32_1 : i32, i32, i32, i32
  }
  func.func @transform_1(%arg0: i32, %arg1: memref<204xf32, #tpu.memory_space<smem>>, %arg2: memref<14xf32, #tpu.memory_space<smem>>) -> (i32, i32, i32) {
    %c0_i32 = arith.constant 0 : i32
    %c0_i32_0 = arith.constant 0 : i32
    %c0_i32_1 = arith.constant 0 : i32
    %c0_i32_2 = arith.constant 0 : i32
    return %c0_i32, %c0_i32_0, %c0_i32_1 : i32, i32, i32
  }
  func.func @transform_2(%arg0: i32, %arg1: memref<204xf32, #tpu.memory_space<smem>>, %arg2: memref<14xf32, #tpu.memory_space<smem>>) -> (i32, i32, i32) {
    %c0_i32 = arith.constant 0 : i32
    %c0_i32_0 = arith.constant 0 : i32
    %c0_i32_1 = arith.constant 0 : i32
    %c0_i32_2 = arith.constant 0 : i32
    return %c0_i32, %c0_i32_0, %c0_i32_1 : i32, i32, i32
  }
  func.func @transform_3(%arg0: i32, %arg1: memref<204xf32, #tpu.memory_space<smem>>, %arg2: memref<14xf32, #tpu.memory_space<smem>>) -> (i32, i32, i32) {
    %c0_i32 = arith.constant 0 : i32
    %c0_i32_0 = arith.constant 0 : i32
    %c0_i32_1 = arith.constant 0 : i32
    %c0_i32_2 = arith.constant 0 : i32
    return %c0_i32, %c0_i32_0, %c0_i32_1 : i32, i32, i32
  }
  func.func @transform_4(%arg0: i32, %arg1: memref<204xf32, #tpu.memory_space<smem>>, %arg2: memref<14xf32, #tpu.memory_space<smem>>) -> (i32, i32, i32) {
    %c0_i32 = arith.constant 0 : i32
    %c0_i32_0 = arith.constant 0 : i32
    %c0_i32_1 = arith.constant 0 : i32
    %c0_i32_2 = arith.constant 0 : i32
    return %c0_i32, %c0_i32_0, %c0_i32_1 : i32, i32, i32
  }
  func.func @transform_5(%arg0: i32, %arg1: memref<204xf32, #tpu.memory_space<smem>>, %arg2: memref<14xf32, #tpu.memory_space<smem>>) -> (i32, i32) {
    %c0_i32 = arith.constant 0 : i32
    %c0_i32_0 = arith.constant 0 : i32
    %c0_i32_1 = arith.constant 0 : i32
    return %c0_i32, %c0_i32_0 : i32, i32
  }
  func.func @transform_6(%arg0: i32, %arg1: memref<204xf32, #tpu.memory_space<smem>>, %arg2: memref<14xf32, #tpu.memory_space<smem>>) -> (i32, i32) {
    %c0_i32 = arith.constant 0 : i32
    %c0_i32_0 = arith.constant 0 : i32
    %c0_i32_1 = arith.constant 0 : i32
    return %c0_i32, %c0_i32_0 : i32, i32
  }
  func.func @transform_7(%arg0: i32, %arg1: memref<204xf32, #tpu.memory_space<smem>>, %arg2: memref<14xf32, #tpu.memory_space<smem>>) -> (i32, i32, i32, i32) {
    %c0_i32 = arith.constant 0 : i32
    %c0_i32_0 = arith.constant 0 : i32
    %c0_i32_1 = arith.constant 0 : i32
    %c0_i32_2 = arith.constant 0 : i32
    return %arg0, %c0_i32, %c0_i32_0, %c0_i32_1 : i32, i32, i32, i32
  }
}

</mosaic_0001>

<llo_original>
// kernel: encoder_forward.1
$region0: #{encoder_forward.1}
  #allocation0 [shape = 'u32[]', space=smem, size = 0x4, offset = 0x4, fixed_abs, tag = 'smem constant byte address 0x4 - core index']
  #allocation1 [shape = 'u32[144,128]{1,0:T(1,128)}', space=vmem, size = 0x12000, scoped, tag = 'internal scratch']
  #allocation2 [shape = 'f32[2,18,18]{2,1,0:T(8,128)}', space=vmem, size = 0x6000, scoped, tag = 'scratch operand']
  #allocation3 [shape = 'f32[2,24,24]{2,1,0:T(8,128)}', space=vmem, size = 0x6000, scoped, tag = 'scratch operand']
  #allocation4 [shape = 's32[1]{0}', space=sflag, size = 0x4, scoped, tag = 'scoped memory for encoder_forward.1']
  #allocation5 [shape = 'u8[1024]{0}', space=smem, size = 0x400, scoped, tag = 'prefetched SMEM operand 0']
  #allocation6 [shape = 'u8[512]{0}', space=smem, size = 0x200, scoped, tag = 'prefetched SMEM operand 1']
  %s0 = inlined_call_operand.vmem [shape: f32[204], index: 0, kind: input, shape index: {}]
  %s1 = inlined_call_operand.vmem [shape: f32[14], index: 1, kind: input, shape index: {}]
  %s2 = inlined_call_operand.vmem [shape: f32[2,2,16,16], index: 2, kind: input, shape index: {}]
  %s3 = inlined_call_operand.vmem [shape: f32[2,96,96], index: 3, kind: input, shape index: {}]
  %s4 = inlined_call_operand.vmem [shape: f32[2,8,16], index: 4, kind: input, shape index: {}]
  %s5 = inlined_call_operand.vmem [shape: f32[2,96,48], index: 5, kind: input, shape index: {}]
  %s6 = inlined_call_operand.vmem [shape: f32[2,4,8], index: 6, kind: input, shape index: {}]
  %s7 = inlined_call_operand.vmem [shape: f32[1,96], index: 7, kind: input, shape index: {}]
  %s8 = inlined_call_operand.vmem [shape: f32[1,48], index: 8, kind: input, shape index: {}]
  %s9 = inlined_call_operand.vmem [shape: f32[2,12,4,4], index: 9, kind: output, shape index: {}]
  %s10 = sld [smem:[#allocation0]]
  $region61: #{encoder_forward.1} parent=0
    _
  %s12 = ssub.s32 1, %s10
  %s13 = scalar_select 0, %s12, %s10
  %s14 = sshll.u32 %s0, 4
  %s15 = int_to_ptr.vmem [resolvable:$true] %s14
  %17 = dma.vmem_to_smem %s15, 32, [#allocation5], [#allocation4]
  %s18 = sshll.u32 %s1, 4
  %s19 = int_to_ptr.vmem [resolvable:$true] %s18
  %21 = dma.vmem_to_smem %s19, 16, [#allocation6], [#allocation4]
  %22 = dma.done [#allocation4], 48
  %23 = sfence
  loop: start=0, step=1, limit=4
  $region2: #{encoder_forward.1} parent=0 // loop_pre_header
    _
  $region3: #{encoder_forward.1} parent=0 // loop_header
    %s25 = sphi 0, %s29
    %p26 = scmp.ge.s32.totalorder %s25, 4
    %s35 = sphi 0, %s37
    %s38 = sphi 0, %s35
    %s39 = sphi 0, %s38
    %s55 = sphi 0, %s39
    %s59 = sphi 0, %s59
    %s61 = sphi 0, %s59
    %s62 = sphi 0, %s61
    %s76 = sphi 0, %s62
    %s80 = sphi 0, %s80
    %s82 = sphi 0, %s80
    %s83 = sphi 0, %s82
    %s97 = sphi 0, %s83
    %s101 = sphi 0, %s101
    %s103 = sphi 0, %s101
    %s104 = sphi 0, %s103
    %s118 = sphi 0, %s104
    %s122 = sphi 0, %s122
    %s124 = sphi 0, %s122
    %s125 = sphi 0, %s124
    %s139 = sphi 0, %s125
    %s143 = sphi 0, %s143
    %s145 = sphi 0, %s143
    %s146 = sphi 0, %s145
    %s160 = sphi 0, %s146
    %s164 = sphi 0, %s164
    %s166 = sphi 0, %s164
    %s167 = sphi 0, %s166
    %s181 = sphi 0, %s167
    %s187 = sphi 0, %s189
    %s190 = sphi 0, %s187
    %s191 = sphi 0, %s190
    %s207 = sphi 0, %s191
  $region4: #{encoder_forward.1} parent=0 // loop_header_branch
    %28 = sbr.rel (%p26) target = $region8
  $region5: #{encoder_forward.1} parent=0 // loop_body
    %s30 = ssub.s32 %s25, 1
    %s31 = ssub.s32 %s25, 2
    %s32 = sadd.s32 %s25, 1
    %s33 = ssub.s32 %s25, %s32
    %p34 = scmp.eq.s32.totalorder %s33, 0
    %s36 = sadd.s32 %s35, 1
    %s37 = scalar_select %p34, %s35, %s36
    %p40 = pneg %p34
    %p41 = scmp.eq.s32.totalorder %s25, 1
    %p42 = por %p40, %p41
    %p43 = scmp.ne.s32.totalorder %s35, %s38
    %p44 = scmp.eq.s32.totalorder %s25, 0
    %p45 = por %p43, %p44
    %p46 = scmp.ne.s32.totalorder %s35, %s38
    %p47 = scmp.eq.s32.totalorder %s30, 1
    %p48 = por %p46, %p47
    %p49 = scmp.ne.s32.totalorder %s38, %s39
    %p50 = scmp.eq.s32.totalorder %s30, 0
    %p51 = por %p49, %p50
    %p52 = scmp.ne.s32.totalorder %s38, %s39
    %p53 = scmp.eq.s32.totalorder %s31, 1
    %p54 = por %p52, %p53
    %p56 = scmp.ne.s32.totalorder %s39, %s55
    %p57 = scmp.eq.s32.totalorder %s31, 0
    %p58 = por %p56, %p57
    %s60 = sadd.s32 %s59, 1
    %p63 = scmp.eq.s32.totalorder %s25, 1
    %p64 = scmp.ne.s32.totalorder %s59, %s61
    %p65 = scmp.eq.s32.totalorder %s25, 0
    %p66 = por %p64, %p65
    %p67 = scmp.ne.s32.totalorder %s59, %s61
    %p68 = scmp.eq.s32.totalorder %s30, 1
    %p69 = por %p67, %p68
    %p70 = scmp.ne.s32.totalorder %s61, %s62
    %p71 = scmp.eq.s32.totalorder %s30, 0
    %p72 = por %p70, %p71
    %p73 = scmp.ne.s32.totalorder %s61, %s62
    %p74 = scmp.eq.s32.totalorder %s31, 1
    %p75 = por %p73, %p74
    %p77 = scmp.ne.s32.totalorder %s62, %s76
    %p78 = scmp.eq.s32.totalorder %s31, 0
    %p79 = por %p77, %p78
    %s81 = sadd.s32 %s80, 1
    %p84 = scmp.eq.s32.totalorder %s25, 1
    %p85 = scmp.ne.s32.totalorder %s80, %s82
    %p86 = scmp.eq.s32.totalorder %s25, 0
    %p87 = por %p85, %p86
    %p88 = scmp.ne.s32.totalorder %s80, %s82
    %p89 = scmp.eq.s32.totalorder %s30, 1
    %p90 = por %p88, %p89
    %p91 = scmp.ne.s32.totalorder %s82, %s83
    %p92 = scmp.eq.s32.totalorder %s30, 0
    %p93 = por %p91, %p92
    %p94 = scmp.ne.s32.totalorder %s82, %s83
    %p95 = scmp.eq.s32.totalorder %s31, 1
    %p96 = por %p94, %p95
    %p98 = scmp.ne.s32.totalorder %s83, %s97
    %p99 = scmp.eq.s32.totalorder %s31, 0
    %p100 = por %p98, %p99
    %s102 = sadd.s32 %s101, 1
    %p105 = scmp.eq.s32.totalorder %s25, 1
    %p106 = scmp.ne.s32.totalorder %s101, %s103
    %p107 = scmp.eq.s32.totalorder %s25, 0
    %p108 = por %p106, %p107
    %p109 = scmp.ne.s32.totalorder %s101, %s103
    %p110 = scmp.eq.s32.totalorder %s30, 1
    %p111 = por %p109, %p110
    %p112 = scmp.ne.s32.totalorder %s103, %s104
    %p113 = scmp.eq.s32.totalorder %s30, 0
    %p114 = por %p112, %p113
    %p115 = scmp.ne.s32.totalorder %s103, %s104
    %p116 = scmp.eq.s32.totalorder %s31, 1
    %p117 = por %p115, %p116
    %p119 = scmp.ne.s32.totalorder %s104, %s118
    %p120 = scmp.eq.s32.totalorder %s31, 0
    %p121 = por %p119, %p120
    %s123 = sadd.s32 %s122, 1
    %p126 = scmp.eq.s32.totalorder %s25, 1
    %p127 = scmp.ne.s32.totalorder %s122, %s124
    %p128 = scmp.eq.s32.totalorder %s25, 0
    %p129 = por %p127, %p128
    %p130 = scmp.ne.s32.totalorder %s122, %s124
    %p131 = scmp.eq.s32.totalorder %s30, 1
    %p132 = por %p130, %p131
    %p133 = scmp.ne.s32.totalorder %s124, %s125
    %p134 = scmp.eq.s32.totalorder %s30, 0
    %p135 = por %p133, %p134
    %p136 = scmp.ne.s32.totalorder %s124, %s125
    %p137 = scmp.eq.s32.totalorder %s31, 1
    %p138 = por %p136, %p137
    %p140 = scmp.ne.s32.totalorder %s125, %s139
    %p141 = scmp.eq.s32.totalorder %s31, 0
    %p142 = por %p140, %p141
    %s144 = sadd.s32 %s143, 1
    %p147 = scmp.eq.s32.totalorder %s25, 1
    %p148 = scmp.ne.s32.totalorder %s143, %s145
    %p149 = scmp.eq.s32.totalorder %s25, 0
    %p150 = por %p148, %p149
    %p151 = scmp.ne.s32.totalorder %s143, %s145
    %p152 = scmp.eq.s32.totalorder %s30, 1
    %p153 = por %p151, %p152
    %p154 = scmp.ne.s32.totalorder %s145, %s146
    %p155 = scmp.eq.s32.totalorder %s30, 0
    %p156 = por %p154, %p155
    %p157 = scmp.ne.s32.totalorder %s145, %s146
    %p158 = scmp.eq.s32.totalorder %s31, 1
    %p159 = por %p157, %p158
    %p161 = scmp.ne.s32.totalorder %s146, %s160
    %p162 = scmp.eq.s32.totalorder %s31, 0
    %p163 = por %p161, %p162
    %s165 = sadd.s32 %s164, 1
    %p168 = scmp.eq.s32.totalorder %s25, 1
    %p169 = scmp.ne.s32.totalorder %s164, %s166
    %p170 = scmp.eq.s32.totalorder %s25, 0
    %p171 = por %p169, %p170
    %p172 = scmp.ne.s32.totalorder %s164, %s166
    %p173 = scmp.eq.s32.totalorder %s30, 1
    %p174 = por %p172, %p173
    %p175 = scmp.ne.s32.totalorder %s166, %s167
    %p176 = scmp.eq.s32.totalorder %s30, 0
    %p177 = por %p175, %p176
    %p178 = scmp.ne.s32.totalorder %s166, %s167
    %p179 = scmp.eq.s32.totalorder %s31, 1
    %p180 = por %p178, %p179
    %p182 = scmp.ne.s32.totalorder %s167, %s181
    %p183 = scmp.eq.s32.totalorder %s31, 0
    %p184 = por %p182, %p183
    %s185 = ssub.s32 %s25, %s32
    %p186 = scmp.eq.s32.totalorder %s185, 0
    %s188 = sadd.s32 %s187, 1
    %s189 = scalar_select %p186, %s187, %s188
    %p192 = pneg %p186
    %p193 = scmp.eq.s32.totalorder %s25, 1
    %p194 = por %p192, %p193
    %p195 = scmp.ne.s32.totalorder %s187, %s190
    %p196 = scmp.eq.s32.totalorder %s25, 0
    %p197 = por %p195, %p196
    %p198 = scmp.ne.s32.totalorder %s187, %s190
    %p199 = scmp.eq.s32.totalorder %s30, 1
    %p200 = por %p198, %p199
    %p201 = scmp.ne.s32.totalorder %s190, %s191
    %p202 = scmp.eq.s32.totalorder %s30, 0
    %p203 = por %p201, %p202
    %p204 = scmp.ne.s32.totalorder %s190, %s191
    %p205 = scmp.eq.s32.totalorder %s31, 1
    %p206 = por %p204, %p205
    %p208 = scmp.ne.s32.totalorder %s191, %s207
    %p209 = scmp.eq.s32.totalorder %s31, 0
    %p210 = por %p208, %p209
    %p211 = scmp.le.s32.totalorder 1, %s25
    %p212 = scmp.lt.s32.totalorder %s25, 3
    %p213 = pnand %p211, %p212
    %p214 = pneg %p213
    // Predicated region
    $region9: #{encoder_forward.1} parent=5 // pred_check
      _
    $region10: #{encoder_forward.1} parent=5 // pred_check_branch
      %216 = sbr.rel (%p213) target = $region12
    $region11: #{encoder_forward.1} parent=5 // pred_region
      %s217 = ssub.s32 %s25, 1
      // Predicated region
      $region13: #{encoder_forward.1} parent=11 // pred_check
        %p218 = pneg %p72
      $region14: #{encoder_forward.1} parent=11 // pred_check_branch
        %220 = sbr.rel (%p218) target = $region16
      $region15: #{encoder_forward.1} parent=11 // pred_region
        _
      $region16: #{encoder_forward.1} parent=11 // pred_fallthru
        _
      // Predicated region
      $region17: #{encoder_forward.1} parent=11 // pred_check
        %p221 = pneg %p93
      $region18: #{encoder_forward.1} parent=11 // pred_check_branch
        %223 = sbr.rel (%p221) target = $region20
      $region19: #{encoder_forward.1} parent=11 // pred_region
        _
      $region20: #{encoder_forward.1} parent=11 // pred_fallthru
        _
      // Predicated region
      $region21: #{encoder_forward.1} parent=11 // pred_check
        %p224 = pneg %p114
      $region22: #{encoder_forward.1} parent=11 // pred_check_branch
        %226 = sbr.rel (%p224) target = $region24
      $region23: #{encoder_forward.1} parent=11 // pred_region
        _
      $region24: #{encoder_forward.1} parent=11 // pred_fallthru
        _
      // Predicated region
      $region25: #{encoder_forward.1} parent=11 // pred_check
        %p227 = pneg %p135
      $region26: #{encoder_forward.1} parent=11 // pred_check_branch
        %229 = sbr.rel (%p227) target = $region28
      $region27: #{encoder_forward.1} parent=11 // pred_region
        _
      $region28: #{encoder_forward.1} parent=11 // pred_fallthru
        _
      // Predicated region
      $region29: #{encoder_forward.1} parent=11 // pred_check
        %p230 = pneg %p156
      $region30: #{encoder_forward.1} parent=11 // pred_check_branch
        %232 = sbr.rel (%p230) target = $region32
      $region31: #{encoder_forward.1} parent=11 // pred_region
        _
      $region32: #{encoder_forward.1} parent=11 // pred_fallthru
        _
      // Predicated region
      $region33: #{encoder_forward.1} parent=11 // pred_check
        %p233 = pneg %p177
      $region34: #{encoder_forward.1} parent=11 // pred_check_branch
        %235 = sbr.rel (%p233) target = $region36
      $region35: #{encoder_forward.1} parent=11 // pred_region
        _
      $region36: #{encoder_forward.1} parent=11 // pred_fallthru
        _
    $region12: #{encoder_forward.1} parent=5 // pred_fallthru
      _
    %p236 = scmp.lt.s32.totalorder %s25, 2
    // Predicated region
    $region37: #{encoder_forward.1} parent=5 // pred_check
      %p237 = pneg %p236
    $region38: #{encoder_forward.1} parent=5 // pred_check_branch
      %239 = sbr.rel (%p237) target = $region40
    $region39: #{encoder_forward.1} parent=5 // pred_region
      // Predicated region
      $region41: #{encoder_forward.1} parent=39 // pred_check
        %p240 = pneg %p45
      $region42: #{encoder_forward.1} parent=39 // pred_check_branch
        %242 = sbr.rel (%p240) target = $region44
      $region43: #{encoder_forward.1} parent=39 // pred_region
        %p243 = scmp.lt.s32.totalorder %s25, 1
        %s244 = scalar_select %p243, %s25, 1
        %s245 = smul.addr %s244, 4
        %s246 = smul.addr %s245, 8
        %s247 = scalar_lea.vmem %s2, %s246
      $region44: #{encoder_forward.1} parent=39 // pred_fallthru
        _
    $region40: #{encoder_forward.1} parent=5 // pred_fallthru
      _
    %p248 = scmp.le.s32.totalorder 1, %s25
    %p249 = scmp.lt.s32.totalorder %s25, 3
    %p250 = pnand %p248, %p249
    %p251 = pneg %p250
    // Predicated region
    $region45: #{encoder_forward.1} parent=5 // pred_check
      _
    $region46: #{encoder_forward.1} parent=5 // pred_check_branch
      %253 = sbr.rel (%p250) target = $region48
    $region47: #{encoder_forward.1} parent=5 // pred_region
      %s254 = ssub.s32 %s25, 1
      %p255 = scmp.lt.s32.totalorder %s30, 1
      %s256 = scalar_select %p255, %s30, 1
      %s257 = smul.addr %s256, 4
      %s258 = smul.addr %s257, 8
      %s259 = scalar_lea.vmem %s2, %s258
      %p260 = pneg %p51
      %p261 = pneg %p48
      %p262 = pneg %p72
      %p263 = pneg %p69
      %p264 = pneg %p93
      %p265 = pneg %p90
      %p266 = pneg %p114
      %p267 = pneg %p111
      %p268 = pneg %p135
      %p269 = pneg %p132
      %p270 = pneg %p156
      %p271 = pneg %p153
      %p272 = pneg %p177
      %p273 = pneg %p174
      %p274 = pneg %p203
      %p275 = pneg %p200
      %p276 = scmp.lt.s32.totalorder %s30, 1
      %s277 = scalar_select %p276, %s30, 1
      %s278 = smul.addr %s277, 12
      %s279 = smul.addr %s278, 4
      %s280 = scalar_lea.vmem %s9, %s279
      %p281 = scmp.lt.s32.totalorder %s30, 1
      %s282 = scalar_select %p281, %s30, 1
      %s283 = smul.addr %s282, 4
      %s284 = smul.addr %s283, 8
      %s285 = scalar_lea.vmem %s2, %s284
      %p286 = scmp.lt.s32.totalorder %s30, 1
      %s287 = scalar_select %p286, %s30, 1
      %s288 = smul.addr %s287, 12
      %s289 = smul.addr %s288, 4
      %s290 = scalar_lea.vmem %s9, %s289
      %vm291 = vcmask 146432
      %292 = vst.msk [vmem:[#allocation2] sm:$0xff] %vm291, 0.0
      %293 = vst.msk [vmem:[#allocation2 + $0x8] sm:$0xff] %vm291, 0.0
      %vm294 = vcmask 140288
      %295 = vst.msk [vmem:[#allocation2 + $0x10] sm:$0x3] %vm294, 0.0
      %296 = vst.msk [vmem:[#allocation2 + $0x18] sm:$0xff] %vm291, 0.0
      %297 = vst.msk [vmem:[#allocation2 + $0x20] sm:$0xff] %vm291, 0.0
      %298 = vst.msk [vmem:[#allocation2 + $0x28] sm:$0x3] %vm294, 0.0
      %vm299 = vcmask 195584
      %300 = vst.msk [vmem:[#allocation3] sm:$0xff] %vm299, 0.0
      %301 = vst.msk [vmem:[#allocation3 + $0x8] sm:$0xff] %vm299, 0.0
      %302 = vst.msk [vmem:[#allocation3 + $0x10] sm:$0xff] %vm299, 0.0
      %303 = vst.msk [vmem:[#allocation3 + $0x18] sm:$0xff] %vm299, 0.0
      %304 = vst.msk [vmem:[#allocation3 + $0x20] sm:$0xff] %vm299, 0.0
      %305 = vst.msk [vmem:[#allocation3 + $0x28] sm:$0xff] %vm299, 0.0
      %v306 = vld [vmem:[%s285] sm:$0xff]
      %v307 = vld [vmem:[%s285 + $0x8] sm:$0xff]
      %v308 = vld [vmem:[%s285 + $0x10] sm:$0xff]
      %v309 = vld [vmem:[%s285 + $0x18] sm:$0xff]
      %314 = vrot.lane.b32.xlu0 %v306, 1
      %v315 = vpop.permute.xlu0 %314
      %316 = vrot.lane.b32.xlu0 %v307, 1
      %v317 = vpop.permute.xlu0 %316
      %318 = vrot.lane.b32.xlu0 %v308, 1
      %v319 = vpop.permute.xlu0 %318
      %320 = vrot.lane.b32.xlu0 %v309, 1
      %v321 = vpop.permute.xlu0 %320
      %vm326 = vcmask 138248
      %327 = vst.msk [vmem:[#allocation2 + $0x1] sm:$0xff] %vm326, %v315
      %328 = vst.msk [vmem:[#allocation2 + $0x9] sm:$0xff] %vm326, %v317
      %329 = vst.msk [vmem:[#allocation2 + $0x19] sm:$0xff] %vm326, %v319
      %330 = vst.msk [vmem:[#allocation2 + $0x21] sm:$0xff] %vm326, %v321
      %v331 = vld [vmem:[#allocation2] sm:$0xff]
      %v332 = vld [vmem:[#allocation2 + $0x8] sm:$0xff]
      %v333 = vld [vmem:[#allocation2 + $0x18] sm:$0xff]
      %v334 = vld [vmem:[#allocation2 + $0x20] sm:$0xff]
      %v335 = vld [vmem:[#allocation2 + $0x1] sm:$0xff]
      %v336 = vld [vmem:[#allocation2 + $0x9] sm:$0xff]
      %v337 = vld [vmem:[#allocation2 + $0x19] sm:$0xff]
      %v338 = vld [vmem:[#allocation2 + $0x21] sm:$0xff]
      %v339 = vld [vmem:[#allocation2 + $0x2] sm:$0xff]
      %v340 = vld [vmem:[#allocation2 + $0xa] sm:$0xff]
      %v341 = vld [vmem:[#allocation2 + $0x1a] sm:$0xff]
      %v342 = vld [vmem:[#allocation2 + $0x22] sm:$0xff]
      %s343 = sld [smem:[#allocation6]]
      %v344 = vstv %s343
      %s345 = sld [smem:[#allocation5]]
      %v346 = vstv %s345
      %v347 = vmul.f32 %v331, %v346
      %v348 = vmul.f32 %v332, %v346
      %v349 = vadd.f32 %v344, %v347
      %v350 = vadd.f32 %v344, %v348
      %s351 = sld [smem:[#allocation5 + $0x9]]
      %v352 = vstv %s351
      %v353 = vmul.f32 %v333, %v352
      %v354 = vmul.f32 %v334, %v352
      %v355 = vadd.f32 %v349, %v353
      %v356 = vadd.f32 %v350, %v354
      %s357 = sld [smem:[#allocation5 + $0x1]]
      %v358 = vstv %s357
      %v359 = vmul.f32 %v331, %v358
      %v360 = vmul.f32 %v332, %v358
      %363 = vrot.lane.b32.xlu0 %v359, 127
      %v364 = vpop.permute.xlu0 %363
      %365 = vrot.lane.b32.xlu0 %v360, 127
      %v366 = vpop.permute.xlu0 %365
      %v369 = vadd.f32 %v355, %v364
      %v370 = vadd.f32 %v356, %v366
      %s371 = sld [smem:[#allocation5 + $0xa]]
      %v372 = vstv %s371
      %v373 = vmul.f32 %v333, %v372
      %v374 = vmul.f32 %v334, %v372
      %377 = vrot.lane.b32.xlu0 %v373, 127
      %v378 = vpop.permute.xlu0 %377
      %379 = vrot.lane.b32.xlu0 %v374, 127
      %v380 = vpop.permute.xlu0 %379
      %v383 = vadd.f32 %v369, %v378
      %v384 = vadd.f32 %v370, %v380
      %s385 = sld [smem:[#allocation5 + $0x2]]
      %v386 = vstv %s385
      %v387 = vmul.f32 %v331, %v386
      %v388 = vmul.f32 %v332, %v386
      %391 = vrot.lane.b32.xlu0 %v387, 126
      %v392 = vpop.permute.xlu0 %391
      %393 = vrot.lane.b32.xlu0 %v388, 126
      %v394 = vpop.permute.xlu0 %393
      %v397 = vadd.f32 %v383, %v392
      %v398 = vadd.f32 %v384, %v394
      %s399 = sld [smem:[#allocation5 + $0xb]]
      %v400 = vstv %s399
      %v401 = vmul.f32 %v333, %v400
      %v402 = vmul.f32 %v334, %v400
      %405 = vrot.lane.b32.xlu0 %v401, 126
      %v406 = vpop.permute.xlu0 %405
      %407 = vrot.lane.b32.xlu0 %v402, 126
      %v408 = vpop.permute.xlu0 %407
      %v411 = vadd.f32 %v397, %v406
      %v412 = vadd.f32 %v398, %v408
      %s413 = sld [smem:[#allocation5 + $0x3]]
      %v414 = vstv %s413
      %v415 = vmul.f32 %v335, %v414
      %v416 = vmul.f32 %v336, %v414
      %v417 = vadd.f32 %v411, %v415
      %v418 = vadd.f32 %v412, %v416
      %s419 = sld [smem:[#allocation5 + $0xc]]
      %v420 = vstv %s419
      %v421 = vmul.f32 %v337, %v420
      %v422 = vmul.f32 %v338, %v420
      %v423 = vadd.f32 %v417, %v421
      %v424 = vadd.f32 %v418, %v422
      %s425 = sld [smem:[#allocation5 + $0x4]]
      %v426 = vstv %s425
      %v427 = vmul.f32 %v335, %v426
      %v428 = vmul.f32 %v336, %v426
      %431 = vrot.lane.b32.xlu0 %v427, 127
      %v432 = vpop.permute.xlu0 %431
      %433 = vrot.lane.b32.xlu0 %v428, 127
      %v434 = vpop.permute.xlu0 %433
      %v437 = vadd.f32 %v423, %v432
      %v438 = vadd.f32 %v424, %v434
      %s439 = sld [smem:[#allocation5 + $0xd]]
      %v440 = vstv %s439
      %v441 = vmul.f32 %v337, %v440
      %v442 = vmul.f32 %v338, %v440
      %445 = vrot.lane.b32.xlu0 %v441, 127
      %v446 = vpop.permute.xlu0 %445
      %447 = vrot.lane.b32.xlu0 %v442, 127
      %v448 = vpop.permute.xlu0 %447
      %v451 = vadd.f32 %v437, %v446
      %v452 = vadd.f32 %v438, %v448
      %s453 = sld [smem:[#allocation5 + $0x5]]
      %v454 = vstv %s453
      %v455 = vmul.f32 %v335, %v454
      %v456 = vmul.f32 %v336, %v454
      %459 = vrot.lane.b32.xlu0 %v455, 126
      %v460 = vpop.permute.xlu0 %459
      %461 = vrot.lane.b32.xlu0 %v456, 126
      %v462 = vpop.permute.xlu0 %461
      %v465 = vadd.f32 %v451, %v460
      %v466 = vadd.f32 %v452, %v462
      %s467 = sld [smem:[#allocation5 + $0xe]]
      %v468 = vstv %s467
      %v469 = vmul.f32 %v337, %v468
      %v470 = vmul.f32 %v338, %v468
      %473 = vrot.lane.b32.xlu0 %v469, 126
      %v474 = vpop.permute.xlu0 %473
      %475 = vrot.lane.b32.xlu0 %v470, 126
      %v476 = vpop.permute.xlu0 %475
      %v479 = vadd.f32 %v465, %v474
      %v480 = vadd.f32 %v466, %v476
      %s481 = sld [smem:[#allocation5 + $0x6]]
      %v482 = vstv %s481
      %v483 = vmul.f32 %v339, %v482
      %v484 = vmul.f32 %v340, %v482
      %v485 = vadd.f32 %v479, %v483
      %v486 = vadd.f32 %v480, %v484
      %s487 = sld [smem:[#allocation5 + $0xf]]
      %v488 = vstv %s487
      %v489 = vmul.f32 %v341, %v488
      %v490 = vmul.f32 %v342, %v488
      %v491 = vadd.f32 %v485, %v489
      %v492 = vadd.f32 %v486, %v490
      %s493 = sld [smem:[#allocation5 + $0x7]]
      %v494 = vstv %s493
      %v495 = vmul.f32 %v339, %v494
      %v496 = vmul.f32 %v340, %v494
      %499 = vrot.lane.b32.xlu0 %v495, 127
      %v500 = vpop.permute.xlu0 %499
      %501 = vrot.lane.b32.xlu0 %v496, 127
      %v502 = vpop.permute.xlu0 %501
      %v505 = vadd.f32 %v491, %v500
      %v506 = vadd.f32 %v492, %v502
      %s507 = sld [smem:[#allocation5 + $0x10]]
      %v508 = vstv %s507
      %v509 = vmul.f32 %v341, %v508
      %v510 = vmul.f32 %v342, %v508
      %513 = vrot.lane.b32.xlu0 %v509, 127
      %v514 = vpop.permute.xlu0 %513
      %515 = vrot.lane.b32.xlu0 %v510, 127
      %v516 = vpop.permute.xlu0 %515
      %v519 = vadd.f32 %v505, %v514
      %v520 = vadd.f32 %v506, %v516
      %s521 = sld [smem:[#allocation5 + $0x8]]
      %v522 = vstv %s521
      %v523 = vmul.f32 %v339, %v522
      %v524 = vmul.f32 %v340, %v522
      %527 = vrot.lane.b32.xlu0 %v523, 126
      %v528 = vpop.permute.xlu0 %527
      %529 = vrot.lane.b32.xlu0 %v524, 126
      %v530 = vpop.permute.xlu0 %529
      %v533 = vadd.f32 %v519, %v528
      %v534 = vadd.f32 %v520, %v530
      %s535 = sld [smem:[#allocation5 + $0x11]]
      %v536 = vstv %s535
      %v537 = vmul.f32 %v341, %v536
      %v538 = vmul.f32 %v342, %v536
      %541 = vrot.lane.b32.xlu0 %v537, 126
      %v542 = vpop.permute.xlu0 %541
      %543 = vrot.lane.b32.xlu0 %v538, 126
      %v544 = vpop.permute.xlu0 %543
      %v547 = vadd.f32 %v533, %v542
      %v548 = vadd.f32 %v534, %v544
      %vm549 = vcmp.ge.f32.partialorder %v547, 0.0
      %vm550 = vcmp.ge.f32.partialorder %v548, 0.0
      %v551 = vmul.f32 %v547, 0.3
      %v552 = vmul.f32 %v548, 0.3
      %v553 = vsel %vm549, %v547, %v551
      %v554 = vsel %vm550, %v548, %v552
      %s555 = sld [smem:[#allocation6 + $0x1]]
      %v556 = vstv %s555
      %s557 = sld [smem:[#allocation5 + $0x12]]
      %v558 = vstv %s557
      %v559 = vmul.f32 %v331, %v558
      %v560 = vmul.f32 %v332, %v558
      %v561 = vadd.f32 %v556, %v559
      %v562 = vadd.f32 %v556, %v560
      %s563 = sld [smem:[#allocation5 + $0x1b]]
      %v564 = vstv %s563
      %v565 = vmul.f32 %v333, %v564
      %v566 = vmul.f32 %v334, %v564
      %v567 = vadd.f32 %v561, %v565
      %v568 = vadd.f32 %v562, %v566
      %s569 = sld [smem:[#allocation5 + $0x13]]
      %v570 = vstv %s569
      %v571 = vmul.f32 %v331, %v570
      %v572 = vmul.f32 %v332, %v570
      %575 = vrot.lane.b32.xlu0 %v571, 127
      %v576 = vpop.permute.xlu0 %575
      %577 = vrot.lane.b32.xlu0 %v572, 127
      %v578 = vpop.permute.xlu0 %577
      %v581 = vadd.f32 %v567, %v576
      %v582 = vadd.f32 %v568, %v578
      %s583 = sld [smem:[#allocation5 + $0x1c]]
      %v584 = vstv %s583
      %v585 = vmul.f32 %v333, %v584
      %v586 = vmul.f32 %v334, %v584
      %589 = vrot.lane.b32.xlu0 %v585, 127
      %v590 = vpop.permute.xlu0 %589
      %591 = vrot.lane.b32.xlu0 %v586, 127
      %v592 = vpop.permute.xlu0 %591
      %v595 = vadd.f32 %v581, %v590
      %v596 = vadd.f32 %v582, %v592
      %s597 = sld [smem:[#allocation5 + $0x14]]
      %v598 = vstv %s597
      %v599 = vmul.f32 %v331, %v598
      %v600 = vmul.f32 %v332, %v598
      %603 = vrot.lane.b32.xlu0 %v599, 126
      %v604 = vpop.permute.xlu0 %603
      %605 = vrot.lane.b32.xlu0 %v600, 126
      %v606 = vpop.permute.xlu0 %605
      %v609 = vadd.f32 %v595, %v604
      %v610 = vadd.f32 %v596, %v606
      %s611 = sld [smem:[#allocation5 + $0x1d]]
      %v612 = vstv %s611
      %v613 = vmul.f32 %v333, %v612
      %v614 = vmul.f32 %v334, %v612
      %617 = vrot.lane.b32.xlu0 %v613, 126
      %v618 = vpop.permute.xlu0 %617
      %619 = vrot.lane.b32.xlu0 %v614, 126
      %v620 = vpop.permute.xlu0 %619
      %v623 = vadd.f32 %v609, %v618
      %v624 = vadd.f32 %v610, %v620
      %s625 = sld [smem:[#allocation5 + $0x15]]
      %v626 = vstv %s625
      %v627 = vmul.f32 %v335, %v626
      %v628 = vmul.f32 %v336, %v626
      %v629 = vadd.f32 %v623, %v627
      %v630 = vadd.f32 %v624, %v628
      %s631 = sld [smem:[#allocation5 + $0x1e]]
      %v632 = vstv %s631
      %v633 = vmul.f32 %v337, %v632
      %v634 = vmul.f32 %v338, %v632
      %v635 = vadd.f32 %v629, %v633
      %v636 = vadd.f32 %v630, %v634
      %s637 = sld [smem:[#allocation5 + $0x16]]
      %v638 = vstv %s637
      %v639 = vmul.f32 %v335, %v638
      %v640 = vmul.f32 %v336, %v638
      %643 = vrot.lane.b32.xlu0 %v639, 127
      %v644 = vpop.permute.xlu0 %643
      %645 = vrot.lane.b32.xlu0 %v640, 127
      %v646 = vpop.permute.xlu0 %645
      %v649 = vadd.f32 %v635, %v644
      %v650 = vadd.f32 %v636, %v646
      %s651 = sld [smem:[#allocation5 + $0x1f]]
      %v652 = vstv %s651
      %v653 = vmul.f32 %v337, %v652
      %v654 = vmul.f32 %v338, %v652
      %657 = vrot.lane.b32.xlu0 %v653, 127
      %v658 = vpop.permute.xlu0 %657
      %659 = vrot.lane.b32.xlu0 %v654, 127
      %v660 = vpop.permute.xlu0 %659
      %v663 = vadd.f32 %v649, %v658
      %v664 = vadd.f32 %v650, %v660
      %s665 = sld [smem:[#allocation5 + $0x17]]
      %v666 = vstv %s665
      %v667 = vmul.f32 %v335, %v666
      %v668 = vmul.f32 %v336, %v666
      %671 = vrot.lane.b32.xlu0 %v667, 126
      %v672 = vpop.permute.xlu0 %671
      %673 = vrot.lane.b32.xlu0 %v668, 126
      %v674 = vpop.permute.xlu0 %673
      %v677 = vadd.f32 %v663, %v672
      %v678 = vadd.f32 %v664, %v674
      %s679 = sld [smem:[#allocation5 + $0x20]]
      %v680 = vstv %s679
      %v681 = vmul.f32 %v337, %v680
      %v682 = vmul.f32 %v338, %v680
      %685 = vrot.lane.b32.xlu0 %v681, 126
      %v686 = vpop.permute.xlu0 %685
      %687 = vrot.lane.b32.xlu0 %v682, 126
      %v688 = vpop.permute.xlu0 %687
      %v691 = vadd.f32 %v677, %v686
      %v692 = vadd.f32 %v678, %v688
      %s693 = sld [smem:[#allocation5 + $0x18]]
      %v694 = vstv %s693
      %v695 = vmul.f32 %v339, %v694
      %v696 = vmul.f32 %v340, %v694
      %v697 = vadd.f32 %v691, %v695
      %v698 = vadd.f32 %v692, %v696
      %s699 = sld [smem:[#allocation5 + $0x21]]
      %v700 = vstv %s699
      %v701 = vmul.f32 %v341, %v700
      %v702 = vmul.f32 %v342, %v700
      %v703 = vadd.f32 %v697, %v701
      %v704 = vadd.f32 %v698, %v702
      %s705 = sld [smem:[#allocation5 + $0x19]]
      %v706 = vstv %s705
      %v707 = vmul.f32 %v339, %v706
      %v708 = vmul.f32 %v340, %v706
      %711 = vrot.lane.b32.xlu0 %v707, 127
      %v712 = vpop.permute.xlu0 %711
      %713 = vrot.lane.b32.xlu0 %v708, 127
      %v714 = vpop.permute.xlu0 %713
      %v717 = vadd.f32 %v703, %v712
      %v718 = vadd.f32 %v704, %v714
      %s719 = sld [smem:[#allocation5 + $0x22]]
      %v720 = vstv %s719
      %v721 = vmul.f32 %v341, %v720
      %v722 = vmul.f32 %v342, %v720
      %725 = vrot.lane.b32.xlu0 %v721, 127
      %v726 = vpop.permute.xlu0 %725
      %727 = vrot.lane.b32.xlu0 %v722, 127
      %v728 = vpop.permute.xlu0 %727
      %v731 = vadd.f32 %v717, %v726
      %v732 = vadd.f32 %v718, %v728
      %s733 = sld [smem:[#allocation5 + $0x1a]]
      %v734 = vstv %s733
      %v735 = vmul.f32 %v339, %v734
      %v736 = vmul.f32 %v340, %v734
      %739 = vrot.lane.b32.xlu0 %v735, 126
      %v740 = vpop.permute.xlu0 %739
      %741 = vrot.lane.b32.xlu0 %v736, 126
      %v742 = vpop.permute.xlu0 %741
      %v745 = vadd.f32 %v731, %v740
      %v746 = vadd.f32 %v732, %v742
      %s747 = sld [smem:[#allocation5 + $0x23]]
      %v748 = vstv %s747
      %v749 = vmul.f32 %v341, %v748
      %v750 = vmul.f32 %v342, %v748
      %753 = vrot.lane.b32.xlu0 %v749, 126
      %v754 = vpop.permute.xlu0 %753
      %755 = vrot.lane.b32.xlu0 %v750, 126
      %v756 = vpop.permute.xlu0 %755
      %v759 = vadd.f32 %v745, %v754
      %v760 = vadd.f32 %v746, %v756
      %vm761 = vcmp.ge.f32.partialorder %v759, 0.0
      %vm762 = vcmp.ge.f32.partialorder %v760, 0.0
      %v763 = vmul.f32 %v759, 0.3
      %v764 = vmul.f32 %v760, 0.3
      %v765 = vsel %vm761, %v759, %v763
      %v766 = vsel %vm762, %v760, %v764
      %769 = vrot.lane.b32.xlu0 %v553, 4
      %v770 = vpop.permute.xlu0 %769
      %771 = vrot.lane.b32.xlu0 %v554, 4
      %v772 = vpop.permute.xlu0 %771
      %vm775 = vcmask 162848
      %776 = vst.msk [vmem:[#allocation3 + $0x4] sm:$0xff] %vm775, %v770
      %777 = vst.msk [vmem:[#allocation3 + $0xc] sm:$0xff] %vm775, %v772
      %780 = vrot.lane.b32.xlu0 %v765, 4
      %v781 = vpop.permute.xlu0 %780
      %782 = vrot.lane.b32.xlu0 %v766, 4
      %v783 = vpop.permute.xlu0 %782
      %s786 = scalar_lea.vmem [#allocation3], 24
      %787 = vst.msk [vmem:[%s786 + $0x4] sm:$0xff] %vm775, %v781
      %788 = vst.msk [vmem:[%s786 + $0xc] sm:$0xff] %vm775, %v783
      %v789 = vld [vmem:[#allocation3 + $0x4] sm:$0xff]
      %v790 = vld [vmem:[#allocation3 + $0xc] sm:$0xff]
      %v791 = vld [vmem:[#allocation3 + $0x1c] sm:$0xff]
      %v792 = vld [vmem:[#allocation3 + $0x24] sm:$0xff]
      %s793 = sld [smem:[#allocation6 + $0x2]]
      %v794 = vstv %s793
      %s795 = sld [smem:[#allocation5 + $0x24]]
      %v796 = vstv %s795
      %v797 = vmul.f32 %v789, %v796
      %v798 = vmul.f32 %v790, %v796
      %v799 = vadd.f32 %v794, %v797
      %v800 = vadd.f32 %v794, %v798
      %s801 = sld [smem:[#allocation5 + $0x2d]]
      %v802 = vstv %s801
      %v803 = vmul.f32 %v791, %v802
      %v804 = vmul.f32 %v792, %v802
      %v805 = vadd.f32 %v799, %v803
      %v806 = vadd.f32 %v800, %v804
      %s807 = sld [smem:[#allocation5 + $0x25]]
      %v808 = vstv %s807
      %v809 = vmul.f32 %v789, %v808
      %v810 = vmul.f32 %v790, %v808
      %813 = vrot.lane.b32.xlu0 %v809, 127
      %v814 = vpop.permute.xlu0 %813
      %815 = vrot.lane.b32.xlu0 %v810, 127
      %v816 = vpop.permute.xlu0 %815
      %v819 = vadd.f32 %v805, %v814
      %v820 = vadd.f32 %v806, %v816
      %s821 = sld [smem:[#allocation5 + $0x2e]]
      %v822 = vstv %s821
      %v823 = vmul.f32 %v791, %v822
      %v824 = vmul.f32 %v792, %v822
      %827 = vrot.lane.b32.xlu0 %v823, 127
      %v828 = vpop.permute.xlu0 %827
      %829 = vrot.lane.b32.xlu0 %v824, 127
      %v830 = vpop.permute.xlu0 %829
      %v833 = vadd.f32 %v819, %v828
      %v834 = vadd.f32 %v820, %v830
      %s835 = sld [smem:[#allocation5 + $0x26]]
      %v836 = vstv %s835
      %v837 = vmul.f32 %v789, %v836
      %v838 = vmul.f32 %v790, %v836
      %841 = vrot.lane.b32.xlu0 %v837, 126
      %v842 = vpop.permute.xlu0 %841
      %843 = vrot.lane.b32.xlu0 %v838, 126
      %v844 = vpop.permute.xlu0 %843
      %v847 = vadd.f32 %v833, %v842
      %v848 = vadd.f32 %v834, %v844
      %s849 = sld [smem:[#allocation5 + $0x2f]]
      %v850 = vstv %s849
      %v851 = vmul.f32 %v791, %v850
      %v852 = vmul.f32 %v792, %v850
      %855 = vrot.lane.b32.xlu0 %v851, 126
      %v856 = vpop.permute.xlu0 %855
      %857 = vrot.lane.b32.xlu0 %v852, 126
      %v858 = vpop.permute.xlu0 %857
      %v861 = vadd.f32 %v847, %v856
      %v862 = vadd.f32 %v848, %v858
      %s863 = sld [smem:[#allocation5 + $0x27]]
      %v864 = vstv %s863
      %v865 = vmul.f32 %v789, %v864
      %v866 = vmul.f32 %v790, %v864
      %869 = vrot.lane.b32.xlu0 %v865, 125
      %v870 = vpop.permute.xlu0 %869
      %871 = vrot.lane.b32.xlu0 %v866, 125
      %v872 = vpop.permute.xlu0 %871
      %v875 = vadd.f32 %v861, %v870
      %v876 = vadd.f32 %v862, %v872
      %s877 = sld [smem:[#allocation5 + $0x30]]
      %v878 = vstv %s877
      %v879 = vmul.f32 %v791, %v878
      %v880 = vmul.f32 %v792, %v878
      %883 = vrot.lane.b32.xlu0 %v879, 125
      %v884 = vpop.permute.xlu0 %883
      %885 = vrot.lane.b32.xlu0 %v880, 125
      %v886 = vpop.permute.xlu0 %885
      %v889 = vadd.f32 %v875, %v884
      %v890 = vadd.f32 %v876, %v886
      %s891 = sld [smem:[#allocation5 + $0x28]]
      %v892 = vstv %s891
      %v893 = vmul.f32 %v789, %v892
      %v894 = vmul.f32 %v790, %v892
      %897 = vrot.lane.b32.xlu0 %v893, 124
      %v898 = vpop.permute.xlu0 %897
      %899 = vrot.lane.b32.xlu0 %v894, 124
      %v900 = vpop.permute.xlu0 %899
      %v903 = vadd.f32 %v889, %v898
      %v904 = vadd.f32 %v890, %v900
      %s905 = sld [smem:[#allocation5 + $0x31]]
      %v906 = vstv %s905
      %v907 = vmul.f32 %v791, %v906
      %v908 = vmul.f32 %v792, %v906
      %911 = vrot.lane.b32.xlu0 %v907, 124
      %v912 = vpop.permute.xlu0 %911
      %913 = vrot.lane.b32.xlu0 %v908, 124
      %v914 = vpop.permute.xlu0 %913
      %v917 = vadd.f32 %v903, %v912
      %v918 = vadd.f32 %v904, %v914
      %s919 = sld [smem:[#allocation5 + $0x29]]
      %v920 = vstv %s919
      %v921 = vmul.f32 %v789, %v920
      %v922 = vmul.f32 %v790, %v920
      %925 = vrot.lane.b32.xlu0 %v921, 123
      %v926 = vpop.permute.xlu0 %925
      %927 = vrot.lane.b32.xlu0 %v922, 123
      %v928 = vpop.permute.xlu0 %927
      %v931 = vadd.f32 %v917, %v926
      %v932 = vadd.f32 %v918, %v928
      %s933 = sld [smem:[#allocation5 + $0x32]]
      %v934 = vstv %s933
      %v935 = vmul.f32 %v791, %v934
      %v936 = vmul.f32 %v792, %v934
      %939 = vrot.lane.b32.xlu0 %v935, 123
      %v940 = vpop.permute.xlu0 %939
      %941 = vrot.lane.b32.xlu0 %v936, 123
      %v942 = vpop.permute.xlu0 %941
      %v945 = vadd.f32 %v931, %v940
      %v946 = vadd.f32 %v932, %v942
      %s947 = sld [smem:[#allocation5 + $0x2a]]
      %v948 = vstv %s947
      %v949 = vmul.f32 %v789, %v948
      %v950 = vmul.f32 %v790, %v948
      %953 = vrot.lane.b32.xlu0 %v949, 122
      %v954 = vpop.permute.xlu0 %953
      %955 = vrot.lane.b32.xlu0 %v950, 122
      %v956 = vpop.permute.xlu0 %955
      %v959 = vadd.f32 %v945, %v954
      %v960 = vadd.f32 %v946, %v956
      %s961 = sld [smem:[#allocation5 + $0x33]]
      %v962 = vstv %s961
      %v963 = vmul.f32 %v791, %v962
      %v964 = vmul.f32 %v792, %v962
      %967 = vrot.lane.b32.xlu0 %v963, 122
      %v968 = vpop.permute.xlu0 %967
      %969 = vrot.lane.b32.xlu0 %v964, 122
      %v970 = vpop.permute.xlu0 %969
      %v973 = vadd.f32 %v959, %v968
      %v974 = vadd.f32 %v960, %v970
      %s975 = sld [smem:[#allocation5 + $0x2b]]
      %v976 = vstv %s975
      %v977 = vmul.f32 %v789, %v976
      %v978 = vmul.f32 %v790, %v976
      %981 = vrot.lane.b32.xlu0 %v977, 121
      %v982 = vpop.permute.xlu0 %981
      %983 = vrot.lane.b32.xlu0 %v978, 121
      %v984 = vpop.permute.xlu0 %983
      %v987 = vadd.f32 %v973, %v982
      %v988 = vadd.f32 %v974, %v984
      %s989 = sld [smem:[#allocation5 + $0x34]]
      %v990 = vstv %s989
      %v991 = vmul.f32 %v791, %v990
      %v992 = vmul.f32 %v792, %v990
      %995 = vrot.lane.b32.xlu0 %v991, 121
      %v996 = vpop.permute.xlu0 %995
      %997 = vrot.lane.b32.xlu0 %v992, 121
      %v998 = vpop.permute.xlu0 %997
      %v1001 = vadd.f32 %v987, %v996
      %v1002 = vadd.f32 %v988, %v998
      %s1003 = sld [smem:[#allocation5 + $0x2c]]
      %v1004 = vstv %s1003
      %v1005 = vmul.f32 %v789, %v1004
      %v1006 = vmul.f32 %v790, %v1004
      %1009 = vrot.lane.b32.xlu0 %v1005, 120
      %v1010 = vpop.permute.xlu0 %1009
      %1011 = vrot.lane.b32.xlu0 %v1006, 120
      %v1012 = vpop.permute.xlu0 %1011
      %v1015 = vadd.f32 %v1001, %v1010
      %v1016 = vadd.f32 %v1002, %v1012
      %s1017 = sld [smem:[#allocation5 + $0x35]]
      %v1018 = vstv %s1017
      %v1019 = vmul.f32 %v791, %v1018
      %v1020 = vmul.f32 %v792, %v1018
      %1023 = vrot.lane.b32.xlu0 %v1019, 120
      %v1024 = vpop.permute.xlu0 %1023
      %1025 = vrot.lane.b32.xlu0 %v1020, 120
      %v1026 = vpop.permute.xlu0 %1025
      %v1029 = vadd.f32 %v1015, %v1024
      %v1030 = vadd.f32 %v1016, %v1026
      %vm1031 = vcmp.ge.f32.partialorder %v1029, 0.0
      %vm1032 = vcmp.ge.f32.partialorder %v1030, 0.0
      %v1033 = vmul.f32 %v1029, 0.3
      %v1034 = vmul.f32 %v1030, 0.3
      %v1035 = vsel %vm1031, %v1029, %v1033
      %v1036 = vsel %vm1032, %v1030, %v1034
      %s1037 = sld [smem:[#allocation6 + $0x3]]
      %v1038 = vstv %s1037
      %s1039 = sld [smem:[#allocation5 + $0x36]]
      %v1040 = vstv %s1039
      %v1041 = vmul.f32 %v789, %v1040
      %v1042 = vmul.f32 %v790, %v1040
      %v1043 = vadd.f32 %v1038, %v1041
      %v1044 = vadd.f32 %v1038, %v1042
      %s1045 = sld [smem:[#allocation5 + $0x3f]]
      %v1046 = vstv %s1045
      %v1047 = vmul.f32 %v791, %v1046
      %v1048 = vmul.f32 %v792, %v1046
      %v1049 = vadd.f32 %v1043, %v1047
      %v1050 = vadd.f32 %v1044, %v1048
      %s1051 = sld [smem:[#allocation5 + $0x37]]
      %v1052 = vstv %s1051
      %v1053 = vmul.f32 %v789, %v1052
      %v1054 = vmul.f32 %v790, %v1052
      %1057 = vrot.lane.b32.xlu0 %v1053, 127
      %v1058 = vpop.permute.xlu0 %1057
      %1059 = vrot.lane.b32.xlu0 %v1054, 127
      %v1060 = vpop.permute.xlu0 %1059
      %v1063 = vadd.f32 %v1049, %v1058
      %v1064 = vadd.f32 %v1050, %v1060
      %s1065 = sld [smem:[#allocation5 + $0x40]]
      %v1066 = vstv %s1065
      %v1067 = vmul.f32 %v791, %v1066
      %v1068 = vmul.f32 %v792, %v1066
      %1071 = vrot.lane.b32.xlu0 %v1067, 127
      %v1072 = vpop.permute.xlu0 %1071
      %1073 = vrot.lane.b32.xlu0 %v1068, 127
      %v1074 = vpop.permute.xlu0 %1073
      %v1077 = vadd.f32 %v1063, %v1072
      %v1078 = vadd.f32 %v1064, %v1074
      %s1079 = sld [smem:[#allocation5 + $0x38]]
      %v1080 = vstv %s1079
      %v1081 = vmul.f32 %v789, %v1080
      %v1082 = vmul.f32 %v790, %v1080
      %1085 = vrot.lane.b32.xlu0 %v1081, 126
      %v1086 = vpop.permute.xlu0 %1085
      %1087 = vrot.lane.b32.xlu0 %v1082, 126
      %v1088 = vpop.permute.xlu0 %1087
      %v1091 = vadd.f32 %v1077, %v1086
      %v1092 = vadd.f32 %v1078, %v1088
      %s1093 = sld [smem:[#allocation5 + $0x41]]
      %v1094 = vstv %s1093
      %v1095 = vmul.f32 %v791, %v1094
      %v1096 = vmul.f32 %v792, %v1094
      %1099 = vrot.lane.b32.xlu0 %v1095, 126
      %v1100 = vpop.permute.xlu0 %1099
      %1101 = vrot.lane.b32.xlu0 %v1096, 126
      %v1102 = vpop.permute.xlu0 %1101
      %v1105 = vadd.f32 %v1091, %v1100
      %v1106 = vadd.f32 %v1092, %v1102
      %s1107 = sld [smem:[#allocation5 + $0x39]]
      %v1108 = vstv %s1107
      %v1109 = vmul.f32 %v789, %v1108
      %v1110 = vmul.f32 %v790, %v1108
      %1113 = vrot.lane.b32.xlu0 %v1109, 125
      %v1114 = vpop.permute.xlu0 %1113
      %1115 = vrot.lane.b32.xlu0 %v1110, 125
      %v1116 = vpop.permute.xlu0 %1115
      %v1119 = vadd.f32 %v1105, %v1114
      %v1120 = vadd.f32 %v1106, %v1116
      %s1121 = sld [smem:[#allocation5 + $0x42]]
      %v1122 = vstv %s1121
      %v1123 = vmul.f32 %v791, %v1122
      %v1124 = vmul.f32 %v792, %v1122
      %1127 = vrot.lane.b32.xlu0 %v1123, 125
      %v1128 = vpop.permute.xlu0 %1127
      %1129 = vrot.lane.b32.xlu0 %v1124, 125
      %v1130 = vpop.permute.xlu0 %1129
      %v1133 = vadd.f32 %v1119, %v1128
      %v1134 = vadd.f32 %v1120, %v1130
      %s1135 = sld [smem:[#allocation5 + $0x3a]]
      %v1136 = vstv %s1135
      %v1137 = vmul.f32 %v789, %v1136
      %v1138 = vmul.f32 %v790, %v1136
      %1141 = vrot.lane.b32.xlu0 %v1137, 124
      %v1142 = vpop.permute.xlu0 %1141
      %1143 = vrot.lane.b32.xlu0 %v1138, 124
      %v1144 = vpop.permute.xlu0 %1143
      %v1147 = vadd.f32 %v1133, %v1142
      %v1148 = vadd.f32 %v1134, %v1144
      %s1149 = sld [smem:[#allocation5 + $0x43]]
      %v1150 = vstv %s1149
      %v1151 = vmul.f32 %v791, %v1150
      %v1152 = vmul.f32 %v792, %v1150
      %1155 = vrot.lane.b32.xlu0 %v1151, 124
      %v1156 = vpop.permute.xlu0 %1155
      %1157 = vrot.lane.b32.xlu0 %v1152, 124
      %v1158 = vpop.permute.xlu0 %1157
      %v1161 = vadd.f32 %v1147, %v1156
      %v1162 = vadd.f32 %v1148, %v1158
      %s1163 = sld [smem:[#allocation5 + $0x3b]]
      %v1164 = vstv %s1163
      %v1165 = vmul.f32 %v789, %v1164
      %v1166 = vmul.f32 %v790, %v1164
      %1169 = vrot.lane.b32.xlu0 %v1165, 123
      %v1170 = vpop.permute.xlu0 %1169
      %1171 = vrot.lane.b32.xlu0 %v1166, 123
      %v1172 = vpop.permute.xlu0 %1171
      %v1175 = vadd.f32 %v1161, %v1170
      %v1176 = vadd.f32 %v1162, %v1172
      %s1177 = sld [smem:[#allocation5 + $0x44]]
      %v1178 = vstv %s1177
      %v1179 = vmul.f32 %v791, %v1178
      %v1180 = vmul.f32 %v792, %v1178
      %1183 = vrot.lane.b32.xlu0 %v1179, 123
      %v1184 = vpop.permute.xlu0 %1183
      %1185 = vrot.lane.b32.xlu0 %v1180, 123
      %v1186 = vpop.permute.xlu0 %1185
      %v1189 = vadd.f32 %v1175, %v1184
      %v1190 = vadd.f32 %v1176, %v1186
      %s1191 = sld [smem:[#allocation5 + $0x3c]]
      %v1192 = vstv %s1191
      %v1193 = vmul.f32 %v789, %v1192
      %v1194 = vmul.f32 %v790, %v1192
      %1197 = vrot.lane.b32.xlu0 %v1193, 122
      %v1198 = vpop.permute.xlu0 %1197
      %1199 = vrot.lane.b32.xlu0 %v1194, 122
      %v1200 = vpop.permute.xlu0 %1199
      %v1203 = vadd.f32 %v1189, %v1198
      %v1204 = vadd.f32 %v1190, %v1200
      %s1205 = sld [smem:[#allocation5 + $0x45]]
      %v1206 = vstv %s1205
      %v1207 = vmul.f32 %v791, %v1206
      %v1208 = vmul.f32 %v792, %v1206
      %1211 = vrot.lane.b32.xlu0 %v1207, 122
      %v1212 = vpop.permute.xlu0 %1211
      %1213 = vrot.lane.b32.xlu0 %v1208, 122
      %v1214 = vpop.permute.xlu0 %1213
      %v1217 = vadd.f32 %v1203, %v1212
      %v1218 = vadd.f32 %v1204, %v1214
      %s1219 = sld [smem:[#allocation5 + $0x3d]]
      %v1220 = vstv %s1219
      %v1221 = vmul.f32 %v789, %v1220
      %v1222 = vmul.f32 %v790, %v1220
      %1225 = vrot.lane.b32.xlu0 %v1221, 121
      %v1226 = vpop.permute.xlu0 %1225
      %1227 = vrot.lane.b32.xlu0 %v1222, 121
      %v1228 = vpop.permute.xlu0 %1227
      %v1231 = vadd.f32 %v1217, %v1226
      %v1232 = vadd.f32 %v1218, %v1228
      %s1233 = sld [smem:[#allocation5 + $0x46]]
      %v1234 = vstv %s1233
      %v1235 = vmul.f32 %v791, %v1234
      %v1236 = vmul.f32 %v792, %v1234
      %1239 = vrot.lane.b32.xlu0 %v1235, 121
      %v1240 = vpop.permute.xlu0 %1239
      %1241 = vrot.lane.b32.xlu0 %v1236, 121
      %v1242 = vpop.permute.xlu0 %1241
      %v1245 = vadd.f32 %v1231, %v1240
      %v1246 = vadd.f32 %v1232, %v1242
      %s1247 = sld [smem:[#allocation5 + $0x3e]]
      %v1248 = vstv %s1247
      %v1249 = vmul.f32 %v789, %v1248
      %v1250 = vmul.f32 %v790, %v1248
      %1253 = vrot.lane.b32.xlu0 %v1249, 120
      %v1254 = vpop.permute.xlu0 %1253
      %1255 = vrot.lane.b32.xlu0 %v1250, 120
      %v1256 = vpop.permute.xlu0 %1255
      %v1259 = vadd.f32 %v1245, %v1254
      %v1260 = vadd.f32 %v1246, %v1256
      %s1261 = sld [smem:[#allocation5 + $0x47]]
      %v1262 = vstv %s1261
      %v1263 = vmul.f32 %v791, %v1262
      %v1264 = vmul.f32 %v792, %v1262
      %1267 = vrot.lane.b32.xlu0 %v1263, 120
      %v1268 = vpop.permute.xlu0 %1267
      %1269 = vrot.lane.b32.xlu0 %v1264, 120
      %v1270 = vpop.permute.xlu0 %1269
      %v1273 = vadd.f32 %v1259, %v1268
      %v1274 = vadd.f32 %v1260, %v1270
      %vm1275 = vcmp.ge.f32.partialorder %v1273, 0.0
      %vm1276 = vcmp.ge.f32.partialorder %v1274, 0.0
      %v1277 = vmul.f32 %v1273, 0.3
      %v1278 = vmul.f32 %v1274, 0.3
      %v1279 = vsel %vm1275, %v1273, %v1277
      %v1280 = vsel %vm1276, %v1274, %v1278
      %1283 = vrot.lane.b32.xlu0 %v1035, 4
      %v1284 = vpop.permute.xlu0 %1283
      %1285 = vrot.lane.b32.xlu0 %v1036, 4
      %v1286 = vpop.permute.xlu0 %1285
      %1289 = vst.msk [vmem:[#allocation3 + $0x4] sm:$0xff] %vm775, %v1284
      %1290 = vst.msk [vmem:[#allocation3 + $0xc] sm:$0xff] %vm775, %v1286
      %1293 = vrot.lane.b32.xlu0 %v1279, 4
      %v1294 = vpop.permute.xlu0 %1293
      %1295 = vrot.lane.b32.xlu0 %v1280, 4
      %v1296 = vpop.permute.xlu0 %1295
      %1299 = vst.msk [vmem:[%s786 + $0x4] sm:$0xff] %vm775, %v1294
      %1300 = vst.msk [vmem:[%s786 + $0xc] sm:$0xff] %vm775, %v1296
      %v1301 = vld [vmem:[#allocation3] sm:$0xff]
      %v1302 = vld [vmem:[#allocation3 + $0x8] sm:$0xff]
      %v1303 = vld [vmem:[#allocation3 + $0x18] sm:$0xff]
      %v1304 = vld [vmem:[#allocation3 + $0x20] sm:$0xff]
      %v1305 = vld [vmem:[#allocation3 + $0x1] sm:$0xff]
      %v1306 = vld [vmem:[#allocation3 + $0x9] sm:$0xff]
      %v1307 = vld [vmem:[#allocation3 + $0x19] sm:$0xff]
      %v1308 = vld [vmem:[#allocation3 + $0x21] sm:$0xff]
      %v1309 = vld [vmem:[#allocation3 + $0x2] sm:$0xff]
      %v1310 = vld [vmem:[#allocation3 + $0xa] sm:$0xff]
      %v1311 = vld [vmem:[#allocation3 + $0x1a] sm:$0xff]
      %v1312 = vld [vmem:[#allocation3 + $0x22] sm:$0xff]
      %v1313 = vld [vmem:[#allocation3 + $0x3] sm:$0xff]
      %v1314 = vld [vmem:[#allocation3 + $0xb] sm:$0xff]
      %v1315 = vld [vmem:[#allocation3 + $0x1b] sm:$0xff]
      %v1316 = vld [vmem:[#allocation3 + $0x23] sm:$0xff]
      %v1317 = vld [vmem:[#allocation3 + $0x4] sm:$0xff]
      %v1318 = vld [vmem:[#allocation3 + $0xc] sm:$0xff]
      %v1319 = vld [vmem:[#allocation3 + $0x1c] sm:$0xff]
      %v1320 = vld [vmem:[#allocation3 + $0x24] sm:$0xff]
      %v1321 = vld [vmem:[#allocation3 + $0x5] sm:$0xff]
      %v1322 = vld [vmem:[#allocation3 + $0xd] sm:$0xff]
      %v1323 = vld [vmem:[#allocation3 + $0x1d] sm:$0xff]
      %v1324 = vld [vmem:[#allocation3 + $0x25] sm:$0xff]
      %v1325 = vld [vmem:[#allocation3 + $0x6] sm:$0xff]
      %v1326 = vld [vmem:[#allocation3 + $0xe] sm:$0xff]
      %v1327 = vld [vmem:[#allocation3 + $0x1e] sm:$0xff]
      %v1328 = vld [vmem:[#allocation3 + $0x26] sm:$0xff]
      %v1329 = vld [vmem:[#allocation3 + $0x7] sm:$0xff]
      %v1330 = vld [vmem:[#allocation3 + $0xf] sm:$0xff]
      %v1331 = vld [vmem:[#allocation3 + $0x1f] sm:$0xff]
      %v1332 = vld [vmem:[#allocation3 + $0x27] sm:$0xff]
      %v1333 = vld [vmem:[#allocation3 + $0x10] sm:$0xff]
      %v1334 = vld [vmem:[#allocation3 + $0x28] sm:$0xff]
      %s1335 = sld [smem:[#allocation6 + $0x4]]
      %v1336 = vstv %s1335
      %s1337 = sld [smem:[#allocation5 + $0x48]]
      %v1338 = vstv %s1337
      %v1339 = vmul.f32 %v1301, %v1338
      %v1340 = vmul.f32 %v1302, %v1338
      %v1341 = vadd.f32 %v1336, %v1339
      %v1342 = vadd.f32 %v1336, %v1340
      %s1343 = sld [smem:[#allocation5 + $0x51]]
      %v1344 = vstv %s1343
      %v1345 = vmul.f32 %v1303, %v1344
      %v1346 = vmul.f32 %v1304, %v1344
      %v1347 = vadd.f32 %v1341, %v1345
      %v1348 = vadd.f32 %v1342, %v1346
      %s1349 = sld [smem:[#allocation5 + $0x49]]
      %v1350 = vstv %s1349
      %v1351 = vmul.f32 %v1305, %v1350
      %v1352 = vmul.f32 %v1306, %v1350
      %v1353 = vadd.f32 %v1347, %v1351
      %v1354 = vadd.f32 %v1348, %v1352
      %s1355 = sld [smem:[#allocation5 + $0x52]]
      %v1356 = vstv %s1355
      %v1357 = vmul.f32 %v1307, %v1356
      %v1358 = vmul.f32 %v1308, %v1356
      %v1359 = vadd.f32 %v1353, %v1357
      %v1360 = vadd.f32 %v1354, %v1358
      %s1361 = sld [smem:[#allocation5 + $0x4a]]
      %v1362 = vstv %s1361
      %v1363 = vmul.f32 %v1309, %v1362
      %v1364 = vmul.f32 %v1310, %v1362
      %v1365 = vadd.f32 %v1359, %v1363
      %v1366 = vadd.f32 %v1360, %v1364
      %s1367 = sld [smem:[#allocation5 + $0x53]]
      %v1368 = vstv %s1367
      %v1369 = vmul.f32 %v1311, %v1368
      %v1370 = vmul.f32 %v1312, %v1368
      %v1371 = vadd.f32 %v1365, %v1369
      %v1372 = vadd.f32 %v1366, %v1370
      %s1373 = sld [smem:[#allocation5 + $0x4b]]
      %v1374 = vstv %s1373
      %v1375 = vmul.f32 %v1313, %v1374
      %v1376 = vmul.f32 %v1314, %v1374
      %v1377 = vadd.f32 %v1371, %v1375
      %v1378 = vadd.f32 %v1372, %v1376
      %s1379 = sld [smem:[#allocation5 + $0x54]]
      %v1380 = vstv %s1379
      %v1381 = vmul.f32 %v1315, %v1380
      %v1382 = vmul.f32 %v1316, %v1380
      %v1383 = vadd.f32 %v1377, %v1381
      %v1384 = vadd.f32 %v1378, %v1382
      %s1385 = sld [smem:[#allocation5 + $0x4c]]
      %v1386 = vstv %s1385
      %v1387 = vmul.f32 %v1317, %v1386
      %v1388 = vmul.f32 %v1318, %v1386
      %v1389 = vadd.f32 %v1383, %v1387
      %v1390 = vadd.f32 %v1384, %v1388
      %s1391 = sld [smem:[#allocation5 + $0x55]]
      %v1392 = vstv %s1391
      %v1393 = vmul.f32 %v1319, %v1392
      %v1394 = vmul.f32 %v1320, %v1392
      %v1395 = vadd.f32 %v1389, %v1393
      %v1396 = vadd.f32 %v1390, %v1394
      %s1397 = sld [smem:[#allocation5 + $0x4d]]
      %v1398 = vstv %s1397
      %v1399 = vmul.f32 %v1321, %v1398
      %v1400 = vmul.f32 %v1322, %v1398
      %v1401 = vadd.f32 %v1395, %v1399
      %v1402 = vadd.f32 %v1396, %v1400
      %s1403 = sld [smem:[#allocation5 + $0x56]]
      %v1404 = vstv %s1403
      %v1405 = vmul.f32 %v1323, %v1404
      %v1406 = vmul.f32 %v1324, %v1404
      %v1407 = vadd.f32 %v1401, %v1405
      %v1408 = vadd.f32 %v1402, %v1406
      %s1409 = sld [smem:[#allocation5 + $0x4e]]
      %v1410 = vstv %s1409
      %v1411 = vmul.f32 %v1325, %v1410
      %v1412 = vmul.f32 %v1326, %v1410
      %v1413 = vadd.f32 %v1407, %v1411
      %v1414 = vadd.f32 %v1408, %v1412
      %s1415 = sld [smem:[#allocation5 + $0x57]]
      %v1416 = vstv %s1415
      %v1417 = vmul.f32 %v1327, %v1416
      %v1418 = vmul.f32 %v1328, %v1416
      %v1419 = vadd.f32 %v1413, %v1417
      %v1420 = vadd.f32 %v1414, %v1418
      %s1421 = sld [smem:[#allocation5 + $0x4f]]
      %v1422 = vstv %s1421
      %v1423 = vmul.f32 %v1329, %v1422
      %v1424 = vmul.f32 %v1330, %v1422
      %v1425 = vadd.f32 %v1419, %v1423
      %v1426 = vadd.f32 %v1420, %v1424
      %s1427 = sld [smem:[#allocation5 + $0x58]]
      %v1428 = vstv %s1427
      %v1429 = vmul.f32 %v1331, %v1428
      %v1430 = vmul.f32 %v1332, %v1428
      %v1431 = vadd.f32 %v1425, %v1429
      %v1432 = vadd.f32 %v1426, %v1430
      %s1433 = sld [smem:[#allocation5 + $0x50]]
      %v1434 = vstv %s1433
      %v1435 = vmul.f32 %v1302, %v1434
      %v1436 = vmul.f32 %v1333, %v1434
      %v1437 = vadd.f32 %v1431, %v1435
      %v1438 = vadd.f32 %v1432, %v1436
      %s1439 = sld [smem:[#allocation5 + $0x59]]
      %v1440 = vstv %s1439
      %v1441 = vmul.f32 %v1304, %v1440
      %v1442 = vmul.f32 %v1334, %v1440
      %v1443 = vadd.f32 %v1437, %v1441
      %v1444 = vadd.f32 %v1438, %v1442
      %vm1445 = vcmp.ge.f32.partialorder %v1443, 0.0
      %vm1446 = vcmp.ge.f32.partialorder %v1444, 0.0
      %v1447 = vmul.f32 %v1443, 0.3
      %v1448 = vmul.f32 %v1444, 0.3
      %v1449 = vsel %vm1445, %v1443, %v1447
      %v1450 = vsel %vm1446, %v1444, %v1448
      %s1451 = sld [smem:[#allocation6 + $0x5]]
      %v1452 = vstv %s1451
      %s1453 = sld [smem:[#allocation5 + $0x5a]]
      %v1454 = vstv %s1453
      %v1455 = vmul.f32 %v1301, %v1454
      %v1456 = vmul.f32 %v1302, %v1454
      %v1457 = vadd.f32 %v1452, %v1455
      %v1458 = vadd.f32 %v1452, %v1456
      %s1459 = sld [smem:[#allocation5 + $0x63]]
      %v1460 = vstv %s1459
      %v1461 = vmul.f32 %v1303, %v1460
      %v1462 = vmul.f32 %v1304, %v1460
      %v1463 = vadd.f32 %v1457, %v1461
      %v1464 = vadd.f32 %v1458, %v1462
      %s1465 = sld [smem:[#allocation5 + $0x5b]]
      %v1466 = vstv %s1465
      %v1467 = vmul.f32 %v1305, %v1466
      %v1468 = vmul.f32 %v1306, %v1466
      %v1469 = vadd.f32 %v1463, %v1467
      %v1470 = vadd.f32 %v1464, %v1468
      %s1471 = sld [smem:[#allocation5 + $0x64]]
      %v1472 = vstv %s1471
      %v1473 = vmul.f32 %v1307, %v1472
      %v1474 = vmul.f32 %v1308, %v1472
      %v1475 = vadd.f32 %v1469, %v1473
      %v1476 = vadd.f32 %v1470, %v1474
      %s1477 = sld [smem:[#allocation5 + $0x5c]]
      %v1478 = vstv %s1477
      %v1479 = vmul.f32 %v1309, %v1478
      %v1480 = vmul.f32 %v1310, %v1478
      %v1481 = vadd.f32 %v1475, %v1479
      %v1482 = vadd.f32 %v1476, %v1480
      %s1483 = sld [smem:[#allocation5 + $0x65]]
      %v1484 = vstv %s1483
      %v1485 = vmul.f32 %v1311, %v1484
      %v1486 = vmul.f32 %v1312, %v1484
      %v1487 = vadd.f32 %v1481, %v1485
      %v1488 = vadd.f32 %v1482, %v1486
      %s1489 = sld [smem:[#allocation5 + $0x5d]]
      %v1490 = vstv %s1489
      %v1491 = vmul.f32 %v1313, %v1490
      %v1492 = vmul.f32 %v1314, %v1490
      %v1493 = vadd.f32 %v1487, %v1491
      %v1494 = vadd.f32 %v1488, %v1492
      %s1495 = sld [smem:[#allocation5 + $0x66]]
      %v1496 = vstv %s1495
      %v1497 = vmul.f32 %v1315, %v1496
      %v1498 = vmul.f32 %v1316, %v1496
      %v1499 = vadd.f32 %v1493, %v1497
      %v1500 = vadd.f32 %v1494, %v1498
      %s1501 = sld [smem:[#allocation5 + $0x5e]]
      %v1502 = vstv %s1501
      %v1503 = vmul.f32 %v1317, %v1502
      %v1504 = vmul.f32 %v1318, %v1502
      %v1505 = vadd.f32 %v1499, %v1503
      %v1506 = vadd.f32 %v1500, %v1504
      %s1507 = sld [smem:[#allocation5 + $0x67]]
      %v1508 = vstv %s1507
      %v1509 = vmul.f32 %v1319, %v1508
      %v1510 = vmul.f32 %v1320, %v1508
      %v1511 = vadd.f32 %v1505, %v1509
      %v1512 = vadd.f32 %v1506, %v1510
      %s1513 = sld [smem:[#allocation5 + $0x5f]]
      %v1514 = vstv %s1513
      %v1515 = vmul.f32 %v1321, %v1514
      %v1516 = vmul.f32 %v1322, %v1514
      %v1517 = vadd.f32 %v1511, %v1515
      %v1518 = vadd.f32 %v1512, %v1516
      %s1519 = sld [smem:[#allocation5 + $0x68]]
      %v1520 = vstv %s1519
      %v1521 = vmul.f32 %v1323, %v1520
      %v1522 = vmul.f32 %v1324, %v1520
      %v1523 = vadd.f32 %v1517, %v1521
      %v1524 = vadd.f32 %v1518, %v1522
      %s1525 = sld [smem:[#allocation5 + $0x60]]
      %v1526 = vstv %s1525
      %v1527 = vmul.f32 %v1325, %v1526
      %v1528 = vmul.f32 %v1326, %v1526
      %v1529 = vadd.f32 %v1523, %v1527
      %v1530 = vadd.f32 %v1524, %v1528
      %s1531 = sld [smem:[#allocation5 + $0x69]]
      %v1532 = vstv %s1531
      %v1533 = vmul.f32 %v1327, %v1532
      %v1534 = vmul.f32 %v1328, %v1532
      %v1535 = vadd.f32 %v1529, %v1533
      %v1536 = vadd.f32 %v1530, %v1534
      %s1537 = sld [smem:[#allocation5 + $0x61]]
      %v1538 = vstv %s1537
      %v1539 = vmul.f32 %v1329, %v1538
      %v1540 = vmul.f32 %v1330, %v1538
      %v1541 = vadd.f32 %v1535, %v1539
      %v1542 = vadd.f32 %v1536, %v1540
      %s1543 = sld [smem:[#allocation5 + $0x6a]]
      %v1544 = vstv %s1543
      %v1545 = vmul.f32 %v1331, %v1544
      %v1546 = vmul.f32 %v1332, %v1544
      %v1547 = vadd.f32 %v1541, %v1545
      %v1548 = vadd.f32 %v1542, %v1546
      %s1549 = sld [smem:[#allocation5 + $0x62]]
      %v1550 = vstv %s1549
      %v1551 = vmul.f32 %v1302, %v1550
      %v1552 = vmul.f32 %v1333, %v1550
      %v1553 = vadd.f32 %v1547, %v1551
      %v1554 = vadd.f32 %v1548, %v1552
      %s1555 = sld [smem:[#allocation5 + $0x6b]]
      %v1556 = vstv %s1555
      %v1557 = vmul.f32 %v1304, %v1556
      %v1558 = vmul.f32 %v1334, %v1556
      %v1559 = vadd.f32 %v1553, %v1557
      %v1560 = vadd.f32 %v1554, %v1558
      %vm1561 = vcmp.ge.f32.partialorder %v1559, 0.0
      %vm1562 = vcmp.ge.f32.partialorder %v1560, 0.0
      %v1563 = vmul.f32 %v1559, 0.3
      %v1564 = vmul.f32 %v1560, 0.3
      %v1565 = vsel %vm1561, %v1559, %v1563
      %v1566 = vsel %vm1562, %v1560, %v1564
      %v1567 = vld [vmem:[#allocation2] sm:$0xff]
      %v1568 = vld [vmem:[#allocation2 + $0x8] sm:$0xff]
      %v1569 = vld [vmem:[#allocation2 + $0x18] sm:$0xff]
      %v1570 = vld [vmem:[#allocation2 + $0x20] sm:$0xff]
      %v1571 = vld [vmem:[#allocation2 + $0x1] sm:$0xff]
      %v1572 = vld [vmem:[#allocation2 + $0x9] sm:$0xff]
      %v1573 = vld [vmem:[#allocation2 + $0x19] sm:$0xff]
      %v1574 = vld [vmem:[#allocation2 + $0x21] sm:$0xff]
      %v1575 = vld [vmem:[#allocation2 + $0x2] sm:$0xff]
      %v1576 = vld [vmem:[#allocation2 + $0xa] sm:$0xff]
      %v1577 = vld [vmem:[#allocation2 + $0x1a] sm:$0xff]
      %v1578 = vld [vmem:[#allocation2 + $0x22] sm:$0xff]
      %s1579 = sld [smem:[#allocation6 + $0x6]]
      %v1580 = vstv %s1579
      %s1581 = sld [smem:[#allocation5 + $0x6c]]
      %v1582 = vstv %s1581
      %v1583 = vmul.f32 %v1567, %v1582
      %v1584 = vmul.f32 %v1568, %v1582
      %v1585 = vadd.f32 %v1580, %v1583
      %v1586 = vadd.f32 %v1580, %v1584
      %s1587 = sld [smem:[#allocation5 + $0x75]]
      %v1588 = vstv %s1587
      %v1589 = vmul.f32 %v1569, %v1588
      %v1590 = vmul.f32 %v1570, %v1588
      %v1591 = vadd.f32 %v1585, %v1589
      %v1592 = vadd.f32 %v1586, %v1590
      %s1593 = sld [smem:[#allocation5 + $0x6d]]
      %v1594 = vstv %s1593
      %v1595 = vmul.f32 %v1567, %v1594
      %v1596 = vmul.f32 %v1568, %v1594
      %1599 = vrot.lane.b32.xlu0 %v1595, 127
      %v1600 = vpop.permute.xlu0 %1599
      %1601 = vrot.lane.b32.xlu0 %v1596, 127
      %v1602 = vpop.permute.xlu0 %1601
      %v1605 = vadd.f32 %v1591, %v1600
      %v1606 = vadd.f32 %v1592, %v1602
      %s1607 = sld [smem:[#allocation5 + $0x76]]
      %v1608 = vstv %s1607
      %v1609 = vmul.f32 %v1569, %v1608
      %v1610 = vmul.f32 %v1570, %v1608
      %1613 = vrot.lane.b32.xlu0 %v1609, 127
      %v1614 = vpop.permute.xlu0 %1613
      %1615 = vrot.lane.b32.xlu0 %v1610, 127
      %v1616 = vpop.permute.xlu0 %1615
      %v1619 = vadd.f32 %v1605, %v1614
      %v1620 = vadd.f32 %v1606, %v1616
      %s1621 = sld [smem:[#allocation5 + $0x6e]]
      %v1622 = vstv %s1621
      %v1623 = vmul.f32 %v1567, %v1622
      %v1624 = vmul.f32 %v1568, %v1622
      %1627 = vrot.lane.b32.xlu0 %v1623, 126
      %v1628 = vpop.permute.xlu0 %1627
      %1629 = vrot.lane.b32.xlu0 %v1624, 126
      %v1630 = vpop.permute.xlu0 %1629
      %v1633 = vadd.f32 %v1619, %v1628
      %v1634 = vadd.f32 %v1620, %v1630
      %s1635 = sld [smem:[#allocation5 + $0x77]]
      %v1636 = vstv %s1635
      %v1637 = vmul.f32 %v1569, %v1636
      %v1638 = vmul.f32 %v1570, %v1636
      %1641 = vrot.lane.b32.xlu0 %v1637, 126
      %v1642 = vpop.permute.xlu0 %1641
      %1643 = vrot.lane.b32.xlu0 %v1638, 126
      %v1644 = vpop.permute.xlu0 %1643
      %v1647 = vadd.f32 %v1633, %v1642
      %v1648 = vadd.f32 %v1634, %v1644
      %s1649 = sld [smem:[#allocation5 + $0x6f]]
      %v1650 = vstv %s1649
      %v1651 = vmul.f32 %v1571, %v1650
      %v1652 = vmul.f32 %v1572, %v1650
      %v1653 = vadd.f32 %v1647, %v1651
      %v1654 = vadd.f32 %v1648, %v1652
      %s1655 = sld [smem:[#allocation5 + $0x78]]
      %v1656 = vstv %s1655
      %v1657 = vmul.f32 %v1573, %v1656
      %v1658 = vmul.f32 %v1574, %v1656
      %v1659 = vadd.f32 %v1653, %v1657
      %v1660 = vadd.f32 %v1654, %v1658
      %s1661 = sld [smem:[#allocation5 + $0x70]]
      %v1662 = vstv %s1661
      %v1663 = vmul.f32 %v1571, %v1662
      %v1664 = vmul.f32 %v1572, %v1662
      %1667 = vrot.lane.b32.xlu0 %v1663, 127
      %v1668 = vpop.permute.xlu0 %1667
      %1669 = vrot.lane.b32.xlu0 %v1664, 127
      %v1670 = vpop.permute.xlu0 %1669
      %v1673 = vadd.f32 %v1659, %v1668
      %v1674 = vadd.f32 %v1660, %v1670
      %s1675 = sld [smem:[#allocation5 + $0x79]]
      %v1676 = vstv %s1675
      %v1677 = vmul.f32 %v1573, %v1676
      %v1678 = vmul.f32 %v1574, %v1676
      %1681 = vrot.lane.b32.xlu0 %v1677, 127
      %v1682 = vpop.permute.xlu0 %1681
      %1683 = vrot.lane.b32.xlu0 %v1678, 127
      %v1684 = vpop.permute.xlu0 %1683
      %v1687 = vadd.f32 %v1673, %v1682
      %v1688 = vadd.f32 %v1674, %v1684
      %s1689 = sld [smem:[#allocation5 + $0x71]]
      %v1690 = vstv %s1689
      %v1691 = vmul.f32 %v1571, %v1690
      %v1692 = vmul.f32 %v1572, %v1690
      %1695 = vrot.lane.b32.xlu0 %v1691, 126
      %v1696 = vpop.permute.xlu0 %1695
      %1697 = vrot.lane.b32.xlu0 %v1692, 126
      %v1698 = vpop.permute.xlu0 %1697
      %v1701 = vadd.f32 %v1687, %v1696
      %v1702 = vadd.f32 %v1688, %v1698
      %s1703 = sld [smem:[#allocation5 + $0x7a]]
      %v1704 = vstv %s1703
      %v1705 = vmul.f32 %v1573, %v1704
      %v1706 = vmul.f32 %v1574, %v1704
      %1709 = vrot.lane.b32.xlu0 %v1705, 126
      %v1710 = vpop.permute.xlu0 %1709
      %1711 = vrot.lane.b32.xlu0 %v1706, 126
      %v1712 = vpop.permute.xlu0 %1711
      %v1715 = vadd.f32 %v1701, %v1710
      %v1716 = vadd.f32 %v1702, %v1712
      %s1717 = sld [smem:[#allocation5 + $0x72]]
      %v1718 = vstv %s1717
      %v1719 = vmul.f32 %v1575, %v1718
      %v1720 = vmul.f32 %v1576, %v1718
      %v1721 = vadd.f32 %v1715, %v1719
      %v1722 = vadd.f32 %v1716, %v1720
      %s1723 = sld [smem:[#allocation5 + $0x7b]]
      %v1724 = vstv %s1723
      %v1725 = vmul.f32 %v1577, %v1724
      %v1726 = vmul.f32 %v1578, %v1724
      %v1727 = vadd.f32 %v1721, %v1725
      %v1728 = vadd.f32 %v1722, %v1726
      %s1729 = sld [smem:[#allocation5 + $0x73]]
      %v1730 = vstv %s1729
      %v1731 = vmul.f32 %v1575, %v1730
      %v1732 = vmul.f32 %v1576, %v1730
      %1735 = vrot.lane.b32.xlu0 %v1731, 127
      %v1736 = vpop.permute.xlu0 %1735
      %1737 = vrot.lane.b32.xlu0 %v1732, 127
      %v1738 = vpop.permute.xlu0 %1737
      %v1741 = vadd.f32 %v1727, %v1736
      %v1742 = vadd.f32 %v1728, %v1738
      %s1743 = sld [smem:[#allocation5 + $0x7c]]
      %v1744 = vstv %s1743
      %v1745 = vmul.f32 %v1577, %v1744
      %v1746 = vmul.f32 %v1578, %v1744
      %1749 = vrot.lane.b32.xlu0 %v1745, 127
      %v1750 = vpop.permute.xlu0 %1749
      %1751 = vrot.lane.b32.xlu0 %v1746, 127
      %v1752 = vpop.permute.xlu0 %1751
      %v1755 = vadd.f32 %v1741, %v1750
      %v1756 = vadd.f32 %v1742, %v1752
      %s1757 = sld [smem:[#allocation5 + $0x74]]
      %v1758 = vstv %s1757
      %v1759 = vmul.f32 %v1575, %v1758
      %v1760 = vmul.f32 %v1576, %v1758
      %1763 = vrot.lane.b32.xlu0 %v1759, 126
      %v1764 = vpop.permute.xlu0 %1763
      %1765 = vrot.lane.b32.xlu0 %v1760, 126
      %v1766 = vpop.permute.xlu0 %1765
      %v1769 = vadd.f32 %v1755, %v1764
      %v1770 = vadd.f32 %v1756, %v1766
      %s1771 = sld [smem:[#allocation5 + $0x7d]]
      %v1772 = vstv %s1771
      %v1773 = vmul.f32 %v1577, %v1772
      %v1774 = vmul.f32 %v1578, %v1772
      %1777 = vrot.lane.b32.xlu0 %v1773, 126
      %v1778 = vpop.permute.xlu0 %1777
      %1779 = vrot.lane.b32.xlu0 %v1774, 126
      %v1780 = vpop.permute.xlu0 %1779
      %v1783 = vadd.f32 %v1769, %v1778
      %v1784 = vadd.f32 %v1770, %v1780
      %vm1785 = vcmp.ge.f32.partialorder %v1783, 0.0
      %vm1786 = vcmp.ge.f32.partialorder %v1784, 0.0
      %v1787 = vmul.f32 %v1783, 0.3
      %v1788 = vmul.f32 %v1784, 0.3
      %v1789 = vsel %vm1785, %v1783, %v1787
      %v1790 = vsel %vm1786, %v1784, %v1788
      %s1791 = sld [smem:[#allocation6 + $0x7]]
      %v1792 = vstv %s1791
      %s1793 = sld [smem:[#allocation5 + $0x7e]]
      %v1794 = vstv %s1793
      %v1795 = vmul.f32 %v1567, %v1794
      %v1796 = vmul.f32 %v1568, %v1794
      %v1797 = vadd.f32 %v1792, %v1795
      %v1798 = vadd.f32 %v1792, %v1796
      %s1799 = sld [smem:[#allocation5 + $0x87]]
      %v1800 = vstv %s1799
      %v1801 = vmul.f32 %v1569, %v1800
      %v1802 = vmul.f32 %v1570, %v1800
      %v1803 = vadd.f32 %v1797, %v1801
      %v1804 = vadd.f32 %v1798, %v1802
      %s1805 = sld [smem:[#allocation5 + $0x7f]]
      %v1806 = vstv %s1805
      %v1807 = vmul.f32 %v1567, %v1806
      %v1808 = vmul.f32 %v1568, %v1806
      %1811 = vrot.lane.b32.xlu0 %v1807, 127
      %v1812 = vpop.permute.xlu0 %1811
      %1813 = vrot.lane.b32.xlu0 %v1808, 127
      %v1814 = vpop.permute.xlu0 %1813
      %v1817 = vadd.f32 %v1803, %v1812
      %v1818 = vadd.f32 %v1804, %v1814
      %s1819 = sld [smem:[#allocation5 + $0x88]]
      %v1820 = vstv %s1819
      %v1821 = vmul.f32 %v1569, %v1820
      %v1822 = vmul.f32 %v1570, %v1820
      %1825 = vrot.lane.b32.xlu0 %v1821, 127
      %v1826 = vpop.permute.xlu0 %1825
      %1827 = vrot.lane.b32.xlu0 %v1822, 127
      %v1828 = vpop.permute.xlu0 %1827
      %v1831 = vadd.f32 %v1817, %v1826
      %v1832 = vadd.f32 %v1818, %v1828
      %s1833 = sld [smem:[#allocation5 + $0x80]]
      %v1834 = vstv %s1833
      %v1835 = vmul.f32 %v1567, %v1834
      %v1836 = vmul.f32 %v1568, %v1834
      %1839 = vrot.lane.b32.xlu0 %v1835, 126
      %v1840 = vpop.permute.xlu0 %1839
      %1841 = vrot.lane.b32.xlu0 %v1836, 126
      %v1842 = vpop.permute.xlu0 %1841
      %v1845 = vadd.f32 %v1831, %v1840
      %v1846 = vadd.f32 %v1832, %v1842
      %s1847 = sld [smem:[#allocation5 + $0x89]]
      %v1848 = vstv %s1847
      %v1849 = vmul.f32 %v1569, %v1848
      %v1850 = vmul.f32 %v1570, %v1848
      %1853 = vrot.lane.b32.xlu0 %v1849, 126
      %v1854 = vpop.permute.xlu0 %1853
      %1855 = vrot.lane.b32.xlu0 %v1850, 126
      %v1856 = vpop.permute.xlu0 %1855
      %v1859 = vadd.f32 %v1845, %v1854
      %v1860 = vadd.f32 %v1846, %v1856
      %s1861 = sld [smem:[#allocation5 + $0x81]]
      %v1862 = vstv %s1861
      %v1863 = vmul.f32 %v1571, %v1862
      %v1864 = vmul.f32 %v1572, %v1862
      %v1865 = vadd.f32 %v1859, %v1863
      %v1866 = vadd.f32 %v1860, %v1864
      %s1867 = sld [smem:[#allocation5 + $0x8a]]
      %v1868 = vstv %s1867
      %v1869 = vmul.f32 %v1573, %v1868
      %v1870 = vmul.f32 %v1574, %v1868
      %v1871 = vadd.f32 %v1865, %v1869
      %v1872 = vadd.f32 %v1866, %v1870
      %s1873 = sld [smem:[#allocation5 + $0x82]]
      %v1874 = vstv %s1873
      %v1875 = vmul.f32 %v1571, %v1874
      %v1876 = vmul.f32 %v1572, %v1874
      %1879 = vrot.lane.b32.xlu0 %v1875, 127
      %v1880 = vpop.permute.xlu0 %1879
      %1881 = vrot.lane.b32.xlu0 %v1876, 127
      %v1882 = vpop.permute.xlu0 %1881
      %v1885 = vadd.f32 %v1871, %v1880
      %v1886 = vadd.f32 %v1872, %v1882
      %s1887 = sld [smem:[#allocation5 + $0x8b]]
      %v1888 = vstv %s1887
      %v1889 = vmul.f32 %v1573, %v1888
      %v1890 = vmul.f32 %v1574, %v1888
      %1893 = vrot.lane.b32.xlu0 %v1889, 127
      %v1894 = vpop.permute.xlu0 %1893
      %1895 = vrot.lane.b32.xlu0 %v1890, 127
      %v1896 = vpop.permute.xlu0 %1895
      %v1899 = vadd.f32 %v1885, %v1894
      %v1900 = vadd.f32 %v1886, %v1896
      %s1901 = sld [smem:[#allocation5 + $0x83]]
      %v1902 = vstv %s1901
      %v1903 = vmul.f32 %v1571, %v1902
      %v1904 = vmul.f32 %v1572, %v1902
      %1907 = vrot.lane.b32.xlu0 %v1903, 126
      %v1908 = vpop.permute.xlu0 %1907
      %1909 = vrot.lane.b32.xlu0 %v1904, 126
      %v1910 = vpop.permute.xlu0 %1909
      %v1913 = vadd.f32 %v1899, %v1908
      %v1914 = vadd.f32 %v1900, %v1910
      %s1915 = sld [smem:[#allocation5 + $0x8c]]
      %v1916 = vstv %s1915
      %v1917 = vmul.f32 %v1573, %v1916
      %v1918 = vmul.f32 %v1574, %v1916
      %1921 = vrot.lane.b32.xlu0 %v1917, 126
      %v1922 = vpop.permute.xlu0 %1921
      %1923 = vrot.lane.b32.xlu0 %v1918, 126
      %v1924 = vpop.permute.xlu0 %1923
      %v1927 = vadd.f32 %v1913, %v1922
      %v1928 = vadd.f32 %v1914, %v1924
      %s1929 = sld [smem:[#allocation5 + $0x84]]
      %v1930 = vstv %s1929
      %v1931 = vmul.f32 %v1575, %v1930
      %v1932 = vmul.f32 %v1576, %v1930
      %v1933 = vadd.f32 %v1927, %v1931
      %v1934 = vadd.f32 %v1928, %v1932
      %s1935 = sld [smem:[#allocation5 + $0x8d]]
      %v1936 = vstv %s1935
      %v1937 = vmul.f32 %v1577, %v1936
      %v1938 = vmul.f32 %v1578, %v1936
      %v1939 = vadd.f32 %v1933, %v1937
      %v1940 = vadd.f32 %v1934, %v1938
      %s1941 = sld [smem:[#allocation5 + $0x85]]
      %v1942 = vstv %s1941
      %v1943 = vmul.f32 %v1575, %v1942
      %v1944 = vmul.f32 %v1576, %v1942
      %1947 = vrot.lane.b32.xlu0 %v1943, 127
      %v1948 = vpop.permute.xlu0 %1947
      %1949 = vrot.lane.b32.xlu0 %v1944, 127
      %v1950 = vpop.permute.xlu0 %1949
      %v1953 = vadd.f32 %v1939, %v1948
      %v1954 = vadd.f32 %v1940, %v1950
      %s1955 = sld [smem:[#allocation5 + $0x8e]]
      %v1956 = vstv %s1955
      %v1957 = vmul.f32 %v1577, %v1956
      %v1958 = vmul.f32 %v1578, %v1956
      %1961 = vrot.lane.b32.xlu0 %v1957, 127
      %v1962 = vpop.permute.xlu0 %1961
      %1963 = vrot.lane.b32.xlu0 %v1958, 127
      %v1964 = vpop.permute.xlu0 %1963
      %v1967 = vadd.f32 %v1953, %v1962
      %v1968 = vadd.f32 %v1954, %v1964
      %s1969 = sld [smem:[#allocation5 + $0x86]]
      %v1970 = vstv %s1969
      %v1971 = vmul.f32 %v1575, %v1970
      %v1972 = vmul.f32 %v1576, %v1970
      %1975 = vrot.lane.b32.xlu0 %v1971, 126
      %v1976 = vpop.permute.xlu0 %1975
      %1977 = vrot.lane.b32.xlu0 %v1972, 126
      %v1978 = vpop.permute.xlu0 %1977
      %v1981 = vadd.f32 %v1967, %v1976
      %v1982 = vadd.f32 %v1968, %v1978
      %s1983 = sld [smem:[#allocation5 + $0x8f]]
      %v1984 = vstv %s1983
      %v1985 = vmul.f32 %v1577, %v1984
      %v1986 = vmul.f32 %v1578, %v1984
      %1989 = vrot.lane.b32.xlu0 %v1985, 126
      %v1990 = vpop.permute.xlu0 %1989
      %1991 = vrot.lane.b32.xlu0 %v1986, 126
      %v1992 = vpop.permute.xlu0 %1991
      %v1995 = vadd.f32 %v1981, %v1990
      %v1996 = vadd.f32 %v1982, %v1992
      %vm1997 = vcmp.ge.f32.partialorder %v1995, 0.0
      %vm1998 = vcmp.ge.f32.partialorder %v1996, 0.0
      %v1999 = vmul.f32 %v1995, 0.3
      %v2000 = vmul.f32 %v1996, 0.3
      %v2001 = vsel %vm1997, %v1995, %v1999
      %v2002 = vsel %vm1998, %v1996, %v2000
      %s2003 = sld [smem:[#allocation6 + $0x8]]
      %v2004 = vstv %s2003
      %s2005 = sld [smem:[#allocation5 + $0x90]]
      %v2006 = vstv %s2005
      %v2007 = vmul.f32 %v1567, %v2006
      %v2008 = vmul.f32 %v1568, %v2006
      %v2009 = vadd.f32 %v2004, %v2007
      %v2010 = vadd.f32 %v2004, %v2008
      %s2011 = sld [smem:[#allocation5 + $0x99]]
      %v2012 = vstv %s2011
      %v2013 = vmul.f32 %v1569, %v2012
      %v2014 = vmul.f32 %v1570, %v2012
      %v2015 = vadd.f32 %v2009, %v2013
      %v2016 = vadd.f32 %v2010, %v2014
      %s2017 = sld [smem:[#allocation5 + $0x91]]
      %v2018 = vstv %s2017
      %v2019 = vmul.f32 %v1567, %v2018
      %v2020 = vmul.f32 %v1568, %v2018
      %2023 = vrot.lane.b32.xlu0 %v2019, 127
      %v2024 = vpop.permute.xlu0 %2023
      %2025 = vrot.lane.b32.xlu0 %v2020, 127
      %v2026 = vpop.permute.xlu0 %2025
      %v2029 = vadd.f32 %v2015, %v2024
      %v2030 = vadd.f32 %v2016, %v2026
      %s2031 = sld [smem:[#allocation5 + $0x9a]]
      %v2032 = vstv %s2031
      %v2033 = vmul.f32 %v1569, %v2032
      %v2034 = vmul.f32 %v1570, %v2032
      %2037 = vrot.lane.b32.xlu0 %v2033, 127
      %v2038 = vpop.permute.xlu0 %2037
      %2039 = vrot.lane.b32.xlu0 %v2034, 127
      %v2040 = vpop.permute.xlu0 %2039
      %v2043 = vadd.f32 %v2029, %v2038
      %v2044 = vadd.f32 %v2030, %v2040
      %s2045 = sld [smem:[#allocation5 + $0x92]]
      %v2046 = vstv %s2045
      %v2047 = vmul.f32 %v1567, %v2046
      %v2048 = vmul.f32 %v1568, %v2046
      %2051 = vrot.lane.b32.xlu0 %v2047, 126
      %v2052 = vpop.permute.xlu0 %2051
      %2053 = vrot.lane.b32.xlu0 %v2048, 126
      %v2054 = vpop.permute.xlu0 %2053
      %v2057 = vadd.f32 %v2043, %v2052
      %v2058 = vadd.f32 %v2044, %v2054
      %s2059 = sld [smem:[#allocation5 + $0x9b]]
      %v2060 = vstv %s2059
      %v2061 = vmul.f32 %v1569, %v2060
      %v2062 = vmul.f32 %v1570, %v2060
      %2065 = vrot.lane.b32.xlu0 %v2061, 126
      %v2066 = vpop.permute.xlu0 %2065
      %2067 = vrot.lane.b32.xlu0 %v2062, 126
      %v2068 = vpop.permute.xlu0 %2067
      %v2071 = vadd.f32 %v2057, %v2066
      %v2072 = vadd.f32 %v2058, %v2068
      %s2073 = sld [smem:[#allocation5 + $0x93]]
      %v2074 = vstv %s2073
      %v2075 = vmul.f32 %v1571, %v2074
      %v2076 = vmul.f32 %v1572, %v2074
      %v2077 = vadd.f32 %v2071, %v2075
      %v2078 = vadd.f32 %v2072, %v2076
      %s2079 = sld [smem:[#allocation5 + $0x9c]]
      %v2080 = vstv %s2079
      %v2081 = vmul.f32 %v1573, %v2080
      %v2082 = vmul.f32 %v1574, %v2080
      %v2083 = vadd.f32 %v2077, %v2081
      %v2084 = vadd.f32 %v2078, %v2082
      %s2085 = sld [smem:[#allocation5 + $0x94]]
      %v2086 = vstv %s2085
      %v2087 = vmul.f32 %v1571, %v2086
      %v2088 = vmul.f32 %v1572, %v2086
      %2091 = vrot.lane.b32.xlu0 %v2087, 127
      %v2092 = vpop.permute.xlu0 %2091
      %2093 = vrot.lane.b32.xlu0 %v2088, 127
      %v2094 = vpop.permute.xlu0 %2093
      %v2097 = vadd.f32 %v2083, %v2092
      %v2098 = vadd.f32 %v2084, %v2094
      %s2099 = sld [smem:[#allocation5 + $0x9d]]
      %v2100 = vstv %s2099
      %v2101 = vmul.f32 %v1573, %v2100
      %v2102 = vmul.f32 %v1574, %v2100
      %2105 = vrot.lane.b32.xlu0 %v2101, 127
      %v2106 = vpop.permute.xlu0 %2105
      %2107 = vrot.lane.b32.xlu0 %v2102, 127
      %v2108 = vpop.permute.xlu0 %2107
      %v2111 = vadd.f32 %v2097, %v2106
      %v2112 = vadd.f32 %v2098, %v2108
      %s2113 = sld [smem:[#allocation5 + $0x95]]
      %v2114 = vstv %s2113
      %v2115 = vmul.f32 %v1571, %v2114
      %v2116 = vmul.f32 %v1572, %v2114
      %2119 = vrot.lane.b32.xlu0 %v2115, 126
      %v2120 = vpop.permute.xlu0 %2119
      %2121 = vrot.lane.b32.xlu0 %v2116, 126
      %v2122 = vpop.permute.xlu0 %2121
      %v2125 = vadd.f32 %v2111, %v2120
      %v2126 = vadd.f32 %v2112, %v2122
      %s2127 = sld [smem:[#allocation5 + $0x9e]]
      %v2128 = vstv %s2127
      %v2129 = vmul.f32 %v1573, %v2128
      %v2130 = vmul.f32 %v1574, %v2128
      %2133 = vrot.lane.b32.xlu0 %v2129, 126
      %v2134 = vpop.permute.xlu0 %2133
      %2135 = vrot.lane.b32.xlu0 %v2130, 126
      %v2136 = vpop.permute.xlu0 %2135
      %v2139 = vadd.f32 %v2125, %v2134
      %v2140 = vadd.f32 %v2126, %v2136
      %s2141 = sld [smem:[#allocation5 + $0x96]]
      %v2142 = vstv %s2141
      %v2143 = vmul.f32 %v1575, %v2142
      %v2144 = vmul.f32 %v1576, %v2142
      %v2145 = vadd.f32 %v2139, %v2143
      %v2146 = vadd.f32 %v2140, %v2144
      %s2147 = sld [smem:[#allocation5 + $0x9f]]
      %v2148 = vstv %s2147
      %v2149 = vmul.f32 %v1577, %v2148
      %v2150 = vmul.f32 %v1578, %v2148
      %v2151 = vadd.f32 %v2145, %v2149
      %v2152 = vadd.f32 %v2146, %v2150
      %s2153 = sld [smem:[#allocation5 + $0x97]]
      %v2154 = vstv %s2153
      %v2155 = vmul.f32 %v1575, %v2154
      %v2156 = vmul.f32 %v1576, %v2154
      %2159 = vrot.lane.b32.xlu0 %v2155, 127
      %v2160 = vpop.permute.xlu0 %2159
      %2161 = vrot.lane.b32.xlu0 %v2156, 127
      %v2162 = vpop.permute.xlu0 %2161
      %v2165 = vadd.f32 %v2151, %v2160
      %v2166 = vadd.f32 %v2152, %v2162
      %s2167 = sld [smem:[#allocation5 + $0xa0]]
      %v2168 = vstv %s2167
      %v2169 = vmul.f32 %v1577, %v2168
      %v2170 = vmul.f32 %v1578, %v2168
      %2173 = vrot.lane.b32.xlu0 %v2169, 127
      %v2174 = vpop.permute.xlu0 %2173
      %2175 = vrot.lane.b32.xlu0 %v2170, 127
      %v2176 = vpop.permute.xlu0 %2175
      %v2179 = vadd.f32 %v2165, %v2174
      %v2180 = vadd.f32 %v2166, %v2176
      %s2181 = sld [smem:[#allocation5 + $0x98]]
      %v2182 = vstv %s2181
      %v2183 = vmul.f32 %v1575, %v2182
      %v2184 = vmul.f32 %v1576, %v2182
      %2187 = vrot.lane.b32.xlu0 %v2183, 126
      %v2188 = vpop.permute.xlu0 %2187
      %2189 = vrot.lane.b32.xlu0 %v2184, 126
      %v2190 = vpop.permute.xlu0 %2189
      %v2193 = vadd.f32 %v2179, %v2188
      %v2194 = vadd.f32 %v2180, %v2190
      %s2195 = sld [smem:[#allocation5 + $0xa1]]
      %v2196 = vstv %s2195
      %v2197 = vmul.f32 %v1577, %v2196
      %v2198 = vmul.f32 %v1578, %v2196
      %2201 = vrot.lane.b32.xlu0 %v2197, 126
      %v2202 = vpop.permute.xlu0 %2201
      %2203 = vrot.lane.b32.xlu0 %v2198, 126
      %v2204 = vpop.permute.xlu0 %2203
      %v2207 = vadd.f32 %v2193, %v2202
      %v2208 = vadd.f32 %v2194, %v2204
      %vm2209 = vcmp.ge.f32.partialorder %v2207, 0.0
      %vm2210 = vcmp.ge.f32.partialorder %v2208, 0.0
      %v2211 = vmul.f32 %v2207, 0.3
      %v2212 = vmul.f32 %v2208, 0.3
      %v2213 = vsel %vm2209, %v2207, %v2211
      %v2214 = vsel %vm2210, %v2208, %v2212
      %s2215 = sld [smem:[#allocation6 + $0x9]]
      %v2216 = vstv %s2215
      %s2217 = sld [smem:[#allocation5 + $0xa2]]
      %v2218 = vstv %s2217
      %v2219 = vmul.f32 %v1567, %v2218
      %v2220 = vmul.f32 %v1568, %v2218
      %v2221 = vadd.f32 %v2216, %v2219
      %v2222 = vadd.f32 %v2216, %v2220
      %s2223 = sld [smem:[#allocation5 + $0xab]]
      %v2224 = vstv %s2223
      %v2225 = vmul.f32 %v1569, %v2224
      %v2226 = vmul.f32 %v1570, %v2224
      %v2227 = vadd.f32 %v2221, %v2225
      %v2228 = vadd.f32 %v2222, %v2226
      %s2229 = sld [smem:[#allocation5 + $0xa3]]
      %v2230 = vstv %s2229
      %v2231 = vmul.f32 %v1567, %v2230
      %v2232 = vmul.f32 %v1568, %v2230
      %2235 = vrot.lane.b32.xlu0 %v2231, 127
      %v2236 = vpop.permute.xlu0 %2235
      %2237 = vrot.lane.b32.xlu0 %v2232, 127
      %v2238 = vpop.permute.xlu0 %2237
      %v2241 = vadd.f32 %v2227, %v2236
      %v2242 = vadd.f32 %v2228, %v2238
      %s2243 = sld [smem:[#allocation5 + $0xac]]
      %v2244 = vstv %s2243
      %v2245 = vmul.f32 %v1569, %v2244
      %v2246 = vmul.f32 %v1570, %v2244
      %2249 = vrot.lane.b32.xlu0 %v2245, 127
      %v2250 = vpop.permute.xlu0 %2249
      %2251 = vrot.lane.b32.xlu0 %v2246, 127
      %v2252 = vpop.permute.xlu0 %2251
      %v2255 = vadd.f32 %v2241, %v2250
      %v2256 = vadd.f32 %v2242, %v2252
      %s2257 = sld [smem:[#allocation5 + $0xa4]]
      %v2258 = vstv %s2257
      %v2259 = vmul.f32 %v1567, %v2258
      %v2260 = vmul.f32 %v1568, %v2258
      %2263 = vrot.lane.b32.xlu0 %v2259, 126
      %v2264 = vpop.permute.xlu0 %2263
      %2265 = vrot.lane.b32.xlu0 %v2260, 126
      %v2266 = vpop.permute.xlu0 %2265
      %v2269 = vadd.f32 %v2255, %v2264
      %v2270 = vadd.f32 %v2256, %v2266
      %s2271 = sld [smem:[#allocation5 + $0xad]]
      %v2272 = vstv %s2271
      %v2273 = vmul.f32 %v1569, %v2272
      %v2274 = vmul.f32 %v1570, %v2272
      %2277 = vrot.lane.b32.xlu0 %v2273, 126
      %v2278 = vpop.permute.xlu0 %2277
      %2279 = vrot.lane.b32.xlu0 %v2274, 126
      %v2280 = vpop.permute.xlu0 %2279
      %v2283 = vadd.f32 %v2269, %v2278
      %v2284 = vadd.f32 %v2270, %v2280
      %s2285 = sld [smem:[#allocation5 + $0xa5]]
      %v2286 = vstv %s2285
      %v2287 = vmul.f32 %v1571, %v2286
      %v2288 = vmul.f32 %v1572, %v2286
      %v2289 = vadd.f32 %v2283, %v2287
      %v2290 = vadd.f32 %v2284, %v2288
      %s2291 = sld [smem:[#allocation5 + $0xae]]
      %v2292 = vstv %s2291
      %v2293 = vmul.f32 %v1573, %v2292
      %v2294 = vmul.f32 %v1574, %v2292
      %v2295 = vadd.f32 %v2289, %v2293
      %v2296 = vadd.f32 %v2290, %v2294
      %s2297 = sld [smem:[#allocation5 + $0xa6]]
      %v2298 = vstv %s2297
      %v2299 = vmul.f32 %v1571, %v2298
      %v2300 = vmul.f32 %v1572, %v2298
      %2303 = vrot.lane.b32.xlu0 %v2299, 127
      %v2304 = vpop.permute.xlu0 %2303
      %2305 = vrot.lane.b32.xlu0 %v2300, 127
      %v2306 = vpop.permute.xlu0 %2305
      %v2309 = vadd.f32 %v2295, %v2304
      %v2310 = vadd.f32 %v2296, %v2306
      %s2311 = sld [smem:[#allocation5 + $0xaf]]
      %v2312 = vstv %s2311
      %v2313 = vmul.f32 %v1573, %v2312
      %v2314 = vmul.f32 %v1574, %v2312
      %2317 = vrot.lane.b32.xlu0 %v2313, 127
      %v2318 = vpop.permute.xlu0 %2317
      %2319 = vrot.lane.b32.xlu0 %v2314, 127
      %v2320 = vpop.permute.xlu0 %2319
      %v2323 = vadd.f32 %v2309, %v2318
      %v2324 = vadd.f32 %v2310, %v2320
      %s2325 = sld [smem:[#allocation5 + $0xa7]]
      %v2326 = vstv %s2325
      %v2327 = vmul.f32 %v1571, %v2326
      %v2328 = vmul.f32 %v1572, %v2326
      %2331 = vrot.lane.b32.xlu0 %v2327, 126
      %v2332 = vpop.permute.xlu0 %2331
      %2333 = vrot.lane.b32.xlu0 %v2328, 126
      %v2334 = vpop.permute.xlu0 %2333
      %v2337 = vadd.f32 %v2323, %v2332
      %v2338 = vadd.f32 %v2324, %v2334
      %s2339 = sld [smem:[#allocation5 + $0xb0]]
      %v2340 = vstv %s2339
      %v2341 = vmul.f32 %v1573, %v2340
      %v2342 = vmul.f32 %v1574, %v2340
      %2345 = vrot.lane.b32.xlu0 %v2341, 126
      %v2346 = vpop.permute.xlu0 %2345
      %2347 = vrot.lane.b32.xlu0 %v2342, 126
      %v2348 = vpop.permute.xlu0 %2347
      %v2351 = vadd.f32 %v2337, %v2346
      %v2352 = vadd.f32 %v2338, %v2348
      %s2353 = sld [smem:[#allocation5 + $0xa8]]
      %v2354 = vstv %s2353
      %v2355 = vmul.f32 %v1575, %v2354
      %v2356 = vmul.f32 %v1576, %v2354
      %v2357 = vadd.f32 %v2351, %v2355
      %v2358 = vadd.f32 %v2352, %v2356
      %s2359 = sld [smem:[#allocation5 + $0xb1]]
      %v2360 = vstv %s2359
      %v2361 = vmul.f32 %v1577, %v2360
      %v2362 = vmul.f32 %v1578, %v2360
      %v2363 = vadd.f32 %v2357, %v2361
      %v2364 = vadd.f32 %v2358, %v2362
      %s2365 = sld [smem:[#allocation5 + $0xa9]]
      %v2366 = vstv %s2365
      %v2367 = vmul.f32 %v1575, %v2366
      %v2368 = vmul.f32 %v1576, %v2366
      %2371 = vrot.lane.b32.xlu0 %v2367, 127
      %v2372 = vpop.permute.xlu0 %2371
      %2373 = vrot.lane.b32.xlu0 %v2368, 127
      %v2374 = vpop.permute.xlu0 %2373
      %v2377 = vadd.f32 %v2363, %v2372
      %v2378 = vadd.f32 %v2364, %v2374
      %s2379 = sld [smem:[#allocation5 + $0xb2]]
      %v2380 = vstv %s2379
      %v2381 = vmul.f32 %v1577, %v2380
      %v2382 = vmul.f32 %v1578, %v2380
      %2385 = vrot.lane.b32.xlu0 %v2381, 127
      %v2386 = vpop.permute.xlu0 %2385
      %2387 = vrot.lane.b32.xlu0 %v2382, 127
      %v2388 = vpop.permute.xlu0 %2387
      %v2391 = vadd.f32 %v2377, %v2386
      %v2392 = vadd.f32 %v2378, %v2388
      %s2393 = sld [smem:[#allocation5 + $0xaa]]
      %v2394 = vstv %s2393
      %v2395 = vmul.f32 %v1575, %v2394
      %v2396 = vmul.f32 %v1576, %v2394
      %2399 = vrot.lane.b32.xlu0 %v2395, 126
      %v2400 = vpop.permute.xlu0 %2399
      %2401 = vrot.lane.b32.xlu0 %v2396, 126
      %v2402 = vpop.permute.xlu0 %2401
      %v2405 = vadd.f32 %v2391, %v2400
      %v2406 = vadd.f32 %v2392, %v2402
      %s2407 = sld [smem:[#allocation5 + $0xb3]]
      %v2408 = vstv %s2407
      %v2409 = vmul.f32 %v1577, %v2408
      %v2410 = vmul.f32 %v1578, %v2408
      %2413 = vrot.lane.b32.xlu0 %v2409, 126
      %v2414 = vpop.permute.xlu0 %2413
      %2415 = vrot.lane.b32.xlu0 %v2410, 126
      %v2416 = vpop.permute.xlu0 %2415
      %v2419 = vadd.f32 %v2405, %v2414
      %v2420 = vadd.f32 %v2406, %v2416
      %vm2421 = vcmp.ge.f32.partialorder %v2419, 0.0
      %vm2422 = vcmp.ge.f32.partialorder %v2420, 0.0
      %v2423 = vmul.f32 %v2419, 0.3
      %v2424 = vmul.f32 %v2420, 0.3
      %v2425 = vsel %vm2421, %v2419, %v2423
      %v2426 = vsel %vm2422, %v2420, %v2424
      %2429 = vrot.lane.b32.xlu0 %v2213, 4
      %v2430 = vpop.permute.xlu0 %2429
      %2431 = vrot.lane.b32.xlu0 %v2214, 4
      %v2432 = vpop.permute.xlu0 %2431
      %2435 = vst.msk [vmem:[#allocation3 + $0x4] sm:$0xff] %vm775, %v2430
      %2436 = vst.msk [vmem:[#allocation3 + $0xc] sm:$0xff] %vm775, %v2432
      %2439 = vrot.lane.b32.xlu0 %v2425, 4
      %v2440 = vpop.permute.xlu0 %2439
      %2441 = vrot.lane.b32.xlu0 %v2426, 4
      %v2442 = vpop.permute.xlu0 %2441
      %2445 = vst.msk [vmem:[%s786 + $0x4] sm:$0xff] %vm775, %v2440
      %2446 = vst.msk [vmem:[%s786 + $0xc] sm:$0xff] %vm775, %v2442
      %v2447 = vld [vmem:[#allocation3 + $0x4] sm:$0xff]
      %v2448 = vld [vmem:[#allocation3 + $0xc] sm:$0xff]
      %v2449 = vld [vmem:[#allocation3 + $0x1c] sm:$0xff]
      %v2450 = vld [vmem:[#allocation3 + $0x24] sm:$0xff]
      %s2451 = sld [smem:[#allocation6 + $0xa]]
      %v2452 = vstv %s2451
      %s2453 = sld [smem:[#allocation5 + $0xb4]]
      %v2454 = vstv %s2453
      %v2455 = vmul.f32 %v2447, %v2454
      %v2456 = vmul.f32 %v2448, %v2454
      %v2457 = vadd.f32 %v2452, %v2455
      %v2458 = vadd.f32 %v2452, %v2456
      %s2459 = sld [smem:[#allocation5 + $0xb7]]
      %v2460 = vstv %s2459
      %v2461 = vmul.f32 %v2449, %v2460
      %v2462 = vmul.f32 %v2450, %v2460
      %v2463 = vadd.f32 %v2457, %v2461
      %v2464 = vadd.f32 %v2458, %v2462
      %s2465 = sld [smem:[#allocation5 + $0xb5]]
      %v2466 = vstv %s2465
      %v2467 = vmul.f32 %v2447, %v2466
      %v2468 = vmul.f32 %v2448, %v2466
      %2471 = vrot.lane.b32.xlu0 %v2467, 127
      %v2472 = vpop.permute.xlu0 %2471
      %2473 = vrot.lane.b32.xlu0 %v2468, 127
      %v2474 = vpop.permute.xlu0 %2473
      %v2477 = vadd.f32 %v2463, %v2472
      %v2478 = vadd.f32 %v2464, %v2474
      %s2479 = sld [smem:[#allocation5 + $0xb8]]
      %v2480 = vstv %s2479
      %v2481 = vmul.f32 %v2449, %v2480
      %v2482 = vmul.f32 %v2450, %v2480
      %2485 = vrot.lane.b32.xlu0 %v2481, 127
      %v2486 = vpop.permute.xlu0 %2485
      %2487 = vrot.lane.b32.xlu0 %v2482, 127
      %v2488 = vpop.permute.xlu0 %2487
      %v2491 = vadd.f32 %v2477, %v2486
      %v2492 = vadd.f32 %v2478, %v2488
      %s2493 = sld [smem:[#allocation5 + $0xb6]]
      %v2494 = vstv %s2493
      %v2495 = vmul.f32 %v2447, %v2494
      %v2496 = vmul.f32 %v2448, %v2494
      %2499 = vrot.lane.b32.xlu0 %v2495, 126
      %v2500 = vpop.permute.xlu0 %2499
      %2501 = vrot.lane.b32.xlu0 %v2496, 126
      %v2502 = vpop.permute.xlu0 %2501
      %v2505 = vadd.f32 %v2491, %v2500
      %v2506 = vadd.f32 %v2492, %v2502
      %s2507 = sld [smem:[#allocation5 + $0xb9]]
      %v2508 = vstv %s2507
      %v2509 = vmul.f32 %v2449, %v2508
      %v2510 = vmul.f32 %v2450, %v2508
      %2513 = vrot.lane.b32.xlu0 %v2509, 126
      %v2514 = vpop.permute.xlu0 %2513
      %2515 = vrot.lane.b32.xlu0 %v2510, 126
      %v2516 = vpop.permute.xlu0 %2515
      %v2519 = vadd.f32 %v2505, %v2514
      %v2520 = vadd.f32 %v2506, %v2516
      %vm2521 = vcmp.ge.f32.partialorder %v2519, 0.0
      %vm2522 = vcmp.ge.f32.partialorder %v2520, 0.0
      %v2523 = vmul.f32 %v2519, 0.3
      %v2524 = vmul.f32 %v2520, 0.3
      %v2525 = vsel %vm2521, %v2519, %v2523
      %v2526 = vsel %vm2522, %v2520, %v2524
      %s2527 = sld [smem:[#allocation6 + $0xb]]
      %v2528 = vstv %s2527
      %s2529 = sld [smem:[#allocation5 + $0xba]]
      %v2530 = vstv %s2529
      %v2531 = vmul.f32 %v2447, %v2530
      %v2532 = vmul.f32 %v2448, %v2530
      %v2533 = vadd.f32 %v2528, %v2531
      %v2534 = vadd.f32 %v2528, %v2532
      %s2535 = sld [smem:[#allocation5 + $0xbd]]
      %v2536 = vstv %s2535
      %v2537 = vmul.f32 %v2449, %v2536
      %v2538 = vmul.f32 %v2450, %v2536
      %v2539 = vadd.f32 %v2533, %v2537
      %v2540 = vadd.f32 %v2534, %v2538
      %s2541 = sld [smem:[#allocation5 + $0xbb]]
      %v2542 = vstv %s2541
      %v2543 = vmul.f32 %v2447, %v2542
      %v2544 = vmul.f32 %v2448, %v2542
      %2547 = vrot.lane.b32.xlu0 %v2543, 127
      %v2548 = vpop.permute.xlu0 %2547
      %2549 = vrot.lane.b32.xlu0 %v2544, 127
      %v2550 = vpop.permute.xlu0 %2549
      %v2553 = vadd.f32 %v2539, %v2548
      %v2554 = vadd.f32 %v2540, %v2550
      %s2555 = sld [smem:[#allocation5 + $0xbe]]
      %v2556 = vstv %s2555
      %v2557 = vmul.f32 %v2449, %v2556
      %v2558 = vmul.f32 %v2450, %v2556
      %2561 = vrot.lane.b32.xlu0 %v2557, 127
      %v2562 = vpop.permute.xlu0 %2561
      %2563 = vrot.lane.b32.xlu0 %v2558, 127
      %v2564 = vpop.permute.xlu0 %2563
      %v2567 = vadd.f32 %v2553, %v2562
      %v2568 = vadd.f32 %v2554, %v2564
      %s2569 = sld [smem:[#allocation5 + $0xbc]]
      %v2570 = vstv %s2569
      %v2571 = vmul.f32 %v2447, %v2570
      %v2572 = vmul.f32 %v2448, %v2570
      %2575 = vrot.lane.b32.xlu0 %v2571, 126
      %v2576 = vpop.permute.xlu0 %2575
      %2577 = vrot.lane.b32.xlu0 %v2572, 126
      %v2578 = vpop.permute.xlu0 %2577
      %v2581 = vadd.f32 %v2567, %v2576
      %v2582 = vadd.f32 %v2568, %v2578
      %s2583 = sld [smem:[#allocation5 + $0xbf]]
      %v2584 = vstv %s2583
      %v2585 = vmul.f32 %v2449, %v2584
      %v2586 = vmul.f32 %v2450, %v2584
      %2589 = vrot.lane.b32.xlu0 %v2585, 126
      %v2590 = vpop.permute.xlu0 %2589
      %2591 = vrot.lane.b32.xlu0 %v2586, 126
      %v2592 = vpop.permute.xlu0 %2591
      %v2595 = vadd.f32 %v2581, %v2590
      %v2596 = vadd.f32 %v2582, %v2592
      %vm2597 = vcmp.ge.f32.partialorder %v2595, 0.0
      %vm2598 = vcmp.ge.f32.partialorder %v2596, 0.0
      %v2599 = vmul.f32 %v2595, 0.3
      %v2600 = vmul.f32 %v2596, 0.3
      %v2601 = vsel %vm2597, %v2595, %v2599
      %v2602 = vsel %vm2598, %v2596, %v2600
      %2605 = vrot.lane.b32.xlu0 %v2525, 1
      %v2606 = vpop.permute.xlu0 %2605
      %2607 = vrot.lane.b32.xlu0 %v2526, 1
      %v2608 = vpop.permute.xlu0 %2607
      %2611 = vst.msk [vmem:[#allocation3 + $0x4] sm:$0xff] %vm775, %v2606
      %2612 = vst.msk [vmem:[#allocation3 + $0xc] sm:$0xff] %vm775, %v2608
      %2615 = vrot.lane.b32.xlu0 %v2601, 1
      %v2616 = vpop.permute.xlu0 %2615
      %2617 = vrot.lane.b32.xlu0 %v2602, 1
      %v2618 = vpop.permute.xlu0 %2617
      %2621 = vst.msk [vmem:[%s786 + $0x4] sm:$0xff] %vm775, %v2616
      %2622 = vst.msk [vmem:[%s786 + $0xc] sm:$0xff] %vm775, %v2618
      %v2623 = vld [vmem:[#allocation3 + $0x3] sm:$0xff]
      %v2624 = vld [vmem:[#allocation3 + $0xb] sm:$0xff]
      %v2625 = vld [vmem:[#allocation3 + $0x1b] sm:$0xff]
      %v2626 = vld [vmem:[#allocation3 + $0x23] sm:$0xff]
      %v2627 = vld [vmem:[#allocation3 + $0x4] sm:$0xff]
      %v2628 = vld [vmem:[#allocation3 + $0xc] sm:$0xff]
      %v2629 = vld [vmem:[#allocation3 + $0x1c] sm:$0xff]
      %v2630 = vld [vmem:[#allocation3 + $0x24] sm:$0xff]
      %v2631 = vld [vmem:[#allocation3 + $0x5] sm:$0xff]
      %v2632 = vld [vmem:[#allocation3 + $0xd] sm:$0xff]
      %v2633 = vld [vmem:[#allocation3 + $0x1d] sm:$0xff]
      %v2634 = vld [vmem:[#allocation3 + $0x25] sm:$0xff]
      %s2635 = sld [smem:[#allocation6 + $0xc]]
      %v2636 = vstv %s2635
      %s2637 = sld [smem:[#allocation5 + $0xc0]]
      %v2638 = vstv %s2637
      %v2639 = vmul.f32 %v2623, %v2638
      %v2640 = vmul.f32 %v2624, %v2638
      %v2641 = vadd.f32 %v2636, %v2639
      %v2642 = vadd.f32 %v2636, %v2640
      %s2643 = sld [smem:[#allocation5 + $0xc3]]
      %v2644 = vstv %s2643
      %v2645 = vmul.f32 %v2625, %v2644
      %v2646 = vmul.f32 %v2626, %v2644
      %v2647 = vadd.f32 %v2641, %v2645
      %v2648 = vadd.f32 %v2642, %v2646
      %s2649 = sld [smem:[#allocation5 + $0xc1]]
      %v2650 = vstv %s2649
      %v2651 = vmul.f32 %v2627, %v2650
      %v2652 = vmul.f32 %v2628, %v2650
      %v2653 = vadd.f32 %v2647, %v2651
      %v2654 = vadd.f32 %v2648, %v2652
      %s2655 = sld [smem:[#allocation5 + $0xc4]]
      %v2656 = vstv %s2655
      %v2657 = vmul.f32 %v2629, %v2656
      %v2658 = vmul.f32 %v2630, %v2656
      %v2659 = vadd.f32 %v2653, %v2657
      %v2660 = vadd.f32 %v2654, %v2658
      %s2661 = sld [smem:[#allocation5 + $0xc2]]
      %v2662 = vstv %s2661
      %v2663 = vmul.f32 %v2631, %v2662
      %v2664 = vmul.f32 %v2632, %v2662
      %v2665 = vadd.f32 %v2659, %v2663
      %v2666 = vadd.f32 %v2660, %v2664
      %s2667 = sld [smem:[#allocation5 + $0xc5]]
      %v2668 = vstv %s2667
      %v2669 = vmul.f32 %v2633, %v2668
      %v2670 = vmul.f32 %v2634, %v2668
      %v2671 = vadd.f32 %v2665, %v2669
      %v2672 = vadd.f32 %v2666, %v2670
      %vm2673 = vcmp.ge.f32.partialorder %v2671, 0.0
      %vm2674 = vcmp.ge.f32.partialorder %v2672, 0.0
      %v2675 = vmul.f32 %v2671, 0.3
      %v2676 = vmul.f32 %v2672, 0.3
      %v2677 = vsel %vm2673, %v2671, %v2675
      %v2678 = vsel %vm2674, %v2672, %v2676
      %s2679 = sld [smem:[#allocation6 + $0xd]]
      %v2680 = vstv %s2679
      %s2681 = sld [smem:[#allocation5 + $0xc6]]
      %v2682 = vstv %s2681
      %v2683 = vmul.f32 %v2623, %v2682
      %v2684 = vmul.f32 %v2624, %v2682
      %v2685 = vadd.f32 %v2680, %v2683
      %v2686 = vadd.f32 %v2680, %v2684
      %s2687 = sld [smem:[#allocation5 + $0xc9]]
      %v2688 = vstv %s2687
      %v2689 = vmul.f32 %v2625, %v2688
      %v2690 = vmul.f32 %v2626, %v2688
      %v2691 = vadd.f32 %v2685, %v2689
      %v2692 = vadd.f32 %v2686, %v2690
      %s2693 = sld [smem:[#allocation5 + $0xc7]]
      %v2694 = vstv %s2693
      %v2695 = vmul.f32 %v2627, %v2694
      %v2696 = vmul.f32 %v2628, %v2694
      %v2697 = vadd.f32 %v2691, %v2695
      %v2698 = vadd.f32 %v2692, %v2696
      %s2699 = sld [smem:[#allocation5 + $0xca]]
      %v2700 = vstv %s2699
      %v2701 = vmul.f32 %v2629, %v2700
      %v2702 = vmul.f32 %v2630, %v2700
      %v2703 = vadd.f32 %v2697, %v2701
      %v2704 = vadd.f32 %v2698, %v2702
      %s2705 = sld [smem:[#allocation5 + $0xc8]]
      %v2706 = vstv %s2705
      %v2707 = vmul.f32 %v2631, %v2706
      %v2708 = vmul.f32 %v2632, %v2706
      %v2709 = vadd.f32 %v2703, %v2707
      %v2710 = vadd.f32 %v2704, %v2708
      %s2711 = sld [smem:[#allocation5 + $0xcb]]
      %v2712 = vstv %s2711
      %v2713 = vmul.f32 %v2633, %v2712
      %v2714 = vmul.f32 %v2634, %v2712
      %v2715 = vadd.f32 %v2709, %v2713
      %v2716 = vadd.f32 %v2710, %v2714
      %vm2717 = vcmp.ge.f32.partialorder %v2715, 0.0
      %vm2718 = vcmp.ge.f32.partialorder %v2716, 0.0
      %v2719 = vmul.f32 %v2715, 0.3
      %v2720 = vmul.f32 %v2716, 0.3
      %v2721 = vsel %vm2717, %v2715, %v2719
      %v2722 = vsel %vm2718, %v2716, %v2720
      %v2723 = vld [vmem:[%s3] sm:$0xff]
      %v2724 = vld [vmem:[%s3 + $0x8] sm:$0xff]
      %v2725 = vld [vmem:[%s3 + $0x10] sm:$0xff]
      %v2726 = vld [vmem:[%s3 + $0x18] sm:$0xff]
      %2729 = vrot.lane.b32.xlu0 %v1565, 124
      %v2730 = vpop.permute.xlu0 %2729
      %2731 = vrot.lane.b32.xlu0 %v1566, 124
      %v2732 = vpop.permute.xlu0 %2731
      %vm2733 = vcmask 130048
      %v2734 = vsel %vm2733, %v2730, 0
      %v2736 = vsel %vm2733, %v2732, 0
      %2738 = vmatprep.subr.mxu0 0.0
      %2739 = vmatpush1.msra.mxu0 %v2725
      %2740 = vmatprep.subr.mxu0 0.0
      %2741 = vmatpush1.msra.mxu0 %v2726
      %2742 = vmatprep.subr.mxu0 0.0
      %2743 = vmatpush1.msra.mxu0 0.0
      %2744 = vmatprep.subr.mxu0 0.0
      %2745 = vmatpush1.msra.mxu0 0.0
      %2746 = vmatprep.subr.mxu0 0.0
      %2747 = vmatpush1.msra.mxu0 0.0
      %2748 = vmatprep.subr.mxu0 0.0
      %2749 = vmatpush1.msra.mxu0 0.0
      %2750 = vmatprep.subr.mxu0 0.0
      %2751 = vmatpush1.msra.mxu0 0.0
      %2752 = vmatprep.subr.mxu0 0.0
      %2753 = vmatpush1.msra.mxu0 0.0
      %2754 = vmatprep.subr.mxu0 0.0
      %2755 = vmatpush1.msra.mxu0 0.0
      %2756 = vmatprep.subr.mxu0 0.0
      %2757 = vmatpush1.msra.mxu0 0.0
      %2758 = vmatprep.subr.mxu0 0.0
      %2759 = vmatpush1.msra.mxu0 0.0
      %2760 = vmatprep.subr.mxu0 0.0
      %2761 = vmatpush1.msra.mxu0 0.0
      %2762 = vmatprep.subr.mxu0 0.0
      %2763 = vmatpush1.msra.mxu0 0.0
      %2764 = vmatprep.subr.mxu0 0.0
      %2765 = vmatpush1.msra.mxu0 0.0
      %2766 = vmatprep.subr.mxu0 0.0
      %2767 = vmatpush1.msra.mxu0 0.0
      %2768 = vmatprep.subr.mxu0 0.0
      %2769 = vmatpush1.msra.mxu0 0.0
      %2770 = vmatprep.subr.mxu0 0.0
      %2771 = vmatpush1.msra.mxu0 0.0
      %2772 = vmatprep.subr.mxu0 0.0
      %2773 = vmatpush1.msra.mxu0 0.0
      %2774 = vmatprep.subr.mxu0 0.0
      %2775 = vmatpush1.msra.mxu0 0.0
      %2776 = vmatprep.subr.mxu0 0.0
      %2777 = vmatpush1.msra.mxu0 0.0
      %2778 = vmatprep.subr.mxu0 0.0
      %2779 = vmatpush1.msra.mxu0 0.0
      %2780 = vmatprep.subr.mxu0 0.0
      %2781 = vmatpush1.msra.mxu0 0.0
      %2782 = vmatprep.subr.mxu0 0.0
      %2783 = vmatpush1.msra.mxu0 0.0
      %2784 = vmatprep.subr.mxu0 0.0
      %2785 = vmatpush1.msra.mxu0 0.0
      %2786 = vmatprep.subr.mxu0 0.0
      %2787 = vmatpush1.msra.mxu0 0.0
      %2788 = vmatprep.subr.mxu0 0.0
      %2789 = vmatpush1.msra.mxu0 0.0
      %2790 = vmatprep.subr.mxu0 0.0
      %2791 = vmatpush1.msra.mxu0 0.0
      %2792 = vmatprep.subr.mxu0 0.0
      %2793 = vmatpush1.msra.mxu0 0.0
      %2794 = vmatprep.subr.mxu0 0.0
      %2795 = vmatpush1.msra.mxu0 0.0
      %2796 = vmatprep.subr.mxu0 0.0
      %2797 = vmatpush1.msra.mxu0 0.0
      %2798 = vmatprep.subr.mxu0 0.0
      %2799 = vmatpush1.msra.mxu0 0.0
      %2800 = vmatprep.subr.mxu0 0.0
      %2801 = vmatpush1.msra.mxu0 0.0
      %2802 = vmatprep.mubr.f32.mxu0 0.0
      %2803 = vmatmul.mubr.f32.gmra.mrb[0].mxu0 %v2734
      %v2804 = vpop.f32.mrb[0].mxu0
      %v2805 = vadd.f32 0.0, %v2804
      %v2806 = vpop.f32.mrb[0].mxu0
      %2807 = vmatprep.mubr.f32.mxu0 0.0
      %2808 = vmatmul.mubr.f32.gmra.mrb[0].mxu0 %v2736
      %v2809 = vpop.f32.mrb[0].mxu0
      %v2810 = vadd.f32 0.0, %v2809
      %v2811 = vpop.f32.mrb[0].mxu0
      %2812 = vdwg.mxu0
      %2815 = vrot.lane.b32.xlu0 %v1449, 124
      %v2816 = vpop.permute.xlu0 %2815
      %2817 = vrot.lane.b32.xlu0 %v1450, 124
      %v2818 = vpop.permute.xlu0 %2817
      %v2819 = vsel %vm2733, %v2816, 0
      %v2821 = vsel %vm2733, %v2818, 0
      %2823 = vmatprep.subr.mxu0 0.0
      %2824 = vmatpush1.msra.mxu0 %v2723
      %2825 = vmatprep.subr.mxu0 0.0
      %2826 = vmatpush1.msra.mxu0 %v2724
      %2827 = vmatprep.subr.mxu0 0.0
      %2828 = vmatpush1.msra.mxu0 0.0
      %2829 = vmatprep.subr.mxu0 0.0
      %2830 = vmatpush1.msra.mxu0 0.0
      %2831 = vmatprep.subr.mxu0 0.0
      %2832 = vmatpush1.msra.mxu0 0.0
      %2833 = vmatprep.subr.mxu0 0.0
      %2834 = vmatpush1.msra.mxu0 0.0
      %2835 = vmatprep.subr.mxu0 0.0
      %2836 = vmatpush1.msra.mxu0 0.0
      %2837 = vmatprep.subr.mxu0 0.0
      %2838 = vmatpush1.msra.mxu0 0.0
      %2839 = vmatprep.subr.mxu0 0.0
      %2840 = vmatpush1.msra.mxu0 0.0
      %2841 = vmatprep.subr.mxu0 0.0
      %2842 = vmatpush1.msra.mxu0 0.0
      %2843 = vmatprep.subr.mxu0 0.0
      %2844 = vmatpush1.msra.mxu0 0.0
      %2845 = vmatprep.subr.mxu0 0.0
      %2846 = vmatpush1.msra.mxu0 0.0
      %2847 = vmatprep.subr.mxu0 0.0
      %2848 = vmatpush1.msra.mxu0 0.0
      %2849 = vmatprep.subr.mxu0 0.0
      %2850 = vmatpush1.msra.mxu0 0.0
      %2851 = vmatprep.subr.mxu0 0.0
      %2852 = vmatpush1.msra.mxu0 0.0
      %2853 = vmatprep.subr.mxu0 0.0
      %2854 = vmatpush1.msra.mxu0 0.0
      %2855 = vmatprep.subr.mxu0 0.0
      %2856 = vmatpush1.msra.mxu0 0.0
      %2857 = vmatprep.subr.mxu0 0.0
      %2858 = vmatpush1.msra.mxu0 0.0
      %2859 = vmatprep.subr.mxu0 0.0
      %2860 = vmatpush1.msra.mxu0 0.0
      %2861 = vmatprep.subr.mxu0 0.0
      %2862 = vmatpush1.msra.mxu0 0.0
      %2863 = vmatprep.subr.mxu0 0.0
      %2864 = vmatpush1.msra.mxu0 0.0
      %2865 = vmatprep.subr.mxu0 0.0
      %2866 = vmatpush1.msra.mxu0 0.0
      %2867 = vmatprep.subr.mxu0 0.0
      %2868 = vmatpush1.msra.mxu0 0.0
      %2869 = vmatprep.subr.mxu0 0.0
      %2870 = vmatpush1.msra.mxu0 0.0
      %2871 = vmatprep.subr.mxu0 0.0
      %2872 = vmatpush1.msra.mxu0 0.0
      %2873 = vmatprep.subr.mxu0 0.0
      %2874 = vmatpush1.msra.mxu0 0.0
      %2875 = vmatprep.subr.mxu0 0.0
      %2876 = vmatpush1.msra.mxu0 0.0
      %2877 = vmatprep.subr.mxu0 0.0
      %2878 = vmatpush1.msra.mxu0 0.0
      %2879 = vmatprep.subr.mxu0 0.0
      %2880 = vmatpush1.msra.mxu0 0.0
      %2881 = vmatprep.subr.mxu0 0.0
      %2882 = vmatpush1.msra.mxu0 0.0
      %2883 = vmatprep.subr.mxu0 0.0
      %2884 = vmatpush1.msra.mxu0 0.0
      %2885 = vmatprep.subr.mxu0 0.0
      %2886 = vmatpush1.msra.mxu0 0.0
      %2887 = vmatprep.mubr.f32.mxu0 0.0
      %2888 = vmatmul.mubr.f32.gmra.mrb[0].mxu0 %v2819
      %v2889 = vpop.f32.mrb[0].mxu0
      %v2890 = vadd.f32 %v2805, %v2889
      %v2891 = vpop.f32.mrb[0].mxu0
      %2892 = vmatprep.mubr.f32.mxu0 0.0
      %2893 = vmatmul.mubr.f32.gmra.mrb[0].mxu0 %v2821
      %v2894 = vpop.f32.mrb[0].mxu0
      %v2895 = vadd.f32 %v2810, %v2894
      %v2896 = vpop.f32.mrb[0].mxu0
      %2897 = vdwg.mxu0
      %v2898 = vld [vmem:[%s3 + $0x20] sm:$0xff]
      %v2899 = vld [vmem:[%s3 + $0x28] sm:$0xff]
      %v2901 = vsel %vm2733, %v1789, 0
      %v2904 = vsel %vm2733, %v1790, 0
      %2906 = vmatprep.subr.mxu0 0.0
      %2907 = vmatpush1.msra.mxu0 %v2898
      %2908 = vmatprep.subr.mxu0 0.0
      %2909 = vmatpush1.msra.mxu0 %v2899
      %2910 = vmatprep.subr.mxu0 0.0
      %2911 = vmatpush1.msra.mxu0 0.0
      %2912 = vmatprep.subr.mxu0 0.0
      %2913 = vmatpush1.msra.mxu0 0.0
      %2914 = vmatprep.subr.mxu0 0.0
      %2915 = vmatpush1.msra.mxu0 0.0
      %2916 = vmatprep.subr.mxu0 0.0
      %2917 = vmatpush1.msra.mxu0 0.0
      %2918 = vmatprep.subr.mxu0 0.0
      %2919 = vmatpush1.msra.mxu0 0.0
      %2920 = vmatprep.subr.mxu0 0.0
      %2921 = vmatpush1.msra.mxu0 0.0
      %2922 = vmatprep.subr.mxu0 0.0
      %2923 = vmatpush1.msra.mxu0 0.0
      %2924 = vmatprep.subr.mxu0 0.0
      %2925 = vmatpush1.msra.mxu0 0.0
      %2926 = vmatprep.subr.mxu0 0.0
      %2927 = vmatpush1.msra.mxu0 0.0
      %2928 = vmatprep.subr.mxu0 0.0
      %2929 = vmatpush1.msra.mxu0 0.0
      %2930 = vmatprep.subr.mxu0 0.0
      %2931 = vmatpush1.msra.mxu0 0.0
      %2932 = vmatprep.subr.mxu0 0.0
      %2933 = vmatpush1.msra.mxu0 0.0
      %2934 = vmatprep.subr.mxu0 0.0
      %2935 = vmatpush1.msra.mxu0 0.0
      %2936 = vmatprep.subr.mxu0 0.0
      %2937 = vmatpush1.msra.mxu0 0.0
      %2938 = vmatprep.subr.mxu0 0.0
      %2939 = vmatpush1.msra.mxu0 0.0
      %2940 = vmatprep.subr.mxu0 0.0
      %2941 = vmatpush1.msra.mxu0 0.0
      %2942 = vmatprep.subr.mxu0 0.0
      %2943 = vmatpush1.msra.mxu0 0.0
      %2944 = vmatprep.subr.mxu0 0.0
      %2945 = vmatpush1.msra.mxu0 0.0
      %2946 = vmatprep.subr.mxu0 0.0
      %2947 = vmatpush1.msra.mxu0 0.0
      %2948 = vmatprep.subr.mxu0 0.0
      %2949 = vmatpush1.msra.mxu0 0.0
      %2950 = vmatprep.subr.mxu0 0.0
      %2951 = vmatpush1.msra.mxu0 0.0
      %2952 = vmatprep.subr.mxu0 0.0
      %2953 = vmatpush1.msra.mxu0 0.0
      %2954 = vmatprep.subr.mxu0 0.0
      %2955 = vmatpush1.msra.mxu0 0.0
      %2956 = vmatprep.subr.mxu0 0.0
      %2957 = vmatpush1.msra.mxu0 0.0
      %2958 = vmatprep.subr.mxu0 0.0
      %2959 = vmatpush1.msra.mxu0 0.0
      %2960 = vmatprep.subr.mxu0 0.0
      %2961 = vmatpush1.msra.mxu0 0.0
      %2962 = vmatprep.subr.mxu0 0.0
      %2963 = vmatpush1.msra.mxu0 0.0
      %2964 = vmatprep.subr.mxu0 0.0
      %2965 = vmatpush1.msra.mxu0 0.0
      %2966 = vmatprep.subr.mxu0 0.0
      %2967 = vmatpush1.msra.mxu0 0.0
      %2968 = vmatprep.subr.mxu0 0.0
      %2969 = vmatpush1.msra.mxu0 0.0
      %2970 = vmatprep.mubr.f32.mxu0 0.0
      %2971 = vmatmul.mubr.f32.gmra.mrb[0].mxu0 %v2901
      %v2972 = vpop.f32.mrb[0].mxu0
      %v2973 = vadd.f32 0.0, %v2972
      %v2974 = vpop.f32.mrb[0].mxu0
      %2975 = vmatprep.mubr.f32.mxu0 0.0
      %2976 = vmatmul.mubr.f32.gmra.mrb[0].mxu0 %v2904
      %v2977 = vpop.f32.mrb[0].mxu0
      %v2978 = vadd.f32 0.0, %v2977
      %v2979 = vpop.f32.mrb[0].mxu0
      %2980 = vdwg.mxu0
      %v2981 = vadd.f32 %v2890, %v2973
      %v2982 = vadd.f32 %v2895, %v2978
      %v2983 = vld [vmem:[%s3 + $0x30] sm:$0xff]
      %v2984 = vld [vmem:[%s3 + $0x38] sm:$0xff]
      %v2986 = vsel %vm2733, %v2001, 0
      %v2989 = vsel %vm2733, %v2002, 0
      %2991 = vmatprep.subr.mxu0 0.0
      %2992 = vmatpush1.msra.mxu0 %v2983
      %2993 = vmatprep.subr.mxu0 0.0
      %2994 = vmatpush1.msra.mxu0 %v2984
      %2995 = vmatprep.subr.mxu0 0.0
      %2996 = vmatpush1.msra.mxu0 0.0
      %2997 = vmatprep.subr.mxu0 0.0
      %2998 = vmatpush1.msra.mxu0 0.0
      %2999 = vmatprep.subr.mxu0 0.0
      %3000 = vmatpush1.msra.mxu0 0.0
      %3001 = vmatprep.subr.mxu0 0.0
      %3002 = vmatpush1.msra.mxu0 0.0
      %3003 = vmatprep.subr.mxu0 0.0
      %3004 = vmatpush1.msra.mxu0 0.0
      %3005 = vmatprep.subr.mxu0 0.0
      %3006 = vmatpush1.msra.mxu0 0.0
      %3007 = vmatprep.subr.mxu0 0.0
      %3008 = vmatpush1.msra.mxu0 0.0
      %3009 = vmatprep.subr.mxu0 0.0
      %3010 = vmatpush1.msra.mxu0 0.0
      %3011 = vmatprep.subr.mxu0 0.0
      %3012 = vmatpush1.msra.mxu0 0.0
      %3013 = vmatprep.subr.mxu0 0.0
      %3014 = vmatpush1.msra.mxu0 0.0
      %3015 = vmatprep.subr.mxu0 0.0
      %3016 = vmatpush1.msra.mxu0 0.0
      %3017 = vmatprep.subr.mxu0 0.0
      %3018 = vmatpush1.msra.mxu0 0.0
      %3019 = vmatprep.subr.mxu0 0.0
      %3020 = vmatpush1.msra.mxu0 0.0
      %3021 = vmatprep.subr.mxu0 0.0
      %3022 = vmatpush1.msra.mxu0 0.0
      %3023 = vmatprep.subr.mxu0 0.0
      %3024 = vmatpush1.msra.mxu0 0.0
      %3025 = vmatprep.subr.mxu0 0.0
      %3026 = vmatpush1.msra.mxu0 0.0
      %3027 = vmatprep.subr.mxu0 0.0
      %3028 = vmatpush1.msra.mxu0 0.0
      %3029 = vmatprep.subr.mxu0 0.0
      %3030 = vmatpush1.msra.mxu0 0.0
      %3031 = vmatprep.subr.mxu0 0.0
      %3032 = vmatpush1.msra.mxu0 0.0
      %3033 = vmatprep.subr.mxu0 0.0
      %3034 = vmatpush1.msra.mxu0 0.0
      %3035 = vmatprep.subr.mxu0 0.0
      %3036 = vmatpush1.msra.mxu0 0.0
      %3037 = vmatprep.subr.mxu0 0.0
      %3038 = vmatpush1.msra.mxu0 0.0
      %3039 = vmatprep.subr.mxu0 0.0
      %3040 = vmatpush1.msra.mxu0 0.0
      %3041 = vmatprep.subr.mxu0 0.0
      %3042 = vmatpush1.msra.mxu0 0.0
      %3043 = vmatprep.subr.mxu0 0.0
      %3044 = vmatpush1.msra.mxu0 0.0
      %3045 = vmatprep.subr.mxu0 0.0
      %3046 = vmatpush1.msra.mxu0 0.0
      %3047 = vmatprep.subr.mxu0 0.0
      %3048 = vmatpush1.msra.mxu0 0.0
      %3049 = vmatprep.subr.mxu0 0.0
      %3050 = vmatpush1.msra.mxu0 0.0
      %3051 = vmatprep.subr.mxu0 0.0
      %3052 = vmatpush1.msra.mxu0 0.0
      %3053 = vmatprep.subr.mxu0 0.0
      %3054 = vmatpush1.msra.mxu0 0.0
      %3055 = vmatprep.mubr.f32.mxu0 0.0
      %3056 = vmatmul.mubr.f32.gmra.mrb[0].mxu0 %v2986
      %v3057 = vpop.f32.mrb[0].mxu0
      %v3058 = vadd.f32 0.0, %v3057
      %v3059 = vpop.f32.mrb[0].mxu0
      %3060 = vmatprep.mubr.f32.mxu0 0.0
      %3061 = vmatmul.mubr.f32.gmra.mrb[0].mxu0 %v2989
      %v3062 = vpop.f32.mrb[0].mxu0
      %v3063 = vadd.f32 0.0, %v3062
      %v3064 = vpop.f32.mrb[0].mxu0
      %3065 = vdwg.mxu0
      %v3066 = vadd.f32 %v2981, %v3058
      %v3067 = vadd.f32 %v2982, %v3063
      %v3068 = vld [vmem:[%s3 + $0x40] sm:$0xff]
      %v3069 = vld [vmem:[%s3 + $0x48] sm:$0xff]
      %3072 = vrot.lane.b32.xlu0 %v2677, 124
      %v3073 = vpop.permute.xlu0 %3072
      %3074 = vrot.lane.b32.xlu0 %v2678, 124
      %v3075 = vpop.permute.xlu0 %3074
      %v3076 = vsel %vm2733, %v3073, 0
      %v3078 = vsel %vm2733, %v3075, 0
      %3080 = vmatprep.subr.mxu0 0.0
      %3081 = vmatpush1.msra.mxu0 %v3068
      %3082 = vmatprep.subr.mxu0 0.0
      %3083 = vmatpush1.msra.mxu0 %v3069
      %3084 = vmatprep.subr.mxu0 0.0
      %3085 = vmatpush1.msra.mxu0 0.0
      %3086 = vmatprep.subr.mxu0 0.0
      %3087 = vmatpush1.msra.mxu0 0.0
      %3088 = vmatprep.subr.mxu0 0.0
      %3089 = vmatpush1.msra.mxu0 0.0
      %3090 = vmatprep.subr.mxu0 0.0
      %3091 = vmatpush1.msra.mxu0 0.0
      %3092 = vmatprep.subr.mxu0 0.0
      %3093 = vmatpush1.msra.mxu0 0.0
      %3094 = vmatprep.subr.mxu0 0.0
      %3095 = vmatpush1.msra.mxu0 0.0
      %3096 = vmatprep.subr.mxu0 0.0
      %3097 = vmatpush1.msra.mxu0 0.0
      %3098 = vmatprep.subr.mxu0 0.0
      %3099 = vmatpush1.msra.mxu0 0.0
      %3100 = vmatprep.subr.mxu0 0.0
      %3101 = vmatpush1.msra.mxu0 0.0
      %3102 = vmatprep.subr.mxu0 0.0
      %3103 = vmatpush1.msra.mxu0 0.0
      %3104 = vmatprep.subr.mxu0 0.0
      %3105 = vmatpush1.msra.mxu0 0.0
      %3106 = vmatprep.subr.mxu0 0.0
      %3107 = vmatpush1.msra.mxu0 0.0
      %3108 = vmatprep.subr.mxu0 0.0
      %3109 = vmatpush1.msra.mxu0 0.0
      %3110 = vmatprep.subr.mxu0 0.0
      %3111 = vmatpush1.msra.mxu0 0.0
      %3112 = vmatprep.subr.mxu0 0.0
      %3113 = vmatpush1.msra.mxu0 0.0
      %3114 = vmatprep.subr.mxu0 0.0
      %3115 = vmatpush1.msra.mxu0 0.0
      %3116 = vmatprep.subr.mxu0 0.0
      %3117 = vmatpush1.msra.mxu0 0.0
      %3118 = vmatprep.subr.mxu0 0.0
      %3119 = vmatpush1.msra.mxu0 0.0
      %3120 = vmatprep.subr.mxu0 0.0
      %3121 = vmatpush1.msra.mxu0 0.0
      %3122 = vmatprep.subr.mxu0 0.0
      %3123 = vmatpush1.msra.mxu0 0.0
      %3124 = vmatprep.subr.mxu0 0.0
      %3125 = vmatpush1.msra.mxu0 0.0
      %3126 = vmatprep.subr.mxu0 0.0
      %3127 = vmatpush1.msra.mxu0 0.0
      %3128 = vmatprep.subr.mxu0 0.0
      %3129 = vmatpush1.msra.mxu0 0.0
      %3130 = vmatprep.subr.mxu0 0.0
      %3131 = vmatpush1.msra.mxu0 0.0
      %3132 = vmatprep.subr.mxu0 0.0
      %3133 = vmatpush1.msra.mxu0 0.0
      %3134 = vmatprep.subr.mxu0 0.0
      %3135 = vmatpush1.msra.mxu0 0.0
      %3136 = vmatprep.subr.mxu0 0.0
      %3137 = vmatpush1.msra.mxu0 0.0
      %3138 = vmatprep.subr.mxu0 0.0
      %3139 = vmatpush1.msra.mxu0 0.0
      %3140 = vmatprep.subr.mxu0 0.0
      %3141 = vmatpush1.msra.mxu0 0.0
      %3142 = vmatprep.subr.mxu0 0.0
      %3143 = vmatpush1.msra.mxu0 0.0
      %3144 = vmatprep.mubr.f32.mxu0 0.0
      %3145 = vmatmul.mubr.f32.gmra.mrb[0].mxu0 %v3076
      %v3146 = vpop.f32.mrb[0].mxu0
      %v3147 = vadd.f32 0.0, %v3146
      %v3148 = vpop.f32.mrb[0].mxu0
      %3149 = vmatprep.mubr.f32.mxu0 0.0
      %3150 = vmatmul.mubr.f32.gmra.mrb[0].mxu0 %v3078
      %v3151 = vpop.f32.mrb[0].mxu0
      %v3152 = vadd.f32 0.0, %v3151
      %v3153 = vpop.f32.mrb[0].mxu0
      %3154 = vdwg.mxu0
      %v3155 = vadd.f32 %v3066, %v3147
      %v3156 = vadd.f32 %v3067, %v3152
      %v3157 = vld [vmem:[%s3 + $0x50] sm:$0xff]
      %v3158 = vld [vmem:[%s3 + $0x58] sm:$0xff]
      %3161 = vrot.lane.b32.xlu0 %v2721, 124
      %v3162 = vpop.permute.xlu0 %3161
      %3163 = vrot.lane.b32.xlu0 %v2722, 124
      %v3164 = vpop.permute.xlu0 %3163
      %v3165 = vsel %vm2733, %v3162, 0
      %v3167 = vsel %vm2733, %v3164, 0
      %3169 = vmatprep.subr.mxu0 0.0
      %3170 = vmatpush1.msra.mxu0 %v3157
      %3171 = vmatprep.subr.mxu0 0.0
      %3172 = vmatpush1.msra.mxu0 %v3158
      %3173 = vmatprep.subr.mxu0 0.0
      %3174 = vmatpush1.msra.mxu0 0.0
      %3175 = vmatprep.subr.mxu0 0.0
      %3176 = vmatpush1.msra.mxu0 0.0
      %3177 = vmatprep.subr.mxu0 0.0
      %3178 = vmatpush1.msra.mxu0 0.0
      %3179 = vmatprep.subr.mxu0 0.0
      %3180 = vmatpush1.msra.mxu0 0.0
      %3181 = vmatprep.subr.mxu0 0.0
      %3182 = vmatpush1.msra.mxu0 0.0
      %3183 = vmatprep.subr.mxu0 0.0
      %3184 = vmatpush1.msra.mxu0 0.0
      %3185 = vmatprep.subr.mxu0 0.0
      %3186 = vmatpush1.msra.mxu0 0.0
      %3187 = vmatprep.subr.mxu0 0.0
      %3188 = vmatpush1.msra.mxu0 0.0
      %3189 = vmatprep.subr.mxu0 0.0
      %3190 = vmatpush1.msra.mxu0 0.0
      %3191 = vmatprep.subr.mxu0 0.0
      %3192 = vmatpush1.msra.mxu0 0.0
      %3193 = vmatprep.subr.mxu0 0.0
      %3194 = vmatpush1.msra.mxu0 0.0
      %3195 = vmatprep.subr.mxu0 0.0
      %3196 = vmatpush1.msra.mxu0 0.0
      %3197 = vmatprep.subr.mxu0 0.0
      %3198 = vmatpush1.msra.mxu0 0.0
      %3199 = vmatprep.subr.mxu0 0.0
      %3200 = vmatpush1.msra.mxu0 0.0
      %3201 = vmatprep.subr.mxu0 0.0
      %3202 = vmatpush1.msra.mxu0 0.0
      %3203 = vmatprep.subr.mxu0 0.0
      %3204 = vmatpush1.msra.mxu0 0.0
      %3205 = vmatprep.subr.mxu0 0.0
      %3206 = vmatpush1.msra.mxu0 0.0
      %3207 = vmatprep.subr.mxu0 0.0
      %3208 = vmatpush1.msra.mxu0 0.0
      %3209 = vmatprep.subr.mxu0 0.0
      %3210 = vmatpush1.msra.mxu0 0.0
      %3211 = vmatprep.subr.mxu0 0.0
      %3212 = vmatpush1.msra.mxu0 0.0
      %3213 = vmatprep.subr.mxu0 0.0
      %3214 = vmatpush1.msra.mxu0 0.0
      %3215 = vmatprep.subr.mxu0 0.0
      %3216 = vmatpush1.msra.mxu0 0.0
      %3217 = vmatprep.subr.mxu0 0.0
      %3218 = vmatpush1.msra.mxu0 0.0
      %3219 = vmatprep.subr.mxu0 0.0
      %3220 = vmatpush1.msra.mxu0 0.0
      %3221 = vmatprep.subr.mxu0 0.0
      %3222 = vmatpush1.msra.mxu0 0.0
      %3223 = vmatprep.subr.mxu0 0.0
      %3224 = vmatpush1.msra.mxu0 0.0
      %3225 = vmatprep.subr.mxu0 0.0
      %3226 = vmatpush1.msra.mxu0 0.0
      %3227 = vmatprep.subr.mxu0 0.0
      %3228 = vmatpush1.msra.mxu0 0.0
      %3229 = vmatprep.subr.mxu0 0.0
      %3230 = vmatpush1.msra.mxu0 0.0
      %3231 = vmatprep.subr.mxu0 0.0
      %3232 = vmatpush1.msra.mxu0 0.0
      %3233 = vmatprep.mubr.f32.mxu0 0.0
      %3234 = vmatmul.mubr.f32.gmra.mrb[0].mxu0 %v3165
      %v3235 = vpop.f32.mrb[0].mxu0
      %v3236 = vadd.f32 0.0, %v3235
      %v3237 = vpop.f32.mrb[0].mxu0
      %3238 = vmatprep.mubr.f32.mxu0 0.0
      %3239 = vmatmul.mubr.f32.gmra.mrb[0].mxu0 %v3167
      %v3240 = vpop.f32.mrb[0].mxu0
      %v3241 = vadd.f32 0.0, %v3240
      %v3242 = vpop.f32.mrb[0].mxu0
      %3243 = vdwg.mxu0
      %v3244 = vadd.f32 %v3155, %v3236
      %v3245 = vadd.f32 %v3156, %v3241
      %v3246 = vld [vmem:[%s4] sm:$0xff]
      %s3247 = scalar_lea.vmem %s3, 96
      %v3248 = vld [vmem:[%s3247] sm:$0xff]
      %v3249 = vld [vmem:[%s3247 + $0x8] sm:$0xff]
      %v3250 = vld [vmem:[%s3247 + $0x10] sm:$0xff]
      %v3251 = vld [vmem:[%s3247 + $0x18] sm:$0xff]
      %3252 = vmatprep.subr.mxu0 0.0
      %3253 = vmatpush1.msra.mxu0 %v3250
      %3254 = vmatprep.subr.mxu0 0.0
      %3255 = vmatpush1.msra.mxu0 %v3251
      %3256 = vmatprep.subr.mxu0 0.0
      %3257 = vmatpush1.msra.mxu0 0.0
      %3258 = vmatprep.subr.mxu0 0.0
      %3259 = vmatpush1.msra.mxu0 0.0
      %3260 = vmatprep.subr.mxu0 0.0
      %3261 = vmatpush1.msra.mxu0 0.0
      %3262 = vmatprep.subr.mxu0 0.0
      %3263 = vmatpush1.msra.mxu0 0.0
      %3264 = vmatprep.subr.mxu0 0.0
      %3265 = vmatpush1.msra.mxu0 0.0
      %3266 = vmatprep.subr.mxu0 0.0
      %3267 = vmatpush1.msra.mxu0 0.0
      %3268 = vmatprep.subr.mxu0 0.0
      %3269 = vmatpush1.msra.mxu0 0.0
      %3270 = vmatprep.subr.mxu0 0.0
      %3271 = vmatpush1.msra.mxu0 0.0
      %3272 = vmatprep.subr.mxu0 0.0
      %3273 = vmatpush1.msra.mxu0 0.0
      %3274 = vmatprep.subr.mxu0 0.0
      %3275 = vmatpush1.msra.mxu0 0.0
      %3276 = vmatprep.subr.mxu0 0.0
      %3277 = vmatpush1.msra.mxu0 0.0
      %3278 = vmatprep.subr.mxu0 0.0
      %3279 = vmatpush1.msra.mxu0 0.0
      %3280 = vmatprep.subr.mxu0 0.0
      %3281 = vmatpush1.msra.mxu0 0.0
      %3282 = vmatprep.subr.mxu0 0.0
      %3283 = vmatpush1.msra.mxu0 0.0
      %3284 = vmatprep.subr.mxu0 0.0
      %3285 = vmatpush1.msra.mxu0 0.0
      %3286 = vmatprep.subr.mxu0 0.0
      %3287 = vmatpush1.msra.mxu0 0.0
      %3288 = vmatprep.subr.mxu0 0.0
      %3289 = vmatpush1.msra.mxu0 0.0
      %3290 = vmatprep.subr.mxu0 0.0
      %3291 = vmatpush1.msra.mxu0 0.0
      %3292 = vmatprep.subr.mxu0 0.0
      %3293 = vmatpush1.msra.mxu0 0.0
      %3294 = vmatprep.subr.mxu0 0.0
      %3295 = vmatpush1.msra.mxu0 0.0
      %3296 = vmatprep.subr.mxu0 0.0
      %3297 = vmatpush1.msra.mxu0 0.0
      %3298 = vmatprep.subr.mxu0 0.0
      %3299 = vmatpush1.msra.mxu0 0.0
      %3300 = vmatprep.subr.mxu0 0.0
      %3301 = vmatpush1.msra.mxu0 0.0
      %3302 = vmatprep.subr.mxu0 0.0
      %3303 = vmatpush1.msra.mxu0 0.0
      %3304 = vmatprep.subr.mxu0 0.0
      %3305 = vmatpush1.msra.mxu0 0.0
      %3306 = vmatprep.subr.mxu0 0.0
      %3307 = vmatpush1.msra.mxu0 0.0
      %3308 = vmatprep.subr.mxu0 0.0
      %3309 = vmatpush1.msra.mxu0 0.0
      %3310 = vmatprep.subr.mxu0 0.0
      %3311 = vmatpush1.msra.mxu0 0.0
      %3312 = vmatprep.subr.mxu0 0.0
      %3313 = vmatpush1.msra.mxu0 0.0
      %3314 = vmatprep.subr.mxu0 0.0
      %3315 = vmatpush1.msra.mxu0 0.0
      %3316 = vmatprep.mubr.f32.mxu0 0.0
      %3317 = vmatmul.mubr.f32.gmra.mrb[0].mxu0 %v2734
      %v3318 = vpop.f32.mrb[0].mxu0
      %v3319 = vadd.f32 0.0, %v3318
      %v3320 = vpop.f32.mrb[0].mxu0
      %3321 = vmatprep.mubr.f32.mxu0 0.0
      %3322 = vmatmul.mubr.f32.gmra.mrb[0].mxu0 %v2736
      %v3323 = vpop.f32.mrb[0].mxu0
      %v3324 = vadd.f32 0.0, %v3323
      %v3325 = vpop.f32.mrb[0].mxu0
      %3326 = vdwg.mxu0
      %3327 = vmatprep.subr.mxu0 0.0
      %3328 = vmatpush1.msra.mxu0 %v3248
      %3329 = vmatprep.subr.mxu0 0.0
      %3330 = vmatpush1.msra.mxu0 %v3249
      %3331 = vmatprep.subr.mxu0 0.0
      %3332 = vmatpush1.msra.mxu0 0.0
      %3333 = vmatprep.subr.mxu0 0.0
      %3334 = vmatpush1.msra.mxu0 0.0
      %3335 = vmatprep.subr.mxu0 0.0
      %3336 = vmatpush1.msra.mxu0 0.0
      %3337 = vmatprep.subr.mxu0 0.0
      %3338 = vmatpush1.msra.mxu0 0.0
      %3339 = vmatprep.subr.mxu0 0.0
      %3340 = vmatpush1.msra.mxu0 0.0
      %3341 = vmatprep.subr.mxu0 0.0
      %3342 = vmatpush1.msra.mxu0 0.0
      %3343 = vmatprep.subr.mxu0 0.0
      %3344 = vmatpush1.msra.mxu0 0.0
      %3345 = vmatprep.subr.mxu0 0.0
      %3346 = vmatpush1.msra.mxu0 0.0
      %3347 = vmatprep.subr.mxu0 0.0
      %3348 = vmatpush1.msra.mxu0 0.0
      %3349 = vmatprep.subr.mxu0 0.0
      %3350 = vmatpush1.msra.mxu0 0.0
      %3351 = vmatprep.subr.mxu0 0.0
      %3352 = vmatpush1.msra.mxu0 0.0
      %3353 = vmatprep.subr.mxu0 0.0
      %3354 = vmatpush1.msra.mxu0 0.0
      %3355 = vmatprep.subr.mxu0 0.0
      %3356 = vmatpush1.msra.mxu0 0.0
      %3357 = vmatprep.subr.mxu0 0.0
      %3358 = vmatpush1.msra.mxu0 0.0
      %3359 = vmatprep.subr.mxu0 0.0
      %3360 = vmatpush1.msra.mxu0 0.0
      %3361 = vmatprep.subr.mxu0 0.0
      %3362 = vmatpush1.msra.mxu0 0.0
      %3363 = vmatprep.subr.mxu0 0.0
      %3364 = vmatpush1.msra.mxu0 0.0
      %3365 = vmatprep.subr.mxu0 0.0
      %3366 = vmatpush1.msra.mxu0 0.0
      %3367 = vmatprep.subr.mxu0 0.0
      %3368 = vmatpush1.msra.mxu0 0.0
      %3369 = vmatprep.subr.mxu0 0.0
      %3370 = vmatpush1.msra.mxu0 0.0
      %3371 = vmatprep.subr.mxu0 0.0
      %3372 = vmatpush1.msra.mxu0 0.0
      %3373 = vmatprep.subr.mxu0 0.0
      %3374 = vmatpush1.msra.mxu0 0.0
      %3375 = vmatprep.subr.mxu0 0.0
      %3376 = vmatpush1.msra.mxu0 0.0
      %3377 = vmatprep.subr.mxu0 0.0
      %3378 = vmatpush1.msra.mxu0 0.0
      %3379 = vmatprep.subr.mxu0 0.0
      %3380 = vmatpush1.msra.mxu0 0.0
      %3381 = vmatprep.subr.mxu0 0.0
      %3382 = vmatpush1.msra.mxu0 0.0
      %3383 = vmatprep.subr.mxu0 0.0
      %3384 = vmatpush1.msra.mxu0 0.0
      %3385 = vmatprep.subr.mxu0 0.0
      %3386 = vmatpush1.msra.mxu0 0.0
      %3387 = vmatprep.subr.mxu0 0.0
      %3388 = vmatpush1.msra.mxu0 0.0
      %3389 = vmatprep.subr.mxu0 0.0
      %3390 = vmatpush1.msra.mxu0 0.0
      %3391 = vmatprep.mubr.f32.mxu0 0.0
      %3392 = vmatmul.mubr.f32.gmra.mrb[0].mxu0 %v2819
      %v3393 = vpop.f32.mrb[0].mxu0
      %v3394 = vadd.f32 %v3319, %v3393
      %v3395 = vpop.f32.mrb[0].mxu0
      %3396 = vmatprep.mubr.f32.mxu0 0.0
      %3397 = vmatmul.mubr.f32.gmra.mrb[0].mxu0 %v2821
      %v3398 = vpop.f32.mrb[0].mxu0
      %v3399 = vadd.f32 %v3324, %v3398
      %v3400 = vpop.f32.mrb[0].mxu0
      %3401 = vdwg.mxu0
      %v3402 = vld [vmem:[%s3247 + $0x20] sm:$0xff]
      %v3403 = vld [vmem:[%s3247 + $0x28] sm:$0xff]
      %3404 = vmatprep.subr.mxu0 0.0
      %3405 = vmatpush1.msra.mxu0 %v3402
      %3406 = vmatprep.subr.mxu0 0.0
      %3407 = vmatpush1.msra.mxu0 %v3403
      %3408 = vmatprep.subr.mxu0 0.0
      %3409 = vmatpush1.msra.mxu0 0.0
      %3410 = vmatprep.subr.mxu0 0.0
      %3411 = vmatpush1.msra.mxu0 0.0
      %3412 = vmatprep.subr.mxu0 0.0
      %3413 = vmatpush1.msra.mxu0 0.0
      %3414 = vmatprep.subr.mxu0 0.0
      %3415 = vmatpush1.msra.mxu0 0.0
      %3416 = vmatprep.subr.mxu0 0.0
      %3417 = vmatpush1.msra.mxu0 0.0
      %3418 = vmatprep.subr.mxu0 0.0
      %3419 = vmatpush1.msra.mxu0 0.0
      %3420 = vmatprep.subr.mxu0 0.0
      %3421 = vmatpush1.msra.mxu0 0.0
      %3422 = vmatprep.subr.mxu0 0.0
      %3423 = vmatpush1.msra.mxu0 0.0
      %3424 = vmatprep.subr.mxu0 0.0
      %3425 = vmatpush1.msra.mxu0 0.0
      %3426 = vmatprep.subr.mxu0 0.0
      %3427 = vmatpush1.msra.mxu0 0.0
      %3428 = vmatprep.subr.mxu0 0.0
      %3429 = vmatpush1.msra.mxu0 0.0
      %3430 = vmatprep.subr.mxu0 0.0
      %3431 = vmatpush1.msra.mxu0 0.0
      %3432 = vmatprep.subr.mxu0 0.0
      %3433 = vmatpush1.msra.mxu0 0.0
      %3434 = vmatprep.subr.mxu0 0.0
      %3435 = vmatpush1.msra.mxu0 0.0
      %3436 = vmatprep.subr.mxu0 0.0
      %3437 = vmatpush1.msra.mxu0 0.0
      %3438 = vmatprep.subr.mxu0 0.0
      %3439 = vmatpush1.msra.mxu0 0.0
      %3440 = vmatprep.subr.mxu0 0.0
      %3441 = vmatpush1.msra.mxu0 0.0
      %3442 = vmatprep.subr.mxu0 0.0
      %3443 = vmatpush1.msra.mxu0 0.0
      %3444 = vmatprep.subr.mxu0 0.0
      %3445 = vmatpush1.msra.mxu0 0.0
      %3446 = vmatprep.subr.mxu0 0.0
      %3447 = vmatpush1.msra.mxu0 0.0
      %3448 = vmatprep.subr.mxu0 0.0
      %3449 = vmatpush1.msra.mxu0 0.0
      %3450 = vmatprep.subr.mxu0 0.0
      %3451 = vmatpush1.msra.mxu0 0.0
      %3452 = vmatprep.subr.mxu0 0.0
      %3453 = vmatpush1.msra.mxu0 0.0
      %3454 = vmatprep.subr.mxu0 0.0
      %3455 = vmatpush1.msra.mxu0 0.0
      %3456 = vmatprep.subr.mxu0 0.0
      %3457 = vmatpush1.msra.mxu0 0.0
      %3458 = vmatprep.subr.mxu0 0.0
      %3459 = vmatpush1.msra.mxu0 0.0
      %3460 = vmatprep.subr.mxu0 0.0
      %3461 = vmatpush1.msra.mxu0 0.0
      %3462 = vmatprep.subr.mxu0 0.0
      %3463 = vmatpush1.msra.mxu0 0.0
      %3464 = vmatprep.subr.mxu0 0.0
      %3465 = vmatpush1.msra.mxu0 0.0
      %3466 = vmatprep.subr.mxu0 0.0
      %3467 = vmatpush1.msra.mxu0 0.0
      %3468 = vmatprep.mubr.f32.mxu0 0.0
      %3469 = vmatmul.mubr.f32.gmra.mrb[0].mxu0 %v2901
      %v3470 = vpop.f32.mrb[0].mxu0
      %v3471 = vadd.f32 0.0, %v3470
      %v3472 = vpop.f32.mrb[0].mxu0
      %3473 = vmatprep.mubr.f32.mxu0 0.0
      %3474 = vmatmul.mubr.f32.gmra.mrb[0].mxu0 %v2904
      %v3475 = vpop.f32.mrb[0].mxu0
      %v3476 = vadd.f32 0.0, %v3475
      %v3477 = vpop.f32.mrb[0].mxu0
      %3478 = vdwg.mxu0
      %v3479 = vadd.f32 %v3394, %v3471
      %v3480 = vadd.f32 %v3399, %v3476
      %v3481 = vld [vmem:[%s3247 + $0x30] sm:$0xff]
      %v3482 = vld [vmem:[%s3247 + $0x38] sm:$0xff]
      %3483 = vmatprep.subr.mxu0 0.0
      %3484 = vmatpush1.msra.mxu0 %v3481
      %3485 = vmatprep.subr.mxu0 0.0
      %3486 = vmatpush1.msra.mxu0 %v3482
      %3487 = vmatprep.subr.mxu0 0.0
      %3488 = vmatpush1.msra.mxu0 0.0
      %3489 = vmatprep.subr.mxu0 0.0
      %3490 = vmatpush1.msra.mxu0 0.0
      %3491 = vmatprep.subr.mxu0 0.0
      %3492 = vmatpush1.msra.mxu0 0.0
      %3493 = vmatprep.subr.mxu0 0.0
      %3494 = vmatpush1.msra.mxu0 0.0
      %3495 = vmatprep.subr.mxu0 0.0
      %3496 = vmatpush1.msra.mxu0 0.0
      %3497 = vmatprep.subr.mxu0 0.0
      %3498 = vmatpush1.msra.mxu0 0.0
      %3499 = vmatprep.subr.mxu0 0.0
      %3500 = vmatpush1.msra.mxu0 0.0
      %3501 = vmatprep.subr.mxu0 0.0
      %3502 = vmatpush1.msra.mxu0 0.0
      %3503 = vmatprep.subr.mxu0 0.0
      %3504 = vmatpush1.msra.mxu0 0.0
      %3505 = vmatprep.subr.mxu0 0.0
      %3506 = vmatpush1.msra.mxu0 0.0
      %3507 = vmatprep.subr.mxu0 0.0
      %3508 = vmatpush1.msra.mxu0 0.0
      %3509 = vmatprep.subr.mxu0 0.0
      %3510 = vmatpush1.msra.mxu0 0.0
      %3511 = vmatprep.subr.mxu0 0.0
      %3512 = vmatpush1.msra.mxu0 0.0
      %3513 = vmatprep.subr.mxu0 0.0
      %3514 = vmatpush1.msra.mxu0 0.0
      %3515 = vmatprep.subr.mxu0 0.0
      %3516 = vmatpush1.msra.mxu0 0.0
      %3517 = vmatprep.subr.mxu0 0.0
      %3518 = vmatpush1.msra.mxu0 0.0
      %3519 = vmatprep.subr.mxu0 0.0
      %3520 = vmatpush1.msra.mxu0 0.0
      %3521 = vmatprep.subr.mxu0 0.0
      %3522 = vmatpush1.msra.mxu0 0.0
      %3523 = vmatprep.subr.mxu0 0.0
      %3524 = vmatpush1.msra.mxu0 0.0
      %3525 = vmatprep.subr.mxu0 0.0
      %3526 = vmatpush1.msra.mxu0 0.0
      %3527 = vmatprep.subr.mxu0 0.0
      %3528 = vmatpush1.msra.mxu0 0.0
      %3529 = vmatprep.subr.mxu0 0.0
      %3530 = vmatpush1.msra.mxu0 0.0
      %3531 = vmatprep.subr.mxu0 0.0
      %3532 = vmatpush1.msra.mxu0 0.0
      %3533 = vmatprep.subr.mxu0 0.0
      %3534 = vmatpush1.msra.mxu0 0.0
      %3535 = vmatprep.subr.mxu0 0.0
      %3536 = vmatpush1.msra.mxu0 0.0
      %3537 = vmatprep.subr.mxu0 0.0
      %3538 = vmatpush1.msra.mxu0 0.0
      %3539 = vmatprep.subr.mxu0 0.0
      %3540 = vmatpush1.msra.mxu0 0.0
      %3541 = vmatprep.subr.mxu0 0.0
      %3542 = vmatpush1.msra.mxu0 0.0
      %3543 = vmatprep.subr.mxu0 0.0
      %3544 = vmatpush1.msra.mxu0 0.0
      %3545 = vmatprep.subr.mxu0 0.0
      %3546 = vmatpush1.msra.mxu0 0.0
      %3547 = vmatprep.mubr.f32.mxu0 0.0
      %3548 = vmatmul.mubr.f32.gmra.mrb[0].mxu0 %v2986
      %v3549 = vpop.f32.mrb[0].mxu0
      %v3550 = vadd.f32 0.0, %v3549
      %v3551 = vpop.f32.mrb[0].mxu0
      %3552 = vmatprep.mubr.f32.mxu0 0.0
      %3553 = vmatmul.mubr.f32.gmra.mrb[0].mxu0 %v2989
      %v3554 = vpop.f32.mrb[0].mxu0
      %v3555 = vadd.f32 0.0, %v3554
      %v3556 = vpop.f32.mrb[0].mxu0
      %3557 = vdwg.mxu0
      %v3558 = vadd.f32 %v3479, %v3550
      %v3559 = vadd.f32 %v3480, %v3555
      %v3560 = vld [vmem:[%s3247 + $0x40] sm:$0xff]
      %v3561 = vld [vmem:[%s3247 + $0x48] sm:$0xff]
      %3562 = vmatprep.subr.mxu0 0.0
      %3563 = vmatpush1.msra.mxu0 %v3560
      %3564 = vmatprep.subr.mxu0 0.0
      %3565 = vmatpush1.msra.mxu0 %v3561
      %3566 = vmatprep.subr.mxu0 0.0
      %3567 = vmatpush1.msra.mxu0 0.0
      %3568 = vmatprep.subr.mxu0 0.0
      %3569 = vmatpush1.msra.mxu0 0.0
      %3570 = vmatprep.subr.mxu0 0.0
      %3571 = vmatpush1.msra.mxu0 0.0
      %3572 = vmatprep.subr.mxu0 0.0
      %3573 = vmatpush1.msra.mxu0 0.0
      %3574 = vmatprep.subr.mxu0 0.0
      %3575 = vmatpush1.msra.mxu0 0.0
      %3576 = vmatprep.subr.mxu0 0.0
      %3577 = vmatpush1.msra.mxu0 0.0
      %3578 = vmatprep.subr.mxu0 0.0
      %3579 = vmatpush1.msra.mxu0 0.0
      %3580 = vmatprep.subr.mxu0 0.0
      %3581 = vmatpush1.msra.mxu0 0.0
      %3582 = vmatprep.subr.mxu0 0.0
      %3583 = vmatpush1.msra.mxu0 0.0
      %3584 = vmatprep.subr.mxu0 0.0
      %3585 = vmatpush1.msra.mxu0 0.0
      %3586 = vmatprep.subr.mxu0 0.0
      %3587 = vmatpush1.msra.mxu0 0.0
      %3588 = vmatprep.subr.mxu0 0.0
      %3589 = vmatpush1.msra.mxu0 0.0
      %3590 = vmatprep.subr.mxu0 0.0
      %3591 = vmatpush1.msra.mxu0 0.0
      %3592 = vmatprep.subr.mxu0 0.0
      %3593 = vmatpush1.msra.mxu0 0.0
      %3594 = vmatprep.subr.mxu0 0.0
      %3595 = vmatpush1.msra.mxu0 0.0
      %3596 = vmatprep.subr.mxu0 0.0
      %3597 = vmatpush1.msra.mxu0 0.0
      %3598 = vmatprep.subr.mxu0 0.0
      %3599 = vmatpush1.msra.mxu0 0.0
      %3600 = vmatprep.subr.mxu0 0.0
      %3601 = vmatpush1.msra.mxu0 0.0
      %3602 = vmatprep.subr.mxu0 0.0
      %3603 = vmatpush1.msra.mxu0 0.0
      %3604 = vmatprep.subr.mxu0 0.0
      %3605 = vmatpush1.msra.mxu0 0.0
      %3606 = vmatprep.subr.mxu0 0.0
      %3607 = vmatpush1.msra.mxu0 0.0
      %3608 = vmatprep.subr.mxu0 0.0
      %3609 = vmatpush1.msra.mxu0 0.0
      %3610 = vmatprep.subr.mxu0 0.0
      %3611 = vmatpush1.msra.mxu0 0.0
      %3612 = vmatprep.subr.mxu0 0.0
      %3613 = vmatpush1.msra.mxu0 0.0
      %3614 = vmatprep.subr.mxu0 0.0
      %3615 = vmatpush1.msra.mxu0 0.0
      %3616 = vmatprep.subr.mxu0 0.0
      %3617 = vmatpush1.msra.mxu0 0.0
      %3618 = vmatprep.subr.mxu0 0.0
      %3619 = vmatpush1.msra.mxu0 0.0
      %3620 = vmatprep.subr.mxu0 0.0
      %3621 = vmatpush1.msra.mxu0 0.0
      %3622 = vmatprep.subr.mxu0 0.0
      %3623 = vmatpush1.msra.mxu0 0.0
      %3624 = vmatprep.subr.mxu0 0.0
      %3625 = vmatpush1.msra.mxu0 0.0
      %3626 = vmatprep.mubr.f32.mxu0 0.0
      %3627 = vmatmul.mubr.f32.gmra.mrb[0].mxu0 %v3076
      %v3628 = vpop.f32.mrb[0].mxu0
      %v3629 = vadd.f32 0.0, %v3628
      %v3630 = vpop.f32.mrb[0].mxu0
      %3631 = vmatprep.mubr.f32.mxu0 0.0
      %3632 = vmatmul.mubr.f32.gmra.mrb[0].mxu0 %v3078
      %v3633 = vpop.f32.mrb[0].mxu0
      %v3634 = vadd.f32 0.0, %v3633
      %v3635 = vpop.f32.mrb[0].mxu0
      %3636 = vdwg.mxu0
      %v3637 = vadd.f32 %v3558, %v3629
      %v3638 = vadd.f32 %v3559, %v3634
      %v3639 = vld [vmem:[%s3247 + $0x50] sm:$0xff]
      %v3640 = vld [vmem:[%s3247 + $0x58] sm:$0xff]
      %3641 = vmatprep.subr.mxu0 0.0
      %3642 = vmatpush1.msra.mxu0 %v3639
      %3643 = vmatprep.subr.mxu0 0.0
      %3644 = vmatpush1.msra.mxu0 %v3640
      %3645 = vmatprep.subr.mxu0 0.0
      %3646 = vmatpush1.msra.mxu0 0.0
      %3647 = vmatprep.subr.mxu0 0.0
      %3648 = vmatpush1.msra.mxu0 0.0
      %3649 = vmatprep.subr.mxu0 0.0
      %3650 = vmatpush1.msra.mxu0 0.0
      %3651 = vmatprep.subr.mxu0 0.0
      %3652 = vmatpush1.msra.mxu0 0.0
      %3653 = vmatprep.subr.mxu0 0.0
      %3654 = vmatpush1.msra.mxu0 0.0
      %3655 = vmatprep.subr.mxu0 0.0
      %3656 = vmatpush1.msra.mxu0 0.0
      %3657 = vmatprep.subr.mxu0 0.0
      %3658 = vmatpush1.msra.mxu0 0.0
      %3659 = vmatprep.subr.mxu0 0.0
      %3660 = vmatpush1.msra.mxu0 0.0
      %3661 = vmatprep.subr.mxu0 0.0
      %3662 = vmatpush1.msra.mxu0 0.0
      %3663 = vmatprep.subr.mxu0 0.0
      %3664 = vmatpush1.msra.mxu0 0.0
      %3665 = vmatprep.subr.mxu0 0.0
      %3666 = vmatpush1.msra.mxu0 0.0
      %3667 = vmatprep.subr.mxu0 0.0
      %3668 = vmatpush1.msra.mxu0 0.0
      %3669 = vmatprep.subr.mxu0 0.0
      %3670 = vmatpush1.msra.mxu0 0.0
      %3671 = vmatprep.subr.mxu0 0.0
      %3672 = vmatpush1.msra.mxu0 0.0
      %3673 = vmatprep.subr.mxu0 0.0
      %3674 = vmatpush1.msra.mxu0 0.0
      %3675 = vmatprep.subr.mxu0 0.0
      %3676 = vmatpush1.msra.mxu0 0.0
      %3677 = vmatprep.subr.mxu0 0.0
      %3678 = vmatpush1.msra.mxu0 0.0
      %3679 = vmatprep.subr.mxu0 0.0
      %3680 = vmatpush1.msra.mxu0 0.0
      %3681 = vmatprep.subr.mxu0 0.0
      %3682 = vmatpush1.msra.mxu0 0.0
      %3683 = vmatprep.subr.mxu0 0.0
      %3684 = vmatpush1.msra.mxu0 0.0
      %3685 = vmatprep.subr.mxu0 0.0
      %3686 = vmatpush1.msra.mxu0 0.0
      %3687 = vmatprep.subr.mxu0 0.0
      %3688 = vmatpush1.msra.mxu0 0.0
      %3689 = vmatprep.subr.mxu0 0.0
      %3690 = vmatpush1.msra.mxu0 0.0
      %3691 = vmatprep.subr.mxu0 0.0
      %3692 = vmatpush1.msra.mxu0 0.0
      %3693 = vmatprep.subr.mxu0 0.0
      %3694 = vmatpush1.msra.mxu0 0.0
      %3695 = vmatprep.subr.mxu0 0.0
      %3696 = vmatpush1.msra.mxu0 0.0
      %3697 = vmatprep.subr.mxu0 0.0
      %3698 = vmatpush1.msra.mxu0 0.0
      %3699 = vmatprep.subr.mxu0 0.0
      %3700 = vmatpush1.msra.mxu0 0.0
      %3701 = vmatprep.subr.mxu0 0.0
      %3702 = vmatpush1.msra.mxu0 0.0
      %3703 = vmatprep.subr.mxu0 0.0
      %3704 = vmatpush1.msra.mxu0 0.0
      %3705 = vmatprep.mubr.f32.mxu0 0.0
      %3706 = vmatmul.mubr.f32.gmra.mrb[0].mxu0 %v3165
      %v3707 = vpop.f32.mrb[0].mxu0
      %v3708 = vadd.f32 0.0, %v3707
      %v3709 = vpop.f32.mrb[0].mxu0
      %3710 = vmatprep.mubr.f32.mxu0 0.0
      %3711 = vmatmul.mubr.f32.gmra.mrb[0].mxu0 %v3167
      %v3712 = vpop.f32.mrb[0].mxu0
      %v3713 = vadd.f32 0.0, %v3712
      %v3714 = vpop.f32.mrb[0].mxu0
      %3715 = vdwg.mxu0
      %v3716 = vadd.f32 %v3637, %v3708
      %v3717 = vadd.f32 %v3638, %v3713
      %s3718 = scalar_lea.vmem %s4, 8
      %v3719 = vld [vmem:[%s3718] sm:$0xff]
      %v3721 = vsel %vm2733, %v3719, 0
      %3723 = vmatprep.subr.mxu0 0.0
      %3724 = vmatpush1.msra.mxu0 %v3716
      %3725 = vmatprep.subr.mxu0 0.0
      %3726 = vmatpush1.msra.mxu0 %v3717
      %3727 = vmatprep.subr.mxu0 0.0
      %3728 = vmatpush1.msra.mxu0 0.0
      %3729 = vmatprep.subr.mxu0 0.0
      %3730 = vmatpush1.msra.mxu0 0.0
      %3731 = vmatprep.subr.mxu0 0.0
      %3732 = vmatpush1.msra.mxu0 0.0
      %3733 = vmatprep.subr.mxu0 0.0
      %3734 = vmatpush1.msra.mxu0 0.0
      %3735 = vmatprep.subr.mxu0 0.0
      %3736 = vmatpush1.msra.mxu0 0.0
      %3737 = vmatprep.subr.mxu0 0.0
      %3738 = vmatpush1.msra.mxu0 0.0
      %3739 = vmatprep.subr.mxu0 0.0
      %3740 = vmatpush1.msra.mxu0 0.0
      %3741 = vmatprep.subr.mxu0 0.0
      %3742 = vmatpush1.msra.mxu0 0.0
      %3743 = vmatprep.subr.mxu0 0.0
      %3744 = vmatpush1.msra.mxu0 0.0
      %3745 = vmatprep.subr.mxu0 0.0
      %3746 = vmatpush1.msra.mxu0 0.0
      %3747 = vmatprep.subr.mxu0 0.0
      %3748 = vmatpush1.msra.mxu0 0.0
      %3749 = vmatprep.subr.mxu0 0.0
      %3750 = vmatpush1.msra.mxu0 0.0
      %3751 = vmatprep.subr.mxu0 0.0
      %3752 = vmatpush1.msra.mxu0 0.0
      %3753 = vmatprep.subr.mxu0 0.0
      %3754 = vmatpush1.msra.mxu0 0.0
      %3755 = vmatprep.subr.mxu0 0.0
      %3756 = vmatpush1.msra.mxu0 0.0
      %3757 = vmatprep.subr.mxu0 0.0
      %3758 = vmatpush1.msra.mxu0 0.0
      %3759 = vmatprep.subr.mxu0 0.0
      %3760 = vmatpush1.msra.mxu0 0.0
      %3761 = vmatprep.subr.mxu0 0.0
      %3762 = vmatpush1.msra.mxu0 0.0
      %3763 = vmatprep.subr.mxu0 0.0
      %3764 = vmatpush1.msra.mxu0 0.0
      %3765 = vmatprep.subr.mxu0 0.0
      %3766 = vmatpush1.msra.mxu0 0.0
      %3767 = vmatprep.subr.mxu0 0.0
      %3768 = vmatpush1.msra.mxu0 0.0
      %3769 = vmatprep.subr.mxu0 0.0
      %3770 = vmatpush1.msra.mxu0 0.0
      %3771 = vmatprep.subr.mxu0 0.0
      %3772 = vmatpush1.msra.mxu0 0.0
      %3773 = vmatprep.subr.mxu0 0.0
      %3774 = vmatpush1.msra.mxu0 0.0
      %3775 = vmatprep.subr.mxu0 0.0
      %3776 = vmatpush1.msra.mxu0 0.0
      %3777 = vmatprep.subr.mxu0 0.0
      %3778 = vmatpush1.msra.mxu0 0.0
      %3779 = vmatprep.subr.mxu0 0.0
      %3780 = vmatpush1.msra.mxu0 0.0
      %3781 = vmatprep.subr.mxu0 0.0
      %3782 = vmatpush1.msra.mxu0 0.0
      %3783 = vmatprep.subr.mxu0 0.0
      %3784 = vmatpush1.msra.mxu0 0.0
      %3785 = vmatprep.subr.mxu0 0.0
      %3786 = vmatpush1.msra.mxu0 0.0
      %3787 = vmatprep.mubr.f32.mxu0 0.0
      %3788 = vmatmul.mubr.f32.gmra.mrb[0].mxu0 %v3721
      %v3789 = vpop.f32.mrb[0].mxu0
      %v3790 = vadd.f32 0.0, %v3789
      %v3791 = vpop.f32.mrb[0].mxu0
      %3792 = vdwg.mxu0
      %v3794 = vsel %vm2733, %v3246, 0
      %3796 = vmatprep.subr.mxu0 0.0
      %3797 = vmatpush1.msra.mxu0 %v3244
      %3798 = vmatprep.subr.mxu0 0.0
      %3799 = vmatpush1.msra.mxu0 %v3245
      %3800 = vmatprep.subr.mxu0 0.0
      %3801 = vmatpush1.msra.mxu0 0.0
      %3802 = vmatprep.subr.mxu0 0.0
      %3803 = vmatpush1.msra.mxu0 0.0
      %3804 = vmatprep.subr.mxu0 0.0
      %3805 = vmatpush1.msra.mxu0 0.0
      %3806 = vmatprep.subr.mxu0 0.0
      %3807 = vmatpush1.msra.mxu0 0.0
      %3808 = vmatprep.subr.mxu0 0.0
      %3809 = vmatpush1.msra.mxu0 0.0
      %3810 = vmatprep.subr.mxu0 0.0
      %3811 = vmatpush1.msra.mxu0 0.0
      %3812 = vmatprep.subr.mxu0 0.0
      %3813 = vmatpush1.msra.mxu0 0.0
      %3814 = vmatprep.subr.mxu0 0.0
      %3815 = vmatpush1.msra.mxu0 0.0
      %3816 = vmatprep.subr.mxu0 0.0
      %3817 = vmatpush1.msra.mxu0 0.0
      %3818 = vmatprep.subr.mxu0 0.0
      %3819 = vmatpush1.msra.mxu0 0.0
      %3820 = vmatprep.subr.mxu0 0.0
      %3821 = vmatpush1.msra.mxu0 0.0
      %3822 = vmatprep.subr.mxu0 0.0
      %3823 = vmatpush1.msra.mxu0 0.0
      %3824 = vmatprep.subr.mxu0 0.0
      %3825 = vmatpush1.msra.mxu0 0.0
      %3826 = vmatprep.subr.mxu0 0.0
      %3827 = vmatpush1.msra.mxu0 0.0
      %3828 = vmatprep.subr.mxu0 0.0
      %3829 = vmatpush1.msra.mxu0 0.0
      %3830 = vmatprep.subr.mxu0 0.0
      %3831 = vmatpush1.msra.mxu0 0.0
      %3832 = vmatprep.subr.mxu0 0.0
      %3833 = vmatpush1.msra.mxu0 0.0
      %3834 = vmatprep.subr.mxu0 0.0
      %3835 = vmatpush1.msra.mxu0 0.0
      %3836 = vmatprep.subr.mxu0 0.0
      %3837 = vmatpush1.msra.mxu0 0.0
      %3838 = vmatprep.subr.mxu0 0.0
      %3839 = vmatpush1.msra.mxu0 0.0
      %3840 = vmatprep.subr.mxu0 0.0
      %3841 = vmatpush1.msra.mxu0 0.0
      %3842 = vmatprep.subr.mxu0 0.0
      %3843 = vmatpush1.msra.mxu0 0.0
      %3844 = vmatprep.subr.mxu0 0.0
      %3845 = vmatpush1.msra.mxu0 0.0
      %3846 = vmatprep.subr.mxu0 0.0
      %3847 = vmatpush1.msra.mxu0 0.0
      %3848 = vmatprep.subr.mxu0 0.0
      %3849 = vmatpush1.msra.mxu0 0.0
      %3850 = vmatprep.subr.mxu0 0.0
      %3851 = vmatpush1.msra.mxu0 0.0
      %3852 = vmatprep.subr.mxu0 0.0
      %3853 = vmatpush1.msra.mxu0 0.0
      %3854 = vmatprep.subr.mxu0 0.0
      %3855 = vmatpush1.msra.mxu0 0.0
      %3856 = vmatprep.subr.mxu0 0.0
      %3857 = vmatpush1.msra.mxu0 0.0
      %3858 = vmatprep.subr.mxu0 0.0
      %3859 = vmatpush1.msra.mxu0 0.0
      %3860 = vmatprep.mubr.f32.mxu0 0.0
      %3861 = vmatmul.mubr.f32.gmra.mrb[0].mxu0 %v3794
      %v3862 = vpop.f32.mrb[0].mxu0
      %v3863 = vadd.f32 %v3790, %v3862
      %v3864 = vpop.f32.mrb[0].mxu0
      %3865 = vdwg.mxu0
      %v3866 = vld [vmem:[%s7] sm:$0x1]
      %v3868 = vlaneseq
      %v3869 = vshrl.u32 %v3868, 7
      %v3870 = vsub.s32 0, %v3869
      %v3871 = vrot.slane %v3866, %v3870
      %v3873 = vadd.f32 %v3863, %v3871
      %vm3874 = vcmp.ge.f32.partialorder %v3873, 0.0
      %v3875 = vmul.f32 %v3873, 0.3
      %v3876 = vsel %vm3874, %v3873, %v3875
      %v3877 = vld [vmem:[%s5] sm:$0xff]
      %v3878 = vld [vmem:[%s5 + $0x8] sm:$0xff]
      %v3879 = vld [vmem:[%s5 + $0x10] sm:$0xff]
      %v3880 = vld [vmem:[%s5 + $0x18] sm:$0xff]
      %v3881 = vld [vmem:[%s5 + $0x20] sm:$0xff]
      %v3882 = vld [vmem:[%s5 + $0x28] sm:$0xff]
      %v3883 = vld [vmem:[%s5 + $0x30] sm:$0xff]
      %v3884 = vld [vmem:[%s5 + $0x38] sm:$0xff]
      %v3885 = vld [vmem:[%s5 + $0x40] sm:$0xff]
      %v3886 = vld [vmem:[%s5 + $0x48] sm:$0xff]
      %v3887 = vld [vmem:[%s5 + $0x50] sm:$0xff]
      %v3888 = vld [vmem:[%s5 + $0x58] sm:$0xff]
      %vm3889 = vcmask 785408
      %v3891 = vsel %vm3889, %v3876, 0
      %3893 = vmatprep.subr.mxu0 0.0
      %3894 = vmatpush1.msra.mxu0 %v3877
      %3895 = vmatprep.subr.mxu0 0.0
      %3896 = vmatpush1.msra.mxu0 %v3878
      %3897 = vmatprep.subr.mxu0 0.0
      %3898 = vmatpush1.msra.mxu0 %v3879
      %3899 = vmatprep.subr.mxu0 0.0
      %3900 = vmatpush1.msra.mxu0 %v3880
      %3901 = vmatprep.subr.mxu0 0.0
      %3902 = vmatpush1.msra.mxu0 %v3881
      %3903 = vmatprep.subr.mxu0 0.0
      %3904 = vmatpush1.msra.mxu0 %v3882
      %3905 = vmatprep.subr.mxu0 0.0
      %3906 = vmatpush1.msra.mxu0 %v3883
      %3907 = vmatprep.subr.mxu0 0.0
      %3908 = vmatpush1.msra.mxu0 %v3884
      %3909 = vmatprep.subr.mxu0 0.0
      %3910 = vmatpush1.msra.mxu0 %v3885
      %3911 = vmatprep.subr.mxu0 0.0
      %3912 = vmatpush1.msra.mxu0 %v3886
      %3913 = vmatprep.subr.mxu0 0.0
      %3914 = vmatpush1.msra.mxu0 %v3887
      %3915 = vmatprep.subr.mxu0 0.0
      %3916 = vmatpush1.msra.mxu0 %v3888
      %3917 = vmatprep.subr.mxu0 0.0
      %3918 = vmatpush1.msra.mxu0 0.0
      %3919 = vmatprep.subr.mxu0 0.0
      %3920 = vmatpush1.msra.mxu0 0.0
      %3921 = vmatprep.subr.mxu0 0.0
      %3922 = vmatpush1.msra.mxu0 0.0
      %3923 = vmatprep.subr.mxu0 0.0
      %3924 = vmatpush1.msra.mxu0 0.0
      %3925 = vmatprep.subr.mxu0 0.0
      %3926 = vmatpush1.msra.mxu0 0.0
      %3927 = vmatprep.subr.mxu0 0.0
      %3928 = vmatpush1.msra.mxu0 0.0
      %3929 = vmatprep.subr.mxu0 0.0
      %3930 = vmatpush1.msra.mxu0 0.0
      %3931 = vmatprep.subr.mxu0 0.0
      %3932 = vmatpush1.msra.mxu0 0.0
      %3933 = vmatprep.subr.mxu0 0.0
      %3934 = vmatpush1.msra.mxu0 0.0
      %3935 = vmatprep.subr.mxu0 0.0
      %3936 = vmatpush1.msra.mxu0 0.0
      %3937 = vmatprep.subr.mxu0 0.0
      %3938 = vmatpush1.msra.mxu0 0.0
      %3939 = vmatprep.subr.mxu0 0.0
      %3940 = vmatpush1.msra.mxu0 0.0
      %3941 = vmatprep.subr.mxu0 0.0
      %3942 = vmatpush1.msra.mxu0 0.0
      %3943 = vmatprep.subr.mxu0 0.0
      %3944 = vmatpush1.msra.mxu0 0.0
      %3945 = vmatprep.subr.mxu0 0.0
      %3946 = vmatpush1.msra.mxu0 0.0
      %3947 = vmatprep.subr.mxu0 0.0
      %3948 = vmatpush1.msra.mxu0 0.0
      %3949 = vmatprep.subr.mxu0 0.0
      %3950 = vmatpush1.msra.mxu0 0.0
      %3951 = vmatprep.subr.mxu0 0.0
      %3952 = vmatpush1.msra.mxu0 0.0
      %3953 = vmatprep.subr.mxu0 0.0
      %3954 = vmatpush1.msra.mxu0 0.0
      %3955 = vmatprep.subr.mxu0 0.0
      %3956 = vmatpush1.msra.mxu0 0.0
      %3957 = vmatprep.mubr.f32.mxu0 0.0
      %3958 = vmatmul.mubr.f32.gmra.mrb[0].mxu0 %v3891
      %v3959 = vpop.f32.mrb[0].mxu0
      %v3960 = vadd.f32 0.0, %v3959
      %v3961 = vpop.f32.mrb[0].mxu0
      %3962 = vdwg.mxu0
      %v3963 = vld [vmem:[%s6] sm:$0xf]
      %s3964 = scalar_lea.vmem %s5, 96
      %v3965 = vld [vmem:[%s3964] sm:$0xff]
      %v3966 = vld [vmem:[%s3964 + $0x8] sm:$0xff]
      %v3967 = vld [vmem:[%s3964 + $0x10] sm:$0xff]
      %v3968 = vld [vmem:[%s3964 + $0x18] sm:$0xff]
      %v3969 = vld [vmem:[%s3964 + $0x20] sm:$0xff]
      %v3970 = vld [vmem:[%s3964 + $0x28] sm:$0xff]
      %v3971 = vld [vmem:[%s3964 + $0x30] sm:$0xff]
      %v3972 = vld [vmem:[%s3964 + $0x38] sm:$0xff]
      %v3973 = vld [vmem:[%s3964 + $0x40] sm:$0xff]
      %v3974 = vld [vmem:[%s3964 + $0x48] sm:$0xff]
      %v3975 = vld [vmem:[%s3964 + $0x50] sm:$0xff]
      %v3976 = vld [vmem:[%s3964 + $0x58] sm:$0xff]
      %3977 = vmatprep.subr.mxu0 0.0
      %3978 = vmatpush1.msra.mxu0 %v3965
      %3979 = vmatprep.subr.mxu0 0.0
      %3980 = vmatpush1.msra.mxu0 %v3966
      %3981 = vmatprep.subr.mxu0 0.0
      %3982 = vmatpush1.msra.mxu0 %v3967
      %3983 = vmatprep.subr.mxu0 0.0
      %3984 = vmatpush1.msra.mxu0 %v3968
      %3985 = vmatprep.subr.mxu0 0.0
      %3986 = vmatpush1.msra.mxu0 %v3969
      %3987 = vmatprep.subr.mxu0 0.0
      %3988 = vmatpush1.msra.mxu0 %v3970
      %3989 = vmatprep.subr.mxu0 0.0
      %3990 = vmatpush1.msra.mxu0 %v3971
      %3991 = vmatprep.subr.mxu0 0.0
      %3992 = vmatpush1.msra.mxu0 %v3972
      %3993 = vmatprep.subr.mxu0 0.0
      %3994 = vmatpush1.msra.mxu0 %v3973
      %3995 = vmatprep.subr.mxu0 0.0
      %3996 = vmatpush1.msra.mxu0 %v3974
      %3997 = vmatprep.subr.mxu0 0.0
      %3998 = vmatpush1.msra.mxu0 %v3975
      %3999 = vmatprep.subr.mxu0 0.0
      %4000 = vmatpush1.msra.mxu0 %v3976
      %4001 = vmatprep.subr.mxu0 0.0
      %4002 = vmatpush1.msra.mxu0 0.0
      %4003 = vmatprep.subr.mxu0 0.0
      %4004 = vmatpush1.msra.mxu0 0.0
      %4005 = vmatprep.subr.mxu0 0.0
      %4006 = vmatpush1.msra.mxu0 0.0
      %4007 = vmatprep.subr.mxu0 0.0
      %4008 = vmatpush1.msra.mxu0 0.0
      %4009 = vmatprep.subr.mxu0 0.0
      %4010 = vmatpush1.msra.mxu0 0.0
      %4011 = vmatprep.subr.mxu0 0.0
      %4012 = vmatpush1.msra.mxu0 0.0
      %4013 = vmatprep.subr.mxu0 0.0
      %4014 = vmatpush1.msra.mxu0 0.0
      %4015 = vmatprep.subr.mxu0 0.0
      %4016 = vmatpush1.msra.mxu0 0.0
      %4017 = vmatprep.subr.mxu0 0.0
      %4018 = vmatpush1.msra.mxu0 0.0
      %4019 = vmatprep.subr.mxu0 0.0
      %4020 = vmatpush1.msra.mxu0 0.0
      %4021 = vmatprep.subr.mxu0 0.0
      %4022 = vmatpush1.msra.mxu0 0.0
      %4023 = vmatprep.subr.mxu0 0.0
      %4024 = vmatpush1.msra.mxu0 0.0
      %4025 = vmatprep.subr.mxu0 0.0
      %4026 = vmatpush1.msra.mxu0 0.0
      %4027 = vmatprep.subr.mxu0 0.0
      %4028 = vmatpush1.msra.mxu0 0.0
      %4029 = vmatprep.subr.mxu0 0.0
      %4030 = vmatpush1.msra.mxu0 0.0
      %4031 = vmatprep.subr.mxu0 0.0
      %4032 = vmatpush1.msra.mxu0 0.0
      %4033 = vmatprep.subr.mxu0 0.0
      %4034 = vmatpush1.msra.mxu0 0.0
      %4035 = vmatprep.subr.mxu0 0.0
      %4036 = vmatpush1.msra.mxu0 0.0
      %4037 = vmatprep.subr.mxu0 0.0
      %4038 = vmatpush1.msra.mxu0 0.0
      %4039 = vmatprep.subr.mxu0 0.0
      %4040 = vmatpush1.msra.mxu0 0.0
      %4041 = vmatprep.mubr.f32.mxu0 0.0
      %4042 = vmatmul.mubr.f32.gmra.mrb[0].mxu0 %v3891
      %v4043 = vpop.f32.mrb[0].mxu0
      %v4044 = vadd.f32 0.0, %v4043
      %v4045 = vpop.f32.mrb[0].mxu0
      %4046 = vdwg.mxu0
      %s4047 = scalar_lea.vmem %s6, 4
      %v4048 = vld [vmem:[%s4047] sm:$0xf]
      %vm4049 = vcmask 64512
      %v4051 = vsel %vm4049, %v4048, 0
      %4053 = vmatprep.subr.mxu0 0.0
      %4054 = vmatpush1.msra.mxu0 %v4044
      %4055 = vmatprep.subr.mxu0 0.0
      %4056 = vmatpush1.msra.mxu0 0.0
      %4057 = vmatprep.subr.mxu0 0.0
      %4058 = vmatpush1.msra.mxu0 0.0
      %4059 = vmatprep.subr.mxu0 0.0
      %4060 = vmatpush1.msra.mxu0 0.0
      %4061 = vmatprep.subr.mxu0 0.0
      %4062 = vmatpush1.msra.mxu0 0.0
      %4063 = vmatprep.subr.mxu0 0.0
      %4064 = vmatpush1.msra.mxu0 0.0
      %4065 = vmatprep.subr.mxu0 0.0
      %4066 = vmatpush1.msra.mxu0 0.0
      %4067 = vmatprep.subr.mxu0 0.0
      %4068 = vmatpush1.msra.mxu0 0.0
      %4069 = vmatprep.subr.mxu0 0.0
      %4070 = vmatpush1.msra.mxu0 0.0
      %4071 = vmatprep.subr.mxu0 0.0
      %4072 = vmatpush1.msra.mxu0 0.0
      %4073 = vmatprep.subr.mxu0 0.0
      %4074 = vmatpush1.msra.mxu0 0.0
      %4075 = vmatprep.subr.mxu0 0.0
      %4076 = vmatpush1.msra.mxu0 0.0
      %4077 = vmatprep.subr.mxu0 0.0
      %4078 = vmatpush1.msra.mxu0 0.0
      %4079 = vmatprep.subr.mxu0 0.0
      %4080 = vmatpush1.msra.mxu0 0.0
      %4081 = vmatprep.subr.mxu0 0.0
      %4082 = vmatpush1.msra.mxu0 0.0
      %4083 = vmatprep.subr.mxu0 0.0
      %4084 = vmatpush1.msra.mxu0 0.0
      %4085 = vmatprep.subr.mxu0 0.0
      %4086 = vmatpush1.msra.mxu0 0.0
      %4087 = vmatprep.subr.mxu0 0.0
      %4088 = vmatpush1.msra.mxu0 0.0
      %4089 = vmatprep.subr.mxu0 0.0
      %4090 = vmatpush1.msra.mxu0 0.0
      %4091 = vmatprep.subr.mxu0 0.0
      %4092 = vmatpush1.msra.mxu0 0.0
      %4093 = vmatprep.subr.mxu0 0.0
      %4094 = vmatpush1.msra.mxu0 0.0
      %4095 = vmatprep.subr.mxu0 0.0
      %4096 = vmatpush1.msra.mxu0 0.0
      %4097 = vmatprep.subr.mxu0 0.0
      %4098 = vmatpush1.msra.mxu0 0.0
      %4099 = vmatprep.subr.mxu0 0.0
      %4100 = vmatpush1.msra.mxu0 0.0
      %4101 = vmatprep.subr.mxu0 0.0
      %4102 = vmatpush1.msra.mxu0 0.0
      %4103 = vmatprep.subr.mxu0 0.0
      %4104 = vmatpush1.msra.mxu0 0.0
      %4105 = vmatprep.subr.mxu0 0.0
      %4106 = vmatpush1.msra.mxu0 0.0
      %4107 = vmatprep.subr.mxu0 0.0
      %4108 = vmatpush1.msra.mxu0 0.0
      %4109 = vmatprep.subr.mxu0 0.0
      %4110 = vmatpush1.msra.mxu0 0.0
      %4111 = vmatprep.subr.mxu0 0.0
      %4112 = vmatpush1.msra.mxu0 0.0
      %4113 = vmatprep.subr.mxu0 0.0
      %4114 = vmatpush1.msra.mxu0 0.0
      %4115 = vmatprep.subr.mxu0 0.0
      %4116 = vmatpush1.msra.mxu0 0.0
      %4117 = vmatprep.mubr.f32.mxu0 0.0
      %4118 = vmatmul.mubr.f32.gmra.mrb[0].mxu0 %v4051
      %v4119 = vpop.f32.mrb[0].mxu0
      %v4120 = vadd.f32 0.0, %v4119
      %v4121 = vpop.f32.mrb[0].mxu0
      %4122 = vdwg.mxu0
      %v4124 = vsel %vm4049, %v3963, 0
      %4126 = vmatprep.subr.mxu0 0.0
      %4127 = vmatpush1.msra.mxu0 %v3960
      %4128 = vmatprep.subr.mxu0 0.0
      %4129 = vmatpush1.msra.mxu0 0.0
      %4130 = vmatprep.subr.mxu0 0.0
      %4131 = vmatpush1.msra.mxu0 0.0
      %4132 = vmatprep.subr.mxu0 0.0
      %4133 = vmatpush1.msra.mxu0 0.0
      %4134 = vmatprep.subr.mxu0 0.0
      %4135 = vmatpush1.msra.mxu0 0.0
      %4136 = vmatprep.subr.mxu0 0.0
      %4137 = vmatpush1.msra.mxu0 0.0
      %4138 = vmatprep.subr.mxu0 0.0
      %4139 = vmatpush1.msra.mxu0 0.0
      %4140 = vmatprep.subr.mxu0 0.0
      %4141 = vmatpush1.msra.mxu0 0.0
      %4142 = vmatprep.subr.mxu0 0.0
      %4143 = vmatpush1.msra.mxu0 0.0
      %4144 = vmatprep.subr.mxu0 0.0
      %4145 = vmatpush1.msra.mxu0 0.0
      %4146 = vmatprep.subr.mxu0 0.0
      %4147 = vmatpush1.msra.mxu0 0.0
      %4148 = vmatprep.subr.mxu0 0.0
      %4149 = vmatpush1.msra.mxu0 0.0
      %4150 = vmatprep.subr.mxu0 0.0
      %4151 = vmatpush1.msra.mxu0 0.0
      %4152 = vmatprep.subr.mxu0 0.0
      %4153 = vmatpush1.msra.mxu0 0.0
      %4154 = vmatprep.subr.mxu0 0.0
      %4155 = vmatpush1.msra.mxu0 0.0
      %4156 = vmatprep.subr.mxu0 0.0
      %4157 = vmatpush1.msra.mxu0 0.0
      %4158 = vmatprep.subr.mxu0 0.0
      %4159 = vmatpush1.msra.mxu0 0.0
      %4160 = vmatprep.subr.mxu0 0.0
      %4161 = vmatpush1.msra.mxu0 0.0
      %4162 = vmatprep.subr.mxu0 0.0
      %4163 = vmatpush1.msra.mxu0 0.0
      %4164 = vmatprep.subr.mxu0 0.0
      %4165 = vmatpush1.msra.mxu0 0.0
      %4166 = vmatprep.subr.mxu0 0.0
      %4167 = vmatpush1.msra.mxu0 0.0
      %4168 = vmatprep.subr.mxu0 0.0
      %4169 = vmatpush1.msra.mxu0 0.0
      %4170 = vmatprep.subr.mxu0 0.0
      %4171 = vmatpush1.msra.mxu0 0.0
      %4172 = vmatprep.subr.mxu0 0.0
      %4173 = vmatpush1.msra.mxu0 0.0
      %4174 = vmatprep.subr.mxu0 0.0
      %4175 = vmatpush1.msra.mxu0 0.0
      %4176 = vmatprep.subr.mxu0 0.0
      %4177 = vmatpush1.msra.mxu0 0.0
      %4178 = vmatprep.subr.mxu0 0.0
      %4179 = vmatpush1.msra.mxu0 0.0
      %4180 = vmatprep.subr.mxu0 0.0
      %4181 = vmatpush1.msra.mxu0 0.0
      %4182 = vmatprep.subr.mxu0 0.0
      %4183 = vmatpush1.msra.mxu0 0.0
      %4184 = vmatprep.subr.mxu0 0.0
      %4185 = vmatpush1.msra.mxu0 0.0
      %4186 = vmatprep.subr.mxu0 0.0
      %4187 = vmatpush1.msra.mxu0 0.0
      %4188 = vmatprep.subr.mxu0 0.0
      %4189 = vmatpush1.msra.mxu0 0.0
      %4190 = vmatprep.mubr.f32.mxu0 0.0
      %4191 = vmatmul.mubr.f32.gmra.mrb[0].mxu0 %v4124
      %v4192 = vpop.f32.mrb[0].mxu0
      %v4193 = vadd.f32 %v4120, %v4192
      %v4194 = vpop.f32.mrb[0].mxu0
      %4195 = vdwg.mxu0
      %v4196 = vld [vmem:[%s8] sm:$0x1]
      %v4198 = vlaneseq
      %v4199 = vshrl.u32 %v4198, 7
      %v4200 = vsub.s32 0, %v4199
      %v4201 = vrot.slane %v4196, %v4200
      %v4203 = vadd.f32 %v4193, %v4201
      %vm4204 = vcmp.ge.f32.partialorder %v4203, 0.0
      %v4205 = vmul.f32 %v4203, 0.3
      %v4206 = vsel %vm4204, %v4203, %v4205
      %vm4207 = vcmask 27648
      %4208 = vst.msk [vmem:[%s290] sm:$0xf] %vm4207, %v4206
      %4210 = vrot.lane.b32.xlu0 %v4206, 124
      %v4211 = vpop.permute.xlu0 %4210
      %s4213 = scalar_lea.vmem %s290, 4
      %4214 = vst.msk [vmem:[%s4213] sm:$0xf] %vm4207, %v4211
      %4215 = vrot.lane.b32.xlu0 %v4206, 120
      %v4216 = vpop.permute.xlu0 %4215
      %s4218 = scalar_lea.vmem %s290, 8
      %4219 = vst.msk [vmem:[%s4218] sm:$0xf] %vm4207, %v4216
      %4220 = vrot.lane.b32.xlu0 %v4206, 116
      %v4221 = vpop.permute.xlu0 %4220
      %s4223 = scalar_lea.vmem %s290, 12
      %4224 = vst.msk [vmem:[%s4223] sm:$0xf] %vm4207, %v4221
      %4225 = vrot.lane.b32.xlu0 %v4206, 112
      %v4226 = vpop.permute.xlu0 %4225
      %s4228 = scalar_lea.vmem %s290, 16
      %4229 = vst.msk [vmem:[%s4228] sm:$0xf] %vm4207, %v4226
      %4230 = vrot.lane.b32.xlu0 %v4206, 108
      %v4231 = vpop.permute.xlu0 %4230
      %s4233 = scalar_lea.vmem %s290, 20
      %4234 = vst.msk [vmem:[%s4233] sm:$0xf] %vm4207, %v4231
      %4235 = vrot.lane.b32.xlu0 %v4206, 104
      %v4236 = vpop.permute.xlu0 %4235
      %s4238 = scalar_lea.vmem %s290, 24
      %4239 = vst.msk [vmem:[%s4238] sm:$0xf] %vm4207, %v4236
      %4240 = vrot.lane.b32.xlu0 %v4206, 100
      %v4241 = vpop.permute.xlu0 %4240
      %s4243 = scalar_lea.vmem %s290, 28
      %4244 = vst.msk [vmem:[%s4243] sm:$0xf] %vm4207, %v4241
      %4245 = vrot.lane.b32.xlu0 %v4206, 96
      %v4246 = vpop.permute.xlu0 %4245
      %s4248 = scalar_lea.vmem %s290, 32
      %4249 = vst.msk [vmem:[%s4248] sm:$0xf] %vm4207, %v4246
      %4250 = vrot.lane.b32.xlu0 %v4206, 92
      %v4251 = vpop.permute.xlu0 %4250
      %s4253 = scalar_lea.vmem %s290, 36
      %4254 = vst.msk [vmem:[%s4253] sm:$0xf] %vm4207, %v4251
      %4255 = vrot.lane.b32.xlu0 %v4206, 88
      %v4256 = vpop.permute.xlu0 %4255
      %s4258 = scalar_lea.vmem %s290, 40
      %4259 = vst.msk [vmem:[%s4258] sm:$0xf] %vm4207, %v4256
      %4260 = vrot.lane.b32.xlu0 %v4206, 84
      %v4261 = vpop.permute.xlu0 %4260
      %s4263 = scalar_lea.vmem %s290, 44
      %4264 = vst.msk [vmem:[%s4263] sm:$0xf] %vm4207, %v4261
      %p4265 = scmp.lt.s32.totalorder %s30, 1
      %s4266 = scalar_select %p4265, %s30, 1
      %s4267 = smul.addr %s4266, 12
      %s4268 = smul.addr %s4267, 4
      %s4269 = scalar_lea.vmem %s9, %s4268
      // Predicated region
      $region49: #{encoder_forward.1} parent=47 // pred_check
        %p4270 = pneg %p200
      $region50: #{encoder_forward.1} parent=47 // pred_check_branch
        %4272 = sbr.rel (%p4270) target = $region52
      $region51: #{encoder_forward.1} parent=47 // pred_region
        _
      $region52: #{encoder_forward.1} parent=47 // pred_fallthru
        _
    $region48: #{encoder_forward.1} parent=5 // pred_fallthru
      _
    %p4273 = scmp.le.s32.totalorder 2, %s25
    // Predicated region
    $region53: #{encoder_forward.1} parent=5 // pred_check
      %p4274 = pneg %p4273
    $region54: #{encoder_forward.1} parent=5 // pred_check_branch
      %4276 = sbr.rel (%p4274) target = $region56
    $region55: #{encoder_forward.1} parent=5 // pred_region
      %s4277 = ssub.s32 %s25, 2
      // Predicated region
      $region57: #{encoder_forward.1} parent=55 // pred_check
        %p4278 = pneg %p206
      $region58: #{encoder_forward.1} parent=55 // pred_check_branch
        %4280 = sbr.rel (%p4278) target = $region60
      $region59: #{encoder_forward.1} parent=55 // pred_region
        %p4281 = scmp.lt.s32.totalorder %s31, 1
        %s4282 = scalar_select %p4281, %s31, 1
        %s4283 = smul.addr %s4282, 12
        %s4284 = smul.addr %s4283, 4
        %s4285 = scalar_lea.vmem %s9, %s4284
      $region60: #{encoder_forward.1} parent=55 // pred_fallthru
        _
    $region56: #{encoder_forward.1} parent=5 // pred_fallthru
      _
  $region6: #{encoder_forward.1} parent=0 // loop_footer
    %s29 = sadd.s32 1, %s25
  $region7: #{encoder_forward.1} parent=0 // loop_footer_branch
    %24 = sbr.rel target = $region3
  $region8: #{encoder_forward.1} parent=0 // loop_exit
    _

</llo_original>
